<compile_context>
chip_gen: v6e
topology: v6e:2x2x1
jax: 0.10.0
libtpu: 0.0.40
codegen_flags: <defaults>
</compile_context>

<pallas_src>
import jax
import jax.numpy as jnp
from jax.experimental import pallas as pl
from jax.experimental.pallas import tpu as pltpu


# ---------------------------------------------------------------------------
# Kernel: all ensemble members for one batch tile.
# ---------------------------------------------------------------------------
def ensemble_mlp_kernel(s_ref, ns_ref, v_ref,
                        w1s_ref, w1ns_ref, w1v_ref, b1_ref,
                        w2_ref, b2_ref, w3_ref, b3_ref,
                        out_ref):
    """Hot path: per member, 4 MXU matmuls + VPU bias/ReLU + lane reduction.

    s_ref / ns_ref : (TB, S)   uint8 image features (1/255 folded into weights)
    v_ref          : (TB, 128) f32   [action | done | zero-pad]
    w1*_ref        : (M, ., Hp) f32  first-layer weights, split per input stream
    w2_ref         : (M, Hp, Hp), b*_ref: (M, Hp) / (M, 1), w3_ref: (M, Hp)
    out_ref        : (M, TB)   per-member rewards, batch on the lane axis
    """
    s = s_ref[...].astype(jnp.float32)      # uint8 -> f32 in VMEM (VPU)
    ns = ns_ref[...].astype(jnp.float32)
    v = v_ref[...]                          # already f32

    num_members = out_ref.shape[0]          # static; ensembles are small
    rows = []
    for m in range(num_members):            # static unroll over members
        h1 = jnp.dot(s, w1s_ref[m], preferred_element_type=jnp.float32)
        h1 = h1 + jnp.dot(ns, w1ns_ref[m], preferred_element_type=jnp.float32)
        h1 = h1 + jnp.dot(v, w1v_ref[m], preferred_element_type=jnp.float32)
        h1 = jnp.maximum(h1 + b1_ref[m], 0.0)                       # (TB, Hp)

        h2 = jnp.dot(h1, w2_ref[m], preferred_element_type=jnp.float32)
        h2 = jnp.maximum(h2 + b2_ref[m], 0.0)                       # (TB, Hp)

        # Final layer as VPU multiply + lane reduction (no N=1 MXU matmul).
        r = jnp.sum(h2 * w3_ref[m], axis=-1) + b3_ref[m]            # (TB,)
        rows.append(r)

    out_ref[...] = jnp.stack(rows, axis=0)                          # (M, TB)


# ---------------------------------------------------------------------------
# One-time weight preprocessing: split/pad/stack member parameters.
# ---------------------------------------------------------------------------
def pack_ensemble_params(members_params, obs_dim, act_dim, *,
                         vec_width=128, hidden_pad=128, normalize_images=True):
    """Split W1 by input stream, fold 1/255 into the image rows, pad hidden to
    128, stack across members."""
    img_scale = (1.0 / 255.0) if normalize_images else 1.0
    W1S, W1NS, W1V, B1, W2, B2, W3, B3 = [], [], [], [], [], [], [], []
    for (w1, b1, w2, b2, w3, b3) in members_params:
        w1 = w1.astype(jnp.float32)
        hidden = w1.shape[1]
        assert hidden <= hidden_pad and act_dim + 1 <= vec_width
        pad_h = hidden_pad - hidden

        w1_s = w1[:obs_dim] * img_scale                              # scaled
        w1_a = w1[obs_dim:obs_dim + act_dim]                         # NOT scaled
        w1_ns = w1[obs_dim + act_dim:2 * obs_dim + act_dim] * img_scale
        w1_d = w1[2 * obs_dim + act_dim:2 * obs_dim + act_dim + 1]   # NOT scaled
        w1_v = jnp.concatenate(
            [w1_a, w1_d,
             jnp.zeros((vec_width - act_dim - 1, hidden), jnp.float32)], axis=0)

        W1S.append(jnp.pad(w1_s, ((0, 0), (0, pad_h))))
        W1NS.append(jnp.pad(w1_ns, ((0, 0), (0, pad_h))))
        W1V.append(jnp.pad(w1_v, ((0, 0), (0, pad_h))))
        B1.append(jnp.pad(b1.astype(jnp.float32).reshape(-1), (0, pad_h)))
        W2.append(jnp.pad(w2.astype(jnp.float32), ((0, pad_h), (0, pad_h))))
        B2.append(jnp.pad(b2.astype(jnp.float32).reshape(-1), (0, pad_h)))
        W3.append(jnp.pad(w3.astype(jnp.float32).reshape(-1), (0, pad_h)))
        B3.append(jnp.reshape(b3.astype(jnp.float32), (1,)))
    return (jnp.stack(W1S), jnp.stack(W1NS), jnp.stack(W1V), jnp.stack(B1),
            jnp.stack(W2), jnp.stack(B2), jnp.stack(W3), jnp.stack(B3))


def _round_up(x, m):
    return (x + m - 1) // m * m


# ---------------------------------------------------------------------------
# Ensemble forward: per-member rewards + mean + unbiased variance.
# ---------------------------------------------------------------------------
def reward_ensemble_moments(state, action, next_state, done, members_params,
                            normalize_images=True):
    """Returns (mean (B,), var ddof=1 (B,), all_rewards (B, M))."""
    B = state.shape[0]
    s = state.reshape(B, -1)                 # keep native dtype (uint8 images)
    ns = next_state.reshape(B, -1)
    a = action.reshape(B, -1).astype(jnp.float32)
    d = done.reshape(B, 1).astype(jnp.float32)
    S = s.shape[1]
    A = a.shape[1]
    VEC = 128                                # action+done padded to 128 lanes
    vec = jnp.concatenate(
        [a, d, jnp.zeros((B, VEC - A - 1), jnp.float32)], axis=-1)

    # --- batch tiling: 128-multiple tiles, padded batch, tile <= 512 rows ----
    B_pad = _round_up(max(B, 1), 128)
    TB = 512 if B_pad % 512 == 0 else (256 if B_pad % 256 == 0 else 128)
    nb = B_pad // TB
    if B_pad != B:
        pad = B_pad - B
        s = jnp.pad(s, ((0, pad), (0, 0)))
        ns = jnp.pad(ns, ((0, pad), (0, 0)))
        vec = jnp.pad(vec, ((0, pad), (0, 0)))

    (W1S, W1NS, W1V, B1, W2, B2, W3, B3) = pack_ensemble_params(
        members_params, S, A, vec_width=VEC, hidden_pad=128,
        normalize_images=normalize_images)
    M = int(W1S.shape[0])
    Hp = int(W1S.shape[2])

    weight_bytes = 4 * (W1S.size + W1NS.size + W1V.size + W2.size
                        + B1.size + B2.size + W3.size + B3.size)
    cost = pl.CostEstimate(
        flops=2 * M * B_pad * ((2 * S + VEC) * Hp + Hp * Hp + Hp),
        transcendentals=0,
        bytes_accessed=int(2 * B_pad * S * s.dtype.itemsize + B_pad * VEC * 4
                           + weight_bytes + M * B_pad * 4),
    )

    all_r = pl.pallas_call(
        ensemble_mlp_kernel,
        out_shape=jax.ShapeDtypeStruct((M, B_pad), jnp.float32),
        grid_spec=pltpu.PrefetchScalarGridSpec(
            num_scalar_prefetch=0,
            grid=(nb,),
            in_specs=[
                # activations: batch-tiled, double-buffered
                pl.BlockSpec((TB, S), lambda i: (i, 0)),     # state (uint8)
                pl.BlockSpec((TB, S), lambda i: (i, 0)),     # next_state (uint8)
                pl.BlockSpec((TB, VEC), lambda i: (i, 0)),   # [action|done|pad]
                # weights: constant index_map -> resident in VMEM
                pl.BlockSpec((M, S, Hp), lambda i: (0, 0, 0)),   # W1 state rows
                pl.BlockSpec((M, S, Hp), lambda i: (0, 0, 0)),   # W1 next_state rows
                pl.BlockSpec((M, VEC, Hp), lambda i: (0, 0, 0)),  # W1 action/done rows
                pl.BlockSpec((M, Hp), lambda i: (0, 0)),          # b1
                pl.BlockSpec((M, Hp, Hp), lambda i: (0, 0, 0)),   # W2
                pl.BlockSpec((M, Hp), lambda i: (0, 0)),          # b2
                pl.BlockSpec((M, Hp), lambda i: (0, 0)),          # w3 (row vector)
                pl.BlockSpec((M, 1), lambda i: (0, 0)),           # b3
            ],
            out_specs=pl.BlockSpec((M, TB), lambda i: (0, i)),    # lane-dense
        ),
        compiler_params=pltpu.CompilerParams(
            dimension_semantics=("parallel",)),   # shard batch across TCs (v7x)
        cost_estimate=cost,
    )(s, ns, vec, W1S, W1NS, W1V, B1, W2, B2, W3, B3)

    all_r = all_r[:, :B]                              # drop batch padding
    mean = jnp.mean(all_r, axis=0)                    # (B,)
    var = jnp.var(all_r, axis=0, ddof=1)              # (B,), unbiased
    return mean, var, all_r.T                         # all_rewards: (B, M)


# ---------------------------------------------------------------------------
# Parameter init + pure-JAX reference
# ---------------------------------------------------------------------------
def init_member_params(key, feature_dim, hidden=32):
    k1, k2, k3, k4, k5, k6 = jax.random.split(key, 6)
    w1 = jax.random.normal(k1, (feature_dim, hidden), jnp.float32) / jnp.sqrt(
        float(feature_dim))
    b1 = jax.random.normal(k2, (hidden,), jnp.float32) * 0.1
    w2 = jax.random.normal(k3, (hidden, hidden), jnp.float32) / jnp.sqrt(
        float(hidden))
    b2 = jax.random.normal(k4, (hidden,), jnp.float32) * 0.1
    w3 = jax.random.normal(k5, (hidden,), jnp.float32) / jnp.sqrt(float(hidden))
    b3 = jax.random.normal(k6, (), jnp.float32) * 0.1
    return (w1, b1, w2, b2, w3, b3)


def reference_member_reward(state, action, next_state, done, params,
                            normalize_images=True):
    B = state.shape[0]
    s = state.reshape(B, -1).astype(jnp.float32)
    ns = next_state.reshape(B, -1).astype(jnp.float32)
    if normalize_images:
        s = s / 255.0
        ns = ns / 255.0
    x = jnp.concatenate([s, action.reshape(B, -1).astype(jnp.float32), ns,
                         done.reshape(B, 1).astype(jnp.float32)], axis=-1)
    w1, b1, w2, b2, w3, b3 = params
    h1 = jnp.maximum(x @ w1 + b1, 0.0)
    h2 = jnp.maximum(h1 @ w2 + b2, 0.0)
    return h2 @ w3 + b3                                            # (B,)


def reference_moments(state, action, next_state, done, members_params,
                      normalize_images=True):
    all_r = jnp.stack(
        [reference_member_reward(state, action, next_state, done, p,
                                 normalize_images) for p in members_params],
        axis=-1)                                                   # (B, M)
    return all_r.mean(-1), jnp.var(all_r, axis=-1, ddof=1), all_r


if __name__ == "__main__":
    key = jax.random.PRNGKey(0)
    k_s, k_ns, k_a, k_d, k_p = jax.random.split(key, 5)

    # Small shapes: image obs (C=4, 16x16), continuous action dim 8, 3 members.
    B, C, Hh, Ww = 2, 4, 16, 16
    A = 8
    M = 3            # RewardEnsemble requires >= 2 members
    hidden = 32

    state = jax.random.randint(k_s, (B, C, Hh, Ww), 0, 256,
                               dtype=jnp.int32).astype(jnp.uint8)
    next_state = jax.random.randint(k_ns, (B, C, Hh, Ww), 0, 256,
                                    dtype=jnp.int32).astype(jnp.uint8)
    action = jax.random.normal(k_a, (B, A), jnp.float32)
    done = (jax.random.uniform(k_d, (B,)) > 0.5).astype(jnp.float32)

    feature_dim = 2 * C * Hh * Ww + A + 1
    members_params = [init_member_params(k, feature_dim, hidden)
                      for k in jax.random.split(k_p, M)]

    mean, var, all_r = reward_ensemble_moments(
        state, action, next_state, done, members_params, normalize_images=True)
    mean = jax.block_until_ready(mean)
    var = jax.block_until_ready(var)
    all_r = jax.block_until_ready(all_r)

    ref_mean, ref_var, ref_all = reference_moments(
        state, action, next_state, done, members_params, normalize_images=True)

    assert mean.shape == (B,) and var.shape == (B,) and all_r.shape == (B, M)
    assert jnp.allclose(all_r, ref_all, atol=1e-3, rtol=1e-3), (all_r, ref_all)
    assert jnp.allclose(mean, ref_mean, atol=1e-3, rtol=1e-3), (mean, ref_mean)
    assert jnp.allclose(var, ref_var, atol=1e-3, rtol=1e-3), (var, ref_var)

    print("KERNEL_OK")
</pallas_src>

<mosaic_0001>
module attributes {stable_mosaic.version = 11 : i64} {
  func.func @ensemble_mlp_kernel(%arg0: i32, %arg1: memref<128x1024xi8, #tpu.memory_space<vmem>>, %arg2: memref<128x1024xi8, #tpu.memory_space<vmem>>, %arg3: memref<128x128xf32, #tpu.memory_space<vmem>>, %arg4: memref<3x1024x128xf32, #tpu.memory_space<vmem>>, %arg5: memref<3x1024x128xf32, #tpu.memory_space<vmem>>, %arg6: memref<3x128x128xf32, #tpu.memory_space<vmem>>, %arg7: memref<3x128xf32, #tpu.memory_space<vmem>>, %arg8: memref<3x128x128xf32, #tpu.memory_space<vmem>>, %arg9: memref<3x128xf32, #tpu.memory_space<vmem>>, %arg10: memref<3x128xf32, #tpu.memory_space<vmem>>, %arg11: memref<3x1xf32, #tpu.memory_space<vmem>>, %arg12: memref<3x128xf32, #tpu.memory_space<vmem>>) attributes {dimension_semantics = [#tpu.dimension_semantics<parallel>], iteration_bounds = array<i64: 1>, scalar_prefetch = 0 : i64, scratch_operands = 0 : i64, tpu.core_type = #tpu.core_type<tc>, window_params = [{transform_indices = @transform_0, window_bounds = array<i64: 128, 1024>}, {transform_indices = @transform_1, window_bounds = array<i64: 128, 1024>}, {transform_indices = @transform_2, window_bounds = array<i64: 128, 128>}, {pipeline_mode = #tpu.pipeline_mode<synchronous>, transform_indices = @transform_3, window_bounds = array<i64: 3, 1024, 128>}, {pipeline_mode = #tpu.pipeline_mode<synchronous>, transform_indices = @transform_4, window_bounds = array<i64: 3, 1024, 128>}, {pipeline_mode = #tpu.pipeline_mode<synchronous>, transform_indices = @transform_5, window_bounds = array<i64: 3, 128, 128>}, {pipeline_mode = #tpu.pipeline_mode<synchronous>, transform_indices = @transform_6, window_bounds = array<i64: 3, 128>}, {pipeline_mode = #tpu.pipeline_mode<synchronous>, transform_indices = @transform_7, window_bounds = array<i64: 3, 128, 128>}, {pipeline_mode = #tpu.pipeline_mode<synchronous>, transform_indices = @transform_8, window_bounds = array<i64: 3, 128>}, {pipeline_mode = #tpu.pipeline_mode<synchronous>, transform_indices = @transform_9, window_bounds = array<i64: 3, 128>}, {pipeline_mode = #tpu.pipeline_mode<synchronous>, transform_indices = @transform_10, window_bounds = array<i64: 3, 1>}, {transform_indices = @transform_11, window_bounds = array<i64: 3, 128>}]} {
    %c0 = arith.constant 0 : index
    %c0_0 = arith.constant 0 : index
    %0 = vector.load %arg1[%c0, %c0_0] : memref<128x1024xi8, #tpu.memory_space<vmem>>, vector<128x1024xi8>
    %1 = arith.uitofp %0 : vector<128x1024xi8> to vector<128x1024xf32>
    %c0_1 = arith.constant 0 : index
    %c0_2 = arith.constant 0 : index
    %2 = vector.load %arg2[%c0_1, %c0_2] : memref<128x1024xi8, #tpu.memory_space<vmem>>, vector<128x1024xi8>
    %3 = arith.uitofp %2 : vector<128x1024xi8> to vector<128x1024xf32>
    %c0_3 = arith.constant 0 : index
    %c0_4 = arith.constant 0 : index
    %4 = vector.load %arg3[%c0_3, %c0_4] : memref<128x128xf32, #tpu.memory_space<vmem>>, vector<128x128xf32>
    %c0_5 = arith.constant 0 : index
    %c0_6 = arith.constant 0 : index
    %c0_7 = arith.constant 0 : index
    %5 = vector.load %arg4[%c0_5, %c0_6, %c0_7] : memref<3x1024x128xf32, #tpu.memory_space<vmem>>, vector<1x1024x128xf32>
    %6 = vector.shape_cast %5 : vector<1x1024x128xf32> to vector<1024x128xf32>
    %cst = arith.constant dense<0.000000e+00> : vector<128x128xf32>
    %7 = tpu.matmul %1, %6, %cst {dimension_numbers = #tpu.dot_dimension_numbers<[1], [0], [0], [1], [0, 0, 1, 1], [], []>} : vector<128x1024xf32>, vector<1024x128xf32>, vector<128x128xf32> -> vector<128x128xf32>
    %c0_8 = arith.constant 0 : index
    %c0_9 = arith.constant 0 : index
    %c0_10 = arith.constant 0 : index
    %8 = vector.load %arg5[%c0_8, %c0_9, %c0_10] : memref<3x1024x128xf32, #tpu.memory_space<vmem>>, vector<1x1024x128xf32>
    %9 = vector.shape_cast %8 : vector<1x1024x128xf32> to vector<1024x128xf32>
    %cst_11 = arith.constant dense<0.000000e+00> : vector<128x128xf32>
    %10 = tpu.matmul %3, %9, %cst_11 {dimension_numbers = #tpu.dot_dimension_numbers<[1], [0], [0], [1], [0, 0, 1, 1], [], []>} : vector<128x1024xf32>, vector<1024x128xf32>, vector<128x128xf32> -> vector<128x128xf32>
    %11 = arith.addf %7, %10 : vector<128x128xf32>
    %c0_12 = arith.constant 0 : index
    %c0_13 = arith.constant 0 : index
    %c0_14 = arith.constant 0 : index
    %12 = vector.load %arg6[%c0_12, %c0_13, %c0_14] : memref<3x128x128xf32, #tpu.memory_space<vmem>>, vector<1x128x128xf32>
    %13 = vector.shape_cast %12 : vector<1x128x128xf32> to vector<128x128xf32>
    %cst_15 = arith.constant dense<0.000000e+00> : vector<128x128xf32>
    %14 = tpu.matmul %4, %13, %cst_15 {dimension_numbers = #tpu.dot_dimension_numbers<[1], [0], [0], [1], [0, 0, 1, 1], [], []>} : vector<128x128xf32>, vector<128x128xf32>, vector<128x128xf32> -> vector<128x128xf32>
    %15 = arith.addf %11, %14 : vector<128x128xf32>
    %c0_16 = arith.constant 0 : index
    %c0_17 = arith.constant 0 : index
    %16 = vector.load %arg7[%c0_16, %c0_17] : memref<3x128xf32, #tpu.memory_space<vmem>>, vector<1x128xf32>
    %17 = vector.shape_cast %16 : vector<1x128xf32> to vector<128xf32>
    %18 = vector.shape_cast %17 : vector<128xf32> to vector<1x128xf32>
    %19 = vector.broadcast %18 : vector<1x128xf32> to vector<128x128xf32>
    %20 = arith.addf %15, %19 : vector<128x128xf32>
    %cst_18 = arith.constant 0.000000e+00 : f32
    %21 = vector.broadcast %cst_18 : f32 to vector<128x128xf32>
    %22 = arith.maximumf %20, %21 : vector<128x128xf32>
    %c0_19 = arith.constant 0 : index
    %c0_20 = arith.constant 0 : index
    %c0_21 = arith.constant 0 : index
    %23 = vector.load %arg8[%c0_19, %c0_20, %c0_21] : memref<3x128x128xf32, #tpu.memory_space<vmem>>, vector<1x128x128xf32>
    %24 = vector.shape_cast %23 : vector<1x128x128xf32> to vector<128x128xf32>
    %cst_22 = arith.constant dense<0.000000e+00> : vector<128x128xf32>
    %25 = tpu.matmul %22, %24, %cst_22 {dimension_numbers = #tpu.dot_dimension_numbers<[1], [0], [0], [1], [0, 0, 1, 1], [], []>} : vector<128x128xf32>, vector<128x128xf32>, vector<128x128xf32> -> vector<128x128xf32>
    %c0_23 = arith.constant 0 : index
    %c0_24 = arith.constant 0 : index
    %26 = vector.load %arg9[%c0_23, %c0_24] : memref<3x128xf32, #tpu.memory_space<vmem>>, vector<1x128xf32>
    %27 = vector.shape_cast %26 : vector<1x128xf32> to vector<128xf32>
    %28 = vector.shape_cast %27 : vector<128xf32> to vector<1x128xf32>
    %29 = vector.broadcast %28 : vector<1x128xf32> to vector<128x128xf32>
    %30 = arith.addf %25, %29 : vector<128x128xf32>
    %cst_25 = arith.constant 0.000000e+00 : f32
    %31 = vector.broadcast %cst_25 : f32 to vector<128x128xf32>
    %32 = arith.maximumf %30, %31 : vector<128x128xf32>
    %c0_26 = arith.constant 0 : index
    %c0_27 = arith.constant 0 : index
    %33 = vector.load %arg10[%c0_26, %c0_27] : memref<3x128xf32, #tpu.memory_space<vmem>>, vector<1x128xf32>
    %34 = vector.shape_cast %33 : vector<1x128xf32> to vector<128xf32>
    %35 = vector.shape_cast %34 : vector<128xf32> to vector<1x128xf32>
    %36 = vector.broadcast %35 : vector<1x128xf32> to vector<128x128xf32>
    %37 = arith.mulf %32, %36 : vector<128x128xf32>
    %cst_28 = arith.constant dense<0.000000e+00> : vector<128xf32>
    %38 = vector.multi_reduction <add>, %37, %cst_28 [1] : vector<128x128xf32> to vector<128xf32>
    %c0_29 = arith.constant 0 : index
    %c0_30 = arith.constant 0 : index
    %39 = vector.load %arg11[%c0_29, %c0_30] : memref<3x1xf32, #tpu.memory_space<vmem>>, vector<1x1xf32>
    %40 = vector.shape_cast %39 : vector<1x1xf32> to vector<1xf32>
    %41 = vector.broadcast %40 : vector<1xf32> to vector<128xf32>
    %42 = arith.addf %38, %41 : vector<128xf32>
    %c1 = arith.constant 1 : index
    %c0_31 = arith.constant 0 : index
    %c0_32 = arith.constant 0 : index
    %43 = vector.load %arg4[%c1, %c0_31, %c0_32] : memref<3x1024x128xf32, #tpu.memory_space<vmem>>, vector<1x1024x128xf32>
    %44 = vector.shape_cast %43 : vector<1x1024x128xf32> to vector<1024x128xf32>
    %cst_33 = arith.constant dense<0.000000e+00> : vector<128x128xf32>
    %45 = tpu.matmul %1, %44, %cst_33 {dimension_numbers = #tpu.dot_dimension_numbers<[1], [0], [0], [1], [0, 0, 1, 1], [], []>} : vector<128x1024xf32>, vector<1024x128xf32>, vector<128x128xf32> -> vector<128x128xf32>
    %c1_34 = arith.constant 1 : index
    %c0_35 = arith.constant 0 : index
    %c0_36 = arith.constant 0 : index
    %46 = vector.load %arg5[%c1_34, %c0_35, %c0_36] : memref<3x1024x128xf32, #tpu.memory_space<vmem>>, vector<1x1024x128xf32>
    %47 = vector.shape_cast %46 : vector<1x1024x128xf32> to vector<1024x128xf32>
    %cst_37 = arith.constant dense<0.000000e+00> : vector<128x128xf32>
    %48 = tpu.matmul %3, %47, %cst_37 {dimension_numbers = #tpu.dot_dimension_numbers<[1], [0], [0], [1], [0, 0, 1, 1], [], []>} : vector<128x1024xf32>, vector<1024x128xf32>, vector<128x128xf32> -> vector<128x128xf32>
    %49 = arith.addf %45, %48 : vector<128x128xf32>
    %c1_38 = arith.constant 1 : index
    %c0_39 = arith.constant 0 : index
    %c0_40 = arith.constant 0 : index
    %50 = vector.load %arg6[%c1_38, %c0_39, %c0_40] : memref<3x128x128xf32, #tpu.memory_space<vmem>>, vector<1x128x128xf32>
    %51 = vector.shape_cast %50 : vector<1x128x128xf32> to vector<128x128xf32>
    %cst_41 = arith.constant dense<0.000000e+00> : vector<128x128xf32>
    %52 = tpu.matmul %4, %51, %cst_41 {dimension_numbers = #tpu.dot_dimension_numbers<[1], [0], [0], [1], [0, 0, 1, 1], [], []>} : vector<128x128xf32>, vector<128x128xf32>, vector<128x128xf32> -> vector<128x128xf32>
    %53 = arith.addf %49, %52 : vector<128x128xf32>
    %c1_42 = arith.constant 1 : index
    %c0_43 = arith.constant 0 : index
    %54 = vector.load %arg7[%c1_42, %c0_43] : memref<3x128xf32, #tpu.memory_space<vmem>>, vector<1x128xf32>
    %55 = vector.shape_cast %54 : vector<1x128xf32> to vector<128xf32>
    %56 = vector.shape_cast %55 : vector<128xf32> to vector<1x128xf32>
    %57 = vector.broadcast %56 : vector<1x128xf32> to vector<128x128xf32>
    %58 = arith.addf %53, %57 : vector<128x128xf32>
    %cst_44 = arith.constant 0.000000e+00 : f32
    %59 = vector.broadcast %cst_44 : f32 to vector<128x128xf32>
    %60 = arith.maximumf %58, %59 : vector<128x128xf32>
    %c1_45 = arith.constant 1 : index
    %c0_46 = arith.constant 0 : index
    %c0_47 = arith.constant 0 : index
    %61 = vector.load %arg8[%c1_45, %c0_46, %c0_47] : memref<3x128x128xf32, #tpu.memory_space<vmem>>, vector<1x128x128xf32>
    %62 = vector.shape_cast %61 : vector<1x128x128xf32> to vector<128x128xf32>
    %cst_48 = arith.constant dense<0.000000e+00> : vector<128x128xf32>
    %63 = tpu.matmul %60, %62, %cst_48 {dimension_numbers = #tpu.dot_dimension_numbers<[1], [0], [0], [1], [0, 0, 1, 1], [], []>} : vector<128x128xf32>, vector<128x128xf32>, vector<128x128xf32> -> vector<128x128xf32>
    %c1_49 = arith.constant 1 : index
    %c0_50 = arith.constant 0 : index
    %64 = vector.load %arg9[%c1_49, %c0_50] : memref<3x128xf32, #tpu.memory_space<vmem>>, vector<1x128xf32>
    %65 = vector.shape_cast %64 : vector<1x128xf32> to vector<128xf32>
    %66 = vector.shape_cast %65 : vector<128xf32> to vector<1x128xf32>
    %67 = vector.broadcast %66 : vector<1x128xf32> to vector<128x128xf32>
    %68 = arith.addf %63, %67 : vector<128x128xf32>
    %cst_51 = arith.constant 0.000000e+00 : f32
    %69 = vector.broadcast %cst_51 : f32 to vector<128x128xf32>
    %70 = arith.maximumf %68, %69 : vector<128x128xf32>
    %c1_52 = arith.constant 1 : index
    %c0_53 = arith.constant 0 : index
    %71 = vector.load %arg10[%c1_52, %c0_53] : memref<3x128xf32, #tpu.memory_space<vmem>>, vector<1x128xf32>
    %72 = vector.shape_cast %71 : vector<1x128xf32> to vector<128xf32>
    %73 = vector.shape_cast %72 : vector<128xf32> to vector<1x128xf32>
    %74 = vector.broadcast %73 : vector<1x128xf32> to vector<128x128xf32>
    %75 = arith.mulf %70, %74 : vector<128x128xf32>
    %cst_54 = arith.constant dense<0.000000e+00> : vector<128xf32>
    %76 = vector.multi_reduction <add>, %75, %cst_54 [1] : vector<128x128xf32> to vector<128xf32>
    %c1_55 = arith.constant 1 : index
    %c0_56 = arith.constant 0 : index
    %77 = vector.load %arg11[%c1_55, %c0_56] : memref<3x1xf32, #tpu.memory_space<vmem>>, vector<1x1xf32>
    %78 = vector.shape_cast %77 : vector<1x1xf32> to vector<1xf32>
    %79 = vector.broadcast %78 : vector<1xf32> to vector<128xf32>
    %80 = arith.addf %76, %79 : vector<128xf32>
    %c2 = arith.constant 2 : index
    %c0_57 = arith.constant 0 : index
    %c0_58 = arith.constant 0 : index
    %81 = vector.load %arg4[%c2, %c0_57, %c0_58] : memref<3x1024x128xf32, #tpu.memory_space<vmem>>, vector<1x1024x128xf32>
    %82 = vector.shape_cast %81 : vector<1x1024x128xf32> to vector<1024x128xf32>
    %cst_59 = arith.constant dense<0.000000e+00> : vector<128x128xf32>
    %83 = tpu.matmul %1, %82, %cst_59 {dimension_numbers = #tpu.dot_dimension_numbers<[1], [0], [0], [1], [0, 0, 1, 1], [], []>} : vector<128x1024xf32>, vector<1024x128xf32>, vector<128x128xf32> -> vector<128x128xf32>
    %c2_60 = arith.constant 2 : index
    %c0_61 = arith.constant 0 : index
    %c0_62 = arith.constant 0 : index
    %84 = vector.load %arg5[%c2_60, %c0_61, %c0_62] : memref<3x1024x128xf32, #tpu.memory_space<vmem>>, vector<1x1024x128xf32>
    %85 = vector.shape_cast %84 : vector<1x1024x128xf32> to vector<1024x128xf32>
    %cst_63 = arith.constant dense<0.000000e+00> : vector<128x128xf32>
    %86 = tpu.matmul %3, %85, %cst_63 {dimension_numbers = #tpu.dot_dimension_numbers<[1], [0], [0], [1], [0, 0, 1, 1], [], []>} : vector<128x1024xf32>, vector<1024x128xf32>, vector<128x128xf32> -> vector<128x128xf32>
    %87 = arith.addf %83, %86 : vector<128x128xf32>
    %c2_64 = arith.constant 2 : index
    %c0_65 = arith.constant 0 : index
    %c0_66 = arith.constant 0 : index
    %88 = vector.load %arg6[%c2_64, %c0_65, %c0_66] : memref<3x128x128xf32, #tpu.memory_space<vmem>>, vector<1x128x128xf32>
    %89 = vector.shape_cast %88 : vector<1x128x128xf32> to vector<128x128xf32>
    %cst_67 = arith.constant dense<0.000000e+00> : vector<128x128xf32>
    %90 = tpu.matmul %4, %89, %cst_67 {dimension_numbers = #tpu.dot_dimension_numbers<[1], [0], [0], [1], [0, 0, 1, 1], [], []>} : vector<128x128xf32>, vector<128x128xf32>, vector<128x128xf32> -> vector<128x128xf32>
    %91 = arith.addf %87, %90 : vector<128x128xf32>
    %c2_68 = arith.constant 2 : index
    %c0_69 = arith.constant 0 : index
    %92 = vector.load %arg7[%c2_68, %c0_69] : memref<3x128xf32, #tpu.memory_space<vmem>>, vector<1x128xf32>
    %93 = vector.shape_cast %92 : vector<1x128xf32> to vector<128xf32>
    %94 = vector.shape_cast %93 : vector<128xf32> to vector<1x128xf32>
    %95 = vector.broadcast %94 : vector<1x128xf32> to vector<128x128xf32>
    %96 = arith.addf %91, %95 : vector<128x128xf32>
    %cst_70 = arith.constant 0.000000e+00 : f32
    %97 = vector.broadcast %cst_70 : f32 to vector<128x128xf32>
    %98 = arith.maximumf %96, %97 : vector<128x128xf32>
    %c2_71 = arith.constant 2 : index
    %c0_72 = arith.constant 0 : index
    %c0_73 = arith.constant 0 : index
    %99 = vector.load %arg8[%c2_71, %c0_72, %c0_73] : memref<3x128x128xf32, #tpu.memory_space<vmem>>, vector<1x128x128xf32>
    %100 = vector.shape_cast %99 : vector<1x128x128xf32> to vector<128x128xf32>
    %cst_74 = arith.constant dense<0.000000e+00> : vector<128x128xf32>
    %101 = tpu.matmul %98, %100, %cst_74 {dimension_numbers = #tpu.dot_dimension_numbers<[1], [0], [0], [1], [0, 0, 1, 1], [], []>} : vector<128x128xf32>, vector<128x128xf32>, vector<128x128xf32> -> vector<128x128xf32>
    %c2_75 = arith.constant 2 : index
    %c0_76 = arith.constant 0 : index
    %102 = vector.load %arg9[%c2_75, %c0_76] : memref<3x128xf32, #tpu.memory_space<vmem>>, vector<1x128xf32>
    %103 = vector.shape_cast %102 : vector<1x128xf32> to vector<128xf32>
    %104 = vector.shape_cast %103 : vector<128xf32> to vector<1x128xf32>
    %105 = vector.broadcast %104 : vector<1x128xf32> to vector<128x128xf32>
    %106 = arith.addf %101, %105 : vector<128x128xf32>
    %cst_77 = arith.constant 0.000000e+00 : f32
    %107 = vector.broadcast %cst_77 : f32 to vector<128x128xf32>
    %108 = arith.maximumf %106, %107 : vector<128x128xf32>
    %c2_78 = arith.constant 2 : index
    %c0_79 = arith.constant 0 : index
    %109 = vector.load %arg10[%c2_78, %c0_79] : memref<3x128xf32, #tpu.memory_space<vmem>>, vector<1x128xf32>
    %110 = vector.shape_cast %109 : vector<1x128xf32> to vector<128xf32>
    %111 = vector.shape_cast %110 : vector<128xf32> to vector<1x128xf32>
    %112 = vector.broadcast %111 : vector<1x128xf32> to vector<128x128xf32>
    %113 = arith.mulf %108, %112 : vector<128x128xf32>
    %cst_80 = arith.constant dense<0.000000e+00> : vector<128xf32>
    %114 = vector.multi_reduction <add>, %113, %cst_80 [1] : vector<128x128xf32> to vector<128xf32>
    %c2_81 = arith.constant 2 : index
    %c0_82 = arith.constant 0 : index
    %115 = vector.load %arg11[%c2_81, %c0_82] : memref<3x1xf32, #tpu.memory_space<vmem>>, vector<1x1xf32>
    %116 = vector.shape_cast %115 : vector<1x1xf32> to vector<1xf32>
    %117 = vector.broadcast %116 : vector<1xf32> to vector<128xf32>
    %118 = arith.addf %114, %117 : vector<128xf32>
    %119 = vector.shape_cast %42 : vector<128xf32> to vector<1x128xf32>
    %120 = vector.shape_cast %80 : vector<128xf32> to vector<1x128xf32>
    %121 = vector.shape_cast %118 : vector<128xf32> to vector<1x128xf32>
    %122 = tpu.concatenate %119, %120, %121 in 0 : vector<1x128xf32>, vector<1x128xf32>, vector<1x128xf32> -> vector<3x128xf32>
    %c0_83 = arith.constant 0 : index
    %c0_84 = arith.constant 0 : index
    %123 = vector.load %arg12[%c0_83, %c0_84] : memref<3x128xf32, #tpu.memory_space<vmem>>, vector<3x128xf32>
    tpu.vector_store %arg12[%c0_83, %c0_84], %122 {strides = array<i32>} : memref<3x128xf32, #tpu.memory_space<vmem>>, vector<3x128xf32>,
    return
  }
  func.func @transform_0(%arg0: i32) -> (i32, i32) {
    %c0_i32 = arith.constant 0 : i32
    %c0_i32_0 = arith.constant 0 : i32
    return %arg0, %c0_i32 : i32, i32
  }
  func.func @transform_1(%arg0: i32) -> (i32, i32) {
    %c0_i32 = arith.constant 0 : i32
    %c0_i32_0 = arith.constant 0 : i32
    return %arg0, %c0_i32 : i32, i32
  }
  func.func @transform_2(%arg0: i32) -> (i32, i32) {
    %c0_i32 = arith.constant 0 : i32
    %c0_i32_0 = arith.constant 0 : i32
    return %arg0, %c0_i32 : i32, i32
  }
  func.func @transform_3(%arg0: i32) -> (i32, i32, i32) {
    %c0_i32 = arith.constant 0 : i32
    %c0_i32_0 = arith.constant 0 : i32
    %c0_i32_1 = arith.constant 0 : i32
    %c0_i32_2 = arith.constant 0 : i32
    return %c0_i32, %c0_i32_0, %c0_i32_1 : i32, i32, i32
  }
  func.func @transform_4(%arg0: i32) -> (i32, i32, i32) {
    %c0_i32 = arith.constant 0 : i32
    %c0_i32_0 = arith.constant 0 : i32
    %c0_i32_1 = arith.constant 0 : i32
    %c0_i32_2 = arith.constant 0 : i32
    return %c0_i32, %c0_i32_0, %c0_i32_1 : i32, i32, i32
  }
  func.func @transform_5(%arg0: i32) -> (i32, i32, i32) {
    %c0_i32 = arith.constant 0 : i32
    %c0_i32_0 = arith.constant 0 : i32
    %c0_i32_1 = arith.constant 0 : i32
    %c0_i32_2 = arith.constant 0 : i32
    return %c0_i32, %c0_i32_0, %c0_i32_1 : i32, i32, i32
  }
  func.func @transform_6(%arg0: i32) -> (i32, i32) {
    %c0_i32 = arith.constant 0 : i32
    %c0_i32_0 = arith.constant 0 : i32
    %c0_i32_1 = arith.constant 0 : i32
    return %c0_i32, %c0_i32_0 : i32, i32
  }
  func.func @transform_7(%arg0: i32) -> (i32, i32, i32) {
    %c0_i32 = arith.constant 0 : i32
    %c0_i32_0 = arith.constant 0 : i32
    %c0_i32_1 = arith.constant 0 : i32
    %c0_i32_2 = arith.constant 0 : i32
    return %c0_i32, %c0_i32_0, %c0_i32_1 : i32, i32, i32
  }
  func.func @transform_8(%arg0: i32) -> (i32, i32) {
    %c0_i32 = arith.constant 0 : i32
    %c0_i32_0 = arith.constant 0 : i32
    %c0_i32_1 = arith.constant 0 : i32
    return %c0_i32, %c0_i32_0 : i32, i32
  }
  func.func @transform_9(%arg0: i32) -> (i32, i32) {
    %c0_i32 = arith.constant 0 : i32
    %c0_i32_0 = arith.constant 0 : i32
    %c0_i32_1 = arith.constant 0 : i32
    return %c0_i32, %c0_i32_0 : i32, i32
  }
  func.func @transform_10(%arg0: i32) -> (i32, i32) {
    %c0_i32 = arith.constant 0 : i32
    %c0_i32_0 = arith.constant 0 : i32
    %c0_i32_1 = arith.constant 0 : i32
    return %c0_i32, %c0_i32_0 : i32, i32
  }
  func.func @transform_11(%arg0: i32) -> (i32, i32) {
    %c0_i32 = arith.constant 0 : i32
    %c0_i32_0 = arith.constant 0 : i32
    return %c0_i32, %arg0 : i32, i32
  }
}

</mosaic_0001>

<llo_original>
// kernel: tpu_custom_call.1
$region0: #{tpu_custom_call.1}
  #allocation0 [shape = 'u32[]', space=smem, size = 0x4, offset = 0x4, fixed_abs, tag = 'smem constant byte address 0x4 - core index']
  #allocation1 [shape = 'u32[144,128]{1,0:T(1,128)}', space=vmem, size = 0x12000, scoped, tag = 'internal scratch']
  %s0 = inlined_call_operand.hbm [shape: u8[128,1024], index: 0, kind: input, shape index: {}]
  %s1 = inlined_call_operand.hbm [shape: u8[128,1024], index: 1, kind: input, shape index: {}]
  %s2 = inlined_call_operand.hbm [shape: f32[128,128], index: 2, kind: input, shape index: {}]
  %s3 = inlined_call_operand.hbm [shape: f32[3,1024,128], index: 3, kind: input, shape index: {}]
  %s4 = inlined_call_operand.hbm [shape: f32[3,1024,128], index: 4, kind: input, shape index: {}]
  %s5 = inlined_call_operand.hbm [shape: f32[3,128,128], index: 5, kind: input, shape index: {}]
  %s6 = inlined_call_operand.hbm [shape: f32[3,128], index: 6, kind: input, shape index: {}]
  %s7 = inlined_call_operand.hbm [shape: f32[3,128,128], index: 7, kind: input, shape index: {}]
  %s8 = inlined_call_operand.hbm [shape: f32[3,128], index: 8, kind: input, shape index: {}]
  %s9 = inlined_call_operand.hbm [shape: f32[3,128], index: 9, kind: input, shape index: {}]
  %s10 = inlined_call_operand.vmem [shape: f32[3,1], index: 10, kind: input, shape index: {}]
  %s11 = inlined_call_operand.hbm [shape: f32[3,128], index: 11, kind: output, shape index: {}]
  %s12 = sld [smem:[#allocation0]]
  $region94: #{tpu_custom_call.1} parent=0
    _
  %s14 = ssub.s32 1, %s12
  %s15 = scalar_select 0, %s14, %s12
  $region1: #{tpu_custom_call.1} parent=0
    #allocation2 [shape = 'u8[131072]{0}', space=vmem, size = 0x20000, scoped, tag = 'input window, operand 0, single buffered']
    #allocation3 [shape = 's32[1]{0}', space=sflag, size = 0x4, scoped, tag = 'scoped memory for tpu_custom_call.1']
    #allocation4 [shape = 's32[1]{0}', space=sflag, size = 0x4, scoped, tag = 'scoped memory for tpu_custom_call.1']
    #allocation5 [shape = 'u8[131072]{0}', space=vmem, size = 0x20000, scoped, tag = 'input window, operand 1, single buffered']
    #allocation6 [shape = 's32[1]{0}', space=sflag, size = 0x4, scoped, tag = 'scoped memory for tpu_custom_call.1']
    #allocation7 [shape = 'u8[65536]{0}', space=vmem, size = 0x10000, scoped, tag = 'input window, operand 2, single buffered']
    #allocation8 [shape = 'u8[1572864]{0}', space=vmem, size = 0x180000, scoped, tag = 'input window, operand 3, single buffered']
    #allocation9 [shape = 's32[1]{0}', space=sflag, size = 0x4, scoped, tag = 'scoped memory for tpu_custom_call.1']
    #allocation10 [shape = 'u8[1572864]{0}', space=vmem, size = 0x180000, scoped, tag = 'input window, operand 4, single buffered']
    #allocation11 [shape = 'u8[196608]{0}', space=vmem, size = 0x30000, scoped, tag = 'input window, operand 5, single buffered']
    #allocation12 [shape = 's32[1]{0}', space=sflag, size = 0x4, scoped, tag = 'scoped memory for tpu_custom_call.1']
    #allocation13 [shape = 'u8[2048]{0}', space=vmem, size = 0x800, scoped, tag = 'input window, operand 6, single buffered']
    #allocation14 [shape = 'u8[196608]{0}', space=vmem, size = 0x30000, scoped, tag = 'input window, operand 7, single buffered']
    #allocation15 [shape = 's32[1]{0}', space=sflag, size = 0x4, scoped, tag = 'scoped memory for tpu_custom_call.1']
    #allocation16 [shape = 'u8[2048]{0}', space=vmem, size = 0x800, scoped, tag = 'input window, operand 8, single buffered']
    #allocation17 [shape = 'u8[2048]{0}', space=vmem, size = 0x800, scoped, tag = 'input window, operand 9, single buffered']
    #allocation18 [shape = 's32[1]{0}', space=sflag, size = 0x4, scoped, tag = 'scoped memory for tpu_custom_call.1']
    #allocation19 [shape = 'u8[2048]{0}', space=vmem, size = 0x800, scoped, tag = 'output window, operand 0, single buffered']
    %16 = vsyncpa [#allocation3], 0
    %17 = vsyncpa [#allocation6], 0
    %18 = vsyncpa [#allocation9], 0
    %19 = vsyncpa [#allocation12], 0
    %20 = vsyncpa [#allocation15], 0
    %21 = vsyncpa [#allocation18], 0
    %22 = vsyncpa [#allocation4], 0
    // Predicated region
    $region2: #{tpu_custom_call.1} parent=1 // pred_check
      _
    $region3: #{tpu_custom_call.1} parent=1 // pred_check_branch
      %24 = sbr.rel (0) target = $region5
    $region4: #{tpu_custom_call.1} parent=1 // pred_region
      %s26 = ssub.s32 4096, 4096
      %27 = vsyncadd [#allocation3], %s26
      %s28 = sshll.u32 [#allocation2], 4
      %s29 = int_to_ptr.vmem [resolvable:$true] %s28
      %34 = dma.hbm_to_vmem [thread:$0]  %s0, 4096, %s29, [#allocation3], 1024, 1024, 64
    $region5: #{tpu_custom_call.1} parent=1 // pred_fallthru
      _
    // Predicated region
    $region6: #{tpu_custom_call.1} parent=1 // pred_check
      _
    $region7: #{tpu_custom_call.1} parent=1 // pred_check_branch
      %36 = sbr.rel (0) target = $region9
    $region8: #{tpu_custom_call.1} parent=1 // pred_region
      %s38 = ssub.s32 4096, 4096
      %39 = vsyncadd [#allocation6], %s38
      %s40 = sshll.u32 [#allocation5], 4
      %s41 = int_to_ptr.vmem [resolvable:$true] %s40
      %46 = dma.hbm_to_vmem [thread:$0]  %s1, 4096, %s41, [#allocation6], 1024, 1024, 64
    $region9: #{tpu_custom_call.1} parent=1 // pred_fallthru
      _
    // Predicated region
    $region10: #{tpu_custom_call.1} parent=1 // pred_check
      _
    $region11: #{tpu_custom_call.1} parent=1 // pred_check_branch
      %48 = sbr.rel (0) target = $region13
    $region12: #{tpu_custom_call.1} parent=1 // pred_region
      %s50 = ssub.s32 2048, 2048
      %51 = vsyncadd [#allocation6], %s50
      %s52 = sshll.u32 [#allocation7], 4
      %s53 = int_to_ptr.vmem [resolvable:$true] %s52
      %58 = dma.hbm_to_vmem [thread:$0]  %s2, 2048, %s53, [#allocation6], 128, 128, 8
    $region13: #{tpu_custom_call.1} parent=1 // pred_fallthru
      _
    // Predicated region
    $region14: #{tpu_custom_call.1} parent=1 // pred_check
      _
    $region15: #{tpu_custom_call.1} parent=1 // pred_check_branch
      %60 = sbr.rel (0) target = $region17
    $region16: #{tpu_custom_call.1} parent=1 // pred_region
      %s62 = ssub.s32 49152, 49152
      %63 = vsyncadd [#allocation9], %s62
      %s64 = sshll.u32 [#allocation8], 4
      %s65 = int_to_ptr.vmem [resolvable:$true] %s64
      %70 = dma.hbm_to_vmem [thread:$0]  %s3, 49152, %s65, [#allocation9], 128, 128, 8
    $region17: #{tpu_custom_call.1} parent=1 // pred_fallthru
      _
    // Predicated region
    $region18: #{tpu_custom_call.1} parent=1 // pred_check
      _
    $region19: #{tpu_custom_call.1} parent=1 // pred_check_branch
      %72 = sbr.rel (0) target = $region21
    $region20: #{tpu_custom_call.1} parent=1 // pred_region
      %s74 = ssub.s32 49152, 49152
      %75 = vsyncadd [#allocation9], %s74
      %s76 = sshll.u32 [#allocation10], 4
      %s77 = int_to_ptr.vmem [resolvable:$true] %s76
      %82 = dma.hbm_to_vmem [thread:$0]  %s4, 49152, %s77, [#allocation9], 128, 128, 8
    $region21: #{tpu_custom_call.1} parent=1 // pred_fallthru
      _
    // Predicated region
    $region22: #{tpu_custom_call.1} parent=1 // pred_check
      _
    $region23: #{tpu_custom_call.1} parent=1 // pred_check_branch
      %84 = sbr.rel (0) target = $region25
    $region24: #{tpu_custom_call.1} parent=1 // pred_region
      %s86 = ssub.s32 6144, 6144
      %87 = vsyncadd [#allocation12], %s86
      %s88 = sshll.u32 [#allocation11], 4
      %s89 = int_to_ptr.vmem [resolvable:$true] %s88
      %94 = dma.hbm_to_vmem [thread:$0]  %s5, 6144, %s89, [#allocation12], 128, 128, 8
    $region25: #{tpu_custom_call.1} parent=1 // pred_fallthru
      _
    // Predicated region
    $region26: #{tpu_custom_call.1} parent=1 // pred_check
      _
    $region27: #{tpu_custom_call.1} parent=1 // pred_check_branch
      %96 = sbr.rel (0) target = $region29
    $region28: #{tpu_custom_call.1} parent=1 // pred_region
      %s98 = ssub.s32 64, 64
      %99 = vsyncadd [#allocation12], %s98
      %s101 = sshll.u32 [#allocation13], 4
      %s102 = int_to_ptr.vmem [resolvable:$true] %s101
      %104 = dma.hbm_to_vmem [thread:$0]  %s6, 64, %s102, [#allocation12]
    $region29: #{tpu_custom_call.1} parent=1 // pred_fallthru
      _
    // Predicated region
    $region30: #{tpu_custom_call.1} parent=1 // pred_check
      _
    $region31: #{tpu_custom_call.1} parent=1 // pred_check_branch
      %106 = sbr.rel (0) target = $region33
    $region32: #{tpu_custom_call.1} parent=1 // pred_region
      %s108 = ssub.s32 6144, 6144
      %109 = vsyncadd [#allocation15], %s108
      %s110 = sshll.u32 [#allocation14], 4
      %s111 = int_to_ptr.vmem [resolvable:$true] %s110
      %116 = dma.hbm_to_vmem [thread:$0]  %s7, 6144, %s111, [#allocation15], 128, 128, 8
    $region33: #{tpu_custom_call.1} parent=1 // pred_fallthru
      _
    // Predicated region
    $region34: #{tpu_custom_call.1} parent=1 // pred_check
      _
    $region35: #{tpu_custom_call.1} parent=1 // pred_check_branch
      %118 = sbr.rel (0) target = $region37
    $region36: #{tpu_custom_call.1} parent=1 // pred_region
      %s120 = ssub.s32 64, 64
      %121 = vsyncadd [#allocation15], %s120
      %s123 = sshll.u32 [#allocation16], 4
      %s124 = int_to_ptr.vmem [resolvable:$true] %s123
      %126 = dma.hbm_to_vmem [thread:$0]  %s8, 64, %s124, [#allocation15]
    $region37: #{tpu_custom_call.1} parent=1 // pred_fallthru
      _
    // Predicated region
    $region38: #{tpu_custom_call.1} parent=1 // pred_check
      _
    $region39: #{tpu_custom_call.1} parent=1 // pred_check_branch
      %128 = sbr.rel (0) target = $region41
    $region40: #{tpu_custom_call.1} parent=1 // pred_region
      %s130 = ssub.s32 64, 64
      %131 = vsyncadd [#allocation18], %s130
      %s133 = sshll.u32 [#allocation17], 4
      %s134 = int_to_ptr.vmem [resolvable:$true] %s133
      %136 = dma.hbm_to_vmem [thread:$0]  %s9, 64, %s134, [#allocation18]
    $region41: #{tpu_custom_call.1} parent=1 // pred_fallthru
      _
    // Predicated region
    $region42: #{tpu_custom_call.1} parent=1 // pred_check
      _
    $region43: #{tpu_custom_call.1} parent=1 // pred_check_branch
      %138 = sbr.rel (0) target = $region45
    $region44: #{tpu_custom_call.1} parent=1 // pred_region
      _
    $region45: #{tpu_custom_call.1} parent=1 // pred_fallthru
      _
    // Predicated region
    $region46: #{tpu_custom_call.1} parent=1 // pred_check
      _
    $region47: #{tpu_custom_call.1} parent=1 // pred_check_branch
      %140 = sbr.rel (0) target = $region49
    $region48: #{tpu_custom_call.1} parent=1 // pred_region
      %141 = dma.done [#allocation3], 4096
    $region49: #{tpu_custom_call.1} parent=1 // pred_fallthru
      _
    // Predicated region
    $region50: #{tpu_custom_call.1} parent=1 // pred_check
      _
    $region51: #{tpu_custom_call.1} parent=1 // pred_check_branch
      %143 = sbr.rel (0) target = $region53
    $region52: #{tpu_custom_call.1} parent=1 // pred_region
      %144 = dma.done [#allocation6], 4096
    $region53: #{tpu_custom_call.1} parent=1 // pred_fallthru
      _
    // Predicated region
    $region54: #{tpu_custom_call.1} parent=1 // pred_check
      _
    $region55: #{tpu_custom_call.1} parent=1 // pred_check_branch
      %146 = sbr.rel (0) target = $region57
    $region56: #{tpu_custom_call.1} parent=1 // pred_region
      %147 = dma.done [#allocation6], 2048
    $region57: #{tpu_custom_call.1} parent=1 // pred_fallthru
      _
    // Predicated region
    $region58: #{tpu_custom_call.1} parent=1 // pred_check
      _
    $region59: #{tpu_custom_call.1} parent=1 // pred_check_branch
      %149 = sbr.rel (0) target = $region61
    $region60: #{tpu_custom_call.1} parent=1 // pred_region
      %150 = dma.done [#allocation9], 49152
    $region61: #{tpu_custom_call.1} parent=1 // pred_fallthru
      _
    // Predicated region
    $region62: #{tpu_custom_call.1} parent=1 // pred_check
      _
    $region63: #{tpu_custom_call.1} parent=1 // pred_check_branch
      %152 = sbr.rel (0) target = $region65
    $region64: #{tpu_custom_call.1} parent=1 // pred_region
      %153 = dma.done [#allocation9], 49152
    $region65: #{tpu_custom_call.1} parent=1 // pred_fallthru
      _
    // Predicated region
    $region66: #{tpu_custom_call.1} parent=1 // pred_check
      _
    $region67: #{tpu_custom_call.1} parent=1 // pred_check_branch
      %155 = sbr.rel (0) target = $region69
    $region68: #{tpu_custom_call.1} parent=1 // pred_region
      %156 = dma.done [#allocation12], 6144
    $region69: #{tpu_custom_call.1} parent=1 // pred_fallthru
      _
    // Predicated region
    $region70: #{tpu_custom_call.1} parent=1 // pred_check
      _
    $region71: #{tpu_custom_call.1} parent=1 // pred_check_branch
      %158 = sbr.rel (0) target = $region73
    $region72: #{tpu_custom_call.1} parent=1 // pred_region
      %159 = dma.done [#allocation12], 64
    $region73: #{tpu_custom_call.1} parent=1 // pred_fallthru
      _
    // Predicated region
    $region74: #{tpu_custom_call.1} parent=1 // pred_check
      _
    $region75: #{tpu_custom_call.1} parent=1 // pred_check_branch
      %161 = sbr.rel (0) target = $region77
    $region76: #{tpu_custom_call.1} parent=1 // pred_region
      %162 = dma.done [#allocation15], 6144
    $region77: #{tpu_custom_call.1} parent=1 // pred_fallthru
      _
    // Predicated region
    $region78: #{tpu_custom_call.1} parent=1 // pred_check
      _
    $region79: #{tpu_custom_call.1} parent=1 // pred_check_branch
      %164 = sbr.rel (0) target = $region81
    $region80: #{tpu_custom_call.1} parent=1 // pred_region
      %165 = dma.done [#allocation15], 64
    $region81: #{tpu_custom_call.1} parent=1 // pred_fallthru
      _
    // Predicated region
    $region82: #{tpu_custom_call.1} parent=1 // pred_check
      _
    $region83: #{tpu_custom_call.1} parent=1 // pred_check_branch
      %167 = sbr.rel (0) target = $region85
    $region84: #{tpu_custom_call.1} parent=1 // pred_region
      %168 = dma.done [#allocation18], 64
    $region85: #{tpu_custom_call.1} parent=1 // pred_fallthru
      _
    %v169 = vld [vmem:[#allocation2] sm:$0xff]
    %v170 = vld [vmem:[#allocation2 + $0x8] sm:$0xff]
    %v171 = vld [vmem:[#allocation2 + $0x10] sm:$0xff]
    %v172 = vld [vmem:[#allocation2 + $0x18] sm:$0xff]
    %v173 = vld [vmem:[#allocation2 + $0x20] sm:$0xff]
    %v174 = vld [vmem:[#allocation2 + $0x28] sm:$0xff]
    %v175 = vld [vmem:[#allocation2 + $0x30] sm:$0xff]
    %v176 = vld [vmem:[#allocation2 + $0x38] sm:$0xff]
    %v177 = vld [vmem:[#allocation2 + $0x40] sm:$0xff]
    %v178 = vld [vmem:[#allocation2 + $0x48] sm:$0xff]
    %v179 = vld [vmem:[#allocation2 + $0x50] sm:$0xff]
    %v180 = vld [vmem:[#allocation2 + $0x58] sm:$0xff]
    %v181 = vld [vmem:[#allocation2 + $0x60] sm:$0xff]
    %v182 = vld [vmem:[#allocation2 + $0x68] sm:$0xff]
    %v183 = vld [vmem:[#allocation2 + $0x70] sm:$0xff]
    %v184 = vld [vmem:[#allocation2 + $0x78] sm:$0xff]
    %v185 = vld [vmem:[#allocation2 + $0x80] sm:$0xff]
    %v186 = vld [vmem:[#allocation2 + $0x88] sm:$0xff]
    %v187 = vld [vmem:[#allocation2 + $0x90] sm:$0xff]
    %v188 = vld [vmem:[#allocation2 + $0x98] sm:$0xff]
    %v189 = vld [vmem:[#allocation2 + $0xa0] sm:$0xff]
    %v190 = vld [vmem:[#allocation2 + $0xa8] sm:$0xff]
    %v191 = vld [vmem:[#allocation2 + $0xb0] sm:$0xff]
    %v192 = vld [vmem:[#allocation2 + $0xb8] sm:$0xff]
    %v193 = vld [vmem:[#allocation2 + $0xc0] sm:$0xff]
    %v194 = vld [vmem:[#allocation2 + $0xc8] sm:$0xff]
    %v195 = vld [vmem:[#allocation2 + $0xd0] sm:$0xff]
    %v196 = vld [vmem:[#allocation2 + $0xd8] sm:$0xff]
    %v197 = vld [vmem:[#allocation2 + $0xe0] sm:$0xff]
    %v198 = vld [vmem:[#allocation2 + $0xe8] sm:$0xff]
    %v199 = vld [vmem:[#allocation2 + $0xf0] sm:$0xff]
    %v200 = vld [vmem:[#allocation2 + $0xf8] sm:$0xff]
    %v201 = vunpack.c.0.s8 %v169
    %v202 = vunpack.c.0.s8 %v170
    %v203 = vunpack.c.0.s8 %v171
    %v204 = vunpack.c.0.s8 %v172
    %v205 = vunpack.c.0.s8 %v173
    %v206 = vunpack.c.0.s8 %v174
    %v207 = vunpack.c.0.s8 %v175
    %v208 = vunpack.c.0.s8 %v176
    %v209 = vunpack.c.1.s8 %v169
    %v210 = vunpack.c.1.s8 %v170
    %v211 = vunpack.c.1.s8 %v171
    %v212 = vunpack.c.1.s8 %v172
    %v213 = vunpack.c.1.s8 %v173
    %v214 = vunpack.c.1.s8 %v174
    %v215 = vunpack.c.1.s8 %v175
    %v216 = vunpack.c.1.s8 %v176
    %v217 = vunpack.c.2.s8 %v169
    %v218 = vunpack.c.2.s8 %v170
    %v219 = vunpack.c.2.s8 %v171
    %v220 = vunpack.c.2.s8 %v172
    %v221 = vunpack.c.2.s8 %v173
    %v222 = vunpack.c.2.s8 %v174
    %v223 = vunpack.c.2.s8 %v175
    %v224 = vunpack.c.2.s8 %v176
    %v225 = vunpack.c.3.s8 %v169
    %v226 = vunpack.c.3.s8 %v170
    %v227 = vunpack.c.3.s8 %v171
    %v228 = vunpack.c.3.s8 %v172
    %v229 = vunpack.c.3.s8 %v173
    %v230 = vunpack.c.3.s8 %v174
    %v231 = vunpack.c.3.s8 %v175
    %v232 = vunpack.c.3.s8 %v176
    %v233 = vunpack.c.0.s8 %v177
    %v234 = vunpack.c.0.s8 %v178
    %v235 = vunpack.c.0.s8 %v179
    %v236 = vunpack.c.0.s8 %v180
    %v237 = vunpack.c.0.s8 %v181
    %v238 = vunpack.c.0.s8 %v182
    %v239 = vunpack.c.0.s8 %v183
    %v240 = vunpack.c.0.s8 %v184
    %v241 = vunpack.c.1.s8 %v177
    %v242 = vunpack.c.1.s8 %v178
    %v243 = vunpack.c.1.s8 %v179
    %v244 = vunpack.c.1.s8 %v180
    %v245 = vunpack.c.1.s8 %v181
    %v246 = vunpack.c.1.s8 %v182
    %v247 = vunpack.c.1.s8 %v183
    %v248 = vunpack.c.1.s8 %v184
    %v249 = vunpack.c.2.s8 %v177
    %v250 = vunpack.c.2.s8 %v178
    %v251 = vunpack.c.2.s8 %v179
    %v252 = vunpack.c.2.s8 %v180
    %v253 = vunpack.c.2.s8 %v181
    %v254 = vunpack.c.2.s8 %v182
    %v255 = vunpack.c.2.s8 %v183
    %v256 = vunpack.c.2.s8 %v184
    %v257 = vunpack.c.3.s8 %v177
    %v258 = vunpack.c.3.s8 %v178
    %v259 = vunpack.c.3.s8 %v179
    %v260 = vunpack.c.3.s8 %v180
    %v261 = vunpack.c.3.s8 %v181
    %v262 = vunpack.c.3.s8 %v182
    %v263 = vunpack.c.3.s8 %v183
    %v264 = vunpack.c.3.s8 %v184
    %v265 = vunpack.c.0.s8 %v185
    %v266 = vunpack.c.0.s8 %v186
    %v267 = vunpack.c.0.s8 %v187
    %v268 = vunpack.c.0.s8 %v188
    %v269 = vunpack.c.0.s8 %v189
    %v270 = vunpack.c.0.s8 %v190
    %v271 = vunpack.c.0.s8 %v191
    %v272 = vunpack.c.0.s8 %v192
    %v273 = vunpack.c.1.s8 %v185
    %v274 = vunpack.c.1.s8 %v186
    %v275 = vunpack.c.1.s8 %v187
    %v276 = vunpack.c.1.s8 %v188
    %v277 = vunpack.c.1.s8 %v189
    %v278 = vunpack.c.1.s8 %v190
    %v279 = vunpack.c.1.s8 %v191
    %v280 = vunpack.c.1.s8 %v192
    %v281 = vunpack.c.2.s8 %v185
    %v282 = vunpack.c.2.s8 %v186
    %v283 = vunpack.c.2.s8 %v187
    %v284 = vunpack.c.2.s8 %v188
    %v285 = vunpack.c.2.s8 %v189
    %v286 = vunpack.c.2.s8 %v190
    %v287 = vunpack.c.2.s8 %v191
    %v288 = vunpack.c.2.s8 %v192
    %v289 = vunpack.c.3.s8 %v185
    %v290 = vunpack.c.3.s8 %v186
    %v291 = vunpack.c.3.s8 %v187
    %v292 = vunpack.c.3.s8 %v188
    %v293 = vunpack.c.3.s8 %v189
    %v294 = vunpack.c.3.s8 %v190
    %v295 = vunpack.c.3.s8 %v191
    %v296 = vunpack.c.3.s8 %v192
    %v297 = vunpack.c.0.s8 %v193
    %v298 = vunpack.c.0.s8 %v194
    %v299 = vunpack.c.0.s8 %v195
    %v300 = vunpack.c.0.s8 %v196
    %v301 = vunpack.c.0.s8 %v197
    %v302 = vunpack.c.0.s8 %v198
    %v303 = vunpack.c.0.s8 %v199
    %v304 = vunpack.c.0.s8 %v200
    %v305 = vunpack.c.1.s8 %v193
    %v306 = vunpack.c.1.s8 %v194
    %v307 = vunpack.c.1.s8 %v195
    %v308 = vunpack.c.1.s8 %v196
    %v309 = vunpack.c.1.s8 %v197
    %v310 = vunpack.c.1.s8 %v198
    %v311 = vunpack.c.1.s8 %v199
    %v312 = vunpack.c.1.s8 %v200
    %v313 = vunpack.c.2.s8 %v193
    %v314 = vunpack.c.2.s8 %v194
    %v315 = vunpack.c.2.s8 %v195
    %v316 = vunpack.c.2.s8 %v196
    %v317 = vunpack.c.2.s8 %v197
    %v318 = vunpack.c.2.s8 %v198
    %v319 = vunpack.c.2.s8 %v199
    %v320 = vunpack.c.2.s8 %v200
    %v321 = vunpack.c.3.s8 %v193
    %v322 = vunpack.c.3.s8 %v194
    %v323 = vunpack.c.3.s8 %v195
    %v324 = vunpack.c.3.s8 %v196
    %v325 = vunpack.c.3.s8 %v197
    %v326 = vunpack.c.3.s8 %v198
    %v327 = vunpack.c.3.s8 %v199
    %v328 = vunpack.c.3.s8 %v200
    %v329 = vand.u32 %v201, 255
    %v330 = vand.u32 %v202, 255
    %v331 = vand.u32 %v203, 255
    %v332 = vand.u32 %v204, 255
    %v333 = vand.u32 %v205, 255
    %v334 = vand.u32 %v206, 255
    %v335 = vand.u32 %v207, 255
    %v336 = vand.u32 %v208, 255
    %v337 = vand.u32 %v209, 255
    %v338 = vand.u32 %v210, 255
    %v339 = vand.u32 %v211, 255
    %v340 = vand.u32 %v212, 255
    %v341 = vand.u32 %v213, 255
    %v342 = vand.u32 %v214, 255
    %v343 = vand.u32 %v215, 255
    %v344 = vand.u32 %v216, 255
    %v345 = vand.u32 %v217, 255
    %v346 = vand.u32 %v218, 255
    %v347 = vand.u32 %v219, 255
    %v348 = vand.u32 %v220, 255
    %v349 = vand.u32 %v221, 255
    %v350 = vand.u32 %v222, 255
    %v351 = vand.u32 %v223, 255
    %v352 = vand.u32 %v224, 255
    %v353 = vand.u32 %v225, 255
    %v354 = vand.u32 %v226, 255
    %v355 = vand.u32 %v227, 255
    %v356 = vand.u32 %v228, 255
    %v357 = vand.u32 %v229, 255
    %v358 = vand.u32 %v230, 255
    %v359 = vand.u32 %v231, 255
    %v360 = vand.u32 %v232, 255
    %v361 = vand.u32 %v233, 255
    %v362 = vand.u32 %v234, 255
    %v363 = vand.u32 %v235, 255
    %v364 = vand.u32 %v236, 255
    %v365 = vand.u32 %v237, 255
    %v366 = vand.u32 %v238, 255
    %v367 = vand.u32 %v239, 255
    %v368 = vand.u32 %v240, 255
    %v369 = vand.u32 %v241, 255
    %v370 = vand.u32 %v242, 255
    %v371 = vand.u32 %v243, 255
    %v372 = vand.u32 %v244, 255
    %v373 = vand.u32 %v245, 255
    %v374 = vand.u32 %v246, 255
    %v375 = vand.u32 %v247, 255
    %v376 = vand.u32 %v248, 255
    %v377 = vand.u32 %v249, 255
    %v378 = vand.u32 %v250, 255
    %v379 = vand.u32 %v251, 255
    %v380 = vand.u32 %v252, 255
    %v381 = vand.u32 %v253, 255
    %v382 = vand.u32 %v254, 255
    %v383 = vand.u32 %v255, 255
    %v384 = vand.u32 %v256, 255
    %v385 = vand.u32 %v257, 255
    %v386 = vand.u32 %v258, 255
    %v387 = vand.u32 %v259, 255
    %v388 = vand.u32 %v260, 255
    %v389 = vand.u32 %v261, 255
    %v390 = vand.u32 %v262, 255
    %v391 = vand.u32 %v263, 255
    %v392 = vand.u32 %v264, 255
    %v393 = vand.u32 %v265, 255
    %v394 = vand.u32 %v266, 255
    %v395 = vand.u32 %v267, 255
    %v396 = vand.u32 %v268, 255
    %v397 = vand.u32 %v269, 255
    %v398 = vand.u32 %v270, 255
    %v399 = vand.u32 %v271, 255
    %v400 = vand.u32 %v272, 255
    %v401 = vand.u32 %v273, 255
    %v402 = vand.u32 %v274, 255
    %v403 = vand.u32 %v275, 255
    %v404 = vand.u32 %v276, 255
    %v405 = vand.u32 %v277, 255
    %v406 = vand.u32 %v278, 255
    %v407 = vand.u32 %v279, 255
    %v408 = vand.u32 %v280, 255
    %v409 = vand.u32 %v281, 255
    %v410 = vand.u32 %v282, 255
    %v411 = vand.u32 %v283, 255
    %v412 = vand.u32 %v284, 255
    %v413 = vand.u32 %v285, 255
    %v414 = vand.u32 %v286, 255
    %v415 = vand.u32 %v287, 255
    %v416 = vand.u32 %v288, 255
    %v417 = vand.u32 %v289, 255
    %v418 = vand.u32 %v290, 255
    %v419 = vand.u32 %v291, 255
    %v420 = vand.u32 %v292, 255
    %v421 = vand.u32 %v293, 255
    %v422 = vand.u32 %v294, 255
    %v423 = vand.u32 %v295, 255
    %v424 = vand.u32 %v296, 255
    %v425 = vand.u32 %v297, 255
    %v426 = vand.u32 %v298, 255
    %v427 = vand.u32 %v299, 255
    %v428 = vand.u32 %v300, 255
    %v429 = vand.u32 %v301, 255
    %v430 = vand.u32 %v302, 255
    %v431 = vand.u32 %v303, 255
    %v432 = vand.u32 %v304, 255
    %v433 = vand.u32 %v305, 255
    %v434 = vand.u32 %v306, 255
    %v435 = vand.u32 %v307, 255
    %v436 = vand.u32 %v308, 255
    %v437 = vand.u32 %v309, 255
    %v438 = vand.u32 %v310, 255
    %v439 = vand.u32 %v311, 255
    %v440 = vand.u32 %v312, 255
    %v441 = vand.u32 %v313, 255
    %v442 = vand.u32 %v314, 255
    %v443 = vand.u32 %v315, 255
    %v444 = vand.u32 %v316, 255
    %v445 = vand.u32 %v317, 255
    %v446 = vand.u32 %v318, 255
    %v447 = vand.u32 %v319, 255
    %v448 = vand.u32 %v320, 255
    %v449 = vand.u32 %v321, 255
    %v450 = vand.u32 %v322, 255
    %v451 = vand.u32 %v323, 255
    %v452 = vand.u32 %v324, 255
    %v453 = vand.u32 %v325, 255
    %v454 = vand.u32 %v326, 255
    %v455 = vand.u32 %v327, 255
    %v456 = vand.u32 %v328, 255
    %v457 = vcvt.s32.f32 %v329
    %v458 = vcvt.s32.f32 %v330
    %v459 = vcvt.s32.f32 %v331
    %v460 = vcvt.s32.f32 %v332
    %v461 = vcvt.s32.f32 %v333
    %v462 = vcvt.s32.f32 %v334
    %v463 = vcvt.s32.f32 %v335
    %v464 = vcvt.s32.f32 %v336
    %v465 = vcvt.s32.f32 %v337
    %v466 = vcvt.s32.f32 %v338
    %v467 = vcvt.s32.f32 %v339
    %v468 = vcvt.s32.f32 %v340
    %v469 = vcvt.s32.f32 %v341
    %v470 = vcvt.s32.f32 %v342
    %v471 = vcvt.s32.f32 %v343
    %v472 = vcvt.s32.f32 %v344
    %v473 = vcvt.s32.f32 %v345
    %v474 = vcvt.s32.f32 %v346
    %v475 = vcvt.s32.f32 %v347
    %v476 = vcvt.s32.f32 %v348
    %v477 = vcvt.s32.f32 %v349
    %v478 = vcvt.s32.f32 %v350
    %v479 = vcvt.s32.f32 %v351
    %v480 = vcvt.s32.f32 %v352
    %v481 = vcvt.s32.f32 %v353
    %v482 = vcvt.s32.f32 %v354
    %v483 = vcvt.s32.f32 %v355
    %v484 = vcvt.s32.f32 %v356
    %v485 = vcvt.s32.f32 %v357
    %v486 = vcvt.s32.f32 %v358
    %v487 = vcvt.s32.f32 %v359
    %v488 = vcvt.s32.f32 %v360
    %v489 = vcvt.s32.f32 %v361
    %v490 = vcvt.s32.f32 %v362
    %v491 = vcvt.s32.f32 %v363
    %v492 = vcvt.s32.f32 %v364
    %v493 = vcvt.s32.f32 %v365
    %v494 = vcvt.s32.f32 %v366
    %v495 = vcvt.s32.f32 %v367
    %v496 = vcvt.s32.f32 %v368
    %v497 = vcvt.s32.f32 %v369
    %v498 = vcvt.s32.f32 %v370
    %v499 = vcvt.s32.f32 %v371
    %v500 = vcvt.s32.f32 %v372
    %v501 = vcvt.s32.f32 %v373
    %v502 = vcvt.s32.f32 %v374
    %v503 = vcvt.s32.f32 %v375
    %v504 = vcvt.s32.f32 %v376
    %v505 = vcvt.s32.f32 %v377
    %v506 = vcvt.s32.f32 %v378
    %v507 = vcvt.s32.f32 %v379
    %v508 = vcvt.s32.f32 %v380
    %v509 = vcvt.s32.f32 %v381
    %v510 = vcvt.s32.f32 %v382
    %v511 = vcvt.s32.f32 %v383
    %v512 = vcvt.s32.f32 %v384
    %v513 = vcvt.s32.f32 %v385
    %v514 = vcvt.s32.f32 %v386
    %v515 = vcvt.s32.f32 %v387
    %v516 = vcvt.s32.f32 %v388
    %v517 = vcvt.s32.f32 %v389
    %v518 = vcvt.s32.f32 %v390
    %v519 = vcvt.s32.f32 %v391
    %v520 = vcvt.s32.f32 %v392
    %v521 = vcvt.s32.f32 %v393
    %v522 = vcvt.s32.f32 %v394
    %v523 = vcvt.s32.f32 %v395
    %v524 = vcvt.s32.f32 %v396
    %v525 = vcvt.s32.f32 %v397
    %v526 = vcvt.s32.f32 %v398
    %v527 = vcvt.s32.f32 %v399
    %v528 = vcvt.s32.f32 %v400
    %v529 = vcvt.s32.f32 %v401
    %v530 = vcvt.s32.f32 %v402
    %v531 = vcvt.s32.f32 %v403
    %v532 = vcvt.s32.f32 %v404
    %v533 = vcvt.s32.f32 %v405
    %v534 = vcvt.s32.f32 %v406
    %v535 = vcvt.s32.f32 %v407
    %v536 = vcvt.s32.f32 %v408
    %v537 = vcvt.s32.f32 %v409
    %v538 = vcvt.s32.f32 %v410
    %v539 = vcvt.s32.f32 %v411
    %v540 = vcvt.s32.f32 %v412
    %v541 = vcvt.s32.f32 %v413
    %v542 = vcvt.s32.f32 %v414
    %v543 = vcvt.s32.f32 %v415
    %v544 = vcvt.s32.f32 %v416
    %v545 = vcvt.s32.f32 %v417
    %v546 = vcvt.s32.f32 %v418
    %v547 = vcvt.s32.f32 %v419
    %v548 = vcvt.s32.f32 %v420
    %v549 = vcvt.s32.f32 %v421
    %v550 = vcvt.s32.f32 %v422
    %v551 = vcvt.s32.f32 %v423
    %v552 = vcvt.s32.f32 %v424
    %v553 = vcvt.s32.f32 %v425
    %v554 = vcvt.s32.f32 %v426
    %v555 = vcvt.s32.f32 %v427
    %v556 = vcvt.s32.f32 %v428
    %v557 = vcvt.s32.f32 %v429
    %v558 = vcvt.s32.f32 %v430
    %v559 = vcvt.s32.f32 %v431
    %v560 = vcvt.s32.f32 %v432
    %v561 = vcvt.s32.f32 %v433
    %v562 = vcvt.s32.f32 %v434
    %v563 = vcvt.s32.f32 %v435
    %v564 = vcvt.s32.f32 %v436
    %v565 = vcvt.s32.f32 %v437
    %v566 = vcvt.s32.f32 %v438
    %v567 = vcvt.s32.f32 %v439
    %v568 = vcvt.s32.f32 %v440
    %v569 = vcvt.s32.f32 %v441
    %v570 = vcvt.s32.f32 %v442
    %v571 = vcvt.s32.f32 %v443
    %v572 = vcvt.s32.f32 %v444
    %v573 = vcvt.s32.f32 %v445
    %v574 = vcvt.s32.f32 %v446
    %v575 = vcvt.s32.f32 %v447
    %v576 = vcvt.s32.f32 %v448
    %v577 = vcvt.s32.f32 %v449
    %v578 = vcvt.s32.f32 %v450
    %v579 = vcvt.s32.f32 %v451
    %v580 = vcvt.s32.f32 %v452
    %v581 = vcvt.s32.f32 %v453
    %v582 = vcvt.s32.f32 %v454
    %v583 = vcvt.s32.f32 %v455
    %v584 = vcvt.s32.f32 %v456
    %v585 = vld [vmem:[#allocation5] sm:$0xff]
    %v586 = vld [vmem:[#allocation5 + $0x8] sm:$0xff]
    %v587 = vld [vmem:[#allocation5 + $0x10] sm:$0xff]
    %v588 = vld [vmem:[#allocation5 + $0x18] sm:$0xff]
    %v589 = vld [vmem:[#allocation5 + $0x20] sm:$0xff]
    %v590 = vld [vmem:[#allocation5 + $0x28] sm:$0xff]
    %v591 = vld [vmem:[#allocation5 + $0x30] sm:$0xff]
    %v592 = vld [vmem:[#allocation5 + $0x38] sm:$0xff]
    %v593 = vld [vmem:[#allocation5 + $0x40] sm:$0xff]
    %v594 = vld [vmem:[#allocation5 + $0x48] sm:$0xff]
    %v595 = vld [vmem:[#allocation5 + $0x50] sm:$0xff]
    %v596 = vld [vmem:[#allocation5 + $0x58] sm:$0xff]
    %v597 = vld [vmem:[#allocation5 + $0x60] sm:$0xff]
    %v598 = vld [vmem:[#allocation5 + $0x68] sm:$0xff]
    %v599 = vld [vmem:[#allocation5 + $0x70] sm:$0xff]
    %v600 = vld [vmem:[#allocation5 + $0x78] sm:$0xff]
    %v601 = vld [vmem:[#allocation5 + $0x80] sm:$0xff]
    %v602 = vld [vmem:[#allocation5 + $0x88] sm:$0xff]
    %v603 = vld [vmem:[#allocation5 + $0x90] sm:$0xff]
    %v604 = vld [vmem:[#allocation5 + $0x98] sm:$0xff]
    %v605 = vld [vmem:[#allocation5 + $0xa0] sm:$0xff]
    %v606 = vld [vmem:[#allocation5 + $0xa8] sm:$0xff]
    %v607 = vld [vmem:[#allocation5 + $0xb0] sm:$0xff]
    %v608 = vld [vmem:[#allocation5 + $0xb8] sm:$0xff]
    %v609 = vld [vmem:[#allocation5 + $0xc0] sm:$0xff]
    %v610 = vld [vmem:[#allocation5 + $0xc8] sm:$0xff]
    %v611 = vld [vmem:[#allocation5 + $0xd0] sm:$0xff]
    %v612 = vld [vmem:[#allocation5 + $0xd8] sm:$0xff]
    %v613 = vld [vmem:[#allocation5 + $0xe0] sm:$0xff]
    %v614 = vld [vmem:[#allocation5 + $0xe8] sm:$0xff]
    %v615 = vld [vmem:[#allocation5 + $0xf0] sm:$0xff]
    %v616 = vld [vmem:[#allocation5 + $0xf8] sm:$0xff]
    %v617 = vunpack.c.0.s8 %v585
    %v618 = vunpack.c.0.s8 %v586
    %v619 = vunpack.c.0.s8 %v587
    %v620 = vunpack.c.0.s8 %v588
    %v621 = vunpack.c.0.s8 %v589
    %v622 = vunpack.c.0.s8 %v590
    %v623 = vunpack.c.0.s8 %v591
    %v624 = vunpack.c.0.s8 %v592
    %v625 = vunpack.c.1.s8 %v585
    %v626 = vunpack.c.1.s8 %v586
    %v627 = vunpack.c.1.s8 %v587
    %v628 = vunpack.c.1.s8 %v588
    %v629 = vunpack.c.1.s8 %v589
    %v630 = vunpack.c.1.s8 %v590
    %v631 = vunpack.c.1.s8 %v591
    %v632 = vunpack.c.1.s8 %v592
    %v633 = vunpack.c.2.s8 %v585
    %v634 = vunpack.c.2.s8 %v586
    %v635 = vunpack.c.2.s8 %v587
    %v636 = vunpack.c.2.s8 %v588
    %v637 = vunpack.c.2.s8 %v589
    %v638 = vunpack.c.2.s8 %v590
    %v639 = vunpack.c.2.s8 %v591
    %v640 = vunpack.c.2.s8 %v592
    %v641 = vunpack.c.3.s8 %v585
    %v642 = vunpack.c.3.s8 %v586
    %v643 = vunpack.c.3.s8 %v587
    %v644 = vunpack.c.3.s8 %v588
    %v645 = vunpack.c.3.s8 %v589
    %v646 = vunpack.c.3.s8 %v590
    %v647 = vunpack.c.3.s8 %v591
    %v648 = vunpack.c.3.s8 %v592
    %v649 = vunpack.c.0.s8 %v593
    %v650 = vunpack.c.0.s8 %v594
    %v651 = vunpack.c.0.s8 %v595
    %v652 = vunpack.c.0.s8 %v596
    %v653 = vunpack.c.0.s8 %v597
    %v654 = vunpack.c.0.s8 %v598
    %v655 = vunpack.c.0.s8 %v599
    %v656 = vunpack.c.0.s8 %v600
    %v657 = vunpack.c.1.s8 %v593
    %v658 = vunpack.c.1.s8 %v594
    %v659 = vunpack.c.1.s8 %v595
    %v660 = vunpack.c.1.s8 %v596
    %v661 = vunpack.c.1.s8 %v597
    %v662 = vunpack.c.1.s8 %v598
    %v663 = vunpack.c.1.s8 %v599
    %v664 = vunpack.c.1.s8 %v600
    %v665 = vunpack.c.2.s8 %v593
    %v666 = vunpack.c.2.s8 %v594
    %v667 = vunpack.c.2.s8 %v595
    %v668 = vunpack.c.2.s8 %v596
    %v669 = vunpack.c.2.s8 %v597
    %v670 = vunpack.c.2.s8 %v598
    %v671 = vunpack.c.2.s8 %v599
    %v672 = vunpack.c.2.s8 %v600
    %v673 = vunpack.c.3.s8 %v593
    %v674 = vunpack.c.3.s8 %v594
    %v675 = vunpack.c.3.s8 %v595
    %v676 = vunpack.c.3.s8 %v596
    %v677 = vunpack.c.3.s8 %v597
    %v678 = vunpack.c.3.s8 %v598
    %v679 = vunpack.c.3.s8 %v599
    %v680 = vunpack.c.3.s8 %v600
    %v681 = vunpack.c.0.s8 %v601
    %v682 = vunpack.c.0.s8 %v602
    %v683 = vunpack.c.0.s8 %v603
    %v684 = vunpack.c.0.s8 %v604
    %v685 = vunpack.c.0.s8 %v605
    %v686 = vunpack.c.0.s8 %v606
    %v687 = vunpack.c.0.s8 %v607
    %v688 = vunpack.c.0.s8 %v608
    %v689 = vunpack.c.1.s8 %v601
    %v690 = vunpack.c.1.s8 %v602
    %v691 = vunpack.c.1.s8 %v603
    %v692 = vunpack.c.1.s8 %v604
    %v693 = vunpack.c.1.s8 %v605
    %v694 = vunpack.c.1.s8 %v606
    %v695 = vunpack.c.1.s8 %v607
    %v696 = vunpack.c.1.s8 %v608
    %v697 = vunpack.c.2.s8 %v601
    %v698 = vunpack.c.2.s8 %v602
    %v699 = vunpack.c.2.s8 %v603
    %v700 = vunpack.c.2.s8 %v604
    %v701 = vunpack.c.2.s8 %v605
    %v702 = vunpack.c.2.s8 %v606
    %v703 = vunpack.c.2.s8 %v607
    %v704 = vunpack.c.2.s8 %v608
    %v705 = vunpack.c.3.s8 %v601
    %v706 = vunpack.c.3.s8 %v602
    %v707 = vunpack.c.3.s8 %v603
    %v708 = vunpack.c.3.s8 %v604
    %v709 = vunpack.c.3.s8 %v605
    %v710 = vunpack.c.3.s8 %v606
    %v711 = vunpack.c.3.s8 %v607
    %v712 = vunpack.c.3.s8 %v608
    %v713 = vunpack.c.0.s8 %v609
    %v714 = vunpack.c.0.s8 %v610
    %v715 = vunpack.c.0.s8 %v611
    %v716 = vunpack.c.0.s8 %v612
    %v717 = vunpack.c.0.s8 %v613
    %v718 = vunpack.c.0.s8 %v614
    %v719 = vunpack.c.0.s8 %v615
    %v720 = vunpack.c.0.s8 %v616
    %v721 = vunpack.c.1.s8 %v609
    %v722 = vunpack.c.1.s8 %v610
    %v723 = vunpack.c.1.s8 %v611
    %v724 = vunpack.c.1.s8 %v612
    %v725 = vunpack.c.1.s8 %v613
    %v726 = vunpack.c.1.s8 %v614
    %v727 = vunpack.c.1.s8 %v615
    %v728 = vunpack.c.1.s8 %v616
    %v729 = vunpack.c.2.s8 %v609
    %v730 = vunpack.c.2.s8 %v610
    %v731 = vunpack.c.2.s8 %v611
    %v732 = vunpack.c.2.s8 %v612
    %v733 = vunpack.c.2.s8 %v613
    %v734 = vunpack.c.2.s8 %v614
    %v735 = vunpack.c.2.s8 %v615
    %v736 = vunpack.c.2.s8 %v616
    %v737 = vunpack.c.3.s8 %v609
    %v738 = vunpack.c.3.s8 %v610
    %v739 = vunpack.c.3.s8 %v611
    %v740 = vunpack.c.3.s8 %v612
    %v741 = vunpack.c.3.s8 %v613
    %v742 = vunpack.c.3.s8 %v614
    %v743 = vunpack.c.3.s8 %v615
    %v744 = vunpack.c.3.s8 %v616
    %v745 = vand.u32 %v617, 255
    %v746 = vand.u32 %v618, 255
    %v747 = vand.u32 %v619, 255
    %v748 = vand.u32 %v620, 255
    %v749 = vand.u32 %v621, 255
    %v750 = vand.u32 %v622, 255
    %v751 = vand.u32 %v623, 255
    %v752 = vand.u32 %v624, 255
    %v753 = vand.u32 %v625, 255
    %v754 = vand.u32 %v626, 255
    %v755 = vand.u32 %v627, 255
    %v756 = vand.u32 %v628, 255
    %v757 = vand.u32 %v629, 255
    %v758 = vand.u32 %v630, 255
    %v759 = vand.u32 %v631, 255
    %v760 = vand.u32 %v632, 255
    %v761 = vand.u32 %v633, 255
    %v762 = vand.u32 %v634, 255
    %v763 = vand.u32 %v635, 255
    %v764 = vand.u32 %v636, 255
    %v765 = vand.u32 %v637, 255
    %v766 = vand.u32 %v638, 255
    %v767 = vand.u32 %v639, 255
    %v768 = vand.u32 %v640, 255
    %v769 = vand.u32 %v641, 255
    %v770 = vand.u32 %v642, 255
    %v771 = vand.u32 %v643, 255
    %v772 = vand.u32 %v644, 255
    %v773 = vand.u32 %v645, 255
    %v774 = vand.u32 %v646, 255
    %v775 = vand.u32 %v647, 255
    %v776 = vand.u32 %v648, 255
    %v777 = vand.u32 %v649, 255
    %v778 = vand.u32 %v650, 255
    %v779 = vand.u32 %v651, 255
    %v780 = vand.u32 %v652, 255
    %v781 = vand.u32 %v653, 255
    %v782 = vand.u32 %v654, 255
    %v783 = vand.u32 %v655, 255
    %v784 = vand.u32 %v656, 255
    %v785 = vand.u32 %v657, 255
    %v786 = vand.u32 %v658, 255
    %v787 = vand.u32 %v659, 255
    %v788 = vand.u32 %v660, 255
    %v789 = vand.u32 %v661, 255
    %v790 = vand.u32 %v662, 255
    %v791 = vand.u32 %v663, 255
    %v792 = vand.u32 %v664, 255
    %v793 = vand.u32 %v665, 255
    %v794 = vand.u32 %v666, 255
    %v795 = vand.u32 %v667, 255
    %v796 = vand.u32 %v668, 255
    %v797 = vand.u32 %v669, 255
    %v798 = vand.u32 %v670, 255
    %v799 = vand.u32 %v671, 255
    %v800 = vand.u32 %v672, 255
    %v801 = vand.u32 %v673, 255
    %v802 = vand.u32 %v674, 255
    %v803 = vand.u32 %v675, 255
    %v804 = vand.u32 %v676, 255
    %v805 = vand.u32 %v677, 255
    %v806 = vand.u32 %v678, 255
    %v807 = vand.u32 %v679, 255
    %v808 = vand.u32 %v680, 255
    %v809 = vand.u32 %v681, 255
    %v810 = vand.u32 %v682, 255
    %v811 = vand.u32 %v683, 255
    %v812 = vand.u32 %v684, 255
    %v813 = vand.u32 %v685, 255
    %v814 = vand.u32 %v686, 255
    %v815 = vand.u32 %v687, 255
    %v816 = vand.u32 %v688, 255
    %v817 = vand.u32 %v689, 255
    %v818 = vand.u32 %v690, 255
    %v819 = vand.u32 %v691, 255
    %v820 = vand.u32 %v692, 255
    %v821 = vand.u32 %v693, 255
    %v822 = vand.u32 %v694, 255
    %v823 = vand.u32 %v695, 255
    %v824 = vand.u32 %v696, 255
    %v825 = vand.u32 %v697, 255
    %v826 = vand.u32 %v698, 255
    %v827 = vand.u32 %v699, 255
    %v828 = vand.u32 %v700, 255
    %v829 = vand.u32 %v701, 255
    %v830 = vand.u32 %v702, 255
    %v831 = vand.u32 %v703, 255
    %v832 = vand.u32 %v704, 255
    %v833 = vand.u32 %v705, 255
    %v834 = vand.u32 %v706, 255
    %v835 = vand.u32 %v707, 255
    %v836 = vand.u32 %v708, 255
    %v837 = vand.u32 %v709, 255
    %v838 = vand.u32 %v710, 255
    %v839 = vand.u32 %v711, 255
    %v840 = vand.u32 %v712, 255
    %v841 = vand.u32 %v713, 255
    %v842 = vand.u32 %v714, 255
    %v843 = vand.u32 %v715, 255
    %v844 = vand.u32 %v716, 255
    %v845 = vand.u32 %v717, 255
    %v846 = vand.u32 %v718, 255
    %v847 = vand.u32 %v719, 255
    %v848 = vand.u32 %v720, 255
    %v849 = vand.u32 %v721, 255
    %v850 = vand.u32 %v722, 255
    %v851 = vand.u32 %v723, 255
    %v852 = vand.u32 %v724, 255
    %v853 = vand.u32 %v725, 255
    %v854 = vand.u32 %v726, 255
    %v855 = vand.u32 %v727, 255
    %v856 = vand.u32 %v728, 255
    %v857 = vand.u32 %v729, 255
    %v858 = vand.u32 %v730, 255
    %v859 = vand.u32 %v731, 255
    %v860 = vand.u32 %v732, 255
    %v861 = vand.u32 %v733, 255
    %v862 = vand.u32 %v734, 255
    %v863 = vand.u32 %v735, 255
    %v864 = vand.u32 %v736, 255
    %v865 = vand.u32 %v737, 255
    %v866 = vand.u32 %v738, 255
    %v867 = vand.u32 %v739, 255
    %v868 = vand.u32 %v740, 255
    %v869 = vand.u32 %v741, 255
    %v870 = vand.u32 %v742, 255
    %v871 = vand.u32 %v743, 255
    %v872 = vand.u32 %v744, 255
    %v873 = vcvt.s32.f32 %v745
    %v874 = vcvt.s32.f32 %v746
    %v875 = vcvt.s32.f32 %v747
    %v876 = vcvt.s32.f32 %v748
    %v877 = vcvt.s32.f32 %v749
    %v878 = vcvt.s32.f32 %v750
    %v879 = vcvt.s32.f32 %v751
    %v880 = vcvt.s32.f32 %v752
    %v881 = vcvt.s32.f32 %v753
    %v882 = vcvt.s32.f32 %v754
    %v883 = vcvt.s32.f32 %v755
    %v884 = vcvt.s32.f32 %v756
    %v885 = vcvt.s32.f32 %v757
    %v886 = vcvt.s32.f32 %v758
    %v887 = vcvt.s32.f32 %v759
    %v888 = vcvt.s32.f32 %v760
    %v889 = vcvt.s32.f32 %v761
    %v890 = vcvt.s32.f32 %v762
    %v891 = vcvt.s32.f32 %v763
    %v892 = vcvt.s32.f32 %v764
    %v893 = vcvt.s32.f32 %v765
    %v894 = vcvt.s32.f32 %v766
    %v895 = vcvt.s32.f32 %v767
    %v896 = vcvt.s32.f32 %v768
    %v897 = vcvt.s32.f32 %v769
    %v898 = vcvt.s32.f32 %v770
    %v899 = vcvt.s32.f32 %v771
    %v900 = vcvt.s32.f32 %v772
    %v901 = vcvt.s32.f32 %v773
    %v902 = vcvt.s32.f32 %v774
    %v903 = vcvt.s32.f32 %v775
    %v904 = vcvt.s32.f32 %v776
    %v905 = vcvt.s32.f32 %v777
    %v906 = vcvt.s32.f32 %v778
    %v907 = vcvt.s32.f32 %v779
    %v908 = vcvt.s32.f32 %v780
    %v909 = vcvt.s32.f32 %v781
    %v910 = vcvt.s32.f32 %v782
    %v911 = vcvt.s32.f32 %v783
    %v912 = vcvt.s32.f32 %v784
    %v913 = vcvt.s32.f32 %v785
    %v914 = vcvt.s32.f32 %v786
    %v915 = vcvt.s32.f32 %v787
    %v916 = vcvt.s32.f32 %v788
    %v917 = vcvt.s32.f32 %v789
    %v918 = vcvt.s32.f32 %v790
    %v919 = vcvt.s32.f32 %v791
    %v920 = vcvt.s32.f32 %v792
    %v921 = vcvt.s32.f32 %v793
    %v922 = vcvt.s32.f32 %v794
    %v923 = vcvt.s32.f32 %v795
    %v924 = vcvt.s32.f32 %v796
    %v925 = vcvt.s32.f32 %v797
    %v926 = vcvt.s32.f32 %v798
    %v927 = vcvt.s32.f32 %v799
    %v928 = vcvt.s32.f32 %v800
    %v929 = vcvt.s32.f32 %v801
    %v930 = vcvt.s32.f32 %v802
    %v931 = vcvt.s32.f32 %v803
    %v932 = vcvt.s32.f32 %v804
    %v933 = vcvt.s32.f32 %v805
    %v934 = vcvt.s32.f32 %v806
    %v935 = vcvt.s32.f32 %v807
    %v936 = vcvt.s32.f32 %v808
    %v937 = vcvt.s32.f32 %v809
    %v938 = vcvt.s32.f32 %v810
    %v939 = vcvt.s32.f32 %v811
    %v940 = vcvt.s32.f32 %v812
    %v941 = vcvt.s32.f32 %v813
    %v942 = vcvt.s32.f32 %v814
    %v943 = vcvt.s32.f32 %v815
    %v944 = vcvt.s32.f32 %v816
    %v945 = vcvt.s32.f32 %v817
    %v946 = vcvt.s32.f32 %v818
    %v947 = vcvt.s32.f32 %v819
    %v948 = vcvt.s32.f32 %v820
    %v949 = vcvt.s32.f32 %v821
    %v950 = vcvt.s32.f32 %v822
    %v951 = vcvt.s32.f32 %v823
    %v952 = vcvt.s32.f32 %v824
    %v953 = vcvt.s32.f32 %v825
    %v954 = vcvt.s32.f32 %v826
    %v955 = vcvt.s32.f32 %v827
    %v956 = vcvt.s32.f32 %v828
    %v957 = vcvt.s32.f32 %v829
    %v958 = vcvt.s32.f32 %v830
    %v959 = vcvt.s32.f32 %v831
    %v960 = vcvt.s32.f32 %v832
    %v961 = vcvt.s32.f32 %v833
    %v962 = vcvt.s32.f32 %v834
    %v963 = vcvt.s32.f32 %v835
    %v964 = vcvt.s32.f32 %v836
    %v965 = vcvt.s32.f32 %v837
    %v966 = vcvt.s32.f32 %v838
    %v967 = vcvt.s32.f32 %v839
    %v968 = vcvt.s32.f32 %v840
    %v969 = vcvt.s32.f32 %v841
    %v970 = vcvt.s32.f32 %v842
    %v971 = vcvt.s32.f32 %v843
    %v972 = vcvt.s32.f32 %v844
    %v973 = vcvt.s32.f32 %v845
    %v974 = vcvt.s32.f32 %v846
    %v975 = vcvt.s32.f32 %v847
    %v976 = vcvt.s32.f32 %v848
    %v977 = vcvt.s32.f32 %v849
    %v978 = vcvt.s32.f32 %v850
    %v979 = vcvt.s32.f32 %v851
    %v980 = vcvt.s32.f32 %v852
    %v981 = vcvt.s32.f32 %v853
    %v982 = vcvt.s32.f32 %v854
    %v983 = vcvt.s32.f32 %v855
    %v984 = vcvt.s32.f32 %v856
    %v985 = vcvt.s32.f32 %v857
    %v986 = vcvt.s32.f32 %v858
    %v987 = vcvt.s32.f32 %v859
    %v988 = vcvt.s32.f32 %v860
    %v989 = vcvt.s32.f32 %v861
    %v990 = vcvt.s32.f32 %v862
    %v991 = vcvt.s32.f32 %v863
    %v992 = vcvt.s32.f32 %v864
    %v993 = vcvt.s32.f32 %v865
    %v994 = vcvt.s32.f32 %v866
    %v995 = vcvt.s32.f32 %v867
    %v996 = vcvt.s32.f32 %v868
    %v997 = vcvt.s32.f32 %v869
    %v998 = vcvt.s32.f32 %v870
    %v999 = vcvt.s32.f32 %v871
    %v1000 = vcvt.s32.f32 %v872
    %v1001 = vld [vmem:[#allocation7] sm:$0xff]
    %v1002 = vld [vmem:[#allocation7 + $0x8] sm:$0xff]
    %v1003 = vld [vmem:[#allocation7 + $0x10] sm:$0xff]
    %v1004 = vld [vmem:[#allocation7 + $0x18] sm:$0xff]
    %v1005 = vld [vmem:[#allocation7 + $0x20] sm:$0xff]
    %v1006 = vld [vmem:[#allocation7 + $0x28] sm:$0xff]
    %v1007 = vld [vmem:[#allocation7 + $0x30] sm:$0xff]
    %v1008 = vld [vmem:[#allocation7 + $0x38] sm:$0xff]
    %v1009 = vld [vmem:[#allocation7 + $0x40] sm:$0xff]
    %v1010 = vld [vmem:[#allocation7 + $0x48] sm:$0xff]
    %v1011 = vld [vmem:[#allocation7 + $0x50] sm:$0xff]
    %v1012 = vld [vmem:[#allocation7 + $0x58] sm:$0xff]
    %v1013 = vld [vmem:[#allocation7 + $0x60] sm:$0xff]
    %v1014 = vld [vmem:[#allocation7 + $0x68] sm:$0xff]
    %v1015 = vld [vmem:[#allocation7 + $0x70] sm:$0xff]
    %v1016 = vld [vmem:[#allocation7 + $0x78] sm:$0xff]
    %v1017 = vld [vmem:[#allocation8] sm:$0xff]
    %v1018 = vld [vmem:[#allocation8 + $0x8] sm:$0xff]
    %v1019 = vld [vmem:[#allocation8 + $0x10] sm:$0xff]
    %v1020 = vld [vmem:[#allocation8 + $0x18] sm:$0xff]
    %v1021 = vld [vmem:[#allocation8 + $0x20] sm:$0xff]
    %v1022 = vld [vmem:[#allocation8 + $0x28] sm:$0xff]
    %v1023 = vld [vmem:[#allocation8 + $0x30] sm:$0xff]
    %v1024 = vld [vmem:[#allocation8 + $0x38] sm:$0xff]
    %v1025 = vld [vmem:[#allocation8 + $0x40] sm:$0xff]
    %v1026 = vld [vmem:[#allocation8 + $0x48] sm:$0xff]
    %v1027 = vld [vmem:[#allocation8 + $0x50] sm:$0xff]
    %v1028 = vld [vmem:[#allocation8 + $0x58] sm:$0xff]
    %v1029 = vld [vmem:[#allocation8 + $0x60] sm:$0xff]
    %v1030 = vld [vmem:[#allocation8 + $0x68] sm:$0xff]
    %v1031 = vld [vmem:[#allocation8 + $0x70] sm:$0xff]
    %v1032 = vld [vmem:[#allocation8 + $0x78] sm:$0xff]
    %v1033 = vld [vmem:[#allocation8 + $0x80] sm:$0xff]
    %v1034 = vld [vmem:[#allocation8 + $0x88] sm:$0xff]
    %v1035 = vld [vmem:[#allocation8 + $0x90] sm:$0xff]
    %v1036 = vld [vmem:[#allocation8 + $0x98] sm:$0xff]
    %v1037 = vld [vmem:[#allocation8 + $0xa0] sm:$0xff]
    %v1038 = vld [vmem:[#allocation8 + $0xa8] sm:$0xff]
    %v1039 = vld [vmem:[#allocation8 + $0xb0] sm:$0xff]
    %v1040 = vld [vmem:[#allocation8 + $0xb8] sm:$0xff]
    %v1041 = vld [vmem:[#allocation8 + $0xc0] sm:$0xff]
    %v1042 = vld [vmem:[#allocation8 + $0xc8] sm:$0xff]
    %v1043 = vld [vmem:[#allocation8 + $0xd0] sm:$0xff]
    %v1044 = vld [vmem:[#allocation8 + $0xd8] sm:$0xff]
    %v1045 = vld [vmem:[#allocation8 + $0xe0] sm:$0xff]
    %v1046 = vld [vmem:[#allocation8 + $0xe8] sm:$0xff]
    %v1047 = vld [vmem:[#allocation8 + $0xf0] sm:$0xff]
    %v1048 = vld [vmem:[#allocation8 + $0xf8] sm:$0xff]
    %v1049 = vld [vmem:[#allocation8 + $0x100] sm:$0xff]
    %v1050 = vld [vmem:[#allocation8 + $0x108] sm:$0xff]
    %v1051 = vld [vmem:[#allocation8 + $0x110] sm:$0xff]
    %v1052 = vld [vmem:[#allocation8 + $0x118] sm:$0xff]
    %v1053 = vld [vmem:[#allocation8 + $0x120] sm:$0xff]
    %v1054 = vld [vmem:[#allocation8 + $0x128] sm:$0xff]
    %v1055 = vld [vmem:[#allocation8 + $0x130] sm:$0xff]
    %v1056 = vld [vmem:[#allocation8 + $0x138] sm:$0xff]
    %v1057 = vld [vmem:[#allocation8 + $0x140] sm:$0xff]
    %v1058 = vld [vmem:[#allocation8 + $0x148] sm:$0xff]
    %v1059 = vld [vmem:[#allocation8 + $0x150] sm:$0xff]
    %v1060 = vld [vmem:[#allocation8 + $0x158] sm:$0xff]
    %v1061 = vld [vmem:[#allocation8 + $0x160] sm:$0xff]
    %v1062 = vld [vmem:[#allocation8 + $0x168] sm:$0xff]
    %v1063 = vld [vmem:[#allocation8 + $0x170] sm:$0xff]
    %v1064 = vld [vmem:[#allocation8 + $0x178] sm:$0xff]
    %v1065 = vld [vmem:[#allocation8 + $0x180] sm:$0xff]
    %v1066 = vld [vmem:[#allocation8 + $0x188] sm:$0xff]
    %v1067 = vld [vmem:[#allocation8 + $0x190] sm:$0xff]
    %v1068 = vld [vmem:[#allocation8 + $0x198] sm:$0xff]
    %v1069 = vld [vmem:[#allocation8 + $0x1a0] sm:$0xff]
    %v1070 = vld [vmem:[#allocation8 + $0x1a8] sm:$0xff]
    %v1071 = vld [vmem:[#allocation8 + $0x1b0] sm:$0xff]
    %v1072 = vld [vmem:[#allocation8 + $0x1b8] sm:$0xff]
    %v1073 = vld [vmem:[#allocation8 + $0x1c0] sm:$0xff]
    %v1074 = vld [vmem:[#allocation8 + $0x1c8] sm:$0xff]
    %v1075 = vld [vmem:[#allocation8 + $0x1d0] sm:$0xff]
    %v1076 = vld [vmem:[#allocation8 + $0x1d8] sm:$0xff]
    %v1077 = vld [vmem:[#allocation8 + $0x1e0] sm:$0xff]
    %v1078 = vld [vmem:[#allocation8 + $0x1e8] sm:$0xff]
    %v1079 = vld [vmem:[#allocation8 + $0x1f0] sm:$0xff]
    %v1080 = vld [vmem:[#allocation8 + $0x1f8] sm:$0xff]
    %v1081 = vld [vmem:[#allocation8 + $0x200] sm:$0xff]
    %v1082 = vld [vmem:[#allocation8 + $0x208] sm:$0xff]
    %v1083 = vld [vmem:[#allocation8 + $0x210] sm:$0xff]
    %v1084 = vld [vmem:[#allocation8 + $0x218] sm:$0xff]
    %v1085 = vld [vmem:[#allocation8 + $0x220] sm:$0xff]
    %v1086 = vld [vmem:[#allocation8 + $0x228] sm:$0xff]
    %v1087 = vld [vmem:[#allocation8 + $0x230] sm:$0xff]
    %v1088 = vld [vmem:[#allocation8 + $0x238] sm:$0xff]
    %v1089 = vld [vmem:[#allocation8 + $0x240] sm:$0xff]
    %v1090 = vld [vmem:[#allocation8 + $0x248] sm:$0xff]
    %v1091 = vld [vmem:[#allocation8 + $0x250] sm:$0xff]
    %v1092 = vld [vmem:[#allocation8 + $0x258] sm:$0xff]
    %v1093 = vld [vmem:[#allocation8 + $0x260] sm:$0xff]
    %v1094 = vld [vmem:[#allocation8 + $0x268] sm:$0xff]
    %v1095 = vld [vmem:[#allocation8 + $0x270] sm:$0xff]
    %v1096 = vld [vmem:[#allocation8 + $0x278] sm:$0xff]
    %v1097 = vld [vmem:[#allocation8 + $0x280] sm:$0xff]
    %v1098 = vld [vmem:[#allocation8 + $0x288] sm:$0xff]
    %v1099 = vld [vmem:[#allocation8 + $0x290] sm:$0xff]
    %v1100 = vld [vmem:[#allocation8 + $0x298] sm:$0xff]
    %v1101 = vld [vmem:[#allocation8 + $0x2a0] sm:$0xff]
    %v1102 = vld [vmem:[#allocation8 + $0x2a8] sm:$0xff]
    %v1103 = vld [vmem:[#allocation8 + $0x2b0] sm:$0xff]
    %v1104 = vld [vmem:[#allocation8 + $0x2b8] sm:$0xff]
    %v1105 = vld [vmem:[#allocation8 + $0x2c0] sm:$0xff]
    %v1106 = vld [vmem:[#allocation8 + $0x2c8] sm:$0xff]
    %v1107 = vld [vmem:[#allocation8 + $0x2d0] sm:$0xff]
    %v1108 = vld [vmem:[#allocation8 + $0x2d8] sm:$0xff]
    %v1109 = vld [vmem:[#allocation8 + $0x2e0] sm:$0xff]
    %v1110 = vld [vmem:[#allocation8 + $0x2e8] sm:$0xff]
    %v1111 = vld [vmem:[#allocation8 + $0x2f0] sm:$0xff]
    %v1112 = vld [vmem:[#allocation8 + $0x2f8] sm:$0xff]
    %v1113 = vld [vmem:[#allocation8 + $0x300] sm:$0xff]
    %v1114 = vld [vmem:[#allocation8 + $0x308] sm:$0xff]
    %v1115 = vld [vmem:[#allocation8 + $0x310] sm:$0xff]
    %v1116 = vld [vmem:[#allocation8 + $0x318] sm:$0xff]
    %v1117 = vld [vmem:[#allocation8 + $0x320] sm:$0xff]
    %v1118 = vld [vmem:[#allocation8 + $0x328] sm:$0xff]
    %v1119 = vld [vmem:[#allocation8 + $0x330] sm:$0xff]
    %v1120 = vld [vmem:[#allocation8 + $0x338] sm:$0xff]
    %v1121 = vld [vmem:[#allocation8 + $0x340] sm:$0xff]
    %v1122 = vld [vmem:[#allocation8 + $0x348] sm:$0xff]
    %v1123 = vld [vmem:[#allocation8 + $0x350] sm:$0xff]
    %v1124 = vld [vmem:[#allocation8 + $0x358] sm:$0xff]
    %v1125 = vld [vmem:[#allocation8 + $0x360] sm:$0xff]
    %v1126 = vld [vmem:[#allocation8 + $0x368] sm:$0xff]
    %v1127 = vld [vmem:[#allocation8 + $0x370] sm:$0xff]
    %v1128 = vld [vmem:[#allocation8 + $0x378] sm:$0xff]
    %v1129 = vld [vmem:[#allocation8 + $0x380] sm:$0xff]
    %v1130 = vld [vmem:[#allocation8 + $0x388] sm:$0xff]
    %v1131 = vld [vmem:[#allocation8 + $0x390] sm:$0xff]
    %v1132 = vld [vmem:[#allocation8 + $0x398] sm:$0xff]
    %v1133 = vld [vmem:[#allocation8 + $0x3a0] sm:$0xff]
    %v1134 = vld [vmem:[#allocation8 + $0x3a8] sm:$0xff]
    %v1135 = vld [vmem:[#allocation8 + $0x3b0] sm:$0xff]
    %v1136 = vld [vmem:[#allocation8 + $0x3b8] sm:$0xff]
    %v1137 = vld [vmem:[#allocation8 + $0x3c0] sm:$0xff]
    %v1138 = vld [vmem:[#allocation8 + $0x3c8] sm:$0xff]
    %v1139 = vld [vmem:[#allocation8 + $0x3d0] sm:$0xff]
    %v1140 = vld [vmem:[#allocation8 + $0x3d8] sm:$0xff]
    %v1141 = vld [vmem:[#allocation8 + $0x3e0] sm:$0xff]
    %v1142 = vld [vmem:[#allocation8 + $0x3e8] sm:$0xff]
    %v1143 = vld [vmem:[#allocation8 + $0x3f0] sm:$0xff]
    %v1144 = vld [vmem:[#allocation8 + $0x3f8] sm:$0xff]
    %v1145 = vld [vmem:[#allocation10] sm:$0xff]
    %v1146 = vld [vmem:[#allocation10 + $0x8] sm:$0xff]
    %v1147 = vld [vmem:[#allocation10 + $0x10] sm:$0xff]
    %v1148 = vld [vmem:[#allocation10 + $0x18] sm:$0xff]
    %v1149 = vld [vmem:[#allocation10 + $0x20] sm:$0xff]
    %v1150 = vld [vmem:[#allocation10 + $0x28] sm:$0xff]
    %v1151 = vld [vmem:[#allocation10 + $0x30] sm:$0xff]
    %v1152 = vld [vmem:[#allocation10 + $0x38] sm:$0xff]
    %v1153 = vld [vmem:[#allocation10 + $0x40] sm:$0xff]
    %v1154 = vld [vmem:[#allocation10 + $0x48] sm:$0xff]
    %v1155 = vld [vmem:[#allocation10 + $0x50] sm:$0xff]
    %v1156 = vld [vmem:[#allocation10 + $0x58] sm:$0xff]
    %v1157 = vld [vmem:[#allocation10 + $0x60] sm:$0xff]
    %v1158 = vld [vmem:[#allocation10 + $0x68] sm:$0xff]
    %v1159 = vld [vmem:[#allocation10 + $0x70] sm:$0xff]
    %v1160 = vld [vmem:[#allocation10 + $0x78] sm:$0xff]
    %v1161 = vld [vmem:[#allocation10 + $0x80] sm:$0xff]
    %v1162 = vld [vmem:[#allocation10 + $0x88] sm:$0xff]
    %v1163 = vld [vmem:[#allocation10 + $0x90] sm:$0xff]
    %v1164 = vld [vmem:[#allocation10 + $0x98] sm:$0xff]
    %v1165 = vld [vmem:[#allocation10 + $0xa0] sm:$0xff]
    %v1166 = vld [vmem:[#allocation10 + $0xa8] sm:$0xff]
    %v1167 = vld [vmem:[#allocation10 + $0xb0] sm:$0xff]
    %v1168 = vld [vmem:[#allocation10 + $0xb8] sm:$0xff]
    %v1169 = vld [vmem:[#allocation10 + $0xc0] sm:$0xff]
    %v1170 = vld [vmem:[#allocation10 + $0xc8] sm:$0xff]
    %v1171 = vld [vmem:[#allocation10 + $0xd0] sm:$0xff]
    %v1172 = vld [vmem:[#allocation10 + $0xd8] sm:$0xff]
    %v1173 = vld [vmem:[#allocation10 + $0xe0] sm:$0xff]
    %v1174 = vld [vmem:[#allocation10 + $0xe8] sm:$0xff]
    %v1175 = vld [vmem:[#allocation10 + $0xf0] sm:$0xff]
    %v1176 = vld [vmem:[#allocation10 + $0xf8] sm:$0xff]
    %v1177 = vld [vmem:[#allocation10 + $0x100] sm:$0xff]
    %v1178 = vld [vmem:[#allocation10 + $0x108] sm:$0xff]
    %v1179 = vld [vmem:[#allocation10 + $0x110] sm:$0xff]
    %v1180 = vld [vmem:[#allocation10 + $0x118] sm:$0xff]
    %v1181 = vld [vmem:[#allocation10 + $0x120] sm:$0xff]
    %v1182 = vld [vmem:[#allocation10 + $0x128] sm:$0xff]
    %v1183 = vld [vmem:[#allocation10 + $0x130] sm:$0xff]
    %v1184 = vld [vmem:[#allocation10 + $0x138] sm:$0xff]
    %v1185 = vld [vmem:[#allocation10 + $0x140] sm:$0xff]
    %v1186 = vld [vmem:[#allocation10 + $0x148] sm:$0xff]
    %v1187 = vld [vmem:[#allocation10 + $0x150] sm:$0xff]
    %v1188 = vld [vmem:[#allocation10 + $0x158] sm:$0xff]
    %v1189 = vld [vmem:[#allocation10 + $0x160] sm:$0xff]
    %v1190 = vld [vmem:[#allocation10 + $0x168] sm:$0xff]
    %v1191 = vld [vmem:[#allocation10 + $0x170] sm:$0xff]
    %v1192 = vld [vmem:[#allocation10 + $0x178] sm:$0xff]
    %v1193 = vld [vmem:[#allocation10 + $0x180] sm:$0xff]
    %v1194 = vld [vmem:[#allocation10 + $0x188] sm:$0xff]
    %v1195 = vld [vmem:[#allocation10 + $0x190] sm:$0xff]
    %v1196 = vld [vmem:[#allocation10 + $0x198] sm:$0xff]
    %v1197 = vld [vmem:[#allocation10 + $0x1a0] sm:$0xff]
    %v1198 = vld [vmem:[#allocation10 + $0x1a8] sm:$0xff]
    %v1199 = vld [vmem:[#allocation10 + $0x1b0] sm:$0xff]
    %v1200 = vld [vmem:[#allocation10 + $0x1b8] sm:$0xff]
    %v1201 = vld [vmem:[#allocation10 + $0x1c0] sm:$0xff]
    %v1202 = vld [vmem:[#allocation10 + $0x1c8] sm:$0xff]
    %v1203 = vld [vmem:[#allocation10 + $0x1d0] sm:$0xff]
    %v1204 = vld [vmem:[#allocation10 + $0x1d8] sm:$0xff]
    %v1205 = vld [vmem:[#allocation10 + $0x1e0] sm:$0xff]
    %v1206 = vld [vmem:[#allocation10 + $0x1e8] sm:$0xff]
    %v1207 = vld [vmem:[#allocation10 + $0x1f0] sm:$0xff]
    %v1208 = vld [vmem:[#allocation10 + $0x1f8] sm:$0xff]
    %v1209 = vld [vmem:[#allocation10 + $0x200] sm:$0xff]
    %v1210 = vld [vmem:[#allocation10 + $0x208] sm:$0xff]
    %v1211 = vld [vmem:[#allocation10 + $0x210] sm:$0xff]
    %v1212 = vld [vmem:[#allocation10 + $0x218] sm:$0xff]
    %v1213 = vld [vmem:[#allocation10 + $0x220] sm:$0xff]
    %v1214 = vld [vmem:[#allocation10 + $0x228] sm:$0xff]
    %v1215 = vld [vmem:[#allocation10 + $0x230] sm:$0xff]
    %v1216 = vld [vmem:[#allocation10 + $0x238] sm:$0xff]
    %v1217 = vld [vmem:[#allocation10 + $0x240] sm:$0xff]
    %v1218 = vld [vmem:[#allocation10 + $0x248] sm:$0xff]
    %v1219 = vld [vmem:[#allocation10 + $0x250] sm:$0xff]
    %v1220 = vld [vmem:[#allocation10 + $0x258] sm:$0xff]
    %v1221 = vld [vmem:[#allocation10 + $0x260] sm:$0xff]
    %v1222 = vld [vmem:[#allocation10 + $0x268] sm:$0xff]
    %v1223 = vld [vmem:[#allocation10 + $0x270] sm:$0xff]
    %v1224 = vld [vmem:[#allocation10 + $0x278] sm:$0xff]
    %v1225 = vld [vmem:[#allocation10 + $0x280] sm:$0xff]
    %v1226 = vld [vmem:[#allocation10 + $0x288] sm:$0xff]
    %v1227 = vld [vmem:[#allocation10 + $0x290] sm:$0xff]
    %v1228 = vld [vmem:[#allocation10 + $0x298] sm:$0xff]
    %v1229 = vld [vmem:[#allocation10 + $0x2a0] sm:$0xff]
    %v1230 = vld [vmem:[#allocation10 + $0x2a8] sm:$0xff]
    %v1231 = vld [vmem:[#allocation10 + $0x2b0] sm:$0xff]
    %v1232 = vld [vmem:[#allocation10 + $0x2b8] sm:$0xff]
    %v1233 = vld [vmem:[#allocation10 + $0x2c0] sm:$0xff]
    %v1234 = vld [vmem:[#allocation10 + $0x2c8] sm:$0xff]
    %v1235 = vld [vmem:[#allocation10 + $0x2d0] sm:$0xff]
    %v1236 = vld [vmem:[#allocation10 + $0x2d8] sm:$0xff]
    %v1237 = vld [vmem:[#allocation10 + $0x2e0] sm:$0xff]
    %v1238 = vld [vmem:[#allocation10 + $0x2e8] sm:$0xff]
    %v1239 = vld [vmem:[#allocation10 + $0x2f0] sm:$0xff]
    %v1240 = vld [vmem:[#allocation10 + $0x2f8] sm:$0xff]
    %v1241 = vld [vmem:[#allocation10 + $0x300] sm:$0xff]
    %v1242 = vld [vmem:[#allocation10 + $0x308] sm:$0xff]
    %v1243 = vld [vmem:[#allocation10 + $0x310] sm:$0xff]
    %v1244 = vld [vmem:[#allocation10 + $0x318] sm:$0xff]
    %v1245 = vld [vmem:[#allocation10 + $0x320] sm:$0xff]
    %v1246 = vld [vmem:[#allocation10 + $0x328] sm:$0xff]
    %v1247 = vld [vmem:[#allocation10 + $0x330] sm:$0xff]
    %v1248 = vld [vmem:[#allocation10 + $0x338] sm:$0xff]
    %v1249 = vld [vmem:[#allocation10 + $0x340] sm:$0xff]
    %v1250 = vld [vmem:[#allocation10 + $0x348] sm:$0xff]
    %v1251 = vld [vmem:[#allocation10 + $0x350] sm:$0xff]
    %v1252 = vld [vmem:[#allocation10 + $0x358] sm:$0xff]
    %v1253 = vld [vmem:[#allocation10 + $0x360] sm:$0xff]
    %v1254 = vld [vmem:[#allocation10 + $0x368] sm:$0xff]
    %v1255 = vld [vmem:[#allocation10 + $0x370] sm:$0xff]
    %v1256 = vld [vmem:[#allocation10 + $0x378] sm:$0xff]
    %v1257 = vld [vmem:[#allocation10 + $0x380] sm:$0xff]
    %v1258 = vld [vmem:[#allocation10 + $0x388] sm:$0xff]
    %v1259 = vld [vmem:[#allocation10 + $0x390] sm:$0xff]
    %v1260 = vld [vmem:[#allocation10 + $0x398] sm:$0xff]
    %v1261 = vld [vmem:[#allocation10 + $0x3a0] sm:$0xff]
    %v1262 = vld [vmem:[#allocation10 + $0x3a8] sm:$0xff]
    %v1263 = vld [vmem:[#allocation10 + $0x3b0] sm:$0xff]
    %v1264 = vld [vmem:[#allocation10 + $0x3b8] sm:$0xff]
    %v1265 = vld [vmem:[#allocation10 + $0x3c0] sm:$0xff]
    %v1266 = vld [vmem:[#allocation10 + $0x3c8] sm:$0xff]
    %v1267 = vld [vmem:[#allocation10 + $0x3d0] sm:$0xff]
    %v1268 = vld [vmem:[#allocation10 + $0x3d8] sm:$0xff]
    %v1269 = vld [vmem:[#allocation10 + $0x3e0] sm:$0xff]
    %v1270 = vld [vmem:[#allocation10 + $0x3e8] sm:$0xff]
    %v1271 = vld [vmem:[#allocation10 + $0x3f0] sm:$0xff]
    %v1272 = vld [vmem:[#allocation10 + $0x3f8] sm:$0xff]
    %1273 = vmatprep.subr.mxu0 0.0
    %1274 = vmatpush1.msra.mxu0 %v1160
    %1275 = vmatprep.subr.mxu0 0.0
    %1276 = vmatpush1.msra.mxu0 %v1159
    %1277 = vmatprep.subr.mxu0 0.0
    %1278 = vmatpush1.msra.mxu0 %v1158
    %1279 = vmatprep.subr.mxu0 0.0
    %1280 = vmatpush1.msra.mxu0 %v1157
    %1281 = vmatprep.subr.mxu0 0.0
    %1282 = vmatpush1.msra.mxu0 %v1156
    %1283 = vmatprep.subr.mxu0 0.0
    %1284 = vmatpush1.msra.mxu0 %v1155
    %1285 = vmatprep.subr.mxu0 0.0
    %1286 = vmatpush1.msra.mxu0 %v1154
    %1287 = vmatprep.subr.mxu0 0.0
    %1288 = vmatpush1.msra.mxu0 %v1153
    %1289 = vmatprep.subr.mxu0 0.0
    %1290 = vmatpush1.msra.mxu0 %v1152
    %1291 = vmatprep.subr.mxu0 0.0
    %1292 = vmatpush1.msra.mxu0 %v1151
    %1293 = vmatprep.subr.mxu0 0.0
    %1294 = vmatpush1.msra.mxu0 %v1150
    %1295 = vmatprep.subr.mxu0 0.0
    %1296 = vmatpush1.msra.mxu0 %v1149
    %1297 = vmatprep.subr.mxu0 0.0
    %1298 = vmatpush1.msra.mxu0 %v1148
    %1299 = vmatprep.subr.mxu0 0.0
    %1300 = vmatpush1.msra.mxu0 %v1147
    %1301 = vmatprep.subr.mxu0 0.0
    %1302 = vmatpush1.msra.mxu0 %v1146
    %1303 = vmatprep.subr.mxu0 0.0
    %1304 = vmatpush1.msra.mxu0 %v1145
    %1305 = vmatprep.subr.mxu0 0.0
    %1306 = vmatpush2.msra.mxu0 %v1176
    %1307 = vmatprep.subr.mxu0 0.0
    %1308 = vmatpush2.msra.mxu0 %v1175
    %1309 = vmatprep.subr.mxu0 0.0
    %1310 = vmatpush2.msra.mxu0 %v1174
    %1311 = vmatprep.subr.mxu0 0.0
    %1312 = vmatpush2.msra.mxu0 %v1173
    %1313 = vmatprep.subr.mxu0 0.0
    %1314 = vmatpush2.msra.mxu0 %v1172
    %1315 = vmatprep.subr.mxu0 0.0
    %1316 = vmatpush2.msra.mxu0 %v1171
    %1317 = vmatprep.subr.mxu0 0.0
    %1318 = vmatpush2.msra.mxu0 %v1170
    %1319 = vmatprep.subr.mxu0 0.0
    %1320 = vmatpush2.msra.mxu0 %v1169
    %1321 = vmatprep.subr.mxu0 0.0
    %1322 = vmatpush2.msra.mxu0 %v1168
    %1323 = vmatprep.subr.mxu0 0.0
    %1324 = vmatpush2.msra.mxu0 %v1167
    %1325 = vmatprep.subr.mxu0 0.0
    %1326 = vmatpush2.msra.mxu0 %v1166
    %1327 = vmatprep.subr.mxu0 0.0
    %1328 = vmatpush2.msra.mxu0 %v1165
    %1329 = vmatprep.subr.mxu0 0.0
    %1330 = vmatpush2.msra.mxu0 %v1164
    %1331 = vmatprep.subr.mxu0 0.0
    %1332 = vmatpush2.msra.mxu0 %v1163
    %1333 = vmatprep.subr.mxu0 0.0
    %1334 = vmatpush2.msra.mxu0 %v1162
    %1335 = vmatprep.subr.mxu0 0.0
    %1336 = vmatpush2.msra.mxu0 %v1161
    %1337 = vmatprep.mubr.f32.mxu0 %v874
    %1338 = vmatmul.mubr.f32.gmra.mxu0 %v873
    %v1339 = vpop.f32.mrf.mxu0
    %v1340 = vadd.f32 0.0, %v1339
    %v1341 = vpop.f32.mrf.mxu0
    %1342 = vmatprep.mubr.f32.mxu0 %v882
    %1343 = vmatmul.mubr.f32.gmra.mxu0 %v881
    %v1344 = vpop.f32.mrf.mxu0
    %v1345 = vadd.f32 0.0, %v1344
    %v1346 = vpop.f32.mrf.mxu0
    %1347 = vmatprep.mubr.f32.mxu0 %v890
    %1348 = vmatmul.mubr.f32.gmra.mxu0 %v889
    %v1349 = vpop.f32.mrf.mxu0
    %v1350 = vadd.f32 0.0, %v1349
    %v1351 = vpop.f32.mrf.mxu0
    %1352 = vmatprep.mubr.f32.mxu0 %v898
    %1353 = vmatmul.mubr.f32.gmra.mxu0 %v897
    %v1354 = vpop.f32.mrf.mxu0
    %v1355 = vadd.f32 0.0, %v1354
    %v1356 = vpop.f32.mrf.mxu0
    %1357 = vmatprep.mubr.f32.mxu0 %v906
    %1358 = vmatmul.mubr.f32.gmra.mxu0 %v905
    %v1359 = vpop.f32.mrf.mxu0
    %v1360 = vadd.f32 0.0, %v1359
    %v1361 = vpop.f32.mrf.mxu0
    %1362 = vmatprep.mubr.f32.mxu0 %v914
    %1363 = vmatmul.mubr.f32.gmra.mxu0 %v913
    %v1364 = vpop.f32.mrf.mxu0
    %v1365 = vadd.f32 0.0, %v1364
    %v1366 = vpop.f32.mrf.mxu0
    %1367 = vmatprep.mubr.f32.mxu0 %v922
    %1368 = vmatmul.mubr.f32.gmra.mxu0 %v921
    %v1369 = vpop.f32.mrf.mxu0
    %v1370 = vadd.f32 0.0, %v1369
    %v1371 = vpop.f32.mrf.mxu0
    %1372 = vmatprep.mubr.f32.mxu0 %v930
    %1373 = vmatmul.mubr.f32.gmra.mxu0 %v929
    %v1374 = vpop.f32.mrf.mxu0
    %v1375 = vadd.f32 0.0, %v1374
    %v1376 = vpop.f32.mrf.mxu0
    %1377 = vmatprep.mubr.f32.mxu0 %v938
    %1378 = vmatmul.mubr.f32.gmra.mxu0 %v937
    %v1379 = vpop.f32.mrf.mxu0
    %v1380 = vadd.f32 0.0, %v1379
    %v1381 = vpop.f32.mrf.mxu0
    %1382 = vmatprep.mubr.f32.mxu0 %v946
    %1383 = vmatmul.mubr.f32.gmra.mxu0 %v945
    %v1384 = vpop.f32.mrf.mxu0
    %v1385 = vadd.f32 0.0, %v1384
    %v1386 = vpop.f32.mrf.mxu0
    %1387 = vmatprep.mubr.f32.mxu0 %v954
    %1388 = vmatmul.mubr.f32.gmra.mxu0 %v953
    %v1389 = vpop.f32.mrf.mxu0
    %v1390 = vadd.f32 0.0, %v1389
    %v1391 = vpop.f32.mrf.mxu0
    %1392 = vmatprep.mubr.f32.mxu0 %v962
    %1393 = vmatmul.mubr.f32.gmra.mxu0 %v961
    %v1394 = vpop.f32.mrf.mxu0
    %v1395 = vadd.f32 0.0, %v1394
    %v1396 = vpop.f32.mrf.mxu0
    %1397 = vmatprep.mubr.f32.mxu0 %v970
    %1398 = vmatmul.mubr.f32.gmra.mxu0 %v969
    %v1399 = vpop.f32.mrf.mxu0
    %v1400 = vadd.f32 0.0, %v1399
    %v1401 = vpop.f32.mrf.mxu0
    %1402 = vmatprep.mubr.f32.mxu0 %v978
    %1403 = vmatmul.mubr.f32.gmra.mxu0 %v977
    %v1404 = vpop.f32.mrf.mxu0
    %v1405 = vadd.f32 0.0, %v1404
    %v1406 = vpop.f32.mrf.mxu0
    %1407 = vmatprep.mubr.f32.mxu0 %v986
    %1408 = vmatmul.mubr.f32.gmra.mxu0 %v985
    %v1409 = vpop.f32.mrf.mxu0
    %v1410 = vadd.f32 0.0, %v1409
    %v1411 = vpop.f32.mrf.mxu0
    %1412 = vmatprep.mubr.f32.mxu0 %v994
    %1413 = vmatmul.mubr.f32.gmra.mxu0 %v993
    %v1414 = vpop.f32.mrf.mxu0
    %v1415 = vadd.f32 0.0, %v1414
    %v1416 = vpop.f32.mrf.mxu0
    %1417 = vdwg.mxu0
    %1418 = vmatprep.subr.mxu0 0.0
    %1419 = vmatpush1.msra.mxu0 %v1192
    %1420 = vmatprep.subr.mxu0 0.0
    %1421 = vmatpush1.msra.mxu0 %v1191
    %1422 = vmatprep.subr.mxu0 0.0
    %1423 = vmatpush1.msra.mxu0 %v1190
    %1424 = vmatprep.subr.mxu0 0.0
    %1425 = vmatpush1.msra.mxu0 %v1189
    %1426 = vmatprep.subr.mxu0 0.0
    %1427 = vmatpush1.msra.mxu0 %v1188
    %1428 = vmatprep.subr.mxu0 0.0
    %1429 = vmatpush1.msra.mxu0 %v1187
    %1430 = vmatprep.subr.mxu0 0.0
    %1431 = vmatpush1.msra.mxu0 %v1186
    %1432 = vmatprep.subr.mxu0 0.0
    %1433 = vmatpush1.msra.mxu0 %v1185
    %1434 = vmatprep.subr.mxu0 0.0
    %1435 = vmatpush1.msra.mxu0 %v1184
    %1436 = vmatprep.subr.mxu0 0.0
    %1437 = vmatpush1.msra.mxu0 %v1183
    %1438 = vmatprep.subr.mxu0 0.0
    %1439 = vmatpush1.msra.mxu0 %v1182
    %1440 = vmatprep.subr.mxu0 0.0
    %1441 = vmatpush1.msra.mxu0 %v1181
    %1442 = vmatprep.subr.mxu0 0.0
    %1443 = vmatpush1.msra.mxu0 %v1180
    %1444 = vmatprep.subr.mxu0 0.0
    %1445 = vmatpush1.msra.mxu0 %v1179
    %1446 = vmatprep.subr.mxu0 0.0
    %1447 = vmatpush1.msra.mxu0 %v1178
    %1448 = vmatprep.subr.mxu0 0.0
    %1449 = vmatpush1.msra.mxu0 %v1177
    %1450 = vmatprep.subr.mxu0 0.0
    %1451 = vmatpush2.msra.mxu0 %v1208
    %1452 = vmatprep.subr.mxu0 0.0
    %1453 = vmatpush2.msra.mxu0 %v1207
    %1454 = vmatprep.subr.mxu0 0.0
    %1455 = vmatpush2.msra.mxu0 %v1206
    %1456 = vmatprep.subr.mxu0 0.0
    %1457 = vmatpush2.msra.mxu0 %v1205
    %1458 = vmatprep.subr.mxu0 0.0
    %1459 = vmatpush2.msra.mxu0 %v1204
    %1460 = vmatprep.subr.mxu0 0.0
    %1461 = vmatpush2.msra.mxu0 %v1203
    %1462 = vmatprep.subr.mxu0 0.0
    %1463 = vmatpush2.msra.mxu0 %v1202
    %1464 = vmatprep.subr.mxu0 0.0
    %1465 = vmatpush2.msra.mxu0 %v1201
    %1466 = vmatprep.subr.mxu0 0.0
    %1467 = vmatpush2.msra.mxu0 %v1200
    %1468 = vmatprep.subr.mxu0 0.0
    %1469 = vmatpush2.msra.mxu0 %v1199
    %1470 = vmatprep.subr.mxu0 0.0
    %1471 = vmatpush2.msra.mxu0 %v1198
    %1472 = vmatprep.subr.mxu0 0.0
    %1473 = vmatpush2.msra.mxu0 %v1197
    %1474 = vmatprep.subr.mxu0 0.0
    %1475 = vmatpush2.msra.mxu0 %v1196
    %1476 = vmatprep.subr.mxu0 0.0
    %1477 = vmatpush2.msra.mxu0 %v1195
    %1478 = vmatprep.subr.mxu0 0.0
    %1479 = vmatpush2.msra.mxu0 %v1194
    %1480 = vmatprep.subr.mxu0 0.0
    %1481 = vmatpush2.msra.mxu0 %v1193
    %1482 = vmatprep.mubr.f32.mxu0 %v876
    %1483 = vmatmul.mubr.f32.gmra.mxu0 %v875
    %v1484 = vpop.f32.mrf.mxu0
    %v1485 = vadd.f32 %v1340, %v1484
    %v1486 = vpop.f32.mrf.mxu0
    %1487 = vmatprep.mubr.f32.mxu0 %v884
    %1488 = vmatmul.mubr.f32.gmra.mxu0 %v883
    %v1489 = vpop.f32.mrf.mxu0
    %v1490 = vadd.f32 %v1345, %v1489
    %v1491 = vpop.f32.mrf.mxu0
    %1492 = vmatprep.mubr.f32.mxu0 %v892
    %1493 = vmatmul.mubr.f32.gmra.mxu0 %v891
    %v1494 = vpop.f32.mrf.mxu0
    %v1495 = vadd.f32 %v1350, %v1494
    %v1496 = vpop.f32.mrf.mxu0
    %1497 = vmatprep.mubr.f32.mxu0 %v900
    %1498 = vmatmul.mubr.f32.gmra.mxu0 %v899
    %v1499 = vpop.f32.mrf.mxu0
    %v1500 = vadd.f32 %v1355, %v1499
    %v1501 = vpop.f32.mrf.mxu0
    %1502 = vmatprep.mubr.f32.mxu0 %v908
    %1503 = vmatmul.mubr.f32.gmra.mxu0 %v907
    %v1504 = vpop.f32.mrf.mxu0
    %v1505 = vadd.f32 %v1360, %v1504
    %v1506 = vpop.f32.mrf.mxu0
    %1507 = vmatprep.mubr.f32.mxu0 %v916
    %1508 = vmatmul.mubr.f32.gmra.mxu0 %v915
    %v1509 = vpop.f32.mrf.mxu0
    %v1510 = vadd.f32 %v1365, %v1509
    %v1511 = vpop.f32.mrf.mxu0
    %1512 = vmatprep.mubr.f32.mxu0 %v924
    %1513 = vmatmul.mubr.f32.gmra.mxu0 %v923
    %v1514 = vpop.f32.mrf.mxu0
    %v1515 = vadd.f32 %v1370, %v1514
    %v1516 = vpop.f32.mrf.mxu0
    %1517 = vmatprep.mubr.f32.mxu0 %v932
    %1518 = vmatmul.mubr.f32.gmra.mxu0 %v931
    %v1519 = vpop.f32.mrf.mxu0
    %v1520 = vadd.f32 %v1375, %v1519
    %v1521 = vpop.f32.mrf.mxu0
    %1522 = vmatprep.mubr.f32.mxu0 %v940
    %1523 = vmatmul.mubr.f32.gmra.mxu0 %v939
    %v1524 = vpop.f32.mrf.mxu0
    %v1525 = vadd.f32 %v1380, %v1524
    %v1526 = vpop.f32.mrf.mxu0
    %1527 = vmatprep.mubr.f32.mxu0 %v948
    %1528 = vmatmul.mubr.f32.gmra.mxu0 %v947
    %v1529 = vpop.f32.mrf.mxu0
    %v1530 = vadd.f32 %v1385, %v1529
    %v1531 = vpop.f32.mrf.mxu0
    %1532 = vmatprep.mubr.f32.mxu0 %v956
    %1533 = vmatmul.mubr.f32.gmra.mxu0 %v955
    %v1534 = vpop.f32.mrf.mxu0
    %v1535 = vadd.f32 %v1390, %v1534
    %v1536 = vpop.f32.mrf.mxu0
    %1537 = vmatprep.mubr.f32.mxu0 %v964
    %1538 = vmatmul.mubr.f32.gmra.mxu0 %v963
    %v1539 = vpop.f32.mrf.mxu0
    %v1540 = vadd.f32 %v1395, %v1539
    %v1541 = vpop.f32.mrf.mxu0
    %1542 = vmatprep.mubr.f32.mxu0 %v972
    %1543 = vmatmul.mubr.f32.gmra.mxu0 %v971
    %v1544 = vpop.f32.mrf.mxu0
    %v1545 = vadd.f32 %v1400, %v1544
    %v1546 = vpop.f32.mrf.mxu0
    %1547 = vmatprep.mubr.f32.mxu0 %v980
    %1548 = vmatmul.mubr.f32.gmra.mxu0 %v979
    %v1549 = vpop.f32.mrf.mxu0
    %v1550 = vadd.f32 %v1405, %v1549
    %v1551 = vpop.f32.mrf.mxu0
    %1552 = vmatprep.mubr.f32.mxu0 %v988
    %1553 = vmatmul.mubr.f32.gmra.mxu0 %v987
    %v1554 = vpop.f32.mrf.mxu0
    %v1555 = vadd.f32 %v1410, %v1554
    %v1556 = vpop.f32.mrf.mxu0
    %1557 = vmatprep.mubr.f32.mxu0 %v996
    %1558 = vmatmul.mubr.f32.gmra.mxu0 %v995
    %v1559 = vpop.f32.mrf.mxu0
    %v1560 = vadd.f32 %v1415, %v1559
    %v1561 = vpop.f32.mrf.mxu0
    %1562 = vdwg.mxu0
    %1563 = vmatprep.subr.mxu0 0.0
    %1564 = vmatpush1.msra.mxu0 %v1224
    %1565 = vmatprep.subr.mxu0 0.0
    %1566 = vmatpush1.msra.mxu0 %v1223
    %1567 = vmatprep.subr.mxu0 0.0
    %1568 = vmatpush1.msra.mxu0 %v1222
    %1569 = vmatprep.subr.mxu0 0.0
    %1570 = vmatpush1.msra.mxu0 %v1221
    %1571 = vmatprep.subr.mxu0 0.0
    %1572 = vmatpush1.msra.mxu0 %v1220
    %1573 = vmatprep.subr.mxu0 0.0
    %1574 = vmatpush1.msra.mxu0 %v1219
    %1575 = vmatprep.subr.mxu0 0.0
    %1576 = vmatpush1.msra.mxu0 %v1218
    %1577 = vmatprep.subr.mxu0 0.0
    %1578 = vmatpush1.msra.mxu0 %v1217
    %1579 = vmatprep.subr.mxu0 0.0
    %1580 = vmatpush1.msra.mxu0 %v1216
    %1581 = vmatprep.subr.mxu0 0.0
    %1582 = vmatpush1.msra.mxu0 %v1215
    %1583 = vmatprep.subr.mxu0 0.0
    %1584 = vmatpush1.msra.mxu0 %v1214
    %1585 = vmatprep.subr.mxu0 0.0
    %1586 = vmatpush1.msra.mxu0 %v1213
    %1587 = vmatprep.subr.mxu0 0.0
    %1588 = vmatpush1.msra.mxu0 %v1212
    %1589 = vmatprep.subr.mxu0 0.0
    %1590 = vmatpush1.msra.mxu0 %v1211
    %1591 = vmatprep.subr.mxu0 0.0
    %1592 = vmatpush1.msra.mxu0 %v1210
    %1593 = vmatprep.subr.mxu0 0.0
    %1594 = vmatpush1.msra.mxu0 %v1209
    %1595 = vmatprep.subr.mxu0 0.0
    %1596 = vmatpush2.msra.mxu0 %v1240
    %1597 = vmatprep.subr.mxu0 0.0
    %1598 = vmatpush2.msra.mxu0 %v1239
    %1599 = vmatprep.subr.mxu0 0.0
    %1600 = vmatpush2.msra.mxu0 %v1238
    %1601 = vmatprep.subr.mxu0 0.0
    %1602 = vmatpush2.msra.mxu0 %v1237
    %1603 = vmatprep.subr.mxu0 0.0
    %1604 = vmatpush2.msra.mxu0 %v1236
    %1605 = vmatprep.subr.mxu0 0.0
    %1606 = vmatpush2.msra.mxu0 %v1235
    %1607 = vmatprep.subr.mxu0 0.0
    %1608 = vmatpush2.msra.mxu0 %v1234
    %1609 = vmatprep.subr.mxu0 0.0
    %1610 = vmatpush2.msra.mxu0 %v1233
    %1611 = vmatprep.subr.mxu0 0.0
    %1612 = vmatpush2.msra.mxu0 %v1232
    %1613 = vmatprep.subr.mxu0 0.0
    %1614 = vmatpush2.msra.mxu0 %v1231
    %1615 = vmatprep.subr.mxu0 0.0
    %1616 = vmatpush2.msra.mxu0 %v1230
    %1617 = vmatprep.subr.mxu0 0.0
    %1618 = vmatpush2.msra.mxu0 %v1229
    %1619 = vmatprep.subr.mxu0 0.0
    %1620 = vmatpush2.msra.mxu0 %v1228
    %1621 = vmatprep.subr.mxu0 0.0
    %1622 = vmatpush2.msra.mxu0 %v1227
    %1623 = vmatprep.subr.mxu0 0.0
    %1624 = vmatpush2.msra.mxu0 %v1226
    %1625 = vmatprep.subr.mxu0 0.0
    %1626 = vmatpush2.msra.mxu0 %v1225
    %1627 = vmatprep.mubr.f32.mxu0 %v878
    %1628 = vmatmul.mubr.f32.gmra.mxu0 %v877
    %v1629 = vpop.f32.mrf.mxu0
    %v1630 = vadd.f32 %v1485, %v1629
    %v1631 = vpop.f32.mrf.mxu0
    %1632 = vmatprep.mubr.f32.mxu0 %v886
    %1633 = vmatmul.mubr.f32.gmra.mxu0 %v885
    %v1634 = vpop.f32.mrf.mxu0
    %v1635 = vadd.f32 %v1490, %v1634
    %v1636 = vpop.f32.mrf.mxu0
    %1637 = vmatprep.mubr.f32.mxu0 %v894
    %1638 = vmatmul.mubr.f32.gmra.mxu0 %v893
    %v1639 = vpop.f32.mrf.mxu0
    %v1640 = vadd.f32 %v1495, %v1639
    %v1641 = vpop.f32.mrf.mxu0
    %1642 = vmatprep.mubr.f32.mxu0 %v902
    %1643 = vmatmul.mubr.f32.gmra.mxu0 %v901
    %v1644 = vpop.f32.mrf.mxu0
    %v1645 = vadd.f32 %v1500, %v1644
    %v1646 = vpop.f32.mrf.mxu0
    %1647 = vmatprep.mubr.f32.mxu0 %v910
    %1648 = vmatmul.mubr.f32.gmra.mxu0 %v909
    %v1649 = vpop.f32.mrf.mxu0
    %v1650 = vadd.f32 %v1505, %v1649
    %v1651 = vpop.f32.mrf.mxu0
    %1652 = vmatprep.mubr.f32.mxu0 %v918
    %1653 = vmatmul.mubr.f32.gmra.mxu0 %v917
    %v1654 = vpop.f32.mrf.mxu0
    %v1655 = vadd.f32 %v1510, %v1654
    %v1656 = vpop.f32.mrf.mxu0
    %1657 = vmatprep.mubr.f32.mxu0 %v926
    %1658 = vmatmul.mubr.f32.gmra.mxu0 %v925
    %v1659 = vpop.f32.mrf.mxu0
    %v1660 = vadd.f32 %v1515, %v1659
    %v1661 = vpop.f32.mrf.mxu0
    %1662 = vmatprep.mubr.f32.mxu0 %v934
    %1663 = vmatmul.mubr.f32.gmra.mxu0 %v933
    %v1664 = vpop.f32.mrf.mxu0
    %v1665 = vadd.f32 %v1520, %v1664
    %v1666 = vpop.f32.mrf.mxu0
    %1667 = vmatprep.mubr.f32.mxu0 %v942
    %1668 = vmatmul.mubr.f32.gmra.mxu0 %v941
    %v1669 = vpop.f32.mrf.mxu0
    %v1670 = vadd.f32 %v1525, %v1669
    %v1671 = vpop.f32.mrf.mxu0
    %1672 = vmatprep.mubr.f32.mxu0 %v950
    %1673 = vmatmul.mubr.f32.gmra.mxu0 %v949
    %v1674 = vpop.f32.mrf.mxu0
    %v1675 = vadd.f32 %v1530, %v1674
    %v1676 = vpop.f32.mrf.mxu0
    %1677 = vmatprep.mubr.f32.mxu0 %v958
    %1678 = vmatmul.mubr.f32.gmra.mxu0 %v957
    %v1679 = vpop.f32.mrf.mxu0
    %v1680 = vadd.f32 %v1535, %v1679
    %v1681 = vpop.f32.mrf.mxu0
    %1682 = vmatprep.mubr.f32.mxu0 %v966
    %1683 = vmatmul.mubr.f32.gmra.mxu0 %v965
    %v1684 = vpop.f32.mrf.mxu0
    %v1685 = vadd.f32 %v1540, %v1684
    %v1686 = vpop.f32.mrf.mxu0
    %1687 = vmatprep.mubr.f32.mxu0 %v974
    %1688 = vmatmul.mubr.f32.gmra.mxu0 %v973
    %v1689 = vpop.f32.mrf.mxu0
    %v1690 = vadd.f32 %v1545, %v1689
    %v1691 = vpop.f32.mrf.mxu0
    %1692 = vmatprep.mubr.f32.mxu0 %v982
    %1693 = vmatmul.mubr.f32.gmra.mxu0 %v981
    %v1694 = vpop.f32.mrf.mxu0
    %v1695 = vadd.f32 %v1550, %v1694
    %v1696 = vpop.f32.mrf.mxu0
    %1697 = vmatprep.mubr.f32.mxu0 %v990
    %1698 = vmatmul.mubr.f32.gmra.mxu0 %v989
    %v1699 = vpop.f32.mrf.mxu0
    %v1700 = vadd.f32 %v1555, %v1699
    %v1701 = vpop.f32.mrf.mxu0
    %1702 = vmatprep.mubr.f32.mxu0 %v998
    %1703 = vmatmul.mubr.f32.gmra.mxu0 %v997
    %v1704 = vpop.f32.mrf.mxu0
    %v1705 = vadd.f32 %v1560, %v1704
    %v1706 = vpop.f32.mrf.mxu0
    %1707 = vdwg.mxu0
    %1708 = vmatprep.subr.mxu0 0.0
    %1709 = vmatpush1.msra.mxu0 %v1256
    %1710 = vmatprep.subr.mxu0 0.0
    %1711 = vmatpush1.msra.mxu0 %v1255
    %1712 = vmatprep.subr.mxu0 0.0
    %1713 = vmatpush1.msra.mxu0 %v1254
    %1714 = vmatprep.subr.mxu0 0.0
    %1715 = vmatpush1.msra.mxu0 %v1253
    %1716 = vmatprep.subr.mxu0 0.0
    %1717 = vmatpush1.msra.mxu0 %v1252
    %1718 = vmatprep.subr.mxu0 0.0
    %1719 = vmatpush1.msra.mxu0 %v1251
    %1720 = vmatprep.subr.mxu0 0.0
    %1721 = vmatpush1.msra.mxu0 %v1250
    %1722 = vmatprep.subr.mxu0 0.0
    %1723 = vmatpush1.msra.mxu0 %v1249
    %1724 = vmatprep.subr.mxu0 0.0
    %1725 = vmatpush1.msra.mxu0 %v1248
    %1726 = vmatprep.subr.mxu0 0.0
    %1727 = vmatpush1.msra.mxu0 %v1247
    %1728 = vmatprep.subr.mxu0 0.0
    %1729 = vmatpush1.msra.mxu0 %v1246
    %1730 = vmatprep.subr.mxu0 0.0
    %1731 = vmatpush1.msra.mxu0 %v1245
    %1732 = vmatprep.subr.mxu0 0.0
    %1733 = vmatpush1.msra.mxu0 %v1244
    %1734 = vmatprep.subr.mxu0 0.0
    %1735 = vmatpush1.msra.mxu0 %v1243
    %1736 = vmatprep.subr.mxu0 0.0
    %1737 = vmatpush1.msra.mxu0 %v1242
    %1738 = vmatprep.subr.mxu0 0.0
    %1739 = vmatpush1.msra.mxu0 %v1241
    %1740 = vmatprep.subr.mxu0 0.0
    %1741 = vmatpush2.msra.mxu0 %v1272
    %1742 = vmatprep.subr.mxu0 0.0
    %1743 = vmatpush2.msra.mxu0 %v1271
    %1744 = vmatprep.subr.mxu0 0.0
    %1745 = vmatpush2.msra.mxu0 %v1270
    %1746 = vmatprep.subr.mxu0 0.0
    %1747 = vmatpush2.msra.mxu0 %v1269
    %1748 = vmatprep.subr.mxu0 0.0
    %1749 = vmatpush2.msra.mxu0 %v1268
    %1750 = vmatprep.subr.mxu0 0.0
    %1751 = vmatpush2.msra.mxu0 %v1267
    %1752 = vmatprep.subr.mxu0 0.0
    %1753 = vmatpush2.msra.mxu0 %v1266
    %1754 = vmatprep.subr.mxu0 0.0
    %1755 = vmatpush2.msra.mxu0 %v1265
    %1756 = vmatprep.subr.mxu0 0.0
    %1757 = vmatpush2.msra.mxu0 %v1264
    %1758 = vmatprep.subr.mxu0 0.0
    %1759 = vmatpush2.msra.mxu0 %v1263
    %1760 = vmatprep.subr.mxu0 0.0
    %1761 = vmatpush2.msra.mxu0 %v1262
    %1762 = vmatprep.subr.mxu0 0.0
    %1763 = vmatpush2.msra.mxu0 %v1261
    %1764 = vmatprep.subr.mxu0 0.0
    %1765 = vmatpush2.msra.mxu0 %v1260
    %1766 = vmatprep.subr.mxu0 0.0
    %1767 = vmatpush2.msra.mxu0 %v1259
    %1768 = vmatprep.subr.mxu0 0.0
    %1769 = vmatpush2.msra.mxu0 %v1258
    %1770 = vmatprep.subr.mxu0 0.0
    %1771 = vmatpush2.msra.mxu0 %v1257
    %1772 = vmatprep.mubr.f32.mxu0 %v880
    %1773 = vmatmul.mubr.f32.gmra.mxu0 %v879
    %v1774 = vpop.f32.mrf.mxu0
    %v1775 = vadd.f32 %v1630, %v1774
    %v1776 = vpop.f32.mrf.mxu0
    %1777 = vmatprep.mubr.f32.mxu0 %v888
    %1778 = vmatmul.mubr.f32.gmra.mxu0 %v887
    %v1779 = vpop.f32.mrf.mxu0
    %v1780 = vadd.f32 %v1635, %v1779
    %v1781 = vpop.f32.mrf.mxu0
    %1782 = vmatprep.mubr.f32.mxu0 %v896
    %1783 = vmatmul.mubr.f32.gmra.mxu0 %v895
    %v1784 = vpop.f32.mrf.mxu0
    %v1785 = vadd.f32 %v1640, %v1784
    %v1786 = vpop.f32.mrf.mxu0
    %1787 = vmatprep.mubr.f32.mxu0 %v904
    %1788 = vmatmul.mubr.f32.gmra.mxu0 %v903
    %v1789 = vpop.f32.mrf.mxu0
    %v1790 = vadd.f32 %v1645, %v1789
    %v1791 = vpop.f32.mrf.mxu0
    %1792 = vmatprep.mubr.f32.mxu0 %v912
    %1793 = vmatmul.mubr.f32.gmra.mxu0 %v911
    %v1794 = vpop.f32.mrf.mxu0
    %v1795 = vadd.f32 %v1650, %v1794
    %v1796 = vpop.f32.mrf.mxu0
    %1797 = vmatprep.mubr.f32.mxu0 %v920
    %1798 = vmatmul.mubr.f32.gmra.mxu0 %v919
    %v1799 = vpop.f32.mrf.mxu0
    %v1800 = vadd.f32 %v1655, %v1799
    %v1801 = vpop.f32.mrf.mxu0
    %1802 = vmatprep.mubr.f32.mxu0 %v928
    %1803 = vmatmul.mubr.f32.gmra.mxu0 %v927
    %v1804 = vpop.f32.mrf.mxu0
    %v1805 = vadd.f32 %v1660, %v1804
    %v1806 = vpop.f32.mrf.mxu0
    %1807 = vmatprep.mubr.f32.mxu0 %v936
    %1808 = vmatmul.mubr.f32.gmra.mxu0 %v935
    %v1809 = vpop.f32.mrf.mxu0
    %v1810 = vadd.f32 %v1665, %v1809
    %v1811 = vpop.f32.mrf.mxu0
    %1812 = vmatprep.mubr.f32.mxu0 %v944
    %1813 = vmatmul.mubr.f32.gmra.mxu0 %v943
    %v1814 = vpop.f32.mrf.mxu0
    %v1815 = vadd.f32 %v1670, %v1814
    %v1816 = vpop.f32.mrf.mxu0
    %1817 = vmatprep.mubr.f32.mxu0 %v952
    %1818 = vmatmul.mubr.f32.gmra.mxu0 %v951
    %v1819 = vpop.f32.mrf.mxu0
    %v1820 = vadd.f32 %v1675, %v1819
    %v1821 = vpop.f32.mrf.mxu0
    %1822 = vmatprep.mubr.f32.mxu0 %v960
    %1823 = vmatmul.mubr.f32.gmra.mxu0 %v959
    %v1824 = vpop.f32.mrf.mxu0
    %v1825 = vadd.f32 %v1680, %v1824
    %v1826 = vpop.f32.mrf.mxu0
    %1827 = vmatprep.mubr.f32.mxu0 %v968
    %1828 = vmatmul.mubr.f32.gmra.mxu0 %v967
    %v1829 = vpop.f32.mrf.mxu0
    %v1830 = vadd.f32 %v1685, %v1829
    %v1831 = vpop.f32.mrf.mxu0
    %1832 = vmatprep.mubr.f32.mxu0 %v976
    %1833 = vmatmul.mubr.f32.gmra.mxu0 %v975
    %v1834 = vpop.f32.mrf.mxu0
    %v1835 = vadd.f32 %v1690, %v1834
    %v1836 = vpop.f32.mrf.mxu0
    %1837 = vmatprep.mubr.f32.mxu0 %v984
    %1838 = vmatmul.mubr.f32.gmra.mxu0 %v983
    %v1839 = vpop.f32.mrf.mxu0
    %v1840 = vadd.f32 %v1695, %v1839
    %v1841 = vpop.f32.mrf.mxu0
    %1842 = vmatprep.mubr.f32.mxu0 %v992
    %1843 = vmatmul.mubr.f32.gmra.mxu0 %v991
    %v1844 = vpop.f32.mrf.mxu0
    %v1845 = vadd.f32 %v1700, %v1844
    %v1846 = vpop.f32.mrf.mxu0
    %1847 = vmatprep.mubr.f32.mxu0 %v1000
    %1848 = vmatmul.mubr.f32.gmra.mxu0 %v999
    %v1849 = vpop.f32.mrf.mxu0
    %v1850 = vadd.f32 %v1705, %v1849
    %v1851 = vpop.f32.mrf.mxu0
    %1852 = vdwg.mxu0
    %1853 = vmatprep.subr.mxu0 0.0
    %1854 = vmatpush1.msra.mxu0 %v1032
    %1855 = vmatprep.subr.mxu0 0.0
    %1856 = vmatpush1.msra.mxu0 %v1031
    %1857 = vmatprep.subr.mxu0 0.0
    %1858 = vmatpush1.msra.mxu0 %v1030
    %1859 = vmatprep.subr.mxu0 0.0
    %1860 = vmatpush1.msra.mxu0 %v1029
    %1861 = vmatprep.subr.mxu0 0.0
    %1862 = vmatpush1.msra.mxu0 %v1028
    %1863 = vmatprep.subr.mxu0 0.0
    %1864 = vmatpush1.msra.mxu0 %v1027
    %1865 = vmatprep.subr.mxu0 0.0
    %1866 = vmatpush1.msra.mxu0 %v1026
    %1867 = vmatprep.subr.mxu0 0.0
    %1868 = vmatpush1.msra.mxu0 %v1025
    %1869 = vmatprep.subr.mxu0 0.0
    %1870 = vmatpush1.msra.mxu0 %v1024
    %1871 = vmatprep.subr.mxu0 0.0
    %1872 = vmatpush1.msra.mxu0 %v1023
    %1873 = vmatprep.subr.mxu0 0.0
    %1874 = vmatpush1.msra.mxu0 %v1022
    %1875 = vmatprep.subr.mxu0 0.0
    %1876 = vmatpush1.msra.mxu0 %v1021
    %1877 = vmatprep.subr.mxu0 0.0
    %1878 = vmatpush1.msra.mxu0 %v1020
    %1879 = vmatprep.subr.mxu0 0.0
    %1880 = vmatpush1.msra.mxu0 %v1019
    %1881 = vmatprep.subr.mxu0 0.0
    %1882 = vmatpush1.msra.mxu0 %v1018
    %1883 = vmatprep.subr.mxu0 0.0
    %1884 = vmatpush1.msra.mxu0 %v1017
    %1885 = vmatprep.subr.mxu0 0.0
    %1886 = vmatpush2.msra.mxu0 %v1048
    %1887 = vmatprep.subr.mxu0 0.0
    %1888 = vmatpush2.msra.mxu0 %v1047
    %1889 = vmatprep.subr.mxu0 0.0
    %1890 = vmatpush2.msra.mxu0 %v1046
    %1891 = vmatprep.subr.mxu0 0.0
    %1892 = vmatpush2.msra.mxu0 %v1045
    %1893 = vmatprep.subr.mxu0 0.0
    %1894 = vmatpush2.msra.mxu0 %v1044
    %1895 = vmatprep.subr.mxu0 0.0
    %1896 = vmatpush2.msra.mxu0 %v1043
    %1897 = vmatprep.subr.mxu0 0.0
    %1898 = vmatpush2.msra.mxu0 %v1042
    %1899 = vmatprep.subr.mxu0 0.0
    %1900 = vmatpush2.msra.mxu0 %v1041
    %1901 = vmatprep.subr.mxu0 0.0
    %1902 = vmatpush2.msra.mxu0 %v1040
    %1903 = vmatprep.subr.mxu0 0.0
    %1904 = vmatpush2.msra.mxu0 %v1039
    %1905 = vmatprep.subr.mxu0 0.0
    %1906 = vmatpush2.msra.mxu0 %v1038
    %1907 = vmatprep.subr.mxu0 0.0
    %1908 = vmatpush2.msra.mxu0 %v1037
    %1909 = vmatprep.subr.mxu0 0.0
    %1910 = vmatpush2.msra.mxu0 %v1036
    %1911 = vmatprep.subr.mxu0 0.0
    %1912 = vmatpush2.msra.mxu0 %v1035
    %1913 = vmatprep.subr.mxu0 0.0
    %1914 = vmatpush2.msra.mxu0 %v1034
    %1915 = vmatprep.subr.mxu0 0.0
    %1916 = vmatpush2.msra.mxu0 %v1033
    %1917 = vmatprep.mubr.f32.mxu0 %v458
    %1918 = vmatmul.mubr.f32.gmra.mxu0 %v457
    %v1919 = vpop.f32.mrf.mxu0
    %v1920 = vadd.f32 %v1775, %v1919
    %v1921 = vpop.f32.mrf.mxu0
    %1922 = vmatprep.mubr.f32.mxu0 %v466
    %1923 = vmatmul.mubr.f32.gmra.mxu0 %v465
    %v1924 = vpop.f32.mrf.mxu0
    %v1925 = vadd.f32 %v1780, %v1924
    %v1926 = vpop.f32.mrf.mxu0
    %1927 = vmatprep.mubr.f32.mxu0 %v474
    %1928 = vmatmul.mubr.f32.gmra.mxu0 %v473
    %v1929 = vpop.f32.mrf.mxu0
    %v1930 = vadd.f32 %v1785, %v1929
    %v1931 = vpop.f32.mrf.mxu0
    %1932 = vmatprep.mubr.f32.mxu0 %v482
    %1933 = vmatmul.mubr.f32.gmra.mxu0 %v481
    %v1934 = vpop.f32.mrf.mxu0
    %v1935 = vadd.f32 %v1790, %v1934
    %v1936 = vpop.f32.mrf.mxu0
    %1937 = vmatprep.mubr.f32.mxu0 %v490
    %1938 = vmatmul.mubr.f32.gmra.mxu0 %v489
    %v1939 = vpop.f32.mrf.mxu0
    %v1940 = vadd.f32 %v1795, %v1939
    %v1941 = vpop.f32.mrf.mxu0
    %1942 = vmatprep.mubr.f32.mxu0 %v498
    %1943 = vmatmul.mubr.f32.gmra.mxu0 %v497
    %v1944 = vpop.f32.mrf.mxu0
    %v1945 = vadd.f32 %v1800, %v1944
    %v1946 = vpop.f32.mrf.mxu0
    %1947 = vmatprep.mubr.f32.mxu0 %v506
    %1948 = vmatmul.mubr.f32.gmra.mxu0 %v505
    %v1949 = vpop.f32.mrf.mxu0
    %v1950 = vadd.f32 %v1805, %v1949
    %v1951 = vpop.f32.mrf.mxu0
    %1952 = vmatprep.mubr.f32.mxu0 %v514
    %1953 = vmatmul.mubr.f32.gmra.mxu0 %v513
    %v1954 = vpop.f32.mrf.mxu0
    %v1955 = vadd.f32 %v1810, %v1954
    %v1956 = vpop.f32.mrf.mxu0
    %1957 = vmatprep.mubr.f32.mxu0 %v522
    %1958 = vmatmul.mubr.f32.gmra.mxu0 %v521
    %v1959 = vpop.f32.mrf.mxu0
    %v1960 = vadd.f32 %v1815, %v1959
    %v1961 = vpop.f32.mrf.mxu0
    %1962 = vmatprep.mubr.f32.mxu0 %v530
    %1963 = vmatmul.mubr.f32.gmra.mxu0 %v529
    %v1964 = vpop.f32.mrf.mxu0
    %v1965 = vadd.f32 %v1820, %v1964
    %v1966 = vpop.f32.mrf.mxu0
    %1967 = vmatprep.mubr.f32.mxu0 %v538
    %1968 = vmatmul.mubr.f32.gmra.mxu0 %v537
    %v1969 = vpop.f32.mrf.mxu0
    %v1970 = vadd.f32 %v1825, %v1969
    %v1971 = vpop.f32.mrf.mxu0
    %1972 = vmatprep.mubr.f32.mxu0 %v546
    %1973 = vmatmul.mubr.f32.gmra.mxu0 %v545
    %v1974 = vpop.f32.mrf.mxu0
    %v1975 = vadd.f32 %v1830, %v1974
    %v1976 = vpop.f32.mrf.mxu0
    %1977 = vmatprep.mubr.f32.mxu0 %v554
    %1978 = vmatmul.mubr.f32.gmra.mxu0 %v553
    %v1979 = vpop.f32.mrf.mxu0
    %v1980 = vadd.f32 %v1835, %v1979
    %v1981 = vpop.f32.mrf.mxu0
    %1982 = vmatprep.mubr.f32.mxu0 %v562
    %1983 = vmatmul.mubr.f32.gmra.mxu0 %v561
    %v1984 = vpop.f32.mrf.mxu0
    %v1985 = vadd.f32 %v1840, %v1984
    %v1986 = vpop.f32.mrf.mxu0
    %1987 = vmatprep.mubr.f32.mxu0 %v570
    %1988 = vmatmul.mubr.f32.gmra.mxu0 %v569
    %v1989 = vpop.f32.mrf.mxu0
    %v1990 = vadd.f32 %v1845, %v1989
    %v1991 = vpop.f32.mrf.mxu0
    %1992 = vmatprep.mubr.f32.mxu0 %v578
    %1993 = vmatmul.mubr.f32.gmra.mxu0 %v577
    %v1994 = vpop.f32.mrf.mxu0
    %v1995 = vadd.f32 %v1850, %v1994
    %v1996 = vpop.f32.mrf.mxu0
    %1997 = vdwg.mxu0
    %1998 = vmatprep.subr.mxu0 0.0
    %1999 = vmatpush1.msra.mxu0 %v1064
    %2000 = vmatprep.subr.mxu0 0.0
    %2001 = vmatpush1.msra.mxu0 %v1063
    %2002 = vmatprep.subr.mxu0 0.0
    %2003 = vmatpush1.msra.mxu0 %v1062
    %2004 = vmatprep.subr.mxu0 0.0
    %2005 = vmatpush1.msra.mxu0 %v1061
    %2006 = vmatprep.subr.mxu0 0.0
    %2007 = vmatpush1.msra.mxu0 %v1060
    %2008 = vmatprep.subr.mxu0 0.0
    %2009 = vmatpush1.msra.mxu0 %v1059
    %2010 = vmatprep.subr.mxu0 0.0
    %2011 = vmatpush1.msra.mxu0 %v1058
    %2012 = vmatprep.subr.mxu0 0.0
    %2013 = vmatpush1.msra.mxu0 %v1057
    %2014 = vmatprep.subr.mxu0 0.0
    %2015 = vmatpush1.msra.mxu0 %v1056
    %2016 = vmatprep.subr.mxu0 0.0
    %2017 = vmatpush1.msra.mxu0 %v1055
    %2018 = vmatprep.subr.mxu0 0.0
    %2019 = vmatpush1.msra.mxu0 %v1054
    %2020 = vmatprep.subr.mxu0 0.0
    %2021 = vmatpush1.msra.mxu0 %v1053
    %2022 = vmatprep.subr.mxu0 0.0
    %2023 = vmatpush1.msra.mxu0 %v1052
    %2024 = vmatprep.subr.mxu0 0.0
    %2025 = vmatpush1.msra.mxu0 %v1051
    %2026 = vmatprep.subr.mxu0 0.0
    %2027 = vmatpush1.msra.mxu0 %v1050
    %2028 = vmatprep.subr.mxu0 0.0
    %2029 = vmatpush1.msra.mxu0 %v1049
    %2030 = vmatprep.subr.mxu0 0.0
    %2031 = vmatpush2.msra.mxu0 %v1080
    %2032 = vmatprep.subr.mxu0 0.0
    %2033 = vmatpush2.msra.mxu0 %v1079
    %2034 = vmatprep.subr.mxu0 0.0
    %2035 = vmatpush2.msra.mxu0 %v1078
    %2036 = vmatprep.subr.mxu0 0.0
    %2037 = vmatpush2.msra.mxu0 %v1077
    %2038 = vmatprep.subr.mxu0 0.0
    %2039 = vmatpush2.msra.mxu0 %v1076
    %2040 = vmatprep.subr.mxu0 0.0
    %2041 = vmatpush2.msra.mxu0 %v1075
    %2042 = vmatprep.subr.mxu0 0.0
    %2043 = vmatpush2.msra.mxu0 %v1074
    %2044 = vmatprep.subr.mxu0 0.0
    %2045 = vmatpush2.msra.mxu0 %v1073
    %2046 = vmatprep.subr.mxu0 0.0
    %2047 = vmatpush2.msra.mxu0 %v1072
    %2048 = vmatprep.subr.mxu0 0.0
    %2049 = vmatpush2.msra.mxu0 %v1071
    %2050 = vmatprep.subr.mxu0 0.0
    %2051 = vmatpush2.msra.mxu0 %v1070
    %2052 = vmatprep.subr.mxu0 0.0
    %2053 = vmatpush2.msra.mxu0 %v1069
    %2054 = vmatprep.subr.mxu0 0.0
    %2055 = vmatpush2.msra.mxu0 %v1068
    %2056 = vmatprep.subr.mxu0 0.0
    %2057 = vmatpush2.msra.mxu0 %v1067
    %2058 = vmatprep.subr.mxu0 0.0
    %2059 = vmatpush2.msra.mxu0 %v1066
    %2060 = vmatprep.subr.mxu0 0.0
    %2061 = vmatpush2.msra.mxu0 %v1065
    %2062 = vmatprep.mubr.f32.mxu0 %v460
    %2063 = vmatmul.mubr.f32.gmra.mxu0 %v459
    %v2064 = vpop.f32.mrf.mxu0
    %v2065 = vadd.f32 %v1920, %v2064
    %v2066 = vpop.f32.mrf.mxu0
    %2067 = vmatprep.mubr.f32.mxu0 %v468
    %2068 = vmatmul.mubr.f32.gmra.mxu0 %v467
    %v2069 = vpop.f32.mrf.mxu0
    %v2070 = vadd.f32 %v1925, %v2069
    %v2071 = vpop.f32.mrf.mxu0
    %2072 = vmatprep.mubr.f32.mxu0 %v476
    %2073 = vmatmul.mubr.f32.gmra.mxu0 %v475
    %v2074 = vpop.f32.mrf.mxu0
    %v2075 = vadd.f32 %v1930, %v2074
    %v2076 = vpop.f32.mrf.mxu0
    %2077 = vmatprep.mubr.f32.mxu0 %v484
    %2078 = vmatmul.mubr.f32.gmra.mxu0 %v483
    %v2079 = vpop.f32.mrf.mxu0
    %v2080 = vadd.f32 %v1935, %v2079
    %v2081 = vpop.f32.mrf.mxu0
    %2082 = vmatprep.mubr.f32.mxu0 %v492
    %2083 = vmatmul.mubr.f32.gmra.mxu0 %v491
    %v2084 = vpop.f32.mrf.mxu0
    %v2085 = vadd.f32 %v1940, %v2084
    %v2086 = vpop.f32.mrf.mxu0
    %2087 = vmatprep.mubr.f32.mxu0 %v500
    %2088 = vmatmul.mubr.f32.gmra.mxu0 %v499
    %v2089 = vpop.f32.mrf.mxu0
    %v2090 = vadd.f32 %v1945, %v2089
    %v2091 = vpop.f32.mrf.mxu0
    %2092 = vmatprep.mubr.f32.mxu0 %v508
    %2093 = vmatmul.mubr.f32.gmra.mxu0 %v507
    %v2094 = vpop.f32.mrf.mxu0
    %v2095 = vadd.f32 %v1950, %v2094
    %v2096 = vpop.f32.mrf.mxu0
    %2097 = vmatprep.mubr.f32.mxu0 %v516
    %2098 = vmatmul.mubr.f32.gmra.mxu0 %v515
    %v2099 = vpop.f32.mrf.mxu0
    %v2100 = vadd.f32 %v1955, %v2099
    %v2101 = vpop.f32.mrf.mxu0
    %2102 = vmatprep.mubr.f32.mxu0 %v524
    %2103 = vmatmul.mubr.f32.gmra.mxu0 %v523
    %v2104 = vpop.f32.mrf.mxu0
    %v2105 = vadd.f32 %v1960, %v2104
    %v2106 = vpop.f32.mrf.mxu0
    %2107 = vmatprep.mubr.f32.mxu0 %v532
    %2108 = vmatmul.mubr.f32.gmra.mxu0 %v531
    %v2109 = vpop.f32.mrf.mxu0
    %v2110 = vadd.f32 %v1965, %v2109
    %v2111 = vpop.f32.mrf.mxu0
    %2112 = vmatprep.mubr.f32.mxu0 %v540
    %2113 = vmatmul.mubr.f32.gmra.mxu0 %v539
    %v2114 = vpop.f32.mrf.mxu0
    %v2115 = vadd.f32 %v1970, %v2114
    %v2116 = vpop.f32.mrf.mxu0
    %2117 = vmatprep.mubr.f32.mxu0 %v548
    %2118 = vmatmul.mubr.f32.gmra.mxu0 %v547
    %v2119 = vpop.f32.mrf.mxu0
    %v2120 = vadd.f32 %v1975, %v2119
    %v2121 = vpop.f32.mrf.mxu0
    %2122 = vmatprep.mubr.f32.mxu0 %v556
    %2123 = vmatmul.mubr.f32.gmra.mxu0 %v555
    %v2124 = vpop.f32.mrf.mxu0
    %v2125 = vadd.f32 %v1980, %v2124
    %v2126 = vpop.f32.mrf.mxu0
    %2127 = vmatprep.mubr.f32.mxu0 %v564
    %2128 = vmatmul.mubr.f32.gmra.mxu0 %v563
    %v2129 = vpop.f32.mrf.mxu0
    %v2130 = vadd.f32 %v1985, %v2129
    %v2131 = vpop.f32.mrf.mxu0
    %2132 = vmatprep.mubr.f32.mxu0 %v572
    %2133 = vmatmul.mubr.f32.gmra.mxu0 %v571
    %v2134 = vpop.f32.mrf.mxu0
    %v2135 = vadd.f32 %v1990, %v2134
    %v2136 = vpop.f32.mrf.mxu0
    %2137 = vmatprep.mubr.f32.mxu0 %v580
    %2138 = vmatmul.mubr.f32.gmra.mxu0 %v579
    %v2139 = vpop.f32.mrf.mxu0
    %v2140 = vadd.f32 %v1995, %v2139
    %v2141 = vpop.f32.mrf.mxu0
    %2142 = vdwg.mxu0
    %2143 = vmatprep.subr.mxu0 0.0
    %2144 = vmatpush1.msra.mxu0 %v1096
    %2145 = vmatprep.subr.mxu0 0.0
    %2146 = vmatpush1.msra.mxu0 %v1095
    %2147 = vmatprep.subr.mxu0 0.0
    %2148 = vmatpush1.msra.mxu0 %v1094
    %2149 = vmatprep.subr.mxu0 0.0
    %2150 = vmatpush1.msra.mxu0 %v1093
    %2151 = vmatprep.subr.mxu0 0.0
    %2152 = vmatpush1.msra.mxu0 %v1092
    %2153 = vmatprep.subr.mxu0 0.0
    %2154 = vmatpush1.msra.mxu0 %v1091
    %2155 = vmatprep.subr.mxu0 0.0
    %2156 = vmatpush1.msra.mxu0 %v1090
    %2157 = vmatprep.subr.mxu0 0.0
    %2158 = vmatpush1.msra.mxu0 %v1089
    %2159 = vmatprep.subr.mxu0 0.0
    %2160 = vmatpush1.msra.mxu0 %v1088
    %2161 = vmatprep.subr.mxu0 0.0
    %2162 = vmatpush1.msra.mxu0 %v1087
    %2163 = vmatprep.subr.mxu0 0.0
    %2164 = vmatpush1.msra.mxu0 %v1086
    %2165 = vmatprep.subr.mxu0 0.0
    %2166 = vmatpush1.msra.mxu0 %v1085
    %2167 = vmatprep.subr.mxu0 0.0
    %2168 = vmatpush1.msra.mxu0 %v1084
    %2169 = vmatprep.subr.mxu0 0.0
    %2170 = vmatpush1.msra.mxu0 %v1083
    %2171 = vmatprep.subr.mxu0 0.0
    %2172 = vmatpush1.msra.mxu0 %v1082
    %2173 = vmatprep.subr.mxu0 0.0
    %2174 = vmatpush1.msra.mxu0 %v1081
    %2175 = vmatprep.subr.mxu0 0.0
    %2176 = vmatpush2.msra.mxu0 %v1112
    %2177 = vmatprep.subr.mxu0 0.0
    %2178 = vmatpush2.msra.mxu0 %v1111
    %2179 = vmatprep.subr.mxu0 0.0
    %2180 = vmatpush2.msra.mxu0 %v1110
    %2181 = vmatprep.subr.mxu0 0.0
    %2182 = vmatpush2.msra.mxu0 %v1109
    %2183 = vmatprep.subr.mxu0 0.0
    %2184 = vmatpush2.msra.mxu0 %v1108
    %2185 = vmatprep.subr.mxu0 0.0
    %2186 = vmatpush2.msra.mxu0 %v1107
    %2187 = vmatprep.subr.mxu0 0.0
    %2188 = vmatpush2.msra.mxu0 %v1106
    %2189 = vmatprep.subr.mxu0 0.0
    %2190 = vmatpush2.msra.mxu0 %v1105
    %2191 = vmatprep.subr.mxu0 0.0
    %2192 = vmatpush2.msra.mxu0 %v1104
    %2193 = vmatprep.subr.mxu0 0.0
    %2194 = vmatpush2.msra.mxu0 %v1103
    %2195 = vmatprep.subr.mxu0 0.0
    %2196 = vmatpush2.msra.mxu0 %v1102
    %2197 = vmatprep.subr.mxu0 0.0
    %2198 = vmatpush2.msra.mxu0 %v1101
    %2199 = vmatprep.subr.mxu0 0.0
    %2200 = vmatpush2.msra.mxu0 %v1100
    %2201 = vmatprep.subr.mxu0 0.0
    %2202 = vmatpush2.msra.mxu0 %v1099
    %2203 = vmatprep.subr.mxu0 0.0
    %2204 = vmatpush2.msra.mxu0 %v1098
    %2205 = vmatprep.subr.mxu0 0.0
    %2206 = vmatpush2.msra.mxu0 %v1097
    %2207 = vmatprep.mubr.f32.mxu0 %v462
    %2208 = vmatmul.mubr.f32.gmra.mxu0 %v461
    %v2209 = vpop.f32.mrf.mxu0
    %v2210 = vadd.f32 %v2065, %v2209
    %v2211 = vpop.f32.mrf.mxu0
    %2212 = vmatprep.mubr.f32.mxu0 %v470
    %2213 = vmatmul.mubr.f32.gmra.mxu0 %v469
    %v2214 = vpop.f32.mrf.mxu0
    %v2215 = vadd.f32 %v2070, %v2214
    %v2216 = vpop.f32.mrf.mxu0
    %2217 = vmatprep.mubr.f32.mxu0 %v478
    %2218 = vmatmul.mubr.f32.gmra.mxu0 %v477
    %v2219 = vpop.f32.mrf.mxu0
    %v2220 = vadd.f32 %v2075, %v2219
    %v2221 = vpop.f32.mrf.mxu0
    %2222 = vmatprep.mubr.f32.mxu0 %v486
    %2223 = vmatmul.mubr.f32.gmra.mxu0 %v485
    %v2224 = vpop.f32.mrf.mxu0
    %v2225 = vadd.f32 %v2080, %v2224
    %v2226 = vpop.f32.mrf.mxu0
    %2227 = vmatprep.mubr.f32.mxu0 %v494
    %2228 = vmatmul.mubr.f32.gmra.mxu0 %v493
    %v2229 = vpop.f32.mrf.mxu0
    %v2230 = vadd.f32 %v2085, %v2229
    %v2231 = vpop.f32.mrf.mxu0
    %2232 = vmatprep.mubr.f32.mxu0 %v502
    %2233 = vmatmul.mubr.f32.gmra.mxu0 %v501
    %v2234 = vpop.f32.mrf.mxu0
    %v2235 = vadd.f32 %v2090, %v2234
    %v2236 = vpop.f32.mrf.mxu0
    %2237 = vmatprep.mubr.f32.mxu0 %v510
    %2238 = vmatmul.mubr.f32.gmra.mxu0 %v509
    %v2239 = vpop.f32.mrf.mxu0
    %v2240 = vadd.f32 %v2095, %v2239
    %v2241 = vpop.f32.mrf.mxu0
    %2242 = vmatprep.mubr.f32.mxu0 %v518
    %2243 = vmatmul.mubr.f32.gmra.mxu0 %v517
    %v2244 = vpop.f32.mrf.mxu0
    %v2245 = vadd.f32 %v2100, %v2244
    %v2246 = vpop.f32.mrf.mxu0
    %2247 = vmatprep.mubr.f32.mxu0 %v526
    %2248 = vmatmul.mubr.f32.gmra.mxu0 %v525
    %v2249 = vpop.f32.mrf.mxu0
    %v2250 = vadd.f32 %v2105, %v2249
    %v2251 = vpop.f32.mrf.mxu0
    %2252 = vmatprep.mubr.f32.mxu0 %v534
    %2253 = vmatmul.mubr.f32.gmra.mxu0 %v533
    %v2254 = vpop.f32.mrf.mxu0
    %v2255 = vadd.f32 %v2110, %v2254
    %v2256 = vpop.f32.mrf.mxu0
    %2257 = vmatprep.mubr.f32.mxu0 %v542
    %2258 = vmatmul.mubr.f32.gmra.mxu0 %v541
    %v2259 = vpop.f32.mrf.mxu0
    %v2260 = vadd.f32 %v2115, %v2259
    %v2261 = vpop.f32.mrf.mxu0
    %2262 = vmatprep.mubr.f32.mxu0 %v550
    %2263 = vmatmul.mubr.f32.gmra.mxu0 %v549
    %v2264 = vpop.f32.mrf.mxu0
    %v2265 = vadd.f32 %v2120, %v2264
    %v2266 = vpop.f32.mrf.mxu0
    %2267 = vmatprep.mubr.f32.mxu0 %v558
    %2268 = vmatmul.mubr.f32.gmra.mxu0 %v557
    %v2269 = vpop.f32.mrf.mxu0
    %v2270 = vadd.f32 %v2125, %v2269
    %v2271 = vpop.f32.mrf.mxu0
    %2272 = vmatprep.mubr.f32.mxu0 %v566
    %2273 = vmatmul.mubr.f32.gmra.mxu0 %v565
    %v2274 = vpop.f32.mrf.mxu0
    %v2275 = vadd.f32 %v2130, %v2274
    %v2276 = vpop.f32.mrf.mxu0
    %2277 = vmatprep.mubr.f32.mxu0 %v574
    %2278 = vmatmul.mubr.f32.gmra.mxu0 %v573
    %v2279 = vpop.f32.mrf.mxu0
    %v2280 = vadd.f32 %v2135, %v2279
    %v2281 = vpop.f32.mrf.mxu0
    %2282 = vmatprep.mubr.f32.mxu0 %v582
    %2283 = vmatmul.mubr.f32.gmra.mxu0 %v581
    %v2284 = vpop.f32.mrf.mxu0
    %v2285 = vadd.f32 %v2140, %v2284
    %v2286 = vpop.f32.mrf.mxu0
    %2287 = vdwg.mxu0
    %2288 = vmatprep.subr.mxu0 0.0
    %2289 = vmatpush1.msra.mxu0 %v1128
    %2290 = vmatprep.subr.mxu0 0.0
    %2291 = vmatpush1.msra.mxu0 %v1127
    %2292 = vmatprep.subr.mxu0 0.0
    %2293 = vmatpush1.msra.mxu0 %v1126
    %2294 = vmatprep.subr.mxu0 0.0
    %2295 = vmatpush1.msra.mxu0 %v1125
    %2296 = vmatprep.subr.mxu0 0.0
    %2297 = vmatpush1.msra.mxu0 %v1124
    %2298 = vmatprep.subr.mxu0 0.0
    %2299 = vmatpush1.msra.mxu0 %v1123
    %2300 = vmatprep.subr.mxu0 0.0
    %2301 = vmatpush1.msra.mxu0 %v1122
    %2302 = vmatprep.subr.mxu0 0.0
    %2303 = vmatpush1.msra.mxu0 %v1121
    %2304 = vmatprep.subr.mxu0 0.0
    %2305 = vmatpush1.msra.mxu0 %v1120
    %2306 = vmatprep.subr.mxu0 0.0
    %2307 = vmatpush1.msra.mxu0 %v1119
    %2308 = vmatprep.subr.mxu0 0.0
    %2309 = vmatpush1.msra.mxu0 %v1118
    %2310 = vmatprep.subr.mxu0 0.0
    %2311 = vmatpush1.msra.mxu0 %v1117
    %2312 = vmatprep.subr.mxu0 0.0
    %2313 = vmatpush1.msra.mxu0 %v1116
    %2314 = vmatprep.subr.mxu0 0.0
    %2315 = vmatpush1.msra.mxu0 %v1115
    %2316 = vmatprep.subr.mxu0 0.0
    %2317 = vmatpush1.msra.mxu0 %v1114
    %2318 = vmatprep.subr.mxu0 0.0
    %2319 = vmatpush1.msra.mxu0 %v1113
    %2320 = vmatprep.subr.mxu0 0.0
    %2321 = vmatpush2.msra.mxu0 %v1144
    %2322 = vmatprep.subr.mxu0 0.0
    %2323 = vmatpush2.msra.mxu0 %v1143
    %2324 = vmatprep.subr.mxu0 0.0
    %2325 = vmatpush2.msra.mxu0 %v1142
    %2326 = vmatprep.subr.mxu0 0.0
    %2327 = vmatpush2.msra.mxu0 %v1141
    %2328 = vmatprep.subr.mxu0 0.0
    %2329 = vmatpush2.msra.mxu0 %v1140
    %2330 = vmatprep.subr.mxu0 0.0
    %2331 = vmatpush2.msra.mxu0 %v1139
    %2332 = vmatprep.subr.mxu0 0.0
    %2333 = vmatpush2.msra.mxu0 %v1138
    %2334 = vmatprep.subr.mxu0 0.0
    %2335 = vmatpush2.msra.mxu0 %v1137
    %2336 = vmatprep.subr.mxu0 0.0
    %2337 = vmatpush2.msra.mxu0 %v1136
    %2338 = vmatprep.subr.mxu0 0.0
    %2339 = vmatpush2.msra.mxu0 %v1135
    %2340 = vmatprep.subr.mxu0 0.0
    %2341 = vmatpush2.msra.mxu0 %v1134
    %2342 = vmatprep.subr.mxu0 0.0
    %2343 = vmatpush2.msra.mxu0 %v1133
    %2344 = vmatprep.subr.mxu0 0.0
    %2345 = vmatpush2.msra.mxu0 %v1132
    %2346 = vmatprep.subr.mxu0 0.0
    %2347 = vmatpush2.msra.mxu0 %v1131
    %2348 = vmatprep.subr.mxu0 0.0
    %2349 = vmatpush2.msra.mxu0 %v1130
    %2350 = vmatprep.subr.mxu0 0.0
    %2351 = vmatpush2.msra.mxu0 %v1129
    %2352 = vmatprep.mubr.f32.mxu0 %v464
    %2353 = vmatmul.mubr.f32.gmra.mxu0 %v463
    %v2354 = vpop.f32.mrf.mxu0
    %v2355 = vadd.f32 %v2210, %v2354
    %v2356 = vpop.f32.mrf.mxu0
    %2357 = vmatprep.mubr.f32.mxu0 %v472
    %2358 = vmatmul.mubr.f32.gmra.mxu0 %v471
    %v2359 = vpop.f32.mrf.mxu0
    %v2360 = vadd.f32 %v2215, %v2359
    %v2361 = vpop.f32.mrf.mxu0
    %2362 = vmatprep.mubr.f32.mxu0 %v480
    %2363 = vmatmul.mubr.f32.gmra.mxu0 %v479
    %v2364 = vpop.f32.mrf.mxu0
    %v2365 = vadd.f32 %v2220, %v2364
    %v2366 = vpop.f32.mrf.mxu0
    %2367 = vmatprep.mubr.f32.mxu0 %v488
    %2368 = vmatmul.mubr.f32.gmra.mxu0 %v487
    %v2369 = vpop.f32.mrf.mxu0
    %v2370 = vadd.f32 %v2225, %v2369
    %v2371 = vpop.f32.mrf.mxu0
    %2372 = vmatprep.mubr.f32.mxu0 %v496
    %2373 = vmatmul.mubr.f32.gmra.mxu0 %v495
    %v2374 = vpop.f32.mrf.mxu0
    %v2375 = vadd.f32 %v2230, %v2374
    %v2376 = vpop.f32.mrf.mxu0
    %2377 = vmatprep.mubr.f32.mxu0 %v504
    %2378 = vmatmul.mubr.f32.gmra.mxu0 %v503
    %v2379 = vpop.f32.mrf.mxu0
    %v2380 = vadd.f32 %v2235, %v2379
    %v2381 = vpop.f32.mrf.mxu0
    %2382 = vmatprep.mubr.f32.mxu0 %v512
    %2383 = vmatmul.mubr.f32.gmra.mxu0 %v511
    %v2384 = vpop.f32.mrf.mxu0
    %v2385 = vadd.f32 %v2240, %v2384
    %v2386 = vpop.f32.mrf.mxu0
    %2387 = vmatprep.mubr.f32.mxu0 %v520
    %2388 = vmatmul.mubr.f32.gmra.mxu0 %v519
    %v2389 = vpop.f32.mrf.mxu0
    %v2390 = vadd.f32 %v2245, %v2389
    %v2391 = vpop.f32.mrf.mxu0
    %2392 = vmatprep.mubr.f32.mxu0 %v528
    %2393 = vmatmul.mubr.f32.gmra.mxu0 %v527
    %v2394 = vpop.f32.mrf.mxu0
    %v2395 = vadd.f32 %v2250, %v2394
    %v2396 = vpop.f32.mrf.mxu0
    %2397 = vmatprep.mubr.f32.mxu0 %v536
    %2398 = vmatmul.mubr.f32.gmra.mxu0 %v535
    %v2399 = vpop.f32.mrf.mxu0
    %v2400 = vadd.f32 %v2255, %v2399
    %v2401 = vpop.f32.mrf.mxu0
    %2402 = vmatprep.mubr.f32.mxu0 %v544
    %2403 = vmatmul.mubr.f32.gmra.mxu0 %v543
    %v2404 = vpop.f32.mrf.mxu0
    %v2405 = vadd.f32 %v2260, %v2404
    %v2406 = vpop.f32.mrf.mxu0
    %2407 = vmatprep.mubr.f32.mxu0 %v552
    %2408 = vmatmul.mubr.f32.gmra.mxu0 %v551
    %v2409 = vpop.f32.mrf.mxu0
    %v2410 = vadd.f32 %v2265, %v2409
    %v2411 = vpop.f32.mrf.mxu0
    %2412 = vmatprep.mubr.f32.mxu0 %v560
    %2413 = vmatmul.mubr.f32.gmra.mxu0 %v559
    %v2414 = vpop.f32.mrf.mxu0
    %v2415 = vadd.f32 %v2270, %v2414
    %v2416 = vpop.f32.mrf.mxu0
    %2417 = vmatprep.mubr.f32.mxu0 %v568
    %2418 = vmatmul.mubr.f32.gmra.mxu0 %v567
    %v2419 = vpop.f32.mrf.mxu0
    %v2420 = vadd.f32 %v2275, %v2419
    %v2421 = vpop.f32.mrf.mxu0
    %2422 = vmatprep.mubr.f32.mxu0 %v576
    %2423 = vmatmul.mubr.f32.gmra.mxu0 %v575
    %v2424 = vpop.f32.mrf.mxu0
    %v2425 = vadd.f32 %v2280, %v2424
    %v2426 = vpop.f32.mrf.mxu0
    %2427 = vmatprep.mubr.f32.mxu0 %v584
    %2428 = vmatmul.mubr.f32.gmra.mxu0 %v583
    %v2429 = vpop.f32.mrf.mxu0
    %v2430 = vadd.f32 %v2285, %v2429
    %v2431 = vpop.f32.mrf.mxu0
    %2432 = vdwg.mxu0
    %v2433 = vld [vmem:[#allocation11] sm:$0xff]
    %v2434 = vld [vmem:[#allocation11 + $0x8] sm:$0xff]
    %v2435 = vld [vmem:[#allocation11 + $0x10] sm:$0xff]
    %v2436 = vld [vmem:[#allocation11 + $0x18] sm:$0xff]
    %v2437 = vld [vmem:[#allocation11 + $0x20] sm:$0xff]
    %v2438 = vld [vmem:[#allocation11 + $0x28] sm:$0xff]
    %v2439 = vld [vmem:[#allocation11 + $0x30] sm:$0xff]
    %v2440 = vld [vmem:[#allocation11 + $0x38] sm:$0xff]
    %v2441 = vld [vmem:[#allocation11 + $0x40] sm:$0xff]
    %v2442 = vld [vmem:[#allocation11 + $0x48] sm:$0xff]
    %v2443 = vld [vmem:[#allocation11 + $0x50] sm:$0xff]
    %v2444 = vld [vmem:[#allocation11 + $0x58] sm:$0xff]
    %v2445 = vld [vmem:[#allocation11 + $0x60] sm:$0xff]
    %v2446 = vld [vmem:[#allocation11 + $0x68] sm:$0xff]
    %v2447 = vld [vmem:[#allocation11 + $0x70] sm:$0xff]
    %v2448 = vld [vmem:[#allocation11 + $0x78] sm:$0xff]
    %2449 = vmatprep.subr.mxu0 0.0
    %2450 = vmatpush1.msra.mxu0 %v2448
    %2451 = vmatprep.subr.mxu0 0.0
    %2452 = vmatpush1.msra.mxu0 %v2447
    %2453 = vmatprep.subr.mxu0 0.0
    %2454 = vmatpush1.msra.mxu0 %v2446
    %2455 = vmatprep.subr.mxu0 0.0
    %2456 = vmatpush1.msra.mxu0 %v2445
    %2457 = vmatprep.subr.mxu0 0.0
    %2458 = vmatpush1.msra.mxu0 %v2444
    %2459 = vmatprep.subr.mxu0 0.0
    %2460 = vmatpush1.msra.mxu0 %v2443
    %2461 = vmatprep.subr.mxu0 0.0
    %2462 = vmatpush1.msra.mxu0 %v2442
    %2463 = vmatprep.subr.mxu0 0.0
    %2464 = vmatpush1.msra.mxu0 %v2441
    %2465 = vmatprep.subr.mxu0 0.0
    %2466 = vmatpush1.msra.mxu0 %v2440
    %2467 = vmatprep.subr.mxu0 0.0
    %2468 = vmatpush1.msra.mxu0 %v2439
    %2469 = vmatprep.subr.mxu0 0.0
    %2470 = vmatpush1.msra.mxu0 %v2438
    %2471 = vmatprep.subr.mxu0 0.0
    %2472 = vmatpush1.msra.mxu0 %v2437
    %2473 = vmatprep.subr.mxu0 0.0
    %2474 = vmatpush1.msra.mxu0 %v2436
    %2475 = vmatprep.subr.mxu0 0.0
    %2476 = vmatpush1.msra.mxu0 %v2435
    %2477 = vmatprep.subr.mxu0 0.0
    %2478 = vmatpush1.msra.mxu0 %v2434
    %2479 = vmatprep.subr.mxu0 0.0
    %2480 = vmatpush1.msra.mxu0 %v2433
    %2481 = vmatprep.subr.mxu0 0.0
    %2482 = vmatpush2.msra.mxu0 0.0
    %2483 = vmatprep.subr.mxu0 0.0
    %2484 = vmatpush2.msra.mxu0 0.0
    %2485 = vmatprep.subr.mxu0 0.0
    %2486 = vmatpush2.msra.mxu0 0.0
    %2487 = vmatprep.subr.mxu0 0.0
    %2488 = vmatpush2.msra.mxu0 0.0
    %2489 = vmatprep.subr.mxu0 0.0
    %2490 = vmatpush2.msra.mxu0 0.0
    %2491 = vmatprep.subr.mxu0 0.0
    %2492 = vmatpush2.msra.mxu0 0.0
    %2493 = vmatprep.subr.mxu0 0.0
    %2494 = vmatpush2.msra.mxu0 0.0
    %2495 = vmatprep.subr.mxu0 0.0
    %2496 = vmatpush2.msra.mxu0 0.0
    %2497 = vmatprep.subr.mxu0 0.0
    %2498 = vmatpush2.msra.mxu0 0.0
    %2499 = vmatprep.subr.mxu0 0.0
    %2500 = vmatpush2.msra.mxu0 0.0
    %2501 = vmatprep.subr.mxu0 0.0
    %2502 = vmatpush2.msra.mxu0 0.0
    %2503 = vmatprep.subr.mxu0 0.0
    %2504 = vmatpush2.msra.mxu0 0.0
    %2505 = vmatprep.subr.mxu0 0.0
    %2506 = vmatpush2.msra.mxu0 0.0
    %2507 = vmatprep.subr.mxu0 0.0
    %2508 = vmatpush2.msra.mxu0 0.0
    %2509 = vmatprep.subr.mxu0 0.0
    %2510 = vmatpush2.msra.mxu0 0.0
    %2511 = vmatprep.subr.mxu0 0.0
    %2512 = vmatpush2.msra.mxu0 0.0
    %2513 = vmatprep.mubr.f32.mxu0 0.0
    %2514 = vmatmul.mubr.f32.gmra.mxu0 %v1001
    %v2515 = vpop.f32.mrf.mxu0
    %v2516 = vadd.f32 0.0, %v2515
    %v2517 = vpop.f32.mrf.mxu0
    %2518 = vmatprep.mubr.f32.mxu0 0.0
    %2519 = vmatmul.mubr.f32.gmra.mxu0 %v1002
    %v2520 = vpop.f32.mrf.mxu0
    %v2521 = vadd.f32 0.0, %v2520
    %v2522 = vpop.f32.mrf.mxu0
    %2523 = vmatprep.mubr.f32.mxu0 0.0
    %2524 = vmatmul.mubr.f32.gmra.mxu0 %v1003
    %v2525 = vpop.f32.mrf.mxu0
    %v2526 = vadd.f32 0.0, %v2525
    %v2527 = vpop.f32.mrf.mxu0
    %2528 = vmatprep.mubr.f32.mxu0 0.0
    %2529 = vmatmul.mubr.f32.gmra.mxu0 %v1004
    %v2530 = vpop.f32.mrf.mxu0
    %v2531 = vadd.f32 0.0, %v2530
    %v2532 = vpop.f32.mrf.mxu0
    %2533 = vmatprep.mubr.f32.mxu0 0.0
    %2534 = vmatmul.mubr.f32.gmra.mxu0 %v1005
    %v2535 = vpop.f32.mrf.mxu0
    %v2536 = vadd.f32 0.0, %v2535
    %v2537 = vpop.f32.mrf.mxu0
    %2538 = vmatprep.mubr.f32.mxu0 0.0
    %2539 = vmatmul.mubr.f32.gmra.mxu0 %v1006
    %v2540 = vpop.f32.mrf.mxu0
    %v2541 = vadd.f32 0.0, %v2540
    %v2542 = vpop.f32.mrf.mxu0
    %2543 = vmatprep.mubr.f32.mxu0 0.0
    %2544 = vmatmul.mubr.f32.gmra.mxu0 %v1007
    %v2545 = vpop.f32.mrf.mxu0
    %v2546 = vadd.f32 0.0, %v2545
    %v2547 = vpop.f32.mrf.mxu0
    %2548 = vmatprep.mubr.f32.mxu0 0.0
    %2549 = vmatmul.mubr.f32.gmra.mxu0 %v1008
    %v2550 = vpop.f32.mrf.mxu0
    %v2551 = vadd.f32 0.0, %v2550
    %v2552 = vpop.f32.mrf.mxu0
    %2553 = vmatprep.mubr.f32.mxu0 0.0
    %2554 = vmatmul.mubr.f32.gmra.mxu0 %v1009
    %v2555 = vpop.f32.mrf.mxu0
    %v2556 = vadd.f32 0.0, %v2555
    %v2557 = vpop.f32.mrf.mxu0
    %2558 = vmatprep.mubr.f32.mxu0 0.0
    %2559 = vmatmul.mubr.f32.gmra.mxu0 %v1010
    %v2560 = vpop.f32.mrf.mxu0
    %v2561 = vadd.f32 0.0, %v2560
    %v2562 = vpop.f32.mrf.mxu0
    %2563 = vmatprep.mubr.f32.mxu0 0.0
    %2564 = vmatmul.mubr.f32.gmra.mxu0 %v1011
    %v2565 = vpop.f32.mrf.mxu0
    %v2566 = vadd.f32 0.0, %v2565
    %v2567 = vpop.f32.mrf.mxu0
    %2568 = vmatprep.mubr.f32.mxu0 0.0
    %2569 = vmatmul.mubr.f32.gmra.mxu0 %v1012
    %v2570 = vpop.f32.mrf.mxu0
    %v2571 = vadd.f32 0.0, %v2570
    %v2572 = vpop.f32.mrf.mxu0
    %2573 = vmatprep.mubr.f32.mxu0 0.0
    %2574 = vmatmul.mubr.f32.gmra.mxu0 %v1013
    %v2575 = vpop.f32.mrf.mxu0
    %v2576 = vadd.f32 0.0, %v2575
    %v2577 = vpop.f32.mrf.mxu0
    %2578 = vmatprep.mubr.f32.mxu0 0.0
    %2579 = vmatmul.mubr.f32.gmra.mxu0 %v1014
    %v2580 = vpop.f32.mrf.mxu0
    %v2581 = vadd.f32 0.0, %v2580
    %v2582 = vpop.f32.mrf.mxu0
    %2583 = vmatprep.mubr.f32.mxu0 0.0
    %2584 = vmatmul.mubr.f32.gmra.mxu0 %v1015
    %v2585 = vpop.f32.mrf.mxu0
    %v2586 = vadd.f32 0.0, %v2585
    %v2587 = vpop.f32.mrf.mxu0
    %2588 = vmatprep.mubr.f32.mxu0 0.0
    %2589 = vmatmul.mubr.f32.gmra.mxu0 %v1016
    %v2590 = vpop.f32.mrf.mxu0
    %v2591 = vadd.f32 0.0, %v2590
    %v2592 = vpop.f32.mrf.mxu0
    %2593 = vdwg.mxu0
    %v2594 = vadd.f32 %v2355, %v2516
    %v2595 = vadd.f32 %v2360, %v2521
    %v2596 = vadd.f32 %v2365, %v2526
    %v2597 = vadd.f32 %v2370, %v2531
    %v2598 = vadd.f32 %v2375, %v2536
    %v2599 = vadd.f32 %v2380, %v2541
    %v2600 = vadd.f32 %v2385, %v2546
    %v2601 = vadd.f32 %v2390, %v2551
    %v2602 = vadd.f32 %v2395, %v2556
    %v2603 = vadd.f32 %v2400, %v2561
    %v2604 = vadd.f32 %v2405, %v2566
    %v2605 = vadd.f32 %v2410, %v2571
    %v2606 = vadd.f32 %v2415, %v2576
    %v2607 = vadd.f32 %v2420, %v2581
    %v2608 = vadd.f32 %v2425, %v2586
    %v2609 = vadd.f32 %v2430, %v2591
    %v2610 = vld [vmem:[#allocation13] sm:$0x1]
    %v2611 = vlaneseq
    %v2612 = vshrl.u32 %v2611, 7
    %v2613 = vsub.s32 0, %v2612
    %v2614 = vrot.slane %v2610, %v2613
    %v2615 = vadd.f32 %v2594, %v2614
    %v2616 = vadd.f32 %v2595, %v2614
    %v2617 = vadd.f32 %v2596, %v2614
    %v2618 = vadd.f32 %v2597, %v2614
    %v2619 = vadd.f32 %v2598, %v2614
    %v2620 = vadd.f32 %v2599, %v2614
    %v2621 = vadd.f32 %v2600, %v2614
    %v2622 = vadd.f32 %v2601, %v2614
    %v2623 = vadd.f32 %v2602, %v2614
    %v2624 = vadd.f32 %v2603, %v2614
    %v2625 = vadd.f32 %v2604, %v2614
    %v2626 = vadd.f32 %v2605, %v2614
    %v2627 = vadd.f32 %v2606, %v2614
    %v2628 = vadd.f32 %v2607, %v2614
    %v2629 = vadd.f32 %v2608, %v2614
    %v2630 = vadd.f32 %v2609, %v2614
    %v2631 = vmax.f32 %v2615, 0.0
    %v2632 = vmax.f32 %v2616, 0.0
    %v2633 = vmax.f32 %v2617, 0.0
    %v2634 = vmax.f32 %v2618, 0.0
    %v2635 = vmax.f32 %v2619, 0.0
    %v2636 = vmax.f32 %v2620, 0.0
    %v2637 = vmax.f32 %v2621, 0.0
    %v2638 = vmax.f32 %v2622, 0.0
    %v2639 = vmax.f32 %v2623, 0.0
    %v2640 = vmax.f32 %v2624, 0.0
    %v2641 = vmax.f32 %v2625, 0.0
    %v2642 = vmax.f32 %v2626, 0.0
    %v2643 = vmax.f32 %v2627, 0.0
    %v2644 = vmax.f32 %v2628, 0.0
    %v2645 = vmax.f32 %v2629, 0.0
    %v2646 = vmax.f32 %v2630, 0.0
    %v2647 = vld [vmem:[#allocation14] sm:$0xff]
    %v2648 = vld [vmem:[#allocation14 + $0x8] sm:$0xff]
    %v2649 = vld [vmem:[#allocation14 + $0x10] sm:$0xff]
    %v2650 = vld [vmem:[#allocation14 + $0x18] sm:$0xff]
    %v2651 = vld [vmem:[#allocation14 + $0x20] sm:$0xff]
    %v2652 = vld [vmem:[#allocation14 + $0x28] sm:$0xff]
    %v2653 = vld [vmem:[#allocation14 + $0x30] sm:$0xff]
    %v2654 = vld [vmem:[#allocation14 + $0x38] sm:$0xff]
    %v2655 = vld [vmem:[#allocation14 + $0x40] sm:$0xff]
    %v2656 = vld [vmem:[#allocation14 + $0x48] sm:$0xff]
    %v2657 = vld [vmem:[#allocation14 + $0x50] sm:$0xff]
    %v2658 = vld [vmem:[#allocation14 + $0x58] sm:$0xff]
    %v2659 = vld [vmem:[#allocation14 + $0x60] sm:$0xff]
    %v2660 = vld [vmem:[#allocation14 + $0x68] sm:$0xff]
    %v2661 = vld [vmem:[#allocation14 + $0x70] sm:$0xff]
    %v2662 = vld [vmem:[#allocation14 + $0x78] sm:$0xff]
    %v2663 = vld [vmem:[#allocation16] sm:$0x1]
    %v2664 = vlaneseq
    %v2665 = vshrl.u32 %v2664, 7
    %v2666 = vsub.s32 0, %v2665
    %v2667 = vrot.slane %v2663, %v2666
    %2668 = vmatprep.subr.mxu0 0.0
    %2669 = vmatpush1.msra.mxu0 %v2662
    %2670 = vmatprep.subr.mxu0 0.0
    %2671 = vmatpush1.msra.mxu0 %v2661
    %2672 = vmatprep.subr.mxu0 0.0
    %2673 = vmatpush1.msra.mxu0 %v2660
    %2674 = vmatprep.subr.mxu0 0.0
    %2675 = vmatpush1.msra.mxu0 %v2659
    %2676 = vmatprep.subr.mxu0 0.0
    %2677 = vmatpush1.msra.mxu0 %v2658
    %2678 = vmatprep.subr.mxu0 0.0
    %2679 = vmatpush1.msra.mxu0 %v2657
    %2680 = vmatprep.subr.mxu0 0.0
    %2681 = vmatpush1.msra.mxu0 %v2656
    %2682 = vmatprep.subr.mxu0 0.0
    %2683 = vmatpush1.msra.mxu0 %v2655
    %2684 = vmatprep.subr.mxu0 0.0
    %2685 = vmatpush1.msra.mxu0 %v2654
    %2686 = vmatprep.subr.mxu0 0.0
    %2687 = vmatpush1.msra.mxu0 %v2653
    %2688 = vmatprep.subr.mxu0 0.0
    %2689 = vmatpush1.msra.mxu0 %v2652
    %2690 = vmatprep.subr.mxu0 0.0
    %2691 = vmatpush1.msra.mxu0 %v2651
    %2692 = vmatprep.subr.mxu0 0.0
    %2693 = vmatpush1.msra.mxu0 %v2650
    %2694 = vmatprep.subr.mxu0 0.0
    %2695 = vmatpush1.msra.mxu0 %v2649
    %2696 = vmatprep.subr.mxu0 0.0
    %2697 = vmatpush1.msra.mxu0 %v2648
    %2698 = vmatprep.subr.mxu0 0.0
    %2699 = vmatpush1.msra.mxu0 %v2647
    %2700 = vmatprep.subr.mxu0 0.0
    %2701 = vmatpush2.msra.mxu0 0.0
    %2702 = vmatprep.subr.mxu0 0.0
    %2703 = vmatpush2.msra.mxu0 0.0
    %2704 = vmatprep.subr.mxu0 0.0
    %2705 = vmatpush2.msra.mxu0 0.0
    %2706 = vmatprep.subr.mxu0 0.0
    %2707 = vmatpush2.msra.mxu0 0.0
    %2708 = vmatprep.subr.mxu0 0.0
    %2709 = vmatpush2.msra.mxu0 0.0
    %2710 = vmatprep.subr.mxu0 0.0
    %2711 = vmatpush2.msra.mxu0 0.0
    %2712 = vmatprep.subr.mxu0 0.0
    %2713 = vmatpush2.msra.mxu0 0.0
    %2714 = vmatprep.subr.mxu0 0.0
    %2715 = vmatpush2.msra.mxu0 0.0
    %2716 = vmatprep.subr.mxu0 0.0
    %2717 = vmatpush2.msra.mxu0 0.0
    %2718 = vmatprep.subr.mxu0 0.0
    %2719 = vmatpush2.msra.mxu0 0.0
    %2720 = vmatprep.subr.mxu0 0.0
    %2721 = vmatpush2.msra.mxu0 0.0
    %2722 = vmatprep.subr.mxu0 0.0
    %2723 = vmatpush2.msra.mxu0 0.0
    %2724 = vmatprep.subr.mxu0 0.0
    %2725 = vmatpush2.msra.mxu0 0.0
    %2726 = vmatprep.subr.mxu0 0.0
    %2727 = vmatpush2.msra.mxu0 0.0
    %2728 = vmatprep.subr.mxu0 0.0
    %2729 = vmatpush2.msra.mxu0 0.0
    %2730 = vmatprep.subr.mxu0 0.0
    %2731 = vmatpush2.msra.mxu0 0.0
    %2732 = vmatprep.mubr.f32.mxu0 0.0
    %2733 = vmatmul.mubr.f32.gmra.mxu0 %v2631
    %v2734 = vpop.f32.mrf.mxu0
    %v2735 = vadd.f32 %v2667, %v2734
    %v2736 = vpop.f32.mrf.mxu0
    %2737 = vmatprep.mubr.f32.mxu0 0.0
    %2738 = vmatmul.mubr.f32.gmra.mxu0 %v2632
    %v2739 = vpop.f32.mrf.mxu0
    %v2740 = vadd.f32 %v2667, %v2739
    %v2741 = vpop.f32.mrf.mxu0
    %2742 = vmatprep.mubr.f32.mxu0 0.0
    %2743 = vmatmul.mubr.f32.gmra.mxu0 %v2633
    %v2744 = vpop.f32.mrf.mxu0
    %v2745 = vadd.f32 %v2667, %v2744
    %v2746 = vpop.f32.mrf.mxu0
    %2747 = vmatprep.mubr.f32.mxu0 0.0
    %2748 = vmatmul.mubr.f32.gmra.mxu0 %v2634
    %v2749 = vpop.f32.mrf.mxu0
    %v2750 = vadd.f32 %v2667, %v2749
    %v2751 = vpop.f32.mrf.mxu0
    %2752 = vmatprep.mubr.f32.mxu0 0.0
    %2753 = vmatmul.mubr.f32.gmra.mxu0 %v2635
    %v2754 = vpop.f32.mrf.mxu0
    %v2755 = vadd.f32 %v2667, %v2754
    %v2756 = vpop.f32.mrf.mxu0
    %2757 = vmatprep.mubr.f32.mxu0 0.0
    %2758 = vmatmul.mubr.f32.gmra.mxu0 %v2636
    %v2759 = vpop.f32.mrf.mxu0
    %v2760 = vadd.f32 %v2667, %v2759
    %v2761 = vpop.f32.mrf.mxu0
    %2762 = vmatprep.mubr.f32.mxu0 0.0
    %2763 = vmatmul.mubr.f32.gmra.mxu0 %v2637
    %v2764 = vpop.f32.mrf.mxu0
    %v2765 = vadd.f32 %v2667, %v2764
    %v2766 = vpop.f32.mrf.mxu0
    %2767 = vmatprep.mubr.f32.mxu0 0.0
    %2768 = vmatmul.mubr.f32.gmra.mxu0 %v2638
    %v2769 = vpop.f32.mrf.mxu0
    %v2770 = vadd.f32 %v2667, %v2769
    %v2771 = vpop.f32.mrf.mxu0
    %2772 = vmatprep.mubr.f32.mxu0 0.0
    %2773 = vmatmul.mubr.f32.gmra.mxu0 %v2639
    %v2774 = vpop.f32.mrf.mxu0
    %v2775 = vadd.f32 %v2667, %v2774
    %v2776 = vpop.f32.mrf.mxu0
    %2777 = vmatprep.mubr.f32.mxu0 0.0
    %2778 = vmatmul.mubr.f32.gmra.mxu0 %v2640
    %v2779 = vpop.f32.mrf.mxu0
    %v2780 = vadd.f32 %v2667, %v2779
    %v2781 = vpop.f32.mrf.mxu0
    %2782 = vmatprep.mubr.f32.mxu0 0.0
    %2783 = vmatmul.mubr.f32.gmra.mxu0 %v2641
    %v2784 = vpop.f32.mrf.mxu0
    %v2785 = vadd.f32 %v2667, %v2784
    %v2786 = vpop.f32.mrf.mxu0
    %2787 = vmatprep.mubr.f32.mxu0 0.0
    %2788 = vmatmul.mubr.f32.gmra.mxu0 %v2642
    %v2789 = vpop.f32.mrf.mxu0
    %v2790 = vadd.f32 %v2667, %v2789
    %v2791 = vpop.f32.mrf.mxu0
    %2792 = vmatprep.mubr.f32.mxu0 0.0
    %2793 = vmatmul.mubr.f32.gmra.mxu0 %v2643
    %v2794 = vpop.f32.mrf.mxu0
    %v2795 = vadd.f32 %v2667, %v2794
    %v2796 = vpop.f32.mrf.mxu0
    %2797 = vmatprep.mubr.f32.mxu0 0.0
    %2798 = vmatmul.mubr.f32.gmra.mxu0 %v2644
    %v2799 = vpop.f32.mrf.mxu0
    %v2800 = vadd.f32 %v2667, %v2799
    %v2801 = vpop.f32.mrf.mxu0
    %2802 = vmatprep.mubr.f32.mxu0 0.0
    %2803 = vmatmul.mubr.f32.gmra.mxu0 %v2645
    %v2804 = vpop.f32.mrf.mxu0
    %v2805 = vadd.f32 %v2667, %v2804
    %v2806 = vpop.f32.mrf.mxu0
    %2807 = vmatprep.mubr.f32.mxu0 0.0
    %2808 = vmatmul.mubr.f32.gmra.mxu0 %v2646
    %v2809 = vpop.f32.mrf.mxu0
    %v2810 = vadd.f32 %v2667, %v2809
    %v2811 = vpop.f32.mrf.mxu0
    %2812 = vdwg.mxu0
    %v2813 = vmax.f32 %v2735, 0.0
    %v2814 = vmax.f32 %v2740, 0.0
    %v2815 = vmax.f32 %v2745, 0.0
    %v2816 = vmax.f32 %v2750, 0.0
    %v2817 = vmax.f32 %v2755, 0.0
    %v2818 = vmax.f32 %v2760, 0.0
    %v2819 = vmax.f32 %v2765, 0.0
    %v2820 = vmax.f32 %v2770, 0.0
    %v2821 = vmax.f32 %v2775, 0.0
    %v2822 = vmax.f32 %v2780, 0.0
    %v2823 = vmax.f32 %v2785, 0.0
    %v2824 = vmax.f32 %v2790, 0.0
    %v2825 = vmax.f32 %v2795, 0.0
    %v2826 = vmax.f32 %v2800, 0.0
    %v2827 = vmax.f32 %v2805, 0.0
    %v2828 = vmax.f32 %v2810, 0.0
    %v2829 = vld [vmem:[#allocation17] sm:$0x1]
    %v2830 = vlaneseq
    %v2831 = vshrl.u32 %v2830, 7
    %v2832 = vsub.s32 0, %v2831
    %v2833 = vrot.slane %v2829, %v2832
    %v2834 = vmul.f32 %v2813, %v2833
    %v2835 = vmul.f32 %v2814, %v2833
    %v2836 = vmul.f32 %v2815, %v2833
    %v2837 = vmul.f32 %v2816, %v2833
    %v2838 = vmul.f32 %v2817, %v2833
    %v2839 = vmul.f32 %v2818, %v2833
    %v2840 = vmul.f32 %v2819, %v2833
    %v2841 = vmul.f32 %v2820, %v2833
    %v2842 = vmul.f32 %v2821, %v2833
    %v2843 = vmul.f32 %v2822, %v2833
    %v2844 = vmul.f32 %v2823, %v2833
    %v2845 = vmul.f32 %v2824, %v2833
    %v2846 = vmul.f32 %v2825, %v2833
    %v2847 = vmul.f32 %v2826, %v2833
    %v2848 = vmul.f32 %v2827, %v2833
    %v2849 = vmul.f32 %v2828, %v2833
    %2850 = vadd.xlane.f32.xlu0 %v2834
    %v2851 = vpop.xlane.xlu0 %2850
    %2852 = vadd.xlane.f32.xlu0 %v2835
    %v2853 = vpop.xlane.xlu0 %2852
    %2854 = vadd.xlane.f32.xlu0 %v2836
    %v2855 = vpop.xlane.xlu0 %2854
    %2856 = vadd.xlane.f32.xlu0 %v2837
    %v2857 = vpop.xlane.xlu0 %2856
    %2858 = vadd.xlane.f32.xlu0 %v2838
    %v2859 = vpop.xlane.xlu0 %2858
    %2860 = vadd.xlane.f32.xlu0 %v2839
    %v2861 = vpop.xlane.xlu0 %2860
    %2862 = vadd.xlane.f32.xlu0 %v2840
    %v2863 = vpop.xlane.xlu0 %2862
    %2864 = vadd.xlane.f32.xlu0 %v2841
    %v2865 = vpop.xlane.xlu0 %2864
    %2866 = vadd.xlane.f32.xlu0 %v2842
    %v2867 = vpop.xlane.xlu0 %2866
    %2868 = vadd.xlane.f32.xlu0 %v2843
    %v2869 = vpop.xlane.xlu0 %2868
    %2870 = vadd.xlane.f32.xlu0 %v2844
    %v2871 = vpop.xlane.xlu0 %2870
    %2872 = vadd.xlane.f32.xlu0 %v2845
    %v2873 = vpop.xlane.xlu0 %2872
    %2874 = vadd.xlane.f32.xlu0 %v2846
    %v2875 = vpop.xlane.xlu0 %2874
    %2876 = vadd.xlane.f32.xlu0 %v2847
    %v2877 = vpop.xlane.xlu0 %2876
    %2878 = vadd.xlane.f32.xlu0 %v2848
    %v2879 = vpop.xlane.xlu0 %2878
    %2880 = vadd.xlane.f32.xlu0 %v2849
    %v2881 = vpop.xlane.xlu0 %2880
    %v2882 = vld [vmem:[%s10] sm:$0x1]
    %2884 = vset.pattern.permute.xlu0 0
    %2885 = vperm.xlu0 %2884, %v2882
    %v2886 = vpop.permute.xlu0 %2885
    %v2887 = vlaneseq
    %v2888 = vshrl.u32 %v2887, 7
    %v2889 = vsub.s32 0, %v2888
    %v2890 = vrot.slane %v2886, %v2889
    %v2892 = vadd.f32 %v2851, %v2890
    %v2893 = vadd.f32 %v2853, %v2890
    %v2894 = vadd.f32 %v2855, %v2890
    %v2895 = vadd.f32 %v2857, %v2890
    %v2896 = vadd.f32 %v2859, %v2890
    %v2897 = vadd.f32 %v2861, %v2890
    %v2898 = vadd.f32 %v2863, %v2890
    %v2899 = vadd.f32 %v2865, %v2890
    %v2900 = vadd.f32 %v2867, %v2890
    %v2901 = vadd.f32 %v2869, %v2890
    %v2902 = vadd.f32 %v2871, %v2890
    %v2903 = vadd.f32 %v2873, %v2890
    %v2904 = vadd.f32 %v2875, %v2890
    %v2905 = vadd.f32 %v2877, %v2890
    %v2906 = vadd.f32 %v2879, %v2890
    %v2907 = vadd.f32 %v2881, %v2890
    %s2908 = scalar_lea.vmem [#allocation8], 1024
    %v2909 = vld [vmem:[%s2908] sm:$0xff]
    %v2910 = vld [vmem:[%s2908 + $0x8] sm:$0xff]
    %v2911 = vld [vmem:[%s2908 + $0x10] sm:$0xff]
    %v2912 = vld [vmem:[%s2908 + $0x18] sm:$0xff]
    %v2913 = vld [vmem:[%s2908 + $0x20] sm:$0xff]
    %v2914 = vld [vmem:[%s2908 + $0x28] sm:$0xff]
    %v2915 = vld [vmem:[%s2908 + $0x30] sm:$0xff]
    %v2916 = vld [vmem:[%s2908 + $0x38] sm:$0xff]
    %v2917 = vld [vmem:[%s2908 + $0x40] sm:$0xff]
    %v2918 = vld [vmem:[%s2908 + $0x48] sm:$0xff]
    %v2919 = vld [vmem:[%s2908 + $0x50] sm:$0xff]
    %v2920 = vld [vmem:[%s2908 + $0x58] sm:$0xff]
    %v2921 = vld [vmem:[%s2908 + $0x60] sm:$0xff]
    %v2922 = vld [vmem:[%s2908 + $0x68] sm:$0xff]
    %v2923 = vld [vmem:[%s2908 + $0x70] sm:$0xff]
    %v2924 = vld [vmem:[%s2908 + $0x78] sm:$0xff]
    %v2925 = vld [vmem:[%s2908 + $0x80] sm:$0xff]
    %v2926 = vld [vmem:[%s2908 + $0x88] sm:$0xff]
    %v2927 = vld [vmem:[%s2908 + $0x90] sm:$0xff]
    %v2928 = vld [vmem:[%s2908 + $0x98] sm:$0xff]
    %v2929 = vld [vmem:[%s2908 + $0xa0] sm:$0xff]
    %v2930 = vld [vmem:[%s2908 + $0xa8] sm:$0xff]
    %v2931 = vld [vmem:[%s2908 + $0xb0] sm:$0xff]
    %v2932 = vld [vmem:[%s2908 + $0xb8] sm:$0xff]
    %v2933 = vld [vmem:[%s2908 + $0xc0] sm:$0xff]
    %v2934 = vld [vmem:[%s2908 + $0xc8] sm:$0xff]
    %v2935 = vld [vmem:[%s2908 + $0xd0] sm:$0xff]
    %v2936 = vld [vmem:[%s2908 + $0xd8] sm:$0xff]
    %v2937 = vld [vmem:[%s2908 + $0xe0] sm:$0xff]
    %v2938 = vld [vmem:[%s2908 + $0xe8] sm:$0xff]
    %v2939 = vld [vmem:[%s2908 + $0xf0] sm:$0xff]
    %v2940 = vld [vmem:[%s2908 + $0xf8] sm:$0xff]
    %v2941 = vld [vmem:[%s2908 + $0x100] sm:$0xff]
    %v2942 = vld [vmem:[%s2908 + $0x108] sm:$0xff]
    %v2943 = vld [vmem:[%s2908 + $0x110] sm:$0xff]
    %v2944 = vld [vmem:[%s2908 + $0x118] sm:$0xff]
    %v2945 = vld [vmem:[%s2908 + $0x120] sm:$0xff]
    %v2946 = vld [vmem:[%s2908 + $0x128] sm:$0xff]
    %v2947 = vld [vmem:[%s2908 + $0x130] sm:$0xff]
    %v2948 = vld [vmem:[%s2908 + $0x138] sm:$0xff]
    %v2949 = vld [vmem:[%s2908 + $0x140] sm:$0xff]
    %v2950 = vld [vmem:[%s2908 + $0x148] sm:$0xff]
    %v2951 = vld [vmem:[%s2908 + $0x150] sm:$0xff]
    %v2952 = vld [vmem:[%s2908 + $0x158] sm:$0xff]
    %v2953 = vld [vmem:[%s2908 + $0x160] sm:$0xff]
    %v2954 = vld [vmem:[%s2908 + $0x168] sm:$0xff]
    %v2955 = vld [vmem:[%s2908 + $0x170] sm:$0xff]
    %v2956 = vld [vmem:[%s2908 + $0x178] sm:$0xff]
    %v2957 = vld [vmem:[%s2908 + $0x180] sm:$0xff]
    %v2958 = vld [vmem:[%s2908 + $0x188] sm:$0xff]
    %v2959 = vld [vmem:[%s2908 + $0x190] sm:$0xff]
    %v2960 = vld [vmem:[%s2908 + $0x198] sm:$0xff]
    %v2961 = vld [vmem:[%s2908 + $0x1a0] sm:$0xff]
    %v2962 = vld [vmem:[%s2908 + $0x1a8] sm:$0xff]
    %v2963 = vld [vmem:[%s2908 + $0x1b0] sm:$0xff]
    %v2964 = vld [vmem:[%s2908 + $0x1b8] sm:$0xff]
    %v2965 = vld [vmem:[%s2908 + $0x1c0] sm:$0xff]
    %v2966 = vld [vmem:[%s2908 + $0x1c8] sm:$0xff]
    %v2967 = vld [vmem:[%s2908 + $0x1d0] sm:$0xff]
    %v2968 = vld [vmem:[%s2908 + $0x1d8] sm:$0xff]
    %v2969 = vld [vmem:[%s2908 + $0x1e0] sm:$0xff]
    %v2970 = vld [vmem:[%s2908 + $0x1e8] sm:$0xff]
    %v2971 = vld [vmem:[%s2908 + $0x1f0] sm:$0xff]
    %v2972 = vld [vmem:[%s2908 + $0x1f8] sm:$0xff]
    %v2973 = vld [vmem:[%s2908 + $0x200] sm:$0xff]
    %v2974 = vld [vmem:[%s2908 + $0x208] sm:$0xff]
    %v2975 = vld [vmem:[%s2908 + $0x210] sm:$0xff]
    %v2976 = vld [vmem:[%s2908 + $0x218] sm:$0xff]
    %v2977 = vld [vmem:[%s2908 + $0x220] sm:$0xff]
    %v2978 = vld [vmem:[%s2908 + $0x228] sm:$0xff]
    %v2979 = vld [vmem:[%s2908 + $0x230] sm:$0xff]
    %v2980 = vld [vmem:[%s2908 + $0x238] sm:$0xff]
    %v2981 = vld [vmem:[%s2908 + $0x240] sm:$0xff]
    %v2982 = vld [vmem:[%s2908 + $0x248] sm:$0xff]
    %v2983 = vld [vmem:[%s2908 + $0x250] sm:$0xff]
    %v2984 = vld [vmem:[%s2908 + $0x258] sm:$0xff]
    %v2985 = vld [vmem:[%s2908 + $0x260] sm:$0xff]
    %v2986 = vld [vmem:[%s2908 + $0x268] sm:$0xff]
    %v2987 = vld [vmem:[%s2908 + $0x270] sm:$0xff]
    %v2988 = vld [vmem:[%s2908 + $0x278] sm:$0xff]
    %v2989 = vld [vmem:[%s2908 + $0x280] sm:$0xff]
    %v2990 = vld [vmem:[%s2908 + $0x288] sm:$0xff]
    %v2991 = vld [vmem:[%s2908 + $0x290] sm:$0xff]
    %v2992 = vld [vmem:[%s2908 + $0x298] sm:$0xff]
    %v2993 = vld [vmem:[%s2908 + $0x2a0] sm:$0xff]
    %v2994 = vld [vmem:[%s2908 + $0x2a8] sm:$0xff]
    %v2995 = vld [vmem:[%s2908 + $0x2b0] sm:$0xff]
    %v2996 = vld [vmem:[%s2908 + $0x2b8] sm:$0xff]
    %v2997 = vld [vmem:[%s2908 + $0x2c0] sm:$0xff]
    %v2998 = vld [vmem:[%s2908 + $0x2c8] sm:$0xff]
    %v2999 = vld [vmem:[%s2908 + $0x2d0] sm:$0xff]
    %v3000 = vld [vmem:[%s2908 + $0x2d8] sm:$0xff]
    %v3001 = vld [vmem:[%s2908 + $0x2e0] sm:$0xff]
    %v3002 = vld [vmem:[%s2908 + $0x2e8] sm:$0xff]
    %v3003 = vld [vmem:[%s2908 + $0x2f0] sm:$0xff]
    %v3004 = vld [vmem:[%s2908 + $0x2f8] sm:$0xff]
    %v3005 = vld [vmem:[%s2908 + $0x300] sm:$0xff]
    %v3006 = vld [vmem:[%s2908 + $0x308] sm:$0xff]
    %v3007 = vld [vmem:[%s2908 + $0x310] sm:$0xff]
    %v3008 = vld [vmem:[%s2908 + $0x318] sm:$0xff]
    %v3009 = vld [vmem:[%s2908 + $0x320] sm:$0xff]
    %v3010 = vld [vmem:[%s2908 + $0x328] sm:$0xff]
    %v3011 = vld [vmem:[%s2908 + $0x330] sm:$0xff]
    %v3012 = vld [vmem:[%s2908 + $0x338] sm:$0xff]
    %v3013 = vld [vmem:[%s2908 + $0x340] sm:$0xff]
    %v3014 = vld [vmem:[%s2908 + $0x348] sm:$0xff]
    %v3015 = vld [vmem:[%s2908 + $0x350] sm:$0xff]
    %v3016 = vld [vmem:[%s2908 + $0x358] sm:$0xff]
    %v3017 = vld [vmem:[%s2908 + $0x360] sm:$0xff]
    %v3018 = vld [vmem:[%s2908 + $0x368] sm:$0xff]
    %v3019 = vld [vmem:[%s2908 + $0x370] sm:$0xff]
    %v3020 = vld [vmem:[%s2908 + $0x378] sm:$0xff]
    %v3021 = vld [vmem:[%s2908 + $0x380] sm:$0xff]
    %v3022 = vld [vmem:[%s2908 + $0x388] sm:$0xff]
    %v3023 = vld [vmem:[%s2908 + $0x390] sm:$0xff]
    %v3024 = vld [vmem:[%s2908 + $0x398] sm:$0xff]
    %v3025 = vld [vmem:[%s2908 + $0x3a0] sm:$0xff]
    %v3026 = vld [vmem:[%s2908 + $0x3a8] sm:$0xff]
    %v3027 = vld [vmem:[%s2908 + $0x3b0] sm:$0xff]
    %v3028 = vld [vmem:[%s2908 + $0x3b8] sm:$0xff]
    %v3029 = vld [vmem:[%s2908 + $0x3c0] sm:$0xff]
    %v3030 = vld [vmem:[%s2908 + $0x3c8] sm:$0xff]
    %v3031 = vld [vmem:[%s2908 + $0x3d0] sm:$0xff]
    %v3032 = vld [vmem:[%s2908 + $0x3d8] sm:$0xff]
    %v3033 = vld [vmem:[%s2908 + $0x3e0] sm:$0xff]
    %v3034 = vld [vmem:[%s2908 + $0x3e8] sm:$0xff]
    %v3035 = vld [vmem:[%s2908 + $0x3f0] sm:$0xff]
    %v3036 = vld [vmem:[%s2908 + $0x3f8] sm:$0xff]
    %s3037 = scalar_lea.vmem [#allocation10], 1024
    %v3038 = vld [vmem:[%s3037] sm:$0xff]
    %v3039 = vld [vmem:[%s3037 + $0x8] sm:$0xff]
    %v3040 = vld [vmem:[%s3037 + $0x10] sm:$0xff]
    %v3041 = vld [vmem:[%s3037 + $0x18] sm:$0xff]
    %v3042 = vld [vmem:[%s3037 + $0x20] sm:$0xff]
    %v3043 = vld [vmem:[%s3037 + $0x28] sm:$0xff]
    %v3044 = vld [vmem:[%s3037 + $0x30] sm:$0xff]
    %v3045 = vld [vmem:[%s3037 + $0x38] sm:$0xff]
    %v3046 = vld [vmem:[%s3037 + $0x40] sm:$0xff]
    %v3047 = vld [vmem:[%s3037 + $0x48] sm:$0xff]
    %v3048 = vld [vmem:[%s3037 + $0x50] sm:$0xff]
    %v3049 = vld [vmem:[%s3037 + $0x58] sm:$0xff]
    %v3050 = vld [vmem:[%s3037 + $0x60] sm:$0xff]
    %v3051 = vld [vmem:[%s3037 + $0x68] sm:$0xff]
    %v3052 = vld [vmem:[%s3037 + $0x70] sm:$0xff]
    %v3053 = vld [vmem:[%s3037 + $0x78] sm:$0xff]
    %v3054 = vld [vmem:[%s3037 + $0x80] sm:$0xff]
    %v3055 = vld [vmem:[%s3037 + $0x88] sm:$0xff]
    %v3056 = vld [vmem:[%s3037 + $0x90] sm:$0xff]
    %v3057 = vld [vmem:[%s3037 + $0x98] sm:$0xff]
    %v3058 = vld [vmem:[%s3037 + $0xa0] sm:$0xff]
    %v3059 = vld [vmem:[%s3037 + $0xa8] sm:$0xff]
    %v3060 = vld [vmem:[%s3037 + $0xb0] sm:$0xff]
    %v3061 = vld [vmem:[%s3037 + $0xb8] sm:$0xff]
    %v3062 = vld [vmem:[%s3037 + $0xc0] sm:$0xff]
    %v3063 = vld [vmem:[%s3037 + $0xc8] sm:$0xff]
    %v3064 = vld [vmem:[%s3037 + $0xd0] sm:$0xff]
    %v3065 = vld [vmem:[%s3037 + $0xd8] sm:$0xff]
    %v3066 = vld [vmem:[%s3037 + $0xe0] sm:$0xff]
    %v3067 = vld [vmem:[%s3037 + $0xe8] sm:$0xff]
    %v3068 = vld [vmem:[%s3037 + $0xf0] sm:$0xff]
    %v3069 = vld [vmem:[%s3037 + $0xf8] sm:$0xff]
    %v3070 = vld [vmem:[%s3037 + $0x100] sm:$0xff]
    %v3071 = vld [vmem:[%s3037 + $0x108] sm:$0xff]
    %v3072 = vld [vmem:[%s3037 + $0x110] sm:$0xff]
    %v3073 = vld [vmem:[%s3037 + $0x118] sm:$0xff]
    %v3074 = vld [vmem:[%s3037 + $0x120] sm:$0xff]
    %v3075 = vld [vmem:[%s3037 + $0x128] sm:$0xff]
    %v3076 = vld [vmem:[%s3037 + $0x130] sm:$0xff]
    %v3077 = vld [vmem:[%s3037 + $0x138] sm:$0xff]
    %v3078 = vld [vmem:[%s3037 + $0x140] sm:$0xff]
    %v3079 = vld [vmem:[%s3037 + $0x148] sm:$0xff]
    %v3080 = vld [vmem:[%s3037 + $0x150] sm:$0xff]
    %v3081 = vld [vmem:[%s3037 + $0x158] sm:$0xff]
    %v3082 = vld [vmem:[%s3037 + $0x160] sm:$0xff]
    %v3083 = vld [vmem:[%s3037 + $0x168] sm:$0xff]
    %v3084 = vld [vmem:[%s3037 + $0x170] sm:$0xff]
    %v3085 = vld [vmem:[%s3037 + $0x178] sm:$0xff]
    %v3086 = vld [vmem:[%s3037 + $0x180] sm:$0xff]
    %v3087 = vld [vmem:[%s3037 + $0x188] sm:$0xff]
    %v3088 = vld [vmem:[%s3037 + $0x190] sm:$0xff]
    %v3089 = vld [vmem:[%s3037 + $0x198] sm:$0xff]
    %v3090 = vld [vmem:[%s3037 + $0x1a0] sm:$0xff]
    %v3091 = vld [vmem:[%s3037 + $0x1a8] sm:$0xff]
    %v3092 = vld [vmem:[%s3037 + $0x1b0] sm:$0xff]
    %v3093 = vld [vmem:[%s3037 + $0x1b8] sm:$0xff]
    %v3094 = vld [vmem:[%s3037 + $0x1c0] sm:$0xff]
    %v3095 = vld [vmem:[%s3037 + $0x1c8] sm:$0xff]
    %v3096 = vld [vmem:[%s3037 + $0x1d0] sm:$0xff]
    %v3097 = vld [vmem:[%s3037 + $0x1d8] sm:$0xff]
    %v3098 = vld [vmem:[%s3037 + $0x1e0] sm:$0xff]
    %v3099 = vld [vmem:[%s3037 + $0x1e8] sm:$0xff]
    %v3100 = vld [vmem:[%s3037 + $0x1f0] sm:$0xff]
    %v3101 = vld [vmem:[%s3037 + $0x1f8] sm:$0xff]
    %v3102 = vld [vmem:[%s3037 + $0x200] sm:$0xff]
    %v3103 = vld [vmem:[%s3037 + $0x208] sm:$0xff]
    %v3104 = vld [vmem:[%s3037 + $0x210] sm:$0xff]
    %v3105 = vld [vmem:[%s3037 + $0x218] sm:$0xff]
    %v3106 = vld [vmem:[%s3037 + $0x220] sm:$0xff]
    %v3107 = vld [vmem:[%s3037 + $0x228] sm:$0xff]
    %v3108 = vld [vmem:[%s3037 + $0x230] sm:$0xff]
    %v3109 = vld [vmem:[%s3037 + $0x238] sm:$0xff]
    %v3110 = vld [vmem:[%s3037 + $0x240] sm:$0xff]
    %v3111 = vld [vmem:[%s3037 + $0x248] sm:$0xff]
    %v3112 = vld [vmem:[%s3037 + $0x250] sm:$0xff]
    %v3113 = vld [vmem:[%s3037 + $0x258] sm:$0xff]
    %v3114 = vld [vmem:[%s3037 + $0x260] sm:$0xff]
    %v3115 = vld [vmem:[%s3037 + $0x268] sm:$0xff]
    %v3116 = vld [vmem:[%s3037 + $0x270] sm:$0xff]
    %v3117 = vld [vmem:[%s3037 + $0x278] sm:$0xff]
    %v3118 = vld [vmem:[%s3037 + $0x280] sm:$0xff]
    %v3119 = vld [vmem:[%s3037 + $0x288] sm:$0xff]
    %v3120 = vld [vmem:[%s3037 + $0x290] sm:$0xff]
    %v3121 = vld [vmem:[%s3037 + $0x298] sm:$0xff]
    %v3122 = vld [vmem:[%s3037 + $0x2a0] sm:$0xff]
    %v3123 = vld [vmem:[%s3037 + $0x2a8] sm:$0xff]
    %v3124 = vld [vmem:[%s3037 + $0x2b0] sm:$0xff]
    %v3125 = vld [vmem:[%s3037 + $0x2b8] sm:$0xff]
    %v3126 = vld [vmem:[%s3037 + $0x2c0] sm:$0xff]
    %v3127 = vld [vmem:[%s3037 + $0x2c8] sm:$0xff]
    %v3128 = vld [vmem:[%s3037 + $0x2d0] sm:$0xff]
    %v3129 = vld [vmem:[%s3037 + $0x2d8] sm:$0xff]
    %v3130 = vld [vmem:[%s3037 + $0x2e0] sm:$0xff]
    %v3131 = vld [vmem:[%s3037 + $0x2e8] sm:$0xff]
    %v3132 = vld [vmem:[%s3037 + $0x2f0] sm:$0xff]
    %v3133 = vld [vmem:[%s3037 + $0x2f8] sm:$0xff]
    %v3134 = vld [vmem:[%s3037 + $0x300] sm:$0xff]
    %v3135 = vld [vmem:[%s3037 + $0x308] sm:$0xff]
    %v3136 = vld [vmem:[%s3037 + $0x310] sm:$0xff]
    %v3137 = vld [vmem:[%s3037 + $0x318] sm:$0xff]
    %v3138 = vld [vmem:[%s3037 + $0x320] sm:$0xff]
    %v3139 = vld [vmem:[%s3037 + $0x328] sm:$0xff]
    %v3140 = vld [vmem:[%s3037 + $0x330] sm:$0xff]
    %v3141 = vld [vmem:[%s3037 + $0x338] sm:$0xff]
    %v3142 = vld [vmem:[%s3037 + $0x340] sm:$0xff]
    %v3143 = vld [vmem:[%s3037 + $0x348] sm:$0xff]
    %v3144 = vld [vmem:[%s3037 + $0x350] sm:$0xff]
    %v3145 = vld [vmem:[%s3037 + $0x358] sm:$0xff]
    %v3146 = vld [vmem:[%s3037 + $0x360] sm:$0xff]
    %v3147 = vld [vmem:[%s3037 + $0x368] sm:$0xff]
    %v3148 = vld [vmem:[%s3037 + $0x370] sm:$0xff]
    %v3149 = vld [vmem:[%s3037 + $0x378] sm:$0xff]
    %v3150 = vld [vmem:[%s3037 + $0x380] sm:$0xff]
    %v3151 = vld [vmem:[%s3037 + $0x388] sm:$0xff]
    %v3152 = vld [vmem:[%s3037 + $0x390] sm:$0xff]
    %v3153 = vld [vmem:[%s3037 + $0x398] sm:$0xff]
    %v3154 = vld [vmem:[%s3037 + $0x3a0] sm:$0xff]
    %v3155 = vld [vmem:[%s3037 + $0x3a8] sm:$0xff]
    %v3156 = vld [vmem:[%s3037 + $0x3b0] sm:$0xff]
    %v3157 = vld [vmem:[%s3037 + $0x3b8] sm:$0xff]
    %v3158 = vld [vmem:[%s3037 + $0x3c0] sm:$0xff]
    %v3159 = vld [vmem:[%s3037 + $0x3c8] sm:$0xff]
    %v3160 = vld [vmem:[%s3037 + $0x3d0] sm:$0xff]
    %v3161 = vld [vmem:[%s3037 + $0x3d8] sm:$0xff]
    %v3162 = vld [vmem:[%s3037 + $0x3e0] sm:$0xff]
    %v3163 = vld [vmem:[%s3037 + $0x3e8] sm:$0xff]
    %v3164 = vld [vmem:[%s3037 + $0x3f0] sm:$0xff]
    %v3165 = vld [vmem:[%s3037 + $0x3f8] sm:$0xff]
    %3166 = vmatprep.subr.mxu0 0.0
    %3167 = vmatpush1.msra.mxu0 %v3053
    %3168 = vmatprep.subr.mxu0 0.0
    %3169 = vmatpush1.msra.mxu0 %v3052
    %3170 = vmatprep.subr.mxu0 0.0
    %3171 = vmatpush1.msra.mxu0 %v3051
    %3172 = vmatprep.subr.mxu0 0.0
    %3173 = vmatpush1.msra.mxu0 %v3050
    %3174 = vmatprep.subr.mxu0 0.0
    %3175 = vmatpush1.msra.mxu0 %v3049
    %3176 = vmatprep.subr.mxu0 0.0
    %3177 = vmatpush1.msra.mxu0 %v3048
    %3178 = vmatprep.subr.mxu0 0.0
    %3179 = vmatpush1.msra.mxu0 %v3047
    %3180 = vmatprep.subr.mxu0 0.0
    %3181 = vmatpush1.msra.mxu0 %v3046
    %3182 = vmatprep.subr.mxu0 0.0
    %3183 = vmatpush1.msra.mxu0 %v3045
    %3184 = vmatprep.subr.mxu0 0.0
    %3185 = vmatpush1.msra.mxu0 %v3044
    %3186 = vmatprep.subr.mxu0 0.0
    %3187 = vmatpush1.msra.mxu0 %v3043
    %3188 = vmatprep.subr.mxu0 0.0
    %3189 = vmatpush1.msra.mxu0 %v3042
    %3190 = vmatprep.subr.mxu0 0.0
    %3191 = vmatpush1.msra.mxu0 %v3041
    %3192 = vmatprep.subr.mxu0 0.0
    %3193 = vmatpush1.msra.mxu0 %v3040
    %3194 = vmatprep.subr.mxu0 0.0
    %3195 = vmatpush1.msra.mxu0 %v3039
    %3196 = vmatprep.subr.mxu0 0.0
    %3197 = vmatpush1.msra.mxu0 %v3038
    %3198 = vmatprep.subr.mxu0 0.0
    %3199 = vmatpush2.msra.mxu0 %v3069
    %3200 = vmatprep.subr.mxu0 0.0
    %3201 = vmatpush2.msra.mxu0 %v3068
    %3202 = vmatprep.subr.mxu0 0.0
    %3203 = vmatpush2.msra.mxu0 %v3067
    %3204 = vmatprep.subr.mxu0 0.0
    %3205 = vmatpush2.msra.mxu0 %v3066
    %3206 = vmatprep.subr.mxu0 0.0
    %3207 = vmatpush2.msra.mxu0 %v3065
    %3208 = vmatprep.subr.mxu0 0.0
    %3209 = vmatpush2.msra.mxu0 %v3064
    %3210 = vmatprep.subr.mxu0 0.0
    %3211 = vmatpush2.msra.mxu0 %v3063
    %3212 = vmatprep.subr.mxu0 0.0
    %3213 = vmatpush2.msra.mxu0 %v3062
    %3214 = vmatprep.subr.mxu0 0.0
    %3215 = vmatpush2.msra.mxu0 %v3061
    %3216 = vmatprep.subr.mxu0 0.0
    %3217 = vmatpush2.msra.mxu0 %v3060
    %3218 = vmatprep.subr.mxu0 0.0
    %3219 = vmatpush2.msra.mxu0 %v3059
    %3220 = vmatprep.subr.mxu0 0.0
    %3221 = vmatpush2.msra.mxu0 %v3058
    %3222 = vmatprep.subr.mxu0 0.0
    %3223 = vmatpush2.msra.mxu0 %v3057
    %3224 = vmatprep.subr.mxu0 0.0
    %3225 = vmatpush2.msra.mxu0 %v3056
    %3226 = vmatprep.subr.mxu0 0.0
    %3227 = vmatpush2.msra.mxu0 %v3055
    %3228 = vmatprep.subr.mxu0 0.0
    %3229 = vmatpush2.msra.mxu0 %v3054
    %3230 = vmatprep.mubr.f32.mxu0 %v874
    %3231 = vmatmul.mubr.f32.gmra.mxu0 %v873
    %v3232 = vpop.f32.mrf.mxu0
    %v3233 = vadd.f32 0.0, %v3232
    %v3234 = vpop.f32.mrf.mxu0
    %3235 = vmatprep.mubr.f32.mxu0 %v882
    %3236 = vmatmul.mubr.f32.gmra.mxu0 %v881
    %v3237 = vpop.f32.mrf.mxu0
    %v3238 = vadd.f32 0.0, %v3237
    %v3239 = vpop.f32.mrf.mxu0
    %3240 = vmatprep.mubr.f32.mxu0 %v890
    %3241 = vmatmul.mubr.f32.gmra.mxu0 %v889
    %v3242 = vpop.f32.mrf.mxu0
    %v3243 = vadd.f32 0.0, %v3242
    %v3244 = vpop.f32.mrf.mxu0
    %3245 = vmatprep.mubr.f32.mxu0 %v898
    %3246 = vmatmul.mubr.f32.gmra.mxu0 %v897
    %v3247 = vpop.f32.mrf.mxu0
    %v3248 = vadd.f32 0.0, %v3247
    %v3249 = vpop.f32.mrf.mxu0
    %3250 = vmatprep.mubr.f32.mxu0 %v906
    %3251 = vmatmul.mubr.f32.gmra.mxu0 %v905
    %v3252 = vpop.f32.mrf.mxu0
    %v3253 = vadd.f32 0.0, %v3252
    %v3254 = vpop.f32.mrf.mxu0
    %3255 = vmatprep.mubr.f32.mxu0 %v914
    %3256 = vmatmul.mubr.f32.gmra.mxu0 %v913
    %v3257 = vpop.f32.mrf.mxu0
    %v3258 = vadd.f32 0.0, %v3257
    %v3259 = vpop.f32.mrf.mxu0
    %3260 = vmatprep.mubr.f32.mxu0 %v922
    %3261 = vmatmul.mubr.f32.gmra.mxu0 %v921
    %v3262 = vpop.f32.mrf.mxu0
    %v3263 = vadd.f32 0.0, %v3262
    %v3264 = vpop.f32.mrf.mxu0
    %3265 = vmatprep.mubr.f32.mxu0 %v930
    %3266 = vmatmul.mubr.f32.gmra.mxu0 %v929
    %v3267 = vpop.f32.mrf.mxu0
    %v3268 = vadd.f32 0.0, %v3267
    %v3269 = vpop.f32.mrf.mxu0
    %3270 = vmatprep.mubr.f32.mxu0 %v938
    %3271 = vmatmul.mubr.f32.gmra.mxu0 %v937
    %v3272 = vpop.f32.mrf.mxu0
    %v3273 = vadd.f32 0.0, %v3272
    %v3274 = vpop.f32.mrf.mxu0
    %3275 = vmatprep.mubr.f32.mxu0 %v946
    %3276 = vmatmul.mubr.f32.gmra.mxu0 %v945
    %v3277 = vpop.f32.mrf.mxu0
    %v3278 = vadd.f32 0.0, %v3277
    %v3279 = vpop.f32.mrf.mxu0
    %3280 = vmatprep.mubr.f32.mxu0 %v954
    %3281 = vmatmul.mubr.f32.gmra.mxu0 %v953
    %v3282 = vpop.f32.mrf.mxu0
    %v3283 = vadd.f32 0.0, %v3282
    %v3284 = vpop.f32.mrf.mxu0
    %3285 = vmatprep.mubr.f32.mxu0 %v962
    %3286 = vmatmul.mubr.f32.gmra.mxu0 %v961
    %v3287 = vpop.f32.mrf.mxu0
    %v3288 = vadd.f32 0.0, %v3287
    %v3289 = vpop.f32.mrf.mxu0
    %3290 = vmatprep.mubr.f32.mxu0 %v970
    %3291 = vmatmul.mubr.f32.gmra.mxu0 %v969
    %v3292 = vpop.f32.mrf.mxu0
    %v3293 = vadd.f32 0.0, %v3292
    %v3294 = vpop.f32.mrf.mxu0
    %3295 = vmatprep.mubr.f32.mxu0 %v978
    %3296 = vmatmul.mubr.f32.gmra.mxu0 %v977
    %v3297 = vpop.f32.mrf.mxu0
    %v3298 = vadd.f32 0.0, %v3297
    %v3299 = vpop.f32.mrf.mxu0
    %3300 = vmatprep.mubr.f32.mxu0 %v986
    %3301 = vmatmul.mubr.f32.gmra.mxu0 %v985
    %v3302 = vpop.f32.mrf.mxu0
    %v3303 = vadd.f32 0.0, %v3302
    %v3304 = vpop.f32.mrf.mxu0
    %3305 = vmatprep.mubr.f32.mxu0 %v994
    %3306 = vmatmul.mubr.f32.gmra.mxu0 %v993
    %v3307 = vpop.f32.mrf.mxu0
    %v3308 = vadd.f32 0.0, %v3307
    %v3309 = vpop.f32.mrf.mxu0
    %3310 = vdwg.mxu0
    %3311 = vmatprep.subr.mxu0 0.0
    %3312 = vmatpush1.msra.mxu0 %v3085
    %3313 = vmatprep.subr.mxu0 0.0
    %3314 = vmatpush1.msra.mxu0 %v3084
    %3315 = vmatprep.subr.mxu0 0.0
    %3316 = vmatpush1.msra.mxu0 %v3083
    %3317 = vmatprep.subr.mxu0 0.0
    %3318 = vmatpush1.msra.mxu0 %v3082
    %3319 = vmatprep.subr.mxu0 0.0
    %3320 = vmatpush1.msra.mxu0 %v3081
    %3321 = vmatprep.subr.mxu0 0.0
    %3322 = vmatpush1.msra.mxu0 %v3080
    %3323 = vmatprep.subr.mxu0 0.0
    %3324 = vmatpush1.msra.mxu0 %v3079
    %3325 = vmatprep.subr.mxu0 0.0
    %3326 = vmatpush1.msra.mxu0 %v3078
    %3327 = vmatprep.subr.mxu0 0.0
    %3328 = vmatpush1.msra.mxu0 %v3077
    %3329 = vmatprep.subr.mxu0 0.0
    %3330 = vmatpush1.msra.mxu0 %v3076
    %3331 = vmatprep.subr.mxu0 0.0
    %3332 = vmatpush1.msra.mxu0 %v3075
    %3333 = vmatprep.subr.mxu0 0.0
    %3334 = vmatpush1.msra.mxu0 %v3074
    %3335 = vmatprep.subr.mxu0 0.0
    %3336 = vmatpush1.msra.mxu0 %v3073
    %3337 = vmatprep.subr.mxu0 0.0
    %3338 = vmatpush1.msra.mxu0 %v3072
    %3339 = vmatprep.subr.mxu0 0.0
    %3340 = vmatpush1.msra.mxu0 %v3071
    %3341 = vmatprep.subr.mxu0 0.0
    %3342 = vmatpush1.msra.mxu0 %v3070
    %3343 = vmatprep.subr.mxu0 0.0
    %3344 = vmatpush2.msra.mxu0 %v3101
    %3345 = vmatprep.subr.mxu0 0.0
    %3346 = vmatpush2.msra.mxu0 %v3100
    %3347 = vmatprep.subr.mxu0 0.0
    %3348 = vmatpush2.msra.mxu0 %v3099
    %3349 = vmatprep.subr.mxu0 0.0
    %3350 = vmatpush2.msra.mxu0 %v3098
    %3351 = vmatprep.subr.mxu0 0.0
    %3352 = vmatpush2.msra.mxu0 %v3097
    %3353 = vmatprep.subr.mxu0 0.0
    %3354 = vmatpush2.msra.mxu0 %v3096
    %3355 = vmatprep.subr.mxu0 0.0
    %3356 = vmatpush2.msra.mxu0 %v3095
    %3357 = vmatprep.subr.mxu0 0.0
    %3358 = vmatpush2.msra.mxu0 %v3094
    %3359 = vmatprep.subr.mxu0 0.0
    %3360 = vmatpush2.msra.mxu0 %v3093
    %3361 = vmatprep.subr.mxu0 0.0
    %3362 = vmatpush2.msra.mxu0 %v3092
    %3363 = vmatprep.subr.mxu0 0.0
    %3364 = vmatpush2.msra.mxu0 %v3091
    %3365 = vmatprep.subr.mxu0 0.0
    %3366 = vmatpush2.msra.mxu0 %v3090
    %3367 = vmatprep.subr.mxu0 0.0
    %3368 = vmatpush2.msra.mxu0 %v3089
    %3369 = vmatprep.subr.mxu0 0.0
    %3370 = vmatpush2.msra.mxu0 %v3088
    %3371 = vmatprep.subr.mxu0 0.0
    %3372 = vmatpush2.msra.mxu0 %v3087
    %3373 = vmatprep.subr.mxu0 0.0
    %3374 = vmatpush2.msra.mxu0 %v3086
    %3375 = vmatprep.mubr.f32.mxu0 %v876
    %3376 = vmatmul.mubr.f32.gmra.mxu0 %v875
    %v3377 = vpop.f32.mrf.mxu0
    %v3378 = vadd.f32 %v3233, %v3377
    %v3379 = vpop.f32.mrf.mxu0
    %3380 = vmatprep.mubr.f32.mxu0 %v884
    %3381 = vmatmul.mubr.f32.gmra.mxu0 %v883
    %v3382 = vpop.f32.mrf.mxu0
    %v3383 = vadd.f32 %v3238, %v3382
    %v3384 = vpop.f32.mrf.mxu0
    %3385 = vmatprep.mubr.f32.mxu0 %v892
    %3386 = vmatmul.mubr.f32.gmra.mxu0 %v891
    %v3387 = vpop.f32.mrf.mxu0
    %v3388 = vadd.f32 %v3243, %v3387
    %v3389 = vpop.f32.mrf.mxu0
    %3390 = vmatprep.mubr.f32.mxu0 %v900
    %3391 = vmatmul.mubr.f32.gmra.mxu0 %v899
    %v3392 = vpop.f32.mrf.mxu0
    %v3393 = vadd.f32 %v3248, %v3392
    %v3394 = vpop.f32.mrf.mxu0
    %3395 = vmatprep.mubr.f32.mxu0 %v908
    %3396 = vmatmul.mubr.f32.gmra.mxu0 %v907
    %v3397 = vpop.f32.mrf.mxu0
    %v3398 = vadd.f32 %v3253, %v3397
    %v3399 = vpop.f32.mrf.mxu0
    %3400 = vmatprep.mubr.f32.mxu0 %v916
    %3401 = vmatmul.mubr.f32.gmra.mxu0 %v915
    %v3402 = vpop.f32.mrf.mxu0
    %v3403 = vadd.f32 %v3258, %v3402
    %v3404 = vpop.f32.mrf.mxu0
    %3405 = vmatprep.mubr.f32.mxu0 %v924
    %3406 = vmatmul.mubr.f32.gmra.mxu0 %v923
    %v3407 = vpop.f32.mrf.mxu0
    %v3408 = vadd.f32 %v3263, %v3407
    %v3409 = vpop.f32.mrf.mxu0
    %3410 = vmatprep.mubr.f32.mxu0 %v932
    %3411 = vmatmul.mubr.f32.gmra.mxu0 %v931
    %v3412 = vpop.f32.mrf.mxu0
    %v3413 = vadd.f32 %v3268, %v3412
    %v3414 = vpop.f32.mrf.mxu0
    %3415 = vmatprep.mubr.f32.mxu0 %v940
    %3416 = vmatmul.mubr.f32.gmra.mxu0 %v939
    %v3417 = vpop.f32.mrf.mxu0
    %v3418 = vadd.f32 %v3273, %v3417
    %v3419 = vpop.f32.mrf.mxu0
    %3420 = vmatprep.mubr.f32.mxu0 %v948
    %3421 = vmatmul.mubr.f32.gmra.mxu0 %v947
    %v3422 = vpop.f32.mrf.mxu0
    %v3423 = vadd.f32 %v3278, %v3422
    %v3424 = vpop.f32.mrf.mxu0
    %3425 = vmatprep.mubr.f32.mxu0 %v956
    %3426 = vmatmul.mubr.f32.gmra.mxu0 %v955
    %v3427 = vpop.f32.mrf.mxu0
    %v3428 = vadd.f32 %v3283, %v3427
    %v3429 = vpop.f32.mrf.mxu0
    %3430 = vmatprep.mubr.f32.mxu0 %v964
    %3431 = vmatmul.mubr.f32.gmra.mxu0 %v963
    %v3432 = vpop.f32.mrf.mxu0
    %v3433 = vadd.f32 %v3288, %v3432
    %v3434 = vpop.f32.mrf.mxu0
    %3435 = vmatprep.mubr.f32.mxu0 %v972
    %3436 = vmatmul.mubr.f32.gmra.mxu0 %v971
    %v3437 = vpop.f32.mrf.mxu0
    %v3438 = vadd.f32 %v3293, %v3437
    %v3439 = vpop.f32.mrf.mxu0
    %3440 = vmatprep.mubr.f32.mxu0 %v980
    %3441 = vmatmul.mubr.f32.gmra.mxu0 %v979
    %v3442 = vpop.f32.mrf.mxu0
    %v3443 = vadd.f32 %v3298, %v3442
    %v3444 = vpop.f32.mrf.mxu0
    %3445 = vmatprep.mubr.f32.mxu0 %v988
    %3446 = vmatmul.mubr.f32.gmra.mxu0 %v987
    %v3447 = vpop.f32.mrf.mxu0
    %v3448 = vadd.f32 %v3303, %v3447
    %v3449 = vpop.f32.mrf.mxu0
    %3450 = vmatprep.mubr.f32.mxu0 %v996
    %3451 = vmatmul.mubr.f32.gmra.mxu0 %v995
    %v3452 = vpop.f32.mrf.mxu0
    %v3453 = vadd.f32 %v3308, %v3452
    %v3454 = vpop.f32.mrf.mxu0
    %3455 = vdwg.mxu0
    %3456 = vmatprep.subr.mxu0 0.0
    %3457 = vmatpush1.msra.mxu0 %v3117
    %3458 = vmatprep.subr.mxu0 0.0
    %3459 = vmatpush1.msra.mxu0 %v3116
    %3460 = vmatprep.subr.mxu0 0.0
    %3461 = vmatpush1.msra.mxu0 %v3115
    %3462 = vmatprep.subr.mxu0 0.0
    %3463 = vmatpush1.msra.mxu0 %v3114
    %3464 = vmatprep.subr.mxu0 0.0
    %3465 = vmatpush1.msra.mxu0 %v3113
    %3466 = vmatprep.subr.mxu0 0.0
    %3467 = vmatpush1.msra.mxu0 %v3112
    %3468 = vmatprep.subr.mxu0 0.0
    %3469 = vmatpush1.msra.mxu0 %v3111
    %3470 = vmatprep.subr.mxu0 0.0
    %3471 = vmatpush1.msra.mxu0 %v3110
    %3472 = vmatprep.subr.mxu0 0.0
    %3473 = vmatpush1.msra.mxu0 %v3109
    %3474 = vmatprep.subr.mxu0 0.0
    %3475 = vmatpush1.msra.mxu0 %v3108
    %3476 = vmatprep.subr.mxu0 0.0
    %3477 = vmatpush1.msra.mxu0 %v3107
    %3478 = vmatprep.subr.mxu0 0.0
    %3479 = vmatpush1.msra.mxu0 %v3106
    %3480 = vmatprep.subr.mxu0 0.0
    %3481 = vmatpush1.msra.mxu0 %v3105
    %3482 = vmatprep.subr.mxu0 0.0
    %3483 = vmatpush1.msra.mxu0 %v3104
    %3484 = vmatprep.subr.mxu0 0.0
    %3485 = vmatpush1.msra.mxu0 %v3103
    %3486 = vmatprep.subr.mxu0 0.0
    %3487 = vmatpush1.msra.mxu0 %v3102
    %3488 = vmatprep.subr.mxu0 0.0
    %3489 = vmatpush2.msra.mxu0 %v3133
    %3490 = vmatprep.subr.mxu0 0.0
    %3491 = vmatpush2.msra.mxu0 %v3132
    %3492 = vmatprep.subr.mxu0 0.0
    %3493 = vmatpush2.msra.mxu0 %v3131
    %3494 = vmatprep.subr.mxu0 0.0
    %3495 = vmatpush2.msra.mxu0 %v3130
    %3496 = vmatprep.subr.mxu0 0.0
    %3497 = vmatpush2.msra.mxu0 %v3129
    %3498 = vmatprep.subr.mxu0 0.0
    %3499 = vmatpush2.msra.mxu0 %v3128
    %3500 = vmatprep.subr.mxu0 0.0
    %3501 = vmatpush2.msra.mxu0 %v3127
    %3502 = vmatprep.subr.mxu0 0.0
    %3503 = vmatpush2.msra.mxu0 %v3126
    %3504 = vmatprep.subr.mxu0 0.0
    %3505 = vmatpush2.msra.mxu0 %v3125
    %3506 = vmatprep.subr.mxu0 0.0
    %3507 = vmatpush2.msra.mxu0 %v3124
    %3508 = vmatprep.subr.mxu0 0.0
    %3509 = vmatpush2.msra.mxu0 %v3123
    %3510 = vmatprep.subr.mxu0 0.0
    %3511 = vmatpush2.msra.mxu0 %v3122
    %3512 = vmatprep.subr.mxu0 0.0
    %3513 = vmatpush2.msra.mxu0 %v3121
    %3514 = vmatprep.subr.mxu0 0.0
    %3515 = vmatpush2.msra.mxu0 %v3120
    %3516 = vmatprep.subr.mxu0 0.0
    %3517 = vmatpush2.msra.mxu0 %v3119
    %3518 = vmatprep.subr.mxu0 0.0
    %3519 = vmatpush2.msra.mxu0 %v3118
    %3520 = vmatprep.mubr.f32.mxu0 %v878
    %3521 = vmatmul.mubr.f32.gmra.mxu0 %v877
    %v3522 = vpop.f32.mrf.mxu0
    %v3523 = vadd.f32 %v3378, %v3522
    %v3524 = vpop.f32.mrf.mxu0
    %3525 = vmatprep.mubr.f32.mxu0 %v886
    %3526 = vmatmul.mubr.f32.gmra.mxu0 %v885
    %v3527 = vpop.f32.mrf.mxu0
    %v3528 = vadd.f32 %v3383, %v3527
    %v3529 = vpop.f32.mrf.mxu0
    %3530 = vmatprep.mubr.f32.mxu0 %v894
    %3531 = vmatmul.mubr.f32.gmra.mxu0 %v893
    %v3532 = vpop.f32.mrf.mxu0
    %v3533 = vadd.f32 %v3388, %v3532
    %v3534 = vpop.f32.mrf.mxu0
    %3535 = vmatprep.mubr.f32.mxu0 %v902
    %3536 = vmatmul.mubr.f32.gmra.mxu0 %v901
    %v3537 = vpop.f32.mrf.mxu0
    %v3538 = vadd.f32 %v3393, %v3537
    %v3539 = vpop.f32.mrf.mxu0
    %3540 = vmatprep.mubr.f32.mxu0 %v910
    %3541 = vmatmul.mubr.f32.gmra.mxu0 %v909
    %v3542 = vpop.f32.mrf.mxu0
    %v3543 = vadd.f32 %v3398, %v3542
    %v3544 = vpop.f32.mrf.mxu0
    %3545 = vmatprep.mubr.f32.mxu0 %v918
    %3546 = vmatmul.mubr.f32.gmra.mxu0 %v917
    %v3547 = vpop.f32.mrf.mxu0
    %v3548 = vadd.f32 %v3403, %v3547
    %v3549 = vpop.f32.mrf.mxu0
    %3550 = vmatprep.mubr.f32.mxu0 %v926
    %3551 = vmatmul.mubr.f32.gmra.mxu0 %v925
    %v3552 = vpop.f32.mrf.mxu0
    %v3553 = vadd.f32 %v3408, %v3552
    %v3554 = vpop.f32.mrf.mxu0
    %3555 = vmatprep.mubr.f32.mxu0 %v934
    %3556 = vmatmul.mubr.f32.gmra.mxu0 %v933
    %v3557 = vpop.f32.mrf.mxu0
    %v3558 = vadd.f32 %v3413, %v3557
    %v3559 = vpop.f32.mrf.mxu0
    %3560 = vmatprep.mubr.f32.mxu0 %v942
    %3561 = vmatmul.mubr.f32.gmra.mxu0 %v941
    %v3562 = vpop.f32.mrf.mxu0
    %v3563 = vadd.f32 %v3418, %v3562
    %v3564 = vpop.f32.mrf.mxu0
    %3565 = vmatprep.mubr.f32.mxu0 %v950
    %3566 = vmatmul.mubr.f32.gmra.mxu0 %v949
    %v3567 = vpop.f32.mrf.mxu0
    %v3568 = vadd.f32 %v3423, %v3567
    %v3569 = vpop.f32.mrf.mxu0
    %3570 = vmatprep.mubr.f32.mxu0 %v958
    %3571 = vmatmul.mubr.f32.gmra.mxu0 %v957
    %v3572 = vpop.f32.mrf.mxu0
    %v3573 = vadd.f32 %v3428, %v3572
    %v3574 = vpop.f32.mrf.mxu0
    %3575 = vmatprep.mubr.f32.mxu0 %v966
    %3576 = vmatmul.mubr.f32.gmra.mxu0 %v965
    %v3577 = vpop.f32.mrf.mxu0
    %v3578 = vadd.f32 %v3433, %v3577
    %v3579 = vpop.f32.mrf.mxu0
    %3580 = vmatprep.mubr.f32.mxu0 %v974
    %3581 = vmatmul.mubr.f32.gmra.mxu0 %v973
    %v3582 = vpop.f32.mrf.mxu0
    %v3583 = vadd.f32 %v3438, %v3582
    %v3584 = vpop.f32.mrf.mxu0
    %3585 = vmatprep.mubr.f32.mxu0 %v982
    %3586 = vmatmul.mubr.f32.gmra.mxu0 %v981
    %v3587 = vpop.f32.mrf.mxu0
    %v3588 = vadd.f32 %v3443, %v3587
    %v3589 = vpop.f32.mrf.mxu0
    %3590 = vmatprep.mubr.f32.mxu0 %v990
    %3591 = vmatmul.mubr.f32.gmra.mxu0 %v989
    %v3592 = vpop.f32.mrf.mxu0
    %v3593 = vadd.f32 %v3448, %v3592
    %v3594 = vpop.f32.mrf.mxu0
    %3595 = vmatprep.mubr.f32.mxu0 %v998
    %3596 = vmatmul.mubr.f32.gmra.mxu0 %v997
    %v3597 = vpop.f32.mrf.mxu0
    %v3598 = vadd.f32 %v3453, %v3597
    %v3599 = vpop.f32.mrf.mxu0
    %3600 = vdwg.mxu0
    %3601 = vmatprep.subr.mxu0 0.0
    %3602 = vmatpush1.msra.mxu0 %v3149
    %3603 = vmatprep.subr.mxu0 0.0
    %3604 = vmatpush1.msra.mxu0 %v3148
    %3605 = vmatprep.subr.mxu0 0.0
    %3606 = vmatpush1.msra.mxu0 %v3147
    %3607 = vmatprep.subr.mxu0 0.0
    %3608 = vmatpush1.msra.mxu0 %v3146
    %3609 = vmatprep.subr.mxu0 0.0
    %3610 = vmatpush1.msra.mxu0 %v3145
    %3611 = vmatprep.subr.mxu0 0.0
    %3612 = vmatpush1.msra.mxu0 %v3144
    %3613 = vmatprep.subr.mxu0 0.0
    %3614 = vmatpush1.msra.mxu0 %v3143
    %3615 = vmatprep.subr.mxu0 0.0
    %3616 = vmatpush1.msra.mxu0 %v3142
    %3617 = vmatprep.subr.mxu0 0.0
    %3618 = vmatpush1.msra.mxu0 %v3141
    %3619 = vmatprep.subr.mxu0 0.0
    %3620 = vmatpush1.msra.mxu0 %v3140
    %3621 = vmatprep.subr.mxu0 0.0
    %3622 = vmatpush1.msra.mxu0 %v3139
    %3623 = vmatprep.subr.mxu0 0.0
    %3624 = vmatpush1.msra.mxu0 %v3138
    %3625 = vmatprep.subr.mxu0 0.0
    %3626 = vmatpush1.msra.mxu0 %v3137
    %3627 = vmatprep.subr.mxu0 0.0
    %3628 = vmatpush1.msra.mxu0 %v3136
    %3629 = vmatprep.subr.mxu0 0.0
    %3630 = vmatpush1.msra.mxu0 %v3135
    %3631 = vmatprep.subr.mxu0 0.0
    %3632 = vmatpush1.msra.mxu0 %v3134
    %3633 = vmatprep.subr.mxu0 0.0
    %3634 = vmatpush2.msra.mxu0 %v3165
    %3635 = vmatprep.subr.mxu0 0.0
    %3636 = vmatpush2.msra.mxu0 %v3164
    %3637 = vmatprep.subr.mxu0 0.0
    %3638 = vmatpush2.msra.mxu0 %v3163
    %3639 = vmatprep.subr.mxu0 0.0
    %3640 = vmatpush2.msra.mxu0 %v3162
    %3641 = vmatprep.subr.mxu0 0.0
    %3642 = vmatpush2.msra.mxu0 %v3161
    %3643 = vmatprep.subr.mxu0 0.0
    %3644 = vmatpush2.msra.mxu0 %v3160
    %3645 = vmatprep.subr.mxu0 0.0
    %3646 = vmatpush2.msra.mxu0 %v3159
    %3647 = vmatprep.subr.mxu0 0.0
    %3648 = vmatpush2.msra.mxu0 %v3158
    %3649 = vmatprep.subr.mxu0 0.0
    %3650 = vmatpush2.msra.mxu0 %v3157
    %3651 = vmatprep.subr.mxu0 0.0
    %3652 = vmatpush2.msra.mxu0 %v3156
    %3653 = vmatprep.subr.mxu0 0.0
    %3654 = vmatpush2.msra.mxu0 %v3155
    %3655 = vmatprep.subr.mxu0 0.0
    %3656 = vmatpush2.msra.mxu0 %v3154
    %3657 = vmatprep.subr.mxu0 0.0
    %3658 = vmatpush2.msra.mxu0 %v3153
    %3659 = vmatprep.subr.mxu0 0.0
    %3660 = vmatpush2.msra.mxu0 %v3152
    %3661 = vmatprep.subr.mxu0 0.0
    %3662 = vmatpush2.msra.mxu0 %v3151
    %3663 = vmatprep.subr.mxu0 0.0
    %3664 = vmatpush2.msra.mxu0 %v3150
    %3665 = vmatprep.mubr.f32.mxu0 %v880
    %3666 = vmatmul.mubr.f32.gmra.mxu0 %v879
    %v3667 = vpop.f32.mrf.mxu0
    %v3668 = vadd.f32 %v3523, %v3667
    %v3669 = vpop.f32.mrf.mxu0
    %3670 = vmatprep.mubr.f32.mxu0 %v888
    %3671 = vmatmul.mubr.f32.gmra.mxu0 %v887
    %v3672 = vpop.f32.mrf.mxu0
    %v3673 = vadd.f32 %v3528, %v3672
    %v3674 = vpop.f32.mrf.mxu0
    %3675 = vmatprep.mubr.f32.mxu0 %v896
    %3676 = vmatmul.mubr.f32.gmra.mxu0 %v895
    %v3677 = vpop.f32.mrf.mxu0
    %v3678 = vadd.f32 %v3533, %v3677
    %v3679 = vpop.f32.mrf.mxu0
    %3680 = vmatprep.mubr.f32.mxu0 %v904
    %3681 = vmatmul.mubr.f32.gmra.mxu0 %v903
    %v3682 = vpop.f32.mrf.mxu0
    %v3683 = vadd.f32 %v3538, %v3682
    %v3684 = vpop.f32.mrf.mxu0
    %3685 = vmatprep.mubr.f32.mxu0 %v912
    %3686 = vmatmul.mubr.f32.gmra.mxu0 %v911
    %v3687 = vpop.f32.mrf.mxu0
    %v3688 = vadd.f32 %v3543, %v3687
    %v3689 = vpop.f32.mrf.mxu0
    %3690 = vmatprep.mubr.f32.mxu0 %v920
    %3691 = vmatmul.mubr.f32.gmra.mxu0 %v919
    %v3692 = vpop.f32.mrf.mxu0
    %v3693 = vadd.f32 %v3548, %v3692
    %v3694 = vpop.f32.mrf.mxu0
    %3695 = vmatprep.mubr.f32.mxu0 %v928
    %3696 = vmatmul.mubr.f32.gmra.mxu0 %v927
    %v3697 = vpop.f32.mrf.mxu0
    %v3698 = vadd.f32 %v3553, %v3697
    %v3699 = vpop.f32.mrf.mxu0
    %3700 = vmatprep.mubr.f32.mxu0 %v936
    %3701 = vmatmul.mubr.f32.gmra.mxu0 %v935
    %v3702 = vpop.f32.mrf.mxu0
    %v3703 = vadd.f32 %v3558, %v3702
    %v3704 = vpop.f32.mrf.mxu0
    %3705 = vmatprep.mubr.f32.mxu0 %v944
    %3706 = vmatmul.mubr.f32.gmra.mxu0 %v943
    %v3707 = vpop.f32.mrf.mxu0
    %v3708 = vadd.f32 %v3563, %v3707
    %v3709 = vpop.f32.mrf.mxu0
    %3710 = vmatprep.mubr.f32.mxu0 %v952
    %3711 = vmatmul.mubr.f32.gmra.mxu0 %v951
    %v3712 = vpop.f32.mrf.mxu0
    %v3713 = vadd.f32 %v3568, %v3712
    %v3714 = vpop.f32.mrf.mxu0
    %3715 = vmatprep.mubr.f32.mxu0 %v960
    %3716 = vmatmul.mubr.f32.gmra.mxu0 %v959
    %v3717 = vpop.f32.mrf.mxu0
    %v3718 = vadd.f32 %v3573, %v3717
    %v3719 = vpop.f32.mrf.mxu0
    %3720 = vmatprep.mubr.f32.mxu0 %v968
    %3721 = vmatmul.mubr.f32.gmra.mxu0 %v967
    %v3722 = vpop.f32.mrf.mxu0
    %v3723 = vadd.f32 %v3578, %v3722
    %v3724 = vpop.f32.mrf.mxu0
    %3725 = vmatprep.mubr.f32.mxu0 %v976
    %3726 = vmatmul.mubr.f32.gmra.mxu0 %v975
    %v3727 = vpop.f32.mrf.mxu0
    %v3728 = vadd.f32 %v3583, %v3727
    %v3729 = vpop.f32.mrf.mxu0
    %3730 = vmatprep.mubr.f32.mxu0 %v984
    %3731 = vmatmul.mubr.f32.gmra.mxu0 %v983
    %v3732 = vpop.f32.mrf.mxu0
    %v3733 = vadd.f32 %v3588, %v3732
    %v3734 = vpop.f32.mrf.mxu0
    %3735 = vmatprep.mubr.f32.mxu0 %v992
    %3736 = vmatmul.mubr.f32.gmra.mxu0 %v991
    %v3737 = vpop.f32.mrf.mxu0
    %v3738 = vadd.f32 %v3593, %v3737
    %v3739 = vpop.f32.mrf.mxu0
    %3740 = vmatprep.mubr.f32.mxu0 %v1000
    %3741 = vmatmul.mubr.f32.gmra.mxu0 %v999
    %v3742 = vpop.f32.mrf.mxu0
    %v3743 = vadd.f32 %v3598, %v3742
    %v3744 = vpop.f32.mrf.mxu0
    %3745 = vdwg.mxu0
    %3746 = vmatprep.subr.mxu0 0.0
    %3747 = vmatpush1.msra.mxu0 %v2924
    %3748 = vmatprep.subr.mxu0 0.0
    %3749 = vmatpush1.msra.mxu0 %v2923
    %3750 = vmatprep.subr.mxu0 0.0
    %3751 = vmatpush1.msra.mxu0 %v2922
    %3752 = vmatprep.subr.mxu0 0.0
    %3753 = vmatpush1.msra.mxu0 %v2921
    %3754 = vmatprep.subr.mxu0 0.0
    %3755 = vmatpush1.msra.mxu0 %v2920
    %3756 = vmatprep.subr.mxu0 0.0
    %3757 = vmatpush1.msra.mxu0 %v2919
    %3758 = vmatprep.subr.mxu0 0.0
    %3759 = vmatpush1.msra.mxu0 %v2918
    %3760 = vmatprep.subr.mxu0 0.0
    %3761 = vmatpush1.msra.mxu0 %v2917
    %3762 = vmatprep.subr.mxu0 0.0
    %3763 = vmatpush1.msra.mxu0 %v2916
    %3764 = vmatprep.subr.mxu0 0.0
    %3765 = vmatpush1.msra.mxu0 %v2915
    %3766 = vmatprep.subr.mxu0 0.0
    %3767 = vmatpush1.msra.mxu0 %v2914
    %3768 = vmatprep.subr.mxu0 0.0
    %3769 = vmatpush1.msra.mxu0 %v2913
    %3770 = vmatprep.subr.mxu0 0.0
    %3771 = vmatpush1.msra.mxu0 %v2912
    %3772 = vmatprep.subr.mxu0 0.0
    %3773 = vmatpush1.msra.mxu0 %v2911
    %3774 = vmatprep.subr.mxu0 0.0
    %3775 = vmatpush1.msra.mxu0 %v2910
    %3776 = vmatprep.subr.mxu0 0.0
    %3777 = vmatpush1.msra.mxu0 %v2909
    %3778 = vmatprep.subr.mxu0 0.0
    %3779 = vmatpush2.msra.mxu0 %v2940
    %3780 = vmatprep.subr.mxu0 0.0
    %3781 = vmatpush2.msra.mxu0 %v2939
    %3782 = vmatprep.subr.mxu0 0.0
    %3783 = vmatpush2.msra.mxu0 %v2938
    %3784 = vmatprep.subr.mxu0 0.0
    %3785 = vmatpush2.msra.mxu0 %v2937
    %3786 = vmatprep.subr.mxu0 0.0
    %3787 = vmatpush2.msra.mxu0 %v2936
    %3788 = vmatprep.subr.mxu0 0.0
    %3789 = vmatpush2.msra.mxu0 %v2935
    %3790 = vmatprep.subr.mxu0 0.0
    %3791 = vmatpush2.msra.mxu0 %v2934
    %3792 = vmatprep.subr.mxu0 0.0
    %3793 = vmatpush2.msra.mxu0 %v2933
    %3794 = vmatprep.subr.mxu0 0.0
    %3795 = vmatpush2.msra.mxu0 %v2932
    %3796 = vmatprep.subr.mxu0 0.0
    %3797 = vmatpush2.msra.mxu0 %v2931
    %3798 = vmatprep.subr.mxu0 0.0
    %3799 = vmatpush2.msra.mxu0 %v2930
    %3800 = vmatprep.subr.mxu0 0.0
    %3801 = vmatpush2.msra.mxu0 %v2929
    %3802 = vmatprep.subr.mxu0 0.0
    %3803 = vmatpush2.msra.mxu0 %v2928
    %3804 = vmatprep.subr.mxu0 0.0
    %3805 = vmatpush2.msra.mxu0 %v2927
    %3806 = vmatprep.subr.mxu0 0.0
    %3807 = vmatpush2.msra.mxu0 %v2926
    %3808 = vmatprep.subr.mxu0 0.0
    %3809 = vmatpush2.msra.mxu0 %v2925
    %3810 = vmatprep.mubr.f32.mxu0 %v458
    %3811 = vmatmul.mubr.f32.gmra.mxu0 %v457
    %v3812 = vpop.f32.mrf.mxu0
    %v3813 = vadd.f32 %v3668, %v3812
    %v3814 = vpop.f32.mrf.mxu0
    %3815 = vmatprep.mubr.f32.mxu0 %v466
    %3816 = vmatmul.mubr.f32.gmra.mxu0 %v465
    %v3817 = vpop.f32.mrf.mxu0
    %v3818 = vadd.f32 %v3673, %v3817
    %v3819 = vpop.f32.mrf.mxu0
    %3820 = vmatprep.mubr.f32.mxu0 %v474
    %3821 = vmatmul.mubr.f32.gmra.mxu0 %v473
    %v3822 = vpop.f32.mrf.mxu0
    %v3823 = vadd.f32 %v3678, %v3822
    %v3824 = vpop.f32.mrf.mxu0
    %3825 = vmatprep.mubr.f32.mxu0 %v482
    %3826 = vmatmul.mubr.f32.gmra.mxu0 %v481
    %v3827 = vpop.f32.mrf.mxu0
    %v3828 = vadd.f32 %v3683, %v3827
    %v3829 = vpop.f32.mrf.mxu0
    %3830 = vmatprep.mubr.f32.mxu0 %v490
    %3831 = vmatmul.mubr.f32.gmra.mxu0 %v489
    %v3832 = vpop.f32.mrf.mxu0
    %v3833 = vadd.f32 %v3688, %v3832
    %v3834 = vpop.f32.mrf.mxu0
    %3835 = vmatprep.mubr.f32.mxu0 %v498
    %3836 = vmatmul.mubr.f32.gmra.mxu0 %v497
    %v3837 = vpop.f32.mrf.mxu0
    %v3838 = vadd.f32 %v3693, %v3837
    %v3839 = vpop.f32.mrf.mxu0
    %3840 = vmatprep.mubr.f32.mxu0 %v506
    %3841 = vmatmul.mubr.f32.gmra.mxu0 %v505
    %v3842 = vpop.f32.mrf.mxu0
    %v3843 = vadd.f32 %v3698, %v3842
    %v3844 = vpop.f32.mrf.mxu0
    %3845 = vmatprep.mubr.f32.mxu0 %v514
    %3846 = vmatmul.mubr.f32.gmra.mxu0 %v513
    %v3847 = vpop.f32.mrf.mxu0
    %v3848 = vadd.f32 %v3703, %v3847
    %v3849 = vpop.f32.mrf.mxu0
    %3850 = vmatprep.mubr.f32.mxu0 %v522
    %3851 = vmatmul.mubr.f32.gmra.mxu0 %v521
    %v3852 = vpop.f32.mrf.mxu0
    %v3853 = vadd.f32 %v3708, %v3852
    %v3854 = vpop.f32.mrf.mxu0
    %3855 = vmatprep.mubr.f32.mxu0 %v530
    %3856 = vmatmul.mubr.f32.gmra.mxu0 %v529
    %v3857 = vpop.f32.mrf.mxu0
    %v3858 = vadd.f32 %v3713, %v3857
    %v3859 = vpop.f32.mrf.mxu0
    %3860 = vmatprep.mubr.f32.mxu0 %v538
    %3861 = vmatmul.mubr.f32.gmra.mxu0 %v537
    %v3862 = vpop.f32.mrf.mxu0
    %v3863 = vadd.f32 %v3718, %v3862
    %v3864 = vpop.f32.mrf.mxu0
    %3865 = vmatprep.mubr.f32.mxu0 %v546
    %3866 = vmatmul.mubr.f32.gmra.mxu0 %v545
    %v3867 = vpop.f32.mrf.mxu0
    %v3868 = vadd.f32 %v3723, %v3867
    %v3869 = vpop.f32.mrf.mxu0
    %3870 = vmatprep.mubr.f32.mxu0 %v554
    %3871 = vmatmul.mubr.f32.gmra.mxu0 %v553
    %v3872 = vpop.f32.mrf.mxu0
    %v3873 = vadd.f32 %v3728, %v3872
    %v3874 = vpop.f32.mrf.mxu0
    %3875 = vmatprep.mubr.f32.mxu0 %v562
    %3876 = vmatmul.mubr.f32.gmra.mxu0 %v561
    %v3877 = vpop.f32.mrf.mxu0
    %v3878 = vadd.f32 %v3733, %v3877
    %v3879 = vpop.f32.mrf.mxu0
    %3880 = vmatprep.mubr.f32.mxu0 %v570
    %3881 = vmatmul.mubr.f32.gmra.mxu0 %v569
    %v3882 = vpop.f32.mrf.mxu0
    %v3883 = vadd.f32 %v3738, %v3882
    %v3884 = vpop.f32.mrf.mxu0
    %3885 = vmatprep.mubr.f32.mxu0 %v578
    %3886 = vmatmul.mubr.f32.gmra.mxu0 %v577
    %v3887 = vpop.f32.mrf.mxu0
    %v3888 = vadd.f32 %v3743, %v3887
    %v3889 = vpop.f32.mrf.mxu0
    %3890 = vdwg.mxu0
    %3891 = vmatprep.subr.mxu0 0.0
    %3892 = vmatpush1.msra.mxu0 %v2956
    %3893 = vmatprep.subr.mxu0 0.0
    %3894 = vmatpush1.msra.mxu0 %v2955
    %3895 = vmatprep.subr.mxu0 0.0
    %3896 = vmatpush1.msra.mxu0 %v2954
    %3897 = vmatprep.subr.mxu0 0.0
    %3898 = vmatpush1.msra.mxu0 %v2953
    %3899 = vmatprep.subr.mxu0 0.0
    %3900 = vmatpush1.msra.mxu0 %v2952
    %3901 = vmatprep.subr.mxu0 0.0
    %3902 = vmatpush1.msra.mxu0 %v2951
    %3903 = vmatprep.subr.mxu0 0.0
    %3904 = vmatpush1.msra.mxu0 %v2950
    %3905 = vmatprep.subr.mxu0 0.0
    %3906 = vmatpush1.msra.mxu0 %v2949
    %3907 = vmatprep.subr.mxu0 0.0
    %3908 = vmatpush1.msra.mxu0 %v2948
    %3909 = vmatprep.subr.mxu0 0.0
    %3910 = vmatpush1.msra.mxu0 %v2947
    %3911 = vmatprep.subr.mxu0 0.0
    %3912 = vmatpush1.msra.mxu0 %v2946
    %3913 = vmatprep.subr.mxu0 0.0
    %3914 = vmatpush1.msra.mxu0 %v2945
    %3915 = vmatprep.subr.mxu0 0.0
    %3916 = vmatpush1.msra.mxu0 %v2944
    %3917 = vmatprep.subr.mxu0 0.0
    %3918 = vmatpush1.msra.mxu0 %v2943
    %3919 = vmatprep.subr.mxu0 0.0
    %3920 = vmatpush1.msra.mxu0 %v2942
    %3921 = vmatprep.subr.mxu0 0.0
    %3922 = vmatpush1.msra.mxu0 %v2941
    %3923 = vmatprep.subr.mxu0 0.0
    %3924 = vmatpush2.msra.mxu0 %v2972
    %3925 = vmatprep.subr.mxu0 0.0
    %3926 = vmatpush2.msra.mxu0 %v2971
    %3927 = vmatprep.subr.mxu0 0.0
    %3928 = vmatpush2.msra.mxu0 %v2970
    %3929 = vmatprep.subr.mxu0 0.0
    %3930 = vmatpush2.msra.mxu0 %v2969
    %3931 = vmatprep.subr.mxu0 0.0
    %3932 = vmatpush2.msra.mxu0 %v2968
    %3933 = vmatprep.subr.mxu0 0.0
    %3934 = vmatpush2.msra.mxu0 %v2967
    %3935 = vmatprep.subr.mxu0 0.0
    %3936 = vmatpush2.msra.mxu0 %v2966
    %3937 = vmatprep.subr.mxu0 0.0
    %3938 = vmatpush2.msra.mxu0 %v2965
    %3939 = vmatprep.subr.mxu0 0.0
    %3940 = vmatpush2.msra.mxu0 %v2964
    %3941 = vmatprep.subr.mxu0 0.0
    %3942 = vmatpush2.msra.mxu0 %v2963
    %3943 = vmatprep.subr.mxu0 0.0
    %3944 = vmatpush2.msra.mxu0 %v2962
    %3945 = vmatprep.subr.mxu0 0.0
    %3946 = vmatpush2.msra.mxu0 %v2961
    %3947 = vmatprep.subr.mxu0 0.0
    %3948 = vmatpush2.msra.mxu0 %v2960
    %3949 = vmatprep.subr.mxu0 0.0
    %3950 = vmatpush2.msra.mxu0 %v2959
    %3951 = vmatprep.subr.mxu0 0.0
    %3952 = vmatpush2.msra.mxu0 %v2958
    %3953 = vmatprep.subr.mxu0 0.0
    %3954 = vmatpush2.msra.mxu0 %v2957
    %3955 = vmatprep.mubr.f32.mxu0 %v460
    %3956 = vmatmul.mubr.f32.gmra.mxu0 %v459
    %v3957 = vpop.f32.mrf.mxu0
    %v3958 = vadd.f32 %v3813, %v3957
    %v3959 = vpop.f32.mrf.mxu0
    %3960 = vmatprep.mubr.f32.mxu0 %v468
    %3961 = vmatmul.mubr.f32.gmra.mxu0 %v467
    %v3962 = vpop.f32.mrf.mxu0
    %v3963 = vadd.f32 %v3818, %v3962
    %v3964 = vpop.f32.mrf.mxu0
    %3965 = vmatprep.mubr.f32.mxu0 %v476
    %3966 = vmatmul.mubr.f32.gmra.mxu0 %v475
    %v3967 = vpop.f32.mrf.mxu0
    %v3968 = vadd.f32 %v3823, %v3967
    %v3969 = vpop.f32.mrf.mxu0
    %3970 = vmatprep.mubr.f32.mxu0 %v484
    %3971 = vmatmul.mubr.f32.gmra.mxu0 %v483
    %v3972 = vpop.f32.mrf.mxu0
    %v3973 = vadd.f32 %v3828, %v3972
    %v3974 = vpop.f32.mrf.mxu0
    %3975 = vmatprep.mubr.f32.mxu0 %v492
    %3976 = vmatmul.mubr.f32.gmra.mxu0 %v491
    %v3977 = vpop.f32.mrf.mxu0
    %v3978 = vadd.f32 %v3833, %v3977
    %v3979 = vpop.f32.mrf.mxu0
    %3980 = vmatprep.mubr.f32.mxu0 %v500
    %3981 = vmatmul.mubr.f32.gmra.mxu0 %v499
    %v3982 = vpop.f32.mrf.mxu0
    %v3983 = vadd.f32 %v3838, %v3982
    %v3984 = vpop.f32.mrf.mxu0
    %3985 = vmatprep.mubr.f32.mxu0 %v508
    %3986 = vmatmul.mubr.f32.gmra.mxu0 %v507
    %v3987 = vpop.f32.mrf.mxu0
    %v3988 = vadd.f32 %v3843, %v3987
    %v3989 = vpop.f32.mrf.mxu0
    %3990 = vmatprep.mubr.f32.mxu0 %v516
    %3991 = vmatmul.mubr.f32.gmra.mxu0 %v515
    %v3992 = vpop.f32.mrf.mxu0
    %v3993 = vadd.f32 %v3848, %v3992
    %v3994 = vpop.f32.mrf.mxu0
    %3995 = vmatprep.mubr.f32.mxu0 %v524
    %3996 = vmatmul.mubr.f32.gmra.mxu0 %v523
    %v3997 = vpop.f32.mrf.mxu0
    %v3998 = vadd.f32 %v3853, %v3997
    %v3999 = vpop.f32.mrf.mxu0
    %4000 = vmatprep.mubr.f32.mxu0 %v532
    %4001 = vmatmul.mubr.f32.gmra.mxu0 %v531
    %v4002 = vpop.f32.mrf.mxu0
    %v4003 = vadd.f32 %v3858, %v4002
    %v4004 = vpop.f32.mrf.mxu0
    %4005 = vmatprep.mubr.f32.mxu0 %v540
    %4006 = vmatmul.mubr.f32.gmra.mxu0 %v539
    %v4007 = vpop.f32.mrf.mxu0
    %v4008 = vadd.f32 %v3863, %v4007
    %v4009 = vpop.f32.mrf.mxu0
    %4010 = vmatprep.mubr.f32.mxu0 %v548
    %4011 = vmatmul.mubr.f32.gmra.mxu0 %v547
    %v4012 = vpop.f32.mrf.mxu0
    %v4013 = vadd.f32 %v3868, %v4012
    %v4014 = vpop.f32.mrf.mxu0
    %4015 = vmatprep.mubr.f32.mxu0 %v556
    %4016 = vmatmul.mubr.f32.gmra.mxu0 %v555
    %v4017 = vpop.f32.mrf.mxu0
    %v4018 = vadd.f32 %v3873, %v4017
    %v4019 = vpop.f32.mrf.mxu0
    %4020 = vmatprep.mubr.f32.mxu0 %v564
    %4021 = vmatmul.mubr.f32.gmra.mxu0 %v563
    %v4022 = vpop.f32.mrf.mxu0
    %v4023 = vadd.f32 %v3878, %v4022
    %v4024 = vpop.f32.mrf.mxu0
    %4025 = vmatprep.mubr.f32.mxu0 %v572
    %4026 = vmatmul.mubr.f32.gmra.mxu0 %v571
    %v4027 = vpop.f32.mrf.mxu0
    %v4028 = vadd.f32 %v3883, %v4027
    %v4029 = vpop.f32.mrf.mxu0
    %4030 = vmatprep.mubr.f32.mxu0 %v580
    %4031 = vmatmul.mubr.f32.gmra.mxu0 %v579
    %v4032 = vpop.f32.mrf.mxu0
    %v4033 = vadd.f32 %v3888, %v4032
    %v4034 = vpop.f32.mrf.mxu0
    %4035 = vdwg.mxu0
    %4036 = vmatprep.subr.mxu0 0.0
    %4037 = vmatpush1.msra.mxu0 %v2988
    %4038 = vmatprep.subr.mxu0 0.0
    %4039 = vmatpush1.msra.mxu0 %v2987
    %4040 = vmatprep.subr.mxu0 0.0
    %4041 = vmatpush1.msra.mxu0 %v2986
    %4042 = vmatprep.subr.mxu0 0.0
    %4043 = vmatpush1.msra.mxu0 %v2985
    %4044 = vmatprep.subr.mxu0 0.0
    %4045 = vmatpush1.msra.mxu0 %v2984
    %4046 = vmatprep.subr.mxu0 0.0
    %4047 = vmatpush1.msra.mxu0 %v2983
    %4048 = vmatprep.subr.mxu0 0.0
    %4049 = vmatpush1.msra.mxu0 %v2982
    %4050 = vmatprep.subr.mxu0 0.0
    %4051 = vmatpush1.msra.mxu0 %v2981
    %4052 = vmatprep.subr.mxu0 0.0
    %4053 = vmatpush1.msra.mxu0 %v2980
    %4054 = vmatprep.subr.mxu0 0.0
    %4055 = vmatpush1.msra.mxu0 %v2979
    %4056 = vmatprep.subr.mxu0 0.0
    %4057 = vmatpush1.msra.mxu0 %v2978
    %4058 = vmatprep.subr.mxu0 0.0
    %4059 = vmatpush1.msra.mxu0 %v2977
    %4060 = vmatprep.subr.mxu0 0.0
    %4061 = vmatpush1.msra.mxu0 %v2976
    %4062 = vmatprep.subr.mxu0 0.0
    %4063 = vmatpush1.msra.mxu0 %v2975
    %4064 = vmatprep.subr.mxu0 0.0
    %4065 = vmatpush1.msra.mxu0 %v2974
    %4066 = vmatprep.subr.mxu0 0.0
    %4067 = vmatpush1.msra.mxu0 %v2973
    %4068 = vmatprep.subr.mxu0 0.0
    %4069 = vmatpush2.msra.mxu0 %v3004
    %4070 = vmatprep.subr.mxu0 0.0
    %4071 = vmatpush2.msra.mxu0 %v3003
    %4072 = vmatprep.subr.mxu0 0.0
    %4073 = vmatpush2.msra.mxu0 %v3002
    %4074 = vmatprep.subr.mxu0 0.0
    %4075 = vmatpush2.msra.mxu0 %v3001
    %4076 = vmatprep.subr.mxu0 0.0
    %4077 = vmatpush2.msra.mxu0 %v3000
    %4078 = vmatprep.subr.mxu0 0.0
    %4079 = vmatpush2.msra.mxu0 %v2999
    %4080 = vmatprep.subr.mxu0 0.0
    %4081 = vmatpush2.msra.mxu0 %v2998
    %4082 = vmatprep.subr.mxu0 0.0
    %4083 = vmatpush2.msra.mxu0 %v2997
    %4084 = vmatprep.subr.mxu0 0.0
    %4085 = vmatpush2.msra.mxu0 %v2996
    %4086 = vmatprep.subr.mxu0 0.0
    %4087 = vmatpush2.msra.mxu0 %v2995
    %4088 = vmatprep.subr.mxu0 0.0
    %4089 = vmatpush2.msra.mxu0 %v2994
    %4090 = vmatprep.subr.mxu0 0.0
    %4091 = vmatpush2.msra.mxu0 %v2993
    %4092 = vmatprep.subr.mxu0 0.0
    %4093 = vmatpush2.msra.mxu0 %v2992
    %4094 = vmatprep.subr.mxu0 0.0
    %4095 = vmatpush2.msra.mxu0 %v2991
    %4096 = vmatprep.subr.mxu0 0.0
    %4097 = vmatpush2.msra.mxu0 %v2990
    %4098 = vmatprep.subr.mxu0 0.0
    %4099 = vmatpush2.msra.mxu0 %v2989
    %4100 = vmatprep.mubr.f32.mxu0 %v462
    %4101 = vmatmul.mubr.f32.gmra.mxu0 %v461
    %v4102 = vpop.f32.mrf.mxu0
    %v4103 = vadd.f32 %v3958, %v4102
    %v4104 = vpop.f32.mrf.mxu0
    %4105 = vmatprep.mubr.f32.mxu0 %v470
    %4106 = vmatmul.mubr.f32.gmra.mxu0 %v469
    %v4107 = vpop.f32.mrf.mxu0
    %v4108 = vadd.f32 %v3963, %v4107
    %v4109 = vpop.f32.mrf.mxu0
    %4110 = vmatprep.mubr.f32.mxu0 %v478
    %4111 = vmatmul.mubr.f32.gmra.mxu0 %v477
    %v4112 = vpop.f32.mrf.mxu0
    %v4113 = vadd.f32 %v3968, %v4112
    %v4114 = vpop.f32.mrf.mxu0
    %4115 = vmatprep.mubr.f32.mxu0 %v486
    %4116 = vmatmul.mubr.f32.gmra.mxu0 %v485
    %v4117 = vpop.f32.mrf.mxu0
    %v4118 = vadd.f32 %v3973, %v4117
    %v4119 = vpop.f32.mrf.mxu0
    %4120 = vmatprep.mubr.f32.mxu0 %v494
    %4121 = vmatmul.mubr.f32.gmra.mxu0 %v493
    %v4122 = vpop.f32.mrf.mxu0
    %v4123 = vadd.f32 %v3978, %v4122
    %v4124 = vpop.f32.mrf.mxu0
    %4125 = vmatprep.mubr.f32.mxu0 %v502
    %4126 = vmatmul.mubr.f32.gmra.mxu0 %v501
    %v4127 = vpop.f32.mrf.mxu0
    %v4128 = vadd.f32 %v3983, %v4127
    %v4129 = vpop.f32.mrf.mxu0
    %4130 = vmatprep.mubr.f32.mxu0 %v510
    %4131 = vmatmul.mubr.f32.gmra.mxu0 %v509
    %v4132 = vpop.f32.mrf.mxu0
    %v4133 = vadd.f32 %v3988, %v4132
    %v4134 = vpop.f32.mrf.mxu0
    %4135 = vmatprep.mubr.f32.mxu0 %v518
    %4136 = vmatmul.mubr.f32.gmra.mxu0 %v517
    %v4137 = vpop.f32.mrf.mxu0
    %v4138 = vadd.f32 %v3993, %v4137
    %v4139 = vpop.f32.mrf.mxu0
    %4140 = vmatprep.mubr.f32.mxu0 %v526
    %4141 = vmatmul.mubr.f32.gmra.mxu0 %v525
    %v4142 = vpop.f32.mrf.mxu0
    %v4143 = vadd.f32 %v3998, %v4142
    %v4144 = vpop.f32.mrf.mxu0
    %4145 = vmatprep.mubr.f32.mxu0 %v534
    %4146 = vmatmul.mubr.f32.gmra.mxu0 %v533
    %v4147 = vpop.f32.mrf.mxu0
    %v4148 = vadd.f32 %v4003, %v4147
    %v4149 = vpop.f32.mrf.mxu0
    %4150 = vmatprep.mubr.f32.mxu0 %v542
    %4151 = vmatmul.mubr.f32.gmra.mxu0 %v541
    %v4152 = vpop.f32.mrf.mxu0
    %v4153 = vadd.f32 %v4008, %v4152
    %v4154 = vpop.f32.mrf.mxu0
    %4155 = vmatprep.mubr.f32.mxu0 %v550
    %4156 = vmatmul.mubr.f32.gmra.mxu0 %v549
    %v4157 = vpop.f32.mrf.mxu0
    %v4158 = vadd.f32 %v4013, %v4157
    %v4159 = vpop.f32.mrf.mxu0
    %4160 = vmatprep.mubr.f32.mxu0 %v558
    %4161 = vmatmul.mubr.f32.gmra.mxu0 %v557
    %v4162 = vpop.f32.mrf.mxu0
    %v4163 = vadd.f32 %v4018, %v4162
    %v4164 = vpop.f32.mrf.mxu0
    %4165 = vmatprep.mubr.f32.mxu0 %v566
    %4166 = vmatmul.mubr.f32.gmra.mxu0 %v565
    %v4167 = vpop.f32.mrf.mxu0
    %v4168 = vadd.f32 %v4023, %v4167
    %v4169 = vpop.f32.mrf.mxu0
    %4170 = vmatprep.mubr.f32.mxu0 %v574
    %4171 = vmatmul.mubr.f32.gmra.mxu0 %v573
    %v4172 = vpop.f32.mrf.mxu0
    %v4173 = vadd.f32 %v4028, %v4172
    %v4174 = vpop.f32.mrf.mxu0
    %4175 = vmatprep.mubr.f32.mxu0 %v582
    %4176 = vmatmul.mubr.f32.gmra.mxu0 %v581
    %v4177 = vpop.f32.mrf.mxu0
    %v4178 = vadd.f32 %v4033, %v4177
    %v4179 = vpop.f32.mrf.mxu0
    %4180 = vdwg.mxu0
    %4181 = vmatprep.subr.mxu0 0.0
    %4182 = vmatpush1.msra.mxu0 %v3020
    %4183 = vmatprep.subr.mxu0 0.0
    %4184 = vmatpush1.msra.mxu0 %v3019
    %4185 = vmatprep.subr.mxu0 0.0
    %4186 = vmatpush1.msra.mxu0 %v3018
    %4187 = vmatprep.subr.mxu0 0.0
    %4188 = vmatpush1.msra.mxu0 %v3017
    %4189 = vmatprep.subr.mxu0 0.0
    %4190 = vmatpush1.msra.mxu0 %v3016
    %4191 = vmatprep.subr.mxu0 0.0
    %4192 = vmatpush1.msra.mxu0 %v3015
    %4193 = vmatprep.subr.mxu0 0.0
    %4194 = vmatpush1.msra.mxu0 %v3014
    %4195 = vmatprep.subr.mxu0 0.0
    %4196 = vmatpush1.msra.mxu0 %v3013
    %4197 = vmatprep.subr.mxu0 0.0
    %4198 = vmatpush1.msra.mxu0 %v3012
    %4199 = vmatprep.subr.mxu0 0.0
    %4200 = vmatpush1.msra.mxu0 %v3011
    %4201 = vmatprep.subr.mxu0 0.0
    %4202 = vmatpush1.msra.mxu0 %v3010
    %4203 = vmatprep.subr.mxu0 0.0
    %4204 = vmatpush1.msra.mxu0 %v3009
    %4205 = vmatprep.subr.mxu0 0.0
    %4206 = vmatpush1.msra.mxu0 %v3008
    %4207 = vmatprep.subr.mxu0 0.0
    %4208 = vmatpush1.msra.mxu0 %v3007
    %4209 = vmatprep.subr.mxu0 0.0
    %4210 = vmatpush1.msra.mxu0 %v3006
    %4211 = vmatprep.subr.mxu0 0.0
    %4212 = vmatpush1.msra.mxu0 %v3005
    %4213 = vmatprep.subr.mxu0 0.0
    %4214 = vmatpush2.msra.mxu0 %v3036
    %4215 = vmatprep.subr.mxu0 0.0
    %4216 = vmatpush2.msra.mxu0 %v3035
    %4217 = vmatprep.subr.mxu0 0.0
    %4218 = vmatpush2.msra.mxu0 %v3034
    %4219 = vmatprep.subr.mxu0 0.0
    %4220 = vmatpush2.msra.mxu0 %v3033
    %4221 = vmatprep.subr.mxu0 0.0
    %4222 = vmatpush2.msra.mxu0 %v3032
    %4223 = vmatprep.subr.mxu0 0.0
    %4224 = vmatpush2.msra.mxu0 %v3031
    %4225 = vmatprep.subr.mxu0 0.0
    %4226 = vmatpush2.msra.mxu0 %v3030
    %4227 = vmatprep.subr.mxu0 0.0
    %4228 = vmatpush2.msra.mxu0 %v3029
    %4229 = vmatprep.subr.mxu0 0.0
    %4230 = vmatpush2.msra.mxu0 %v3028
    %4231 = vmatprep.subr.mxu0 0.0
    %4232 = vmatpush2.msra.mxu0 %v3027
    %4233 = vmatprep.subr.mxu0 0.0
    %4234 = vmatpush2.msra.mxu0 %v3026
    %4235 = vmatprep.subr.mxu0 0.0
    %4236 = vmatpush2.msra.mxu0 %v3025
    %4237 = vmatprep.subr.mxu0 0.0
    %4238 = vmatpush2.msra.mxu0 %v3024
    %4239 = vmatprep.subr.mxu0 0.0
    %4240 = vmatpush2.msra.mxu0 %v3023
    %4241 = vmatprep.subr.mxu0 0.0
    %4242 = vmatpush2.msra.mxu0 %v3022
    %4243 = vmatprep.subr.mxu0 0.0
    %4244 = vmatpush2.msra.mxu0 %v3021
    %4245 = vmatprep.mubr.f32.mxu0 %v464
    %4246 = vmatmul.mubr.f32.gmra.mxu0 %v463
    %v4247 = vpop.f32.mrf.mxu0
    %v4248 = vadd.f32 %v4103, %v4247
    %v4249 = vpop.f32.mrf.mxu0
    %4250 = vmatprep.mubr.f32.mxu0 %v472
    %4251 = vmatmul.mubr.f32.gmra.mxu0 %v471
    %v4252 = vpop.f32.mrf.mxu0
    %v4253 = vadd.f32 %v4108, %v4252
    %v4254 = vpop.f32.mrf.mxu0
    %4255 = vmatprep.mubr.f32.mxu0 %v480
    %4256 = vmatmul.mubr.f32.gmra.mxu0 %v479
    %v4257 = vpop.f32.mrf.mxu0
    %v4258 = vadd.f32 %v4113, %v4257
    %v4259 = vpop.f32.mrf.mxu0
    %4260 = vmatprep.mubr.f32.mxu0 %v488
    %4261 = vmatmul.mubr.f32.gmra.mxu0 %v487
    %v4262 = vpop.f32.mrf.mxu0
    %v4263 = vadd.f32 %v4118, %v4262
    %v4264 = vpop.f32.mrf.mxu0
    %4265 = vmatprep.mubr.f32.mxu0 %v496
    %4266 = vmatmul.mubr.f32.gmra.mxu0 %v495
    %v4267 = vpop.f32.mrf.mxu0
    %v4268 = vadd.f32 %v4123, %v4267
    %v4269 = vpop.f32.mrf.mxu0
    %4270 = vmatprep.mubr.f32.mxu0 %v504
    %4271 = vmatmul.mubr.f32.gmra.mxu0 %v503
    %v4272 = vpop.f32.mrf.mxu0
    %v4273 = vadd.f32 %v4128, %v4272
    %v4274 = vpop.f32.mrf.mxu0
    %4275 = vmatprep.mubr.f32.mxu0 %v512
    %4276 = vmatmul.mubr.f32.gmra.mxu0 %v511
    %v4277 = vpop.f32.mrf.mxu0
    %v4278 = vadd.f32 %v4133, %v4277
    %v4279 = vpop.f32.mrf.mxu0
    %4280 = vmatprep.mubr.f32.mxu0 %v520
    %4281 = vmatmul.mubr.f32.gmra.mxu0 %v519
    %v4282 = vpop.f32.mrf.mxu0
    %v4283 = vadd.f32 %v4138, %v4282
    %v4284 = vpop.f32.mrf.mxu0
    %4285 = vmatprep.mubr.f32.mxu0 %v528
    %4286 = vmatmul.mubr.f32.gmra.mxu0 %v527
    %v4287 = vpop.f32.mrf.mxu0
    %v4288 = vadd.f32 %v4143, %v4287
    %v4289 = vpop.f32.mrf.mxu0
    %4290 = vmatprep.mubr.f32.mxu0 %v536
    %4291 = vmatmul.mubr.f32.gmra.mxu0 %v535
    %v4292 = vpop.f32.mrf.mxu0
    %v4293 = vadd.f32 %v4148, %v4292
    %v4294 = vpop.f32.mrf.mxu0
    %4295 = vmatprep.mubr.f32.mxu0 %v544
    %4296 = vmatmul.mubr.f32.gmra.mxu0 %v543
    %v4297 = vpop.f32.mrf.mxu0
    %v4298 = vadd.f32 %v4153, %v4297
    %v4299 = vpop.f32.mrf.mxu0
    %4300 = vmatprep.mubr.f32.mxu0 %v552
    %4301 = vmatmul.mubr.f32.gmra.mxu0 %v551
    %v4302 = vpop.f32.mrf.mxu0
    %v4303 = vadd.f32 %v4158, %v4302
    %v4304 = vpop.f32.mrf.mxu0
    %4305 = vmatprep.mubr.f32.mxu0 %v560
    %4306 = vmatmul.mubr.f32.gmra.mxu0 %v559
    %v4307 = vpop.f32.mrf.mxu0
    %v4308 = vadd.f32 %v4163, %v4307
    %v4309 = vpop.f32.mrf.mxu0
    %4310 = vmatprep.mubr.f32.mxu0 %v568
    %4311 = vmatmul.mubr.f32.gmra.mxu0 %v567
    %v4312 = vpop.f32.mrf.mxu0
    %v4313 = vadd.f32 %v4168, %v4312
    %v4314 = vpop.f32.mrf.mxu0
    %4315 = vmatprep.mubr.f32.mxu0 %v576
    %4316 = vmatmul.mubr.f32.gmra.mxu0 %v575
    %v4317 = vpop.f32.mrf.mxu0
    %v4318 = vadd.f32 %v4173, %v4317
    %v4319 = vpop.f32.mrf.mxu0
    %4320 = vmatprep.mubr.f32.mxu0 %v584
    %4321 = vmatmul.mubr.f32.gmra.mxu0 %v583
    %v4322 = vpop.f32.mrf.mxu0
    %v4323 = vadd.f32 %v4178, %v4322
    %v4324 = vpop.f32.mrf.mxu0
    %4325 = vdwg.mxu0
    %s4326 = scalar_lea.vmem [#allocation11], 128
    %v4327 = vld [vmem:[%s4326] sm:$0xff]
    %v4328 = vld [vmem:[%s4326 + $0x8] sm:$0xff]
    %v4329 = vld [vmem:[%s4326 + $0x10] sm:$0xff]
    %v4330 = vld [vmem:[%s4326 + $0x18] sm:$0xff]
    %v4331 = vld [vmem:[%s4326 + $0x20] sm:$0xff]
    %v4332 = vld [vmem:[%s4326 + $0x28] sm:$0xff]
    %v4333 = vld [vmem:[%s4326 + $0x30] sm:$0xff]
    %v4334 = vld [vmem:[%s4326 + $0x38] sm:$0xff]
    %v4335 = vld [vmem:[%s4326 + $0x40] sm:$0xff]
    %v4336 = vld [vmem:[%s4326 + $0x48] sm:$0xff]
    %v4337 = vld [vmem:[%s4326 + $0x50] sm:$0xff]
    %v4338 = vld [vmem:[%s4326 + $0x58] sm:$0xff]
    %v4339 = vld [vmem:[%s4326 + $0x60] sm:$0xff]
    %v4340 = vld [vmem:[%s4326 + $0x68] sm:$0xff]
    %v4341 = vld [vmem:[%s4326 + $0x70] sm:$0xff]
    %v4342 = vld [vmem:[%s4326 + $0x78] sm:$0xff]
    %4343 = vmatprep.subr.mxu0 0.0
    %4344 = vmatpush1.msra.mxu0 %v4342
    %4345 = vmatprep.subr.mxu0 0.0
    %4346 = vmatpush1.msra.mxu0 %v4341
    %4347 = vmatprep.subr.mxu0 0.0
    %4348 = vmatpush1.msra.mxu0 %v4340
    %4349 = vmatprep.subr.mxu0 0.0
    %4350 = vmatpush1.msra.mxu0 %v4339
    %4351 = vmatprep.subr.mxu0 0.0
    %4352 = vmatpush1.msra.mxu0 %v4338
    %4353 = vmatprep.subr.mxu0 0.0
    %4354 = vmatpush1.msra.mxu0 %v4337
    %4355 = vmatprep.subr.mxu0 0.0
    %4356 = vmatpush1.msra.mxu0 %v4336
    %4357 = vmatprep.subr.mxu0 0.0
    %4358 = vmatpush1.msra.mxu0 %v4335
    %4359 = vmatprep.subr.mxu0 0.0
    %4360 = vmatpush1.msra.mxu0 %v4334
    %4361 = vmatprep.subr.mxu0 0.0
    %4362 = vmatpush1.msra.mxu0 %v4333
    %4363 = vmatprep.subr.mxu0 0.0
    %4364 = vmatpush1.msra.mxu0 %v4332
    %4365 = vmatprep.subr.mxu0 0.0
    %4366 = vmatpush1.msra.mxu0 %v4331
    %4367 = vmatprep.subr.mxu0 0.0
    %4368 = vmatpush1.msra.mxu0 %v4330
    %4369 = vmatprep.subr.mxu0 0.0
    %4370 = vmatpush1.msra.mxu0 %v4329
    %4371 = vmatprep.subr.mxu0 0.0
    %4372 = vmatpush1.msra.mxu0 %v4328
    %4373 = vmatprep.subr.mxu0 0.0
    %4374 = vmatpush1.msra.mxu0 %v4327
    %4375 = vmatprep.subr.mxu0 0.0
    %4376 = vmatpush2.msra.mxu0 0.0
    %4377 = vmatprep.subr.mxu0 0.0
    %4378 = vmatpush2.msra.mxu0 0.0
    %4379 = vmatprep.subr.mxu0 0.0
    %4380 = vmatpush2.msra.mxu0 0.0
    %4381 = vmatprep.subr.mxu0 0.0
    %4382 = vmatpush2.msra.mxu0 0.0
    %4383 = vmatprep.subr.mxu0 0.0
    %4384 = vmatpush2.msra.mxu0 0.0
    %4385 = vmatprep.subr.mxu0 0.0
    %4386 = vmatpush2.msra.mxu0 0.0
    %4387 = vmatprep.subr.mxu0 0.0
    %4388 = vmatpush2.msra.mxu0 0.0
    %4389 = vmatprep.subr.mxu0 0.0
    %4390 = vmatpush2.msra.mxu0 0.0
    %4391 = vmatprep.subr.mxu0 0.0
    %4392 = vmatpush2.msra.mxu0 0.0
    %4393 = vmatprep.subr.mxu0 0.0
    %4394 = vmatpush2.msra.mxu0 0.0
    %4395 = vmatprep.subr.mxu0 0.0
    %4396 = vmatpush2.msra.mxu0 0.0
    %4397 = vmatprep.subr.mxu0 0.0
    %4398 = vmatpush2.msra.mxu0 0.0
    %4399 = vmatprep.subr.mxu0 0.0
    %4400 = vmatpush2.msra.mxu0 0.0
    %4401 = vmatprep.subr.mxu0 0.0
    %4402 = vmatpush2.msra.mxu0 0.0
    %4403 = vmatprep.subr.mxu0 0.0
    %4404 = vmatpush2.msra.mxu0 0.0
    %4405 = vmatprep.subr.mxu0 0.0
    %4406 = vmatpush2.msra.mxu0 0.0
    %4407 = vmatprep.mubr.f32.mxu0 0.0
    %4408 = vmatmul.mubr.f32.gmra.mxu0 %v1001
    %v4409 = vpop.f32.mrf.mxu0
    %v4410 = vadd.f32 0.0, %v4409
    %v4411 = vpop.f32.mrf.mxu0
    %4412 = vmatprep.mubr.f32.mxu0 0.0
    %4413 = vmatmul.mubr.f32.gmra.mxu0 %v1002
    %v4414 = vpop.f32.mrf.mxu0
    %v4415 = vadd.f32 0.0, %v4414
    %v4416 = vpop.f32.mrf.mxu0
    %4417 = vmatprep.mubr.f32.mxu0 0.0
    %4418 = vmatmul.mubr.f32.gmra.mxu0 %v1003
    %v4419 = vpop.f32.mrf.mxu0
    %v4420 = vadd.f32 0.0, %v4419
    %v4421 = vpop.f32.mrf.mxu0
    %4422 = vmatprep.mubr.f32.mxu0 0.0
    %4423 = vmatmul.mubr.f32.gmra.mxu0 %v1004
    %v4424 = vpop.f32.mrf.mxu0
    %v4425 = vadd.f32 0.0, %v4424
    %v4426 = vpop.f32.mrf.mxu0
    %4427 = vmatprep.mubr.f32.mxu0 0.0
    %4428 = vmatmul.mubr.f32.gmra.mxu0 %v1005
    %v4429 = vpop.f32.mrf.mxu0
    %v4430 = vadd.f32 0.0, %v4429
    %v4431 = vpop.f32.mrf.mxu0
    %4432 = vmatprep.mubr.f32.mxu0 0.0
    %4433 = vmatmul.mubr.f32.gmra.mxu0 %v1006
    %v4434 = vpop.f32.mrf.mxu0
    %v4435 = vadd.f32 0.0, %v4434
    %v4436 = vpop.f32.mrf.mxu0
    %4437 = vmatprep.mubr.f32.mxu0 0.0
    %4438 = vmatmul.mubr.f32.gmra.mxu0 %v1007
    %v4439 = vpop.f32.mrf.mxu0
    %v4440 = vadd.f32 0.0, %v4439
    %v4441 = vpop.f32.mrf.mxu0
    %4442 = vmatprep.mubr.f32.mxu0 0.0
    %4443 = vmatmul.mubr.f32.gmra.mxu0 %v1008
    %v4444 = vpop.f32.mrf.mxu0
    %v4445 = vadd.f32 0.0, %v4444
    %v4446 = vpop.f32.mrf.mxu0
    %4447 = vmatprep.mubr.f32.mxu0 0.0
    %4448 = vmatmul.mubr.f32.gmra.mxu0 %v1009
    %v4449 = vpop.f32.mrf.mxu0
    %v4450 = vadd.f32 0.0, %v4449
    %v4451 = vpop.f32.mrf.mxu0
    %4452 = vmatprep.mubr.f32.mxu0 0.0
    %4453 = vmatmul.mubr.f32.gmra.mxu0 %v1010
    %v4454 = vpop.f32.mrf.mxu0
    %v4455 = vadd.f32 0.0, %v4454
    %v4456 = vpop.f32.mrf.mxu0
    %4457 = vmatprep.mubr.f32.mxu0 0.0
    %4458 = vmatmul.mubr.f32.gmra.mxu0 %v1011
    %v4459 = vpop.f32.mrf.mxu0
    %v4460 = vadd.f32 0.0, %v4459
    %v4461 = vpop.f32.mrf.mxu0
    %4462 = vmatprep.mubr.f32.mxu0 0.0
    %4463 = vmatmul.mubr.f32.gmra.mxu0 %v1012
    %v4464 = vpop.f32.mrf.mxu0
    %v4465 = vadd.f32 0.0, %v4464
    %v4466 = vpop.f32.mrf.mxu0
    %4467 = vmatprep.mubr.f32.mxu0 0.0
    %4468 = vmatmul.mubr.f32.gmra.mxu0 %v1013
    %v4469 = vpop.f32.mrf.mxu0
    %v4470 = vadd.f32 0.0, %v4469
    %v4471 = vpop.f32.mrf.mxu0
    %4472 = vmatprep.mubr.f32.mxu0 0.0
    %4473 = vmatmul.mubr.f32.gmra.mxu0 %v1014
    %v4474 = vpop.f32.mrf.mxu0
    %v4475 = vadd.f32 0.0, %v4474
    %v4476 = vpop.f32.mrf.mxu0
    %4477 = vmatprep.mubr.f32.mxu0 0.0
    %4478 = vmatmul.mubr.f32.gmra.mxu0 %v1015
    %v4479 = vpop.f32.mrf.mxu0
    %v4480 = vadd.f32 0.0, %v4479
    %v4481 = vpop.f32.mrf.mxu0
    %4482 = vmatprep.mubr.f32.mxu0 0.0
    %4483 = vmatmul.mubr.f32.gmra.mxu0 %v1016
    %v4484 = vpop.f32.mrf.mxu0
    %v4485 = vadd.f32 0.0, %v4484
    %v4486 = vpop.f32.mrf.mxu0
    %4487 = vdwg.mxu0
    %v4488 = vadd.f32 %v4248, %v4410
    %v4489 = vadd.f32 %v4253, %v4415
    %v4490 = vadd.f32 %v4258, %v4420
    %v4491 = vadd.f32 %v4263, %v4425
    %v4492 = vadd.f32 %v4268, %v4430
    %v4493 = vadd.f32 %v4273, %v4435
    %v4494 = vadd.f32 %v4278, %v4440
    %v4495 = vadd.f32 %v4283, %v4445
    %v4496 = vadd.f32 %v4288, %v4450
    %v4497 = vadd.f32 %v4293, %v4455
    %v4498 = vadd.f32 %v4298, %v4460
    %v4499 = vadd.f32 %v4303, %v4465
    %v4500 = vadd.f32 %v4308, %v4470
    %v4501 = vadd.f32 %v4313, %v4475
    %v4502 = vadd.f32 %v4318, %v4480
    %v4503 = vadd.f32 %v4323, %v4485
    %v4504 = vld [vmem:[#allocation13 + $0x1] sm:$0x1]
    %v4505 = vlaneseq
    %v4506 = vshrl.u32 %v4505, 7
    %v4507 = vsub.s32 0, %v4506
    %v4508 = vrot.slane %v4504, %v4507
    %v4509 = vadd.f32 %v4488, %v4508
    %v4510 = vadd.f32 %v4489, %v4508
    %v4511 = vadd.f32 %v4490, %v4508
    %v4512 = vadd.f32 %v4491, %v4508
    %v4513 = vadd.f32 %v4492, %v4508
    %v4514 = vadd.f32 %v4493, %v4508
    %v4515 = vadd.f32 %v4494, %v4508
    %v4516 = vadd.f32 %v4495, %v4508
    %v4517 = vadd.f32 %v4496, %v4508
    %v4518 = vadd.f32 %v4497, %v4508
    %v4519 = vadd.f32 %v4498, %v4508
    %v4520 = vadd.f32 %v4499, %v4508
    %v4521 = vadd.f32 %v4500, %v4508
    %v4522 = vadd.f32 %v4501, %v4508
    %v4523 = vadd.f32 %v4502, %v4508
    %v4524 = vadd.f32 %v4503, %v4508
    %v4525 = vmax.f32 %v4509, 0.0
    %v4526 = vmax.f32 %v4510, 0.0
    %v4527 = vmax.f32 %v4511, 0.0
    %v4528 = vmax.f32 %v4512, 0.0
    %v4529 = vmax.f32 %v4513, 0.0
    %v4530 = vmax.f32 %v4514, 0.0
    %v4531 = vmax.f32 %v4515, 0.0
    %v4532 = vmax.f32 %v4516, 0.0
    %v4533 = vmax.f32 %v4517, 0.0
    %v4534 = vmax.f32 %v4518, 0.0
    %v4535 = vmax.f32 %v4519, 0.0
    %v4536 = vmax.f32 %v4520, 0.0
    %v4537 = vmax.f32 %v4521, 0.0
    %v4538 = vmax.f32 %v4522, 0.0
    %v4539 = vmax.f32 %v4523, 0.0
    %v4540 = vmax.f32 %v4524, 0.0
    %s4541 = scalar_lea.vmem [#allocation14], 128
    %v4542 = vld [vmem:[%s4541] sm:$0xff]
    %v4543 = vld [vmem:[%s4541 + $0x8] sm:$0xff]
    %v4544 = vld [vmem:[%s4541 + $0x10] sm:$0xff]
    %v4545 = vld [vmem:[%s4541 + $0x18] sm:$0xff]
    %v4546 = vld [vmem:[%s4541 + $0x20] sm:$0xff]
    %v4547 = vld [vmem:[%s4541 + $0x28] sm:$0xff]
    %v4548 = vld [vmem:[%s4541 + $0x30] sm:$0xff]
    %v4549 = vld [vmem:[%s4541 + $0x38] sm:$0xff]
    %v4550 = vld [vmem:[%s4541 + $0x40] sm:$0xff]
    %v4551 = vld [vmem:[%s4541 + $0x48] sm:$0xff]
    %v4552 = vld [vmem:[%s4541 + $0x50] sm:$0xff]
    %v4553 = vld [vmem:[%s4541 + $0x58] sm:$0xff]
    %v4554 = vld [vmem:[%s4541 + $0x60] sm:$0xff]
    %v4555 = vld [vmem:[%s4541 + $0x68] sm:$0xff]
    %v4556 = vld [vmem:[%s4541 + $0x70] sm:$0xff]
    %v4557 = vld [vmem:[%s4541 + $0x78] sm:$0xff]
    %v4558 = vld [vmem:[#allocation16 + $0x1] sm:$0x1]
    %v4559 = vlaneseq
    %v4560 = vshrl.u32 %v4559, 7
    %v4561 = vsub.s32 0, %v4560
    %v4562 = vrot.slane %v4558, %v4561
    %4563 = vmatprep.subr.mxu0 0.0
    %4564 = vmatpush1.msra.mxu0 %v4557
    %4565 = vmatprep.subr.mxu0 0.0
    %4566 = vmatpush1.msra.mxu0 %v4556
    %4567 = vmatprep.subr.mxu0 0.0
    %4568 = vmatpush1.msra.mxu0 %v4555
    %4569 = vmatprep.subr.mxu0 0.0
    %4570 = vmatpush1.msra.mxu0 %v4554
    %4571 = vmatprep.subr.mxu0 0.0
    %4572 = vmatpush1.msra.mxu0 %v4553
    %4573 = vmatprep.subr.mxu0 0.0
    %4574 = vmatpush1.msra.mxu0 %v4552
    %4575 = vmatprep.subr.mxu0 0.0
    %4576 = vmatpush1.msra.mxu0 %v4551
    %4577 = vmatprep.subr.mxu0 0.0
    %4578 = vmatpush1.msra.mxu0 %v4550
    %4579 = vmatprep.subr.mxu0 0.0
    %4580 = vmatpush1.msra.mxu0 %v4549
    %4581 = vmatprep.subr.mxu0 0.0
    %4582 = vmatpush1.msra.mxu0 %v4548
    %4583 = vmatprep.subr.mxu0 0.0
    %4584 = vmatpush1.msra.mxu0 %v4547
    %4585 = vmatprep.subr.mxu0 0.0
    %4586 = vmatpush1.msra.mxu0 %v4546
    %4587 = vmatprep.subr.mxu0 0.0
    %4588 = vmatpush1.msra.mxu0 %v4545
    %4589 = vmatprep.subr.mxu0 0.0
    %4590 = vmatpush1.msra.mxu0 %v4544
    %4591 = vmatprep.subr.mxu0 0.0
    %4592 = vmatpush1.msra.mxu0 %v4543
    %4593 = vmatprep.subr.mxu0 0.0
    %4594 = vmatpush1.msra.mxu0 %v4542
    %4595 = vmatprep.subr.mxu0 0.0
    %4596 = vmatpush2.msra.mxu0 0.0
    %4597 = vmatprep.subr.mxu0 0.0
    %4598 = vmatpush2.msra.mxu0 0.0
    %4599 = vmatprep.subr.mxu0 0.0
    %4600 = vmatpush2.msra.mxu0 0.0
    %4601 = vmatprep.subr.mxu0 0.0
    %4602 = vmatpush2.msra.mxu0 0.0
    %4603 = vmatprep.subr.mxu0 0.0
    %4604 = vmatpush2.msra.mxu0 0.0
    %4605 = vmatprep.subr.mxu0 0.0
    %4606 = vmatpush2.msra.mxu0 0.0
    %4607 = vmatprep.subr.mxu0 0.0
    %4608 = vmatpush2.msra.mxu0 0.0
    %4609 = vmatprep.subr.mxu0 0.0
    %4610 = vmatpush2.msra.mxu0 0.0
    %4611 = vmatprep.subr.mxu0 0.0
    %4612 = vmatpush2.msra.mxu0 0.0
    %4613 = vmatprep.subr.mxu0 0.0
    %4614 = vmatpush2.msra.mxu0 0.0
    %4615 = vmatprep.subr.mxu0 0.0
    %4616 = vmatpush2.msra.mxu0 0.0
    %4617 = vmatprep.subr.mxu0 0.0
    %4618 = vmatpush2.msra.mxu0 0.0
    %4619 = vmatprep.subr.mxu0 0.0
    %4620 = vmatpush2.msra.mxu0 0.0
    %4621 = vmatprep.subr.mxu0 0.0
    %4622 = vmatpush2.msra.mxu0 0.0
    %4623 = vmatprep.subr.mxu0 0.0
    %4624 = vmatpush2.msra.mxu0 0.0
    %4625 = vmatprep.subr.mxu0 0.0
    %4626 = vmatpush2.msra.mxu0 0.0
    %4627 = vmatprep.mubr.f32.mxu0 0.0
    %4628 = vmatmul.mubr.f32.gmra.mxu0 %v4525
    %v4629 = vpop.f32.mrf.mxu0
    %v4630 = vadd.f32 %v4562, %v4629
    %v4631 = vpop.f32.mrf.mxu0
    %4632 = vmatprep.mubr.f32.mxu0 0.0
    %4633 = vmatmul.mubr.f32.gmra.mxu0 %v4526
    %v4634 = vpop.f32.mrf.mxu0
    %v4635 = vadd.f32 %v4562, %v4634
    %v4636 = vpop.f32.mrf.mxu0
    %4637 = vmatprep.mubr.f32.mxu0 0.0
    %4638 = vmatmul.mubr.f32.gmra.mxu0 %v4527
    %v4639 = vpop.f32.mrf.mxu0
    %v4640 = vadd.f32 %v4562, %v4639
    %v4641 = vpop.f32.mrf.mxu0
    %4642 = vmatprep.mubr.f32.mxu0 0.0
    %4643 = vmatmul.mubr.f32.gmra.mxu0 %v4528
    %v4644 = vpop.f32.mrf.mxu0
    %v4645 = vadd.f32 %v4562, %v4644
    %v4646 = vpop.f32.mrf.mxu0
    %4647 = vmatprep.mubr.f32.mxu0 0.0
    %4648 = vmatmul.mubr.f32.gmra.mxu0 %v4529
    %v4649 = vpop.f32.mrf.mxu0
    %v4650 = vadd.f32 %v4562, %v4649
    %v4651 = vpop.f32.mrf.mxu0
    %4652 = vmatprep.mubr.f32.mxu0 0.0
    %4653 = vmatmul.mubr.f32.gmra.mxu0 %v4530
    %v4654 = vpop.f32.mrf.mxu0
    %v4655 = vadd.f32 %v4562, %v4654
    %v4656 = vpop.f32.mrf.mxu0
    %4657 = vmatprep.mubr.f32.mxu0 0.0
    %4658 = vmatmul.mubr.f32.gmra.mxu0 %v4531
    %v4659 = vpop.f32.mrf.mxu0
    %v4660 = vadd.f32 %v4562, %v4659
    %v4661 = vpop.f32.mrf.mxu0
    %4662 = vmatprep.mubr.f32.mxu0 0.0
    %4663 = vmatmul.mubr.f32.gmra.mxu0 %v4532
    %v4664 = vpop.f32.mrf.mxu0
    %v4665 = vadd.f32 %v4562, %v4664
    %v4666 = vpop.f32.mrf.mxu0
    %4667 = vmatprep.mubr.f32.mxu0 0.0
    %4668 = vmatmul.mubr.f32.gmra.mxu0 %v4533
    %v4669 = vpop.f32.mrf.mxu0
    %v4670 = vadd.f32 %v4562, %v4669
    %v4671 = vpop.f32.mrf.mxu0
    %4672 = vmatprep.mubr.f32.mxu0 0.0
    %4673 = vmatmul.mubr.f32.gmra.mxu0 %v4534
    %v4674 = vpop.f32.mrf.mxu0
    %v4675 = vadd.f32 %v4562, %v4674
    %v4676 = vpop.f32.mrf.mxu0
    %4677 = vmatprep.mubr.f32.mxu0 0.0
    %4678 = vmatmul.mubr.f32.gmra.mxu0 %v4535
    %v4679 = vpop.f32.mrf.mxu0
    %v4680 = vadd.f32 %v4562, %v4679
    %v4681 = vpop.f32.mrf.mxu0
    %4682 = vmatprep.mubr.f32.mxu0 0.0
    %4683 = vmatmul.mubr.f32.gmra.mxu0 %v4536
    %v4684 = vpop.f32.mrf.mxu0
    %v4685 = vadd.f32 %v4562, %v4684
    %v4686 = vpop.f32.mrf.mxu0
    %4687 = vmatprep.mubr.f32.mxu0 0.0
    %4688 = vmatmul.mubr.f32.gmra.mxu0 %v4537
    %v4689 = vpop.f32.mrf.mxu0
    %v4690 = vadd.f32 %v4562, %v4689
    %v4691 = vpop.f32.mrf.mxu0
    %4692 = vmatprep.mubr.f32.mxu0 0.0
    %4693 = vmatmul.mubr.f32.gmra.mxu0 %v4538
    %v4694 = vpop.f32.mrf.mxu0
    %v4695 = vadd.f32 %v4562, %v4694
    %v4696 = vpop.f32.mrf.mxu0
    %4697 = vmatprep.mubr.f32.mxu0 0.0
    %4698 = vmatmul.mubr.f32.gmra.mxu0 %v4539
    %v4699 = vpop.f32.mrf.mxu0
    %v4700 = vadd.f32 %v4562, %v4699
    %v4701 = vpop.f32.mrf.mxu0
    %4702 = vmatprep.mubr.f32.mxu0 0.0
    %4703 = vmatmul.mubr.f32.gmra.mxu0 %v4540
    %v4704 = vpop.f32.mrf.mxu0
    %v4705 = vadd.f32 %v4562, %v4704
    %v4706 = vpop.f32.mrf.mxu0
    %4707 = vdwg.mxu0
    %v4708 = vmax.f32 %v4630, 0.0
    %v4709 = vmax.f32 %v4635, 0.0
    %v4710 = vmax.f32 %v4640, 0.0
    %v4711 = vmax.f32 %v4645, 0.0
    %v4712 = vmax.f32 %v4650, 0.0
    %v4713 = vmax.f32 %v4655, 0.0
    %v4714 = vmax.f32 %v4660, 0.0
    %v4715 = vmax.f32 %v4665, 0.0
    %v4716 = vmax.f32 %v4670, 0.0
    %v4717 = vmax.f32 %v4675, 0.0
    %v4718 = vmax.f32 %v4680, 0.0
    %v4719 = vmax.f32 %v4685, 0.0
    %v4720 = vmax.f32 %v4690, 0.0
    %v4721 = vmax.f32 %v4695, 0.0
    %v4722 = vmax.f32 %v4700, 0.0
    %v4723 = vmax.f32 %v4705, 0.0
    %v4724 = vld [vmem:[#allocation17 + $0x1] sm:$0x1]
    %v4725 = vlaneseq
    %v4726 = vshrl.u32 %v4725, 7
    %v4727 = vsub.s32 0, %v4726
    %v4728 = vrot.slane %v4724, %v4727
    %v4729 = vmul.f32 %v4708, %v4728
    %v4730 = vmul.f32 %v4709, %v4728
    %v4731 = vmul.f32 %v4710, %v4728
    %v4732 = vmul.f32 %v4711, %v4728
    %v4733 = vmul.f32 %v4712, %v4728
    %v4734 = vmul.f32 %v4713, %v4728
    %v4735 = vmul.f32 %v4714, %v4728
    %v4736 = vmul.f32 %v4715, %v4728
    %v4737 = vmul.f32 %v4716, %v4728
    %v4738 = vmul.f32 %v4717, %v4728
    %v4739 = vmul.f32 %v4718, %v4728
    %v4740 = vmul.f32 %v4719, %v4728
    %v4741 = vmul.f32 %v4720, %v4728
    %v4742 = vmul.f32 %v4721, %v4728
    %v4743 = vmul.f32 %v4722, %v4728
    %v4744 = vmul.f32 %v4723, %v4728
    %4745 = vadd.xlane.f32.xlu0 %v4729
    %v4746 = vpop.xlane.xlu0 %4745
    %4747 = vadd.xlane.f32.xlu0 %v4730
    %v4748 = vpop.xlane.xlu0 %4747
    %4749 = vadd.xlane.f32.xlu0 %v4731
    %v4750 = vpop.xlane.xlu0 %4749
    %4751 = vadd.xlane.f32.xlu0 %v4732
    %v4752 = vpop.xlane.xlu0 %4751
    %4753 = vadd.xlane.f32.xlu0 %v4733
    %v4754 = vpop.xlane.xlu0 %4753
    %4755 = vadd.xlane.f32.xlu0 %v4734
    %v4756 = vpop.xlane.xlu0 %4755
    %4757 = vadd.xlane.f32.xlu0 %v4735
    %v4758 = vpop.xlane.xlu0 %4757
    %4759 = vadd.xlane.f32.xlu0 %v4736
    %v4760 = vpop.xlane.xlu0 %4759
    %4761 = vadd.xlane.f32.xlu0 %v4737
    %v4762 = vpop.xlane.xlu0 %4761
    %4763 = vadd.xlane.f32.xlu0 %v4738
    %v4764 = vpop.xlane.xlu0 %4763
    %4765 = vadd.xlane.f32.xlu0 %v4739
    %v4766 = vpop.xlane.xlu0 %4765
    %4767 = vadd.xlane.f32.xlu0 %v4740
    %v4768 = vpop.xlane.xlu0 %4767
    %4769 = vadd.xlane.f32.xlu0 %v4741
    %v4770 = vpop.xlane.xlu0 %4769
    %4771 = vadd.xlane.f32.xlu0 %v4742
    %v4772 = vpop.xlane.xlu0 %4771
    %4773 = vadd.xlane.f32.xlu0 %v4743
    %v4774 = vpop.xlane.xlu0 %4773
    %4775 = vadd.xlane.f32.xlu0 %v4744
    %v4776 = vpop.xlane.xlu0 %4775
    %v4777 = vld [vmem:[%s10 + $0x1] sm:$0x1]
    %4779 = vset.pattern.permute.xlu0 0
    %4780 = vperm.xlu0 %4779, %v4777
    %v4781 = vpop.permute.xlu0 %4780
    %v4782 = vlaneseq
    %v4783 = vshrl.u32 %v4782, 7
    %v4784 = vsub.s32 0, %v4783
    %v4785 = vrot.slane %v4781, %v4784
    %v4787 = vadd.f32 %v4746, %v4785
    %v4788 = vadd.f32 %v4748, %v4785
    %v4789 = vadd.f32 %v4750, %v4785
    %v4790 = vadd.f32 %v4752, %v4785
    %v4791 = vadd.f32 %v4754, %v4785
    %v4792 = vadd.f32 %v4756, %v4785
    %v4793 = vadd.f32 %v4758, %v4785
    %v4794 = vadd.f32 %v4760, %v4785
    %v4795 = vadd.f32 %v4762, %v4785
    %v4796 = vadd.f32 %v4764, %v4785
    %v4797 = vadd.f32 %v4766, %v4785
    %v4798 = vadd.f32 %v4768, %v4785
    %v4799 = vadd.f32 %v4770, %v4785
    %v4800 = vadd.f32 %v4772, %v4785
    %v4801 = vadd.f32 %v4774, %v4785
    %v4802 = vadd.f32 %v4776, %v4785
    %s4803 = scalar_lea.vmem [#allocation8], 2048
    %v4804 = vld [vmem:[%s4803] sm:$0xff]
    %v4805 = vld [vmem:[%s4803 + $0x8] sm:$0xff]
    %v4806 = vld [vmem:[%s4803 + $0x10] sm:$0xff]
    %v4807 = vld [vmem:[%s4803 + $0x18] sm:$0xff]
    %v4808 = vld [vmem:[%s4803 + $0x20] sm:$0xff]
    %v4809 = vld [vmem:[%s4803 + $0x28] sm:$0xff]
    %v4810 = vld [vmem:[%s4803 + $0x30] sm:$0xff]
    %v4811 = vld [vmem:[%s4803 + $0x38] sm:$0xff]
    %v4812 = vld [vmem:[%s4803 + $0x40] sm:$0xff]
    %v4813 = vld [vmem:[%s4803 + $0x48] sm:$0xff]
    %v4814 = vld [vmem:[%s4803 + $0x50] sm:$0xff]
    %v4815 = vld [vmem:[%s4803 + $0x58] sm:$0xff]
    %v4816 = vld [vmem:[%s4803 + $0x60] sm:$0xff]
    %v4817 = vld [vmem:[%s4803 + $0x68] sm:$0xff]
    %v4818 = vld [vmem:[%s4803 + $0x70] sm:$0xff]
    %v4819 = vld [vmem:[%s4803 + $0x78] sm:$0xff]
    %v4820 = vld [vmem:[%s4803 + $0x80] sm:$0xff]
    %v4821 = vld [vmem:[%s4803 + $0x88] sm:$0xff]
    %v4822 = vld [vmem:[%s4803 + $0x90] sm:$0xff]
    %v4823 = vld [vmem:[%s4803 + $0x98] sm:$0xff]
    %v4824 = vld [vmem:[%s4803 + $0xa0] sm:$0xff]
    %v4825 = vld [vmem:[%s4803 + $0xa8] sm:$0xff]
    %v4826 = vld [vmem:[%s4803 + $0xb0] sm:$0xff]
    %v4827 = vld [vmem:[%s4803 + $0xb8] sm:$0xff]
    %v4828 = vld [vmem:[%s4803 + $0xc0] sm:$0xff]
    %v4829 = vld [vmem:[%s4803 + $0xc8] sm:$0xff]
    %v4830 = vld [vmem:[%s4803 + $0xd0] sm:$0xff]
    %v4831 = vld [vmem:[%s4803 + $0xd8] sm:$0xff]
    %v4832 = vld [vmem:[%s4803 + $0xe0] sm:$0xff]
    %v4833 = vld [vmem:[%s4803 + $0xe8] sm:$0xff]
    %v4834 = vld [vmem:[%s4803 + $0xf0] sm:$0xff]
    %v4835 = vld [vmem:[%s4803 + $0xf8] sm:$0xff]
    %v4836 = vld [vmem:[%s4803 + $0x100] sm:$0xff]
    %v4837 = vld [vmem:[%s4803 + $0x108] sm:$0xff]
    %v4838 = vld [vmem:[%s4803 + $0x110] sm:$0xff]
    %v4839 = vld [vmem:[%s4803 + $0x118] sm:$0xff]
    %v4840 = vld [vmem:[%s4803 + $0x120] sm:$0xff]
    %v4841 = vld [vmem:[%s4803 + $0x128] sm:$0xff]
    %v4842 = vld [vmem:[%s4803 + $0x130] sm:$0xff]
    %v4843 = vld [vmem:[%s4803 + $0x138] sm:$0xff]
    %v4844 = vld [vmem:[%s4803 + $0x140] sm:$0xff]
    %v4845 = vld [vmem:[%s4803 + $0x148] sm:$0xff]
    %v4846 = vld [vmem:[%s4803 + $0x150] sm:$0xff]
    %v4847 = vld [vmem:[%s4803 + $0x158] sm:$0xff]
    %v4848 = vld [vmem:[%s4803 + $0x160] sm:$0xff]
    %v4849 = vld [vmem:[%s4803 + $0x168] sm:$0xff]
    %v4850 = vld [vmem:[%s4803 + $0x170] sm:$0xff]
    %v4851 = vld [vmem:[%s4803 + $0x178] sm:$0xff]
    %v4852 = vld [vmem:[%s4803 + $0x180] sm:$0xff]
    %v4853 = vld [vmem:[%s4803 + $0x188] sm:$0xff]
    %v4854 = vld [vmem:[%s4803 + $0x190] sm:$0xff]
    %v4855 = vld [vmem:[%s4803 + $0x198] sm:$0xff]
    %v4856 = vld [vmem:[%s4803 + $0x1a0] sm:$0xff]
    %v4857 = vld [vmem:[%s4803 + $0x1a8] sm:$0xff]
    %v4858 = vld [vmem:[%s4803 + $0x1b0] sm:$0xff]
    %v4859 = vld [vmem:[%s4803 + $0x1b8] sm:$0xff]
    %v4860 = vld [vmem:[%s4803 + $0x1c0] sm:$0xff]
    %v4861 = vld [vmem:[%s4803 + $0x1c8] sm:$0xff]
    %v4862 = vld [vmem:[%s4803 + $0x1d0] sm:$0xff]
    %v4863 = vld [vmem:[%s4803 + $0x1d8] sm:$0xff]
    %v4864 = vld [vmem:[%s4803 + $0x1e0] sm:$0xff]
    %v4865 = vld [vmem:[%s4803 + $0x1e8] sm:$0xff]
    %v4866 = vld [vmem:[%s4803 + $0x1f0] sm:$0xff]
    %v4867 = vld [vmem:[%s4803 + $0x1f8] sm:$0xff]
    %v4868 = vld [vmem:[%s4803 + $0x200] sm:$0xff]
    %v4869 = vld [vmem:[%s4803 + $0x208] sm:$0xff]
    %v4870 = vld [vmem:[%s4803 + $0x210] sm:$0xff]
    %v4871 = vld [vmem:[%s4803 + $0x218] sm:$0xff]
    %v4872 = vld [vmem:[%s4803 + $0x220] sm:$0xff]
    %v4873 = vld [vmem:[%s4803 + $0x228] sm:$0xff]
    %v4874 = vld [vmem:[%s4803 + $0x230] sm:$0xff]
    %v4875 = vld [vmem:[%s4803 + $0x238] sm:$0xff]
    %v4876 = vld [vmem:[%s4803 + $0x240] sm:$0xff]
    %v4877 = vld [vmem:[%s4803 + $0x248] sm:$0xff]
    %v4878 = vld [vmem:[%s4803 + $0x250] sm:$0xff]
    %v4879 = vld [vmem:[%s4803 + $0x258] sm:$0xff]
    %v4880 = vld [vmem:[%s4803 + $0x260] sm:$0xff]
    %v4881 = vld [vmem:[%s4803 + $0x268] sm:$0xff]
    %v4882 = vld [vmem:[%s4803 + $0x270] sm:$0xff]
    %v4883 = vld [vmem:[%s4803 + $0x278] sm:$0xff]
    %v4884 = vld [vmem:[%s4803 + $0x280] sm:$0xff]
    %v4885 = vld [vmem:[%s4803 + $0x288] sm:$0xff]
    %v4886 = vld [vmem:[%s4803 + $0x290] sm:$0xff]
    %v4887 = vld [vmem:[%s4803 + $0x298] sm:$0xff]
    %v4888 = vld [vmem:[%s4803 + $0x2a0] sm:$0xff]
    %v4889 = vld [vmem:[%s4803 + $0x2a8] sm:$0xff]
    %v4890 = vld [vmem:[%s4803 + $0x2b0] sm:$0xff]
    %v4891 = vld [vmem:[%s4803 + $0x2b8] sm:$0xff]
    %v4892 = vld [vmem:[%s4803 + $0x2c0] sm:$0xff]
    %v4893 = vld [vmem:[%s4803 + $0x2c8] sm:$0xff]
    %v4894 = vld [vmem:[%s4803 + $0x2d0] sm:$0xff]
    %v4895 = vld [vmem:[%s4803 + $0x2d8] sm:$0xff]
    %v4896 = vld [vmem:[%s4803 + $0x2e0] sm:$0xff]
    %v4897 = vld [vmem:[%s4803 + $0x2e8] sm:$0xff]
    %v4898 = vld [vmem:[%s4803 + $0x2f0] sm:$0xff]
    %v4899 = vld [vmem:[%s4803 + $0x2f8] sm:$0xff]
    %v4900 = vld [vmem:[%s4803 + $0x300] sm:$0xff]
    %v4901 = vld [vmem:[%s4803 + $0x308] sm:$0xff]
    %v4902 = vld [vmem:[%s4803 + $0x310] sm:$0xff]
    %v4903 = vld [vmem:[%s4803 + $0x318] sm:$0xff]
    %v4904 = vld [vmem:[%s4803 + $0x320] sm:$0xff]
    %v4905 = vld [vmem:[%s4803 + $0x328] sm:$0xff]
    %v4906 = vld [vmem:[%s4803 + $0x330] sm:$0xff]
    %v4907 = vld [vmem:[%s4803 + $0x338] sm:$0xff]
    %v4908 = vld [vmem:[%s4803 + $0x340] sm:$0xff]
    %v4909 = vld [vmem:[%s4803 + $0x348] sm:$0xff]
    %v4910 = vld [vmem:[%s4803 + $0x350] sm:$0xff]
    %v4911 = vld [vmem:[%s4803 + $0x358] sm:$0xff]
    %v4912 = vld [vmem:[%s4803 + $0x360] sm:$0xff]
    %v4913 = vld [vmem:[%s4803 + $0x368] sm:$0xff]
    %v4914 = vld [vmem:[%s4803 + $0x370] sm:$0xff]
    %v4915 = vld [vmem:[%s4803 + $0x378] sm:$0xff]
    %v4916 = vld [vmem:[%s4803 + $0x380] sm:$0xff]
    %v4917 = vld [vmem:[%s4803 + $0x388] sm:$0xff]
    %v4918 = vld [vmem:[%s4803 + $0x390] sm:$0xff]
    %v4919 = vld [vmem:[%s4803 + $0x398] sm:$0xff]
    %v4920 = vld [vmem:[%s4803 + $0x3a0] sm:$0xff]
    %v4921 = vld [vmem:[%s4803 + $0x3a8] sm:$0xff]
    %v4922 = vld [vmem:[%s4803 + $0x3b0] sm:$0xff]
    %v4923 = vld [vmem:[%s4803 + $0x3b8] sm:$0xff]
    %v4924 = vld [vmem:[%s4803 + $0x3c0] sm:$0xff]
    %v4925 = vld [vmem:[%s4803 + $0x3c8] sm:$0xff]
    %v4926 = vld [vmem:[%s4803 + $0x3d0] sm:$0xff]
    %v4927 = vld [vmem:[%s4803 + $0x3d8] sm:$0xff]
    %v4928 = vld [vmem:[%s4803 + $0x3e0] sm:$0xff]
    %v4929 = vld [vmem:[%s4803 + $0x3e8] sm:$0xff]
    %v4930 = vld [vmem:[%s4803 + $0x3f0] sm:$0xff]
    %v4931 = vld [vmem:[%s4803 + $0x3f8] sm:$0xff]
    %s4932 = scalar_lea.vmem [#allocation10], 2048
    %v4933 = vld [vmem:[%s4932] sm:$0xff]
    %v4934 = vld [vmem:[%s4932 + $0x8] sm:$0xff]
    %v4935 = vld [vmem:[%s4932 + $0x10] sm:$0xff]
    %v4936 = vld [vmem:[%s4932 + $0x18] sm:$0xff]
    %v4937 = vld [vmem:[%s4932 + $0x20] sm:$0xff]
    %v4938 = vld [vmem:[%s4932 + $0x28] sm:$0xff]
    %v4939 = vld [vmem:[%s4932 + $0x30] sm:$0xff]
    %v4940 = vld [vmem:[%s4932 + $0x38] sm:$0xff]
    %v4941 = vld [vmem:[%s4932 + $0x40] sm:$0xff]
    %v4942 = vld [vmem:[%s4932 + $0x48] sm:$0xff]
    %v4943 = vld [vmem:[%s4932 + $0x50] sm:$0xff]
    %v4944 = vld [vmem:[%s4932 + $0x58] sm:$0xff]
    %v4945 = vld [vmem:[%s4932 + $0x60] sm:$0xff]
    %v4946 = vld [vmem:[%s4932 + $0x68] sm:$0xff]
    %v4947 = vld [vmem:[%s4932 + $0x70] sm:$0xff]
    %v4948 = vld [vmem:[%s4932 + $0x78] sm:$0xff]
    %v4949 = vld [vmem:[%s4932 + $0x80] sm:$0xff]
    %v4950 = vld [vmem:[%s4932 + $0x88] sm:$0xff]
    %v4951 = vld [vmem:[%s4932 + $0x90] sm:$0xff]
    %v4952 = vld [vmem:[%s4932 + $0x98] sm:$0xff]
    %v4953 = vld [vmem:[%s4932 + $0xa0] sm:$0xff]
    %v4954 = vld [vmem:[%s4932 + $0xa8] sm:$0xff]
    %v4955 = vld [vmem:[%s4932 + $0xb0] sm:$0xff]
    %v4956 = vld [vmem:[%s4932 + $0xb8] sm:$0xff]
    %v4957 = vld [vmem:[%s4932 + $0xc0] sm:$0xff]
    %v4958 = vld [vmem:[%s4932 + $0xc8] sm:$0xff]
    %v4959 = vld [vmem:[%s4932 + $0xd0] sm:$0xff]
    %v4960 = vld [vmem:[%s4932 + $0xd8] sm:$0xff]
    %v4961 = vld [vmem:[%s4932 + $0xe0] sm:$0xff]
    %v4962 = vld [vmem:[%s4932 + $0xe8] sm:$0xff]
    %v4963 = vld [vmem:[%s4932 + $0xf0] sm:$0xff]
    %v4964 = vld [vmem:[%s4932 + $0xf8] sm:$0xff]
    %v4965 = vld [vmem:[%s4932 + $0x100] sm:$0xff]
    %v4966 = vld [vmem:[%s4932 + $0x108] sm:$0xff]
    %v4967 = vld [vmem:[%s4932 + $0x110] sm:$0xff]
    %v4968 = vld [vmem:[%s4932 + $0x118] sm:$0xff]
    %v4969 = vld [vmem:[%s4932 + $0x120] sm:$0xff]
    %v4970 = vld [vmem:[%s4932 + $0x128] sm:$0xff]
    %v4971 = vld [vmem:[%s4932 + $0x130] sm:$0xff]
    %v4972 = vld [vmem:[%s4932 + $0x138] sm:$0xff]
    %v4973 = vld [vmem:[%s4932 + $0x140] sm:$0xff]
    %v4974 = vld [vmem:[%s4932 + $0x148] sm:$0xff]
    %v4975 = vld [vmem:[%s4932 + $0x150] sm:$0xff]
    %v4976 = vld [vmem:[%s4932 + $0x158] sm:$0xff]
    %v4977 = vld [vmem:[%s4932 + $0x160] sm:$0xff]
    %v4978 = vld [vmem:[%s4932 + $0x168] sm:$0xff]
    %v4979 = vld [vmem:[%s4932 + $0x170] sm:$0xff]
    %v4980 = vld [vmem:[%s4932 + $0x178] sm:$0xff]
    %v4981 = vld [vmem:[%s4932 + $0x180] sm:$0xff]
    %v4982 = vld [vmem:[%s4932 + $0x188] sm:$0xff]
    %v4983 = vld [vmem:[%s4932 + $0x190] sm:$0xff]
    %v4984 = vld [vmem:[%s4932 + $0x198] sm:$0xff]
    %v4985 = vld [vmem:[%s4932 + $0x1a0] sm:$0xff]
    %v4986 = vld [vmem:[%s4932 + $0x1a8] sm:$0xff]
    %v4987 = vld [vmem:[%s4932 + $0x1b0] sm:$0xff]
    %v4988 = vld [vmem:[%s4932 + $0x1b8] sm:$0xff]
    %v4989 = vld [vmem:[%s4932 + $0x1c0] sm:$0xff]
    %v4990 = vld [vmem:[%s4932 + $0x1c8] sm:$0xff]
    %v4991 = vld [vmem:[%s4932 + $0x1d0] sm:$0xff]
    %v4992 = vld [vmem:[%s4932 + $0x1d8] sm:$0xff]
    %v4993 = vld [vmem:[%s4932 + $0x1e0] sm:$0xff]
    %v4994 = vld [vmem:[%s4932 + $0x1e8] sm:$0xff]
    %v4995 = vld [vmem:[%s4932 + $0x1f0] sm:$0xff]
    %v4996 = vld [vmem:[%s4932 + $0x1f8] sm:$0xff]
    %v4997 = vld [vmem:[%s4932 + $0x200] sm:$0xff]
    %v4998 = vld [vmem:[%s4932 + $0x208] sm:$0xff]
    %v4999 = vld [vmem:[%s4932 + $0x210] sm:$0xff]
    %v5000 = vld [vmem:[%s4932 + $0x218] sm:$0xff]
    %v5001 = vld [vmem:[%s4932 + $0x220] sm:$0xff]
    %v5002 = vld [vmem:[%s4932 + $0x228] sm:$0xff]
    %v5003 = vld [vmem:[%s4932 + $0x230] sm:$0xff]
    %v5004 = vld [vmem:[%s4932 + $0x238] sm:$0xff]
    %v5005 = vld [vmem:[%s4932 + $0x240] sm:$0xff]
    %v5006 = vld [vmem:[%s4932 + $0x248] sm:$0xff]
    %v5007 = vld [vmem:[%s4932 + $0x250] sm:$0xff]
    %v5008 = vld [vmem:[%s4932 + $0x258] sm:$0xff]
    %v5009 = vld [vmem:[%s4932 + $0x260] sm:$0xff]
    %v5010 = vld [vmem:[%s4932 + $0x268] sm:$0xff]
    %v5011 = vld [vmem:[%s4932 + $0x270] sm:$0xff]
    %v5012 = vld [vmem:[%s4932 + $0x278] sm:$0xff]
    %v5013 = vld [vmem:[%s4932 + $0x280] sm:$0xff]
    %v5014 = vld [vmem:[%s4932 + $0x288] sm:$0xff]
    %v5015 = vld [vmem:[%s4932 + $0x290] sm:$0xff]
    %v5016 = vld [vmem:[%s4932 + $0x298] sm:$0xff]
    %v5017 = vld [vmem:[%s4932 + $0x2a0] sm:$0xff]
    %v5018 = vld [vmem:[%s4932 + $0x2a8] sm:$0xff]
    %v5019 = vld [vmem:[%s4932 + $0x2b0] sm:$0xff]
    %v5020 = vld [vmem:[%s4932 + $0x2b8] sm:$0xff]
    %v5021 = vld [vmem:[%s4932 + $0x2c0] sm:$0xff]
    %v5022 = vld [vmem:[%s4932 + $0x2c8] sm:$0xff]
    %v5023 = vld [vmem:[%s4932 + $0x2d0] sm:$0xff]
    %v5024 = vld [vmem:[%s4932 + $0x2d8] sm:$0xff]
    %v5025 = vld [vmem:[%s4932 + $0x2e0] sm:$0xff]
    %v5026 = vld [vmem:[%s4932 + $0x2e8] sm:$0xff]
    %v5027 = vld [vmem:[%s4932 + $0x2f0] sm:$0xff]
    %v5028 = vld [vmem:[%s4932 + $0x2f8] sm:$0xff]
    %v5029 = vld [vmem:[%s4932 + $0x300] sm:$0xff]
    %v5030 = vld [vmem:[%s4932 + $0x308] sm:$0xff]
    %v5031 = vld [vmem:[%s4932 + $0x310] sm:$0xff]
    %v5032 = vld [vmem:[%s4932 + $0x318] sm:$0xff]
    %v5033 = vld [vmem:[%s4932 + $0x320] sm:$0xff]
    %v5034 = vld [vmem:[%s4932 + $0x328] sm:$0xff]
    %v5035 = vld [vmem:[%s4932 + $0x330] sm:$0xff]
    %v5036 = vld [vmem:[%s4932 + $0x338] sm:$0xff]
    %v5037 = vld [vmem:[%s4932 + $0x340] sm:$0xff]
    %v5038 = vld [vmem:[%s4932 + $0x348] sm:$0xff]
    %v5039 = vld [vmem:[%s4932 + $0x350] sm:$0xff]
    %v5040 = vld [vmem:[%s4932 + $0x358] sm:$0xff]
    %v5041 = vld [vmem:[%s4932 + $0x360] sm:$0xff]
    %v5042 = vld [vmem:[%s4932 + $0x368] sm:$0xff]
    %v5043 = vld [vmem:[%s4932 + $0x370] sm:$0xff]
    %v5044 = vld [vmem:[%s4932 + $0x378] sm:$0xff]
    %v5045 = vld [vmem:[%s4932 + $0x380] sm:$0xff]
    %v5046 = vld [vmem:[%s4932 + $0x388] sm:$0xff]
    %v5047 = vld [vmem:[%s4932 + $0x390] sm:$0xff]
    %v5048 = vld [vmem:[%s4932 + $0x398] sm:$0xff]
    %v5049 = vld [vmem:[%s4932 + $0x3a0] sm:$0xff]
    %v5050 = vld [vmem:[%s4932 + $0x3a8] sm:$0xff]
    %v5051 = vld [vmem:[%s4932 + $0x3b0] sm:$0xff]
    %v5052 = vld [vmem:[%s4932 + $0x3b8] sm:$0xff]
    %v5053 = vld [vmem:[%s4932 + $0x3c0] sm:$0xff]
    %v5054 = vld [vmem:[%s4932 + $0x3c8] sm:$0xff]
    %v5055 = vld [vmem:[%s4932 + $0x3d0] sm:$0xff]
    %v5056 = vld [vmem:[%s4932 + $0x3d8] sm:$0xff]
    %v5057 = vld [vmem:[%s4932 + $0x3e0] sm:$0xff]
    %v5058 = vld [vmem:[%s4932 + $0x3e8] sm:$0xff]
    %v5059 = vld [vmem:[%s4932 + $0x3f0] sm:$0xff]
    %v5060 = vld [vmem:[%s4932 + $0x3f8] sm:$0xff]
    %5061 = vmatprep.subr.mxu0 0.0
    %5062 = vmatpush1.msra.mxu0 %v4948
    %5063 = vmatprep.subr.mxu0 0.0
    %5064 = vmatpush1.msra.mxu0 %v4947
    %5065 = vmatprep.subr.mxu0 0.0
    %5066 = vmatpush1.msra.mxu0 %v4946
    %5067 = vmatprep.subr.mxu0 0.0
    %5068 = vmatpush1.msra.mxu0 %v4945
    %5069 = vmatprep.subr.mxu0 0.0
    %5070 = vmatpush1.msra.mxu0 %v4944
    %5071 = vmatprep.subr.mxu0 0.0
    %5072 = vmatpush1.msra.mxu0 %v4943
    %5073 = vmatprep.subr.mxu0 0.0
    %5074 = vmatpush1.msra.mxu0 %v4942
    %5075 = vmatprep.subr.mxu0 0.0
    %5076 = vmatpush1.msra.mxu0 %v4941
    %5077 = vmatprep.subr.mxu0 0.0
    %5078 = vmatpush1.msra.mxu0 %v4940
    %5079 = vmatprep.subr.mxu0 0.0
    %5080 = vmatpush1.msra.mxu0 %v4939
    %5081 = vmatprep.subr.mxu0 0.0
    %5082 = vmatpush1.msra.mxu0 %v4938
    %5083 = vmatprep.subr.mxu0 0.0
    %5084 = vmatpush1.msra.mxu0 %v4937
    %5085 = vmatprep.subr.mxu0 0.0
    %5086 = vmatpush1.msra.mxu0 %v4936
    %5087 = vmatprep.subr.mxu0 0.0
    %5088 = vmatpush1.msra.mxu0 %v4935
    %5089 = vmatprep.subr.mxu0 0.0
    %5090 = vmatpush1.msra.mxu0 %v4934
    %5091 = vmatprep.subr.mxu0 0.0
    %5092 = vmatpush1.msra.mxu0 %v4933
    %5093 = vmatprep.subr.mxu0 0.0
    %5094 = vmatpush2.msra.mxu0 %v4964
    %5095 = vmatprep.subr.mxu0 0.0
    %5096 = vmatpush2.msra.mxu0 %v4963
    %5097 = vmatprep.subr.mxu0 0.0
    %5098 = vmatpush2.msra.mxu0 %v4962
    %5099 = vmatprep.subr.mxu0 0.0
    %5100 = vmatpush2.msra.mxu0 %v4961
    %5101 = vmatprep.subr.mxu0 0.0
    %5102 = vmatpush2.msra.mxu0 %v4960
    %5103 = vmatprep.subr.mxu0 0.0
    %5104 = vmatpush2.msra.mxu0 %v4959
    %5105 = vmatprep.subr.mxu0 0.0
    %5106 = vmatpush2.msra.mxu0 %v4958
    %5107 = vmatprep.subr.mxu0 0.0
    %5108 = vmatpush2.msra.mxu0 %v4957
    %5109 = vmatprep.subr.mxu0 0.0
    %5110 = vmatpush2.msra.mxu0 %v4956
    %5111 = vmatprep.subr.mxu0 0.0
    %5112 = vmatpush2.msra.mxu0 %v4955
    %5113 = vmatprep.subr.mxu0 0.0
    %5114 = vmatpush2.msra.mxu0 %v4954
    %5115 = vmatprep.subr.mxu0 0.0
    %5116 = vmatpush2.msra.mxu0 %v4953
    %5117 = vmatprep.subr.mxu0 0.0
    %5118 = vmatpush2.msra.mxu0 %v4952
    %5119 = vmatprep.subr.mxu0 0.0
    %5120 = vmatpush2.msra.mxu0 %v4951
    %5121 = vmatprep.subr.mxu0 0.0
    %5122 = vmatpush2.msra.mxu0 %v4950
    %5123 = vmatprep.subr.mxu0 0.0
    %5124 = vmatpush2.msra.mxu0 %v4949
    %5125 = vmatprep.mubr.f32.mxu0 %v874
    %5126 = vmatmul.mubr.f32.gmra.mxu0 %v873
    %v5127 = vpop.f32.mrf.mxu0
    %v5128 = vadd.f32 0.0, %v5127
    %v5129 = vpop.f32.mrf.mxu0
    %5130 = vmatprep.mubr.f32.mxu0 %v882
    %5131 = vmatmul.mubr.f32.gmra.mxu0 %v881
    %v5132 = vpop.f32.mrf.mxu0
    %v5133 = vadd.f32 0.0, %v5132
    %v5134 = vpop.f32.mrf.mxu0
    %5135 = vmatprep.mubr.f32.mxu0 %v890
    %5136 = vmatmul.mubr.f32.gmra.mxu0 %v889
    %v5137 = vpop.f32.mrf.mxu0
    %v5138 = vadd.f32 0.0, %v5137
    %v5139 = vpop.f32.mrf.mxu0
    %5140 = vmatprep.mubr.f32.mxu0 %v898
    %5141 = vmatmul.mubr.f32.gmra.mxu0 %v897
    %v5142 = vpop.f32.mrf.mxu0
    %v5143 = vadd.f32 0.0, %v5142
    %v5144 = vpop.f32.mrf.mxu0
    %5145 = vmatprep.mubr.f32.mxu0 %v906
    %5146 = vmatmul.mubr.f32.gmra.mxu0 %v905
    %v5147 = vpop.f32.mrf.mxu0
    %v5148 = vadd.f32 0.0, %v5147
    %v5149 = vpop.f32.mrf.mxu0
    %5150 = vmatprep.mubr.f32.mxu0 %v914
    %5151 = vmatmul.mubr.f32.gmra.mxu0 %v913
    %v5152 = vpop.f32.mrf.mxu0
    %v5153 = vadd.f32 0.0, %v5152
    %v5154 = vpop.f32.mrf.mxu0
    %5155 = vmatprep.mubr.f32.mxu0 %v922
    %5156 = vmatmul.mubr.f32.gmra.mxu0 %v921
    %v5157 = vpop.f32.mrf.mxu0
    %v5158 = vadd.f32 0.0, %v5157
    %v5159 = vpop.f32.mrf.mxu0
    %5160 = vmatprep.mubr.f32.mxu0 %v930
    %5161 = vmatmul.mubr.f32.gmra.mxu0 %v929
    %v5162 = vpop.f32.mrf.mxu0
    %v5163 = vadd.f32 0.0, %v5162
    %v5164 = vpop.f32.mrf.mxu0
    %5165 = vmatprep.mubr.f32.mxu0 %v938
    %5166 = vmatmul.mubr.f32.gmra.mxu0 %v937
    %v5167 = vpop.f32.mrf.mxu0
    %v5168 = vadd.f32 0.0, %v5167
    %v5169 = vpop.f32.mrf.mxu0
    %5170 = vmatprep.mubr.f32.mxu0 %v946
    %5171 = vmatmul.mubr.f32.gmra.mxu0 %v945
    %v5172 = vpop.f32.mrf.mxu0
    %v5173 = vadd.f32 0.0, %v5172
    %v5174 = vpop.f32.mrf.mxu0
    %5175 = vmatprep.mubr.f32.mxu0 %v954
    %5176 = vmatmul.mubr.f32.gmra.mxu0 %v953
    %v5177 = vpop.f32.mrf.mxu0
    %v5178 = vadd.f32 0.0, %v5177
    %v5179 = vpop.f32.mrf.mxu0
    %5180 = vmatprep.mubr.f32.mxu0 %v962
    %5181 = vmatmul.mubr.f32.gmra.mxu0 %v961
    %v5182 = vpop.f32.mrf.mxu0
    %v5183 = vadd.f32 0.0, %v5182
    %v5184 = vpop.f32.mrf.mxu0
    %5185 = vmatprep.mubr.f32.mxu0 %v970
    %5186 = vmatmul.mubr.f32.gmra.mxu0 %v969
    %v5187 = vpop.f32.mrf.mxu0
    %v5188 = vadd.f32 0.0, %v5187
    %v5189 = vpop.f32.mrf.mxu0
    %5190 = vmatprep.mubr.f32.mxu0 %v978
    %5191 = vmatmul.mubr.f32.gmra.mxu0 %v977
    %v5192 = vpop.f32.mrf.mxu0
    %v5193 = vadd.f32 0.0, %v5192
    %v5194 = vpop.f32.mrf.mxu0
    %5195 = vmatprep.mubr.f32.mxu0 %v986
    %5196 = vmatmul.mubr.f32.gmra.mxu0 %v985
    %v5197 = vpop.f32.mrf.mxu0
    %v5198 = vadd.f32 0.0, %v5197
    %v5199 = vpop.f32.mrf.mxu0
    %5200 = vmatprep.mubr.f32.mxu0 %v994
    %5201 = vmatmul.mubr.f32.gmra.mxu0 %v993
    %v5202 = vpop.f32.mrf.mxu0
    %v5203 = vadd.f32 0.0, %v5202
    %v5204 = vpop.f32.mrf.mxu0
    %5205 = vdwg.mxu0
    %5206 = vmatprep.subr.mxu0 0.0
    %5207 = vmatpush1.msra.mxu0 %v4980
    %5208 = vmatprep.subr.mxu0 0.0
    %5209 = vmatpush1.msra.mxu0 %v4979
    %5210 = vmatprep.subr.mxu0 0.0
    %5211 = vmatpush1.msra.mxu0 %v4978
    %5212 = vmatprep.subr.mxu0 0.0
    %5213 = vmatpush1.msra.mxu0 %v4977
    %5214 = vmatprep.subr.mxu0 0.0
    %5215 = vmatpush1.msra.mxu0 %v4976
    %5216 = vmatprep.subr.mxu0 0.0
    %5217 = vmatpush1.msra.mxu0 %v4975
    %5218 = vmatprep.subr.mxu0 0.0
    %5219 = vmatpush1.msra.mxu0 %v4974
    %5220 = vmatprep.subr.mxu0 0.0
    %5221 = vmatpush1.msra.mxu0 %v4973
    %5222 = vmatprep.subr.mxu0 0.0
    %5223 = vmatpush1.msra.mxu0 %v4972
    %5224 = vmatprep.subr.mxu0 0.0
    %5225 = vmatpush1.msra.mxu0 %v4971
    %5226 = vmatprep.subr.mxu0 0.0
    %5227 = vmatpush1.msra.mxu0 %v4970
    %5228 = vmatprep.subr.mxu0 0.0
    %5229 = vmatpush1.msra.mxu0 %v4969
    %5230 = vmatprep.subr.mxu0 0.0
    %5231 = vmatpush1.msra.mxu0 %v4968
    %5232 = vmatprep.subr.mxu0 0.0
    %5233 = vmatpush1.msra.mxu0 %v4967
    %5234 = vmatprep.subr.mxu0 0.0
    %5235 = vmatpush1.msra.mxu0 %v4966
    %5236 = vmatprep.subr.mxu0 0.0
    %5237 = vmatpush1.msra.mxu0 %v4965
    %5238 = vmatprep.subr.mxu0 0.0
    %5239 = vmatpush2.msra.mxu0 %v4996
    %5240 = vmatprep.subr.mxu0 0.0
    %5241 = vmatpush2.msra.mxu0 %v4995
    %5242 = vmatprep.subr.mxu0 0.0
    %5243 = vmatpush2.msra.mxu0 %v4994
    %5244 = vmatprep.subr.mxu0 0.0
    %5245 = vmatpush2.msra.mxu0 %v4993
    %5246 = vmatprep.subr.mxu0 0.0
    %5247 = vmatpush2.msra.mxu0 %v4992
    %5248 = vmatprep.subr.mxu0 0.0
    %5249 = vmatpush2.msra.mxu0 %v4991
    %5250 = vmatprep.subr.mxu0 0.0
    %5251 = vmatpush2.msra.mxu0 %v4990
    %5252 = vmatprep.subr.mxu0 0.0
    %5253 = vmatpush2.msra.mxu0 %v4989
    %5254 = vmatprep.subr.mxu0 0.0
    %5255 = vmatpush2.msra.mxu0 %v4988
    %5256 = vmatprep.subr.mxu0 0.0
    %5257 = vmatpush2.msra.mxu0 %v4987
    %5258 = vmatprep.subr.mxu0 0.0
    %5259 = vmatpush2.msra.mxu0 %v4986
    %5260 = vmatprep.subr.mxu0 0.0
    %5261 = vmatpush2.msra.mxu0 %v4985
    %5262 = vmatprep.subr.mxu0 0.0
    %5263 = vmatpush2.msra.mxu0 %v4984
    %5264 = vmatprep.subr.mxu0 0.0
    %5265 = vmatpush2.msra.mxu0 %v4983
    %5266 = vmatprep.subr.mxu0 0.0
    %5267 = vmatpush2.msra.mxu0 %v4982
    %5268 = vmatprep.subr.mxu0 0.0
    %5269 = vmatpush2.msra.mxu0 %v4981
    %5270 = vmatprep.mubr.f32.mxu0 %v876
    %5271 = vmatmul.mubr.f32.gmra.mxu0 %v875
    %v5272 = vpop.f32.mrf.mxu0
    %v5273 = vadd.f32 %v5128, %v5272
    %v5274 = vpop.f32.mrf.mxu0
    %5275 = vmatprep.mubr.f32.mxu0 %v884
    %5276 = vmatmul.mubr.f32.gmra.mxu0 %v883
    %v5277 = vpop.f32.mrf.mxu0
    %v5278 = vadd.f32 %v5133, %v5277
    %v5279 = vpop.f32.mrf.mxu0
    %5280 = vmatprep.mubr.f32.mxu0 %v892
    %5281 = vmatmul.mubr.f32.gmra.mxu0 %v891
    %v5282 = vpop.f32.mrf.mxu0
    %v5283 = vadd.f32 %v5138, %v5282
    %v5284 = vpop.f32.mrf.mxu0
    %5285 = vmatprep.mubr.f32.mxu0 %v900
    %5286 = vmatmul.mubr.f32.gmra.mxu0 %v899
    %v5287 = vpop.f32.mrf.mxu0
    %v5288 = vadd.f32 %v5143, %v5287
    %v5289 = vpop.f32.mrf.mxu0
    %5290 = vmatprep.mubr.f32.mxu0 %v908
    %5291 = vmatmul.mubr.f32.gmra.mxu0 %v907
    %v5292 = vpop.f32.mrf.mxu0
    %v5293 = vadd.f32 %v5148, %v5292
    %v5294 = vpop.f32.mrf.mxu0
    %5295 = vmatprep.mubr.f32.mxu0 %v916
    %5296 = vmatmul.mubr.f32.gmra.mxu0 %v915
    %v5297 = vpop.f32.mrf.mxu0
    %v5298 = vadd.f32 %v5153, %v5297
    %v5299 = vpop.f32.mrf.mxu0
    %5300 = vmatprep.mubr.f32.mxu0 %v924
    %5301 = vmatmul.mubr.f32.gmra.mxu0 %v923
    %v5302 = vpop.f32.mrf.mxu0
    %v5303 = vadd.f32 %v5158, %v5302
    %v5304 = vpop.f32.mrf.mxu0
    %5305 = vmatprep.mubr.f32.mxu0 %v932
    %5306 = vmatmul.mubr.f32.gmra.mxu0 %v931
    %v5307 = vpop.f32.mrf.mxu0
    %v5308 = vadd.f32 %v5163, %v5307
    %v5309 = vpop.f32.mrf.mxu0
    %5310 = vmatprep.mubr.f32.mxu0 %v940
    %5311 = vmatmul.mubr.f32.gmra.mxu0 %v939
    %v5312 = vpop.f32.mrf.mxu0
    %v5313 = vadd.f32 %v5168, %v5312
    %v5314 = vpop.f32.mrf.mxu0
    %5315 = vmatprep.mubr.f32.mxu0 %v948
    %5316 = vmatmul.mubr.f32.gmra.mxu0 %v947
    %v5317 = vpop.f32.mrf.mxu0
    %v5318 = vadd.f32 %v5173, %v5317
    %v5319 = vpop.f32.mrf.mxu0
    %5320 = vmatprep.mubr.f32.mxu0 %v956
    %5321 = vmatmul.mubr.f32.gmra.mxu0 %v955
    %v5322 = vpop.f32.mrf.mxu0
    %v5323 = vadd.f32 %v5178, %v5322
    %v5324 = vpop.f32.mrf.mxu0
    %5325 = vmatprep.mubr.f32.mxu0 %v964
    %5326 = vmatmul.mubr.f32.gmra.mxu0 %v963
    %v5327 = vpop.f32.mrf.mxu0
    %v5328 = vadd.f32 %v5183, %v5327
    %v5329 = vpop.f32.mrf.mxu0
    %5330 = vmatprep.mubr.f32.mxu0 %v972
    %5331 = vmatmul.mubr.f32.gmra.mxu0 %v971
    %v5332 = vpop.f32.mrf.mxu0
    %v5333 = vadd.f32 %v5188, %v5332
    %v5334 = vpop.f32.mrf.mxu0
    %5335 = vmatprep.mubr.f32.mxu0 %v980
    %5336 = vmatmul.mubr.f32.gmra.mxu0 %v979
    %v5337 = vpop.f32.mrf.mxu0
    %v5338 = vadd.f32 %v5193, %v5337
    %v5339 = vpop.f32.mrf.mxu0
    %5340 = vmatprep.mubr.f32.mxu0 %v988
    %5341 = vmatmul.mubr.f32.gmra.mxu0 %v987
    %v5342 = vpop.f32.mrf.mxu0
    %v5343 = vadd.f32 %v5198, %v5342
    %v5344 = vpop.f32.mrf.mxu0
    %5345 = vmatprep.mubr.f32.mxu0 %v996
    %5346 = vmatmul.mubr.f32.gmra.mxu0 %v995
    %v5347 = vpop.f32.mrf.mxu0
    %v5348 = vadd.f32 %v5203, %v5347
    %v5349 = vpop.f32.mrf.mxu0
    %5350 = vdwg.mxu0
    %5351 = vmatprep.subr.mxu0 0.0
    %5352 = vmatpush1.msra.mxu0 %v5012
    %5353 = vmatprep.subr.mxu0 0.0
    %5354 = vmatpush1.msra.mxu0 %v5011
    %5355 = vmatprep.subr.mxu0 0.0
    %5356 = vmatpush1.msra.mxu0 %v5010
    %5357 = vmatprep.subr.mxu0 0.0
    %5358 = vmatpush1.msra.mxu0 %v5009
    %5359 = vmatprep.subr.mxu0 0.0
    %5360 = vmatpush1.msra.mxu0 %v5008
    %5361 = vmatprep.subr.mxu0 0.0
    %5362 = vmatpush1.msra.mxu0 %v5007
    %5363 = vmatprep.subr.mxu0 0.0
    %5364 = vmatpush1.msra.mxu0 %v5006
    %5365 = vmatprep.subr.mxu0 0.0
    %5366 = vmatpush1.msra.mxu0 %v5005
    %5367 = vmatprep.subr.mxu0 0.0
    %5368 = vmatpush1.msra.mxu0 %v5004
    %5369 = vmatprep.subr.mxu0 0.0
    %5370 = vmatpush1.msra.mxu0 %v5003
    %5371 = vmatprep.subr.mxu0 0.0
    %5372 = vmatpush1.msra.mxu0 %v5002
    %5373 = vmatprep.subr.mxu0 0.0
    %5374 = vmatpush1.msra.mxu0 %v5001
    %5375 = vmatprep.subr.mxu0 0.0
    %5376 = vmatpush1.msra.mxu0 %v5000
    %5377 = vmatprep.subr.mxu0 0.0
    %5378 = vmatpush1.msra.mxu0 %v4999
    %5379 = vmatprep.subr.mxu0 0.0
    %5380 = vmatpush1.msra.mxu0 %v4998
    %5381 = vmatprep.subr.mxu0 0.0
    %5382 = vmatpush1.msra.mxu0 %v4997
    %5383 = vmatprep.subr.mxu0 0.0
    %5384 = vmatpush2.msra.mxu0 %v5028
    %5385 = vmatprep.subr.mxu0 0.0
    %5386 = vmatpush2.msra.mxu0 %v5027
    %5387 = vmatprep.subr.mxu0 0.0
    %5388 = vmatpush2.msra.mxu0 %v5026
    %5389 = vmatprep.subr.mxu0 0.0
    %5390 = vmatpush2.msra.mxu0 %v5025
    %5391 = vmatprep.subr.mxu0 0.0
    %5392 = vmatpush2.msra.mxu0 %v5024
    %5393 = vmatprep.subr.mxu0 0.0
    %5394 = vmatpush2.msra.mxu0 %v5023
    %5395 = vmatprep.subr.mxu0 0.0
    %5396 = vmatpush2.msra.mxu0 %v5022
    %5397 = vmatprep.subr.mxu0 0.0
    %5398 = vmatpush2.msra.mxu0 %v5021
    %5399 = vmatprep.subr.mxu0 0.0
    %5400 = vmatpush2.msra.mxu0 %v5020
    %5401 = vmatprep.subr.mxu0 0.0
    %5402 = vmatpush2.msra.mxu0 %v5019
    %5403 = vmatprep.subr.mxu0 0.0
    %5404 = vmatpush2.msra.mxu0 %v5018
    %5405 = vmatprep.subr.mxu0 0.0
    %5406 = vmatpush2.msra.mxu0 %v5017
    %5407 = vmatprep.subr.mxu0 0.0
    %5408 = vmatpush2.msra.mxu0 %v5016
    %5409 = vmatprep.subr.mxu0 0.0
    %5410 = vmatpush2.msra.mxu0 %v5015
    %5411 = vmatprep.subr.mxu0 0.0
    %5412 = vmatpush2.msra.mxu0 %v5014
    %5413 = vmatprep.subr.mxu0 0.0
    %5414 = vmatpush2.msra.mxu0 %v5013
    %5415 = vmatprep.mubr.f32.mxu0 %v878
    %5416 = vmatmul.mubr.f32.gmra.mxu0 %v877
    %v5417 = vpop.f32.mrf.mxu0
    %v5418 = vadd.f32 %v5273, %v5417
    %v5419 = vpop.f32.mrf.mxu0
    %5420 = vmatprep.mubr.f32.mxu0 %v886
    %5421 = vmatmul.mubr.f32.gmra.mxu0 %v885
    %v5422 = vpop.f32.mrf.mxu0
    %v5423 = vadd.f32 %v5278, %v5422
    %v5424 = vpop.f32.mrf.mxu0
    %5425 = vmatprep.mubr.f32.mxu0 %v894
    %5426 = vmatmul.mubr.f32.gmra.mxu0 %v893
    %v5427 = vpop.f32.mrf.mxu0
    %v5428 = vadd.f32 %v5283, %v5427
    %v5429 = vpop.f32.mrf.mxu0
    %5430 = vmatprep.mubr.f32.mxu0 %v902
    %5431 = vmatmul.mubr.f32.gmra.mxu0 %v901
    %v5432 = vpop.f32.mrf.mxu0
    %v5433 = vadd.f32 %v5288, %v5432
    %v5434 = vpop.f32.mrf.mxu0
    %5435 = vmatprep.mubr.f32.mxu0 %v910
    %5436 = vmatmul.mubr.f32.gmra.mxu0 %v909
    %v5437 = vpop.f32.mrf.mxu0
    %v5438 = vadd.f32 %v5293, %v5437
    %v5439 = vpop.f32.mrf.mxu0
    %5440 = vmatprep.mubr.f32.mxu0 %v918
    %5441 = vmatmul.mubr.f32.gmra.mxu0 %v917
    %v5442 = vpop.f32.mrf.mxu0
    %v5443 = vadd.f32 %v5298, %v5442
    %v5444 = vpop.f32.mrf.mxu0
    %5445 = vmatprep.mubr.f32.mxu0 %v926
    %5446 = vmatmul.mubr.f32.gmra.mxu0 %v925
    %v5447 = vpop.f32.mrf.mxu0
    %v5448 = vadd.f32 %v5303, %v5447
    %v5449 = vpop.f32.mrf.mxu0
    %5450 = vmatprep.mubr.f32.mxu0 %v934
    %5451 = vmatmul.mubr.f32.gmra.mxu0 %v933
    %v5452 = vpop.f32.mrf.mxu0
    %v5453 = vadd.f32 %v5308, %v5452
    %v5454 = vpop.f32.mrf.mxu0
    %5455 = vmatprep.mubr.f32.mxu0 %v942
    %5456 = vmatmul.mubr.f32.gmra.mxu0 %v941
    %v5457 = vpop.f32.mrf.mxu0
    %v5458 = vadd.f32 %v5313, %v5457
    %v5459 = vpop.f32.mrf.mxu0
    %5460 = vmatprep.mubr.f32.mxu0 %v950
    %5461 = vmatmul.mubr.f32.gmra.mxu0 %v949
    %v5462 = vpop.f32.mrf.mxu0
    %v5463 = vadd.f32 %v5318, %v5462
    %v5464 = vpop.f32.mrf.mxu0
    %5465 = vmatprep.mubr.f32.mxu0 %v958
    %5466 = vmatmul.mubr.f32.gmra.mxu0 %v957
    %v5467 = vpop.f32.mrf.mxu0
    %v5468 = vadd.f32 %v5323, %v5467
    %v5469 = vpop.f32.mrf.mxu0
    %5470 = vmatprep.mubr.f32.mxu0 %v966
    %5471 = vmatmul.mubr.f32.gmra.mxu0 %v965
    %v5472 = vpop.f32.mrf.mxu0
    %v5473 = vadd.f32 %v5328, %v5472
    %v5474 = vpop.f32.mrf.mxu0
    %5475 = vmatprep.mubr.f32.mxu0 %v974
    %5476 = vmatmul.mubr.f32.gmra.mxu0 %v973
    %v5477 = vpop.f32.mrf.mxu0
    %v5478 = vadd.f32 %v5333, %v5477
    %v5479 = vpop.f32.mrf.mxu0
    %5480 = vmatprep.mubr.f32.mxu0 %v982
    %5481 = vmatmul.mubr.f32.gmra.mxu0 %v981
    %v5482 = vpop.f32.mrf.mxu0
    %v5483 = vadd.f32 %v5338, %v5482
    %v5484 = vpop.f32.mrf.mxu0
    %5485 = vmatprep.mubr.f32.mxu0 %v990
    %5486 = vmatmul.mubr.f32.gmra.mxu0 %v989
    %v5487 = vpop.f32.mrf.mxu0
    %v5488 = vadd.f32 %v5343, %v5487
    %v5489 = vpop.f32.mrf.mxu0
    %5490 = vmatprep.mubr.f32.mxu0 %v998
    %5491 = vmatmul.mubr.f32.gmra.mxu0 %v997
    %v5492 = vpop.f32.mrf.mxu0
    %v5493 = vadd.f32 %v5348, %v5492
    %v5494 = vpop.f32.mrf.mxu0
    %5495 = vdwg.mxu0
    %5496 = vmatprep.subr.mxu0 0.0
    %5497 = vmatpush1.msra.mxu0 %v5044
    %5498 = vmatprep.subr.mxu0 0.0
    %5499 = vmatpush1.msra.mxu0 %v5043
    %5500 = vmatprep.subr.mxu0 0.0
    %5501 = vmatpush1.msra.mxu0 %v5042
    %5502 = vmatprep.subr.mxu0 0.0
    %5503 = vmatpush1.msra.mxu0 %v5041
    %5504 = vmatprep.subr.mxu0 0.0
    %5505 = vmatpush1.msra.mxu0 %v5040
    %5506 = vmatprep.subr.mxu0 0.0
    %5507 = vmatpush1.msra.mxu0 %v5039
    %5508 = vmatprep.subr.mxu0 0.0
    %5509 = vmatpush1.msra.mxu0 %v5038
    %5510 = vmatprep.subr.mxu0 0.0
    %5511 = vmatpush1.msra.mxu0 %v5037
    %5512 = vmatprep.subr.mxu0 0.0
    %5513 = vmatpush1.msra.mxu0 %v5036
    %5514 = vmatprep.subr.mxu0 0.0
    %5515 = vmatpush1.msra.mxu0 %v5035
    %5516 = vmatprep.subr.mxu0 0.0
    %5517 = vmatpush1.msra.mxu0 %v5034
    %5518 = vmatprep.subr.mxu0 0.0
    %5519 = vmatpush1.msra.mxu0 %v5033
    %5520 = vmatprep.subr.mxu0 0.0
    %5521 = vmatpush1.msra.mxu0 %v5032
    %5522 = vmatprep.subr.mxu0 0.0
    %5523 = vmatpush1.msra.mxu0 %v5031
    %5524 = vmatprep.subr.mxu0 0.0
    %5525 = vmatpush1.msra.mxu0 %v5030
    %5526 = vmatprep.subr.mxu0 0.0
    %5527 = vmatpush1.msra.mxu0 %v5029
    %5528 = vmatprep.subr.mxu0 0.0
    %5529 = vmatpush2.msra.mxu0 %v5060
    %5530 = vmatprep.subr.mxu0 0.0
    %5531 = vmatpush2.msra.mxu0 %v5059
    %5532 = vmatprep.subr.mxu0 0.0
    %5533 = vmatpush2.msra.mxu0 %v5058
    %5534 = vmatprep.subr.mxu0 0.0
    %5535 = vmatpush2.msra.mxu0 %v5057
    %5536 = vmatprep.subr.mxu0 0.0
    %5537 = vmatpush2.msra.mxu0 %v5056
    %5538 = vmatprep.subr.mxu0 0.0
    %5539 = vmatpush2.msra.mxu0 %v5055
    %5540 = vmatprep.subr.mxu0 0.0
    %5541 = vmatpush2.msra.mxu0 %v5054
    %5542 = vmatprep.subr.mxu0 0.0
    %5543 = vmatpush2.msra.mxu0 %v5053
    %5544 = vmatprep.subr.mxu0 0.0
    %5545 = vmatpush2.msra.mxu0 %v5052
    %5546 = vmatprep.subr.mxu0 0.0
    %5547 = vmatpush2.msra.mxu0 %v5051
    %5548 = vmatprep.subr.mxu0 0.0
    %5549 = vmatpush2.msra.mxu0 %v5050
    %5550 = vmatprep.subr.mxu0 0.0
    %5551 = vmatpush2.msra.mxu0 %v5049
    %5552 = vmatprep.subr.mxu0 0.0
    %5553 = vmatpush2.msra.mxu0 %v5048
    %5554 = vmatprep.subr.mxu0 0.0
    %5555 = vmatpush2.msra.mxu0 %v5047
    %5556 = vmatprep.subr.mxu0 0.0
    %5557 = vmatpush2.msra.mxu0 %v5046
    %5558 = vmatprep.subr.mxu0 0.0
    %5559 = vmatpush2.msra.mxu0 %v5045
    %5560 = vmatprep.mubr.f32.mxu0 %v880
    %5561 = vmatmul.mubr.f32.gmra.mxu0 %v879
    %v5562 = vpop.f32.mrf.mxu0
    %v5563 = vadd.f32 %v5418, %v5562
    %v5564 = vpop.f32.mrf.mxu0
    %5565 = vmatprep.mubr.f32.mxu0 %v888
    %5566 = vmatmul.mubr.f32.gmra.mxu0 %v887
    %v5567 = vpop.f32.mrf.mxu0
    %v5568 = vadd.f32 %v5423, %v5567
    %v5569 = vpop.f32.mrf.mxu0
    %5570 = vmatprep.mubr.f32.mxu0 %v896
    %5571 = vmatmul.mubr.f32.gmra.mxu0 %v895
    %v5572 = vpop.f32.mrf.mxu0
    %v5573 = vadd.f32 %v5428, %v5572
    %v5574 = vpop.f32.mrf.mxu0
    %5575 = vmatprep.mubr.f32.mxu0 %v904
    %5576 = vmatmul.mubr.f32.gmra.mxu0 %v903
    %v5577 = vpop.f32.mrf.mxu0
    %v5578 = vadd.f32 %v5433, %v5577
    %v5579 = vpop.f32.mrf.mxu0
    %5580 = vmatprep.mubr.f32.mxu0 %v912
    %5581 = vmatmul.mubr.f32.gmra.mxu0 %v911
    %v5582 = vpop.f32.mrf.mxu0
    %v5583 = vadd.f32 %v5438, %v5582
    %v5584 = vpop.f32.mrf.mxu0
    %5585 = vmatprep.mubr.f32.mxu0 %v920
    %5586 = vmatmul.mubr.f32.gmra.mxu0 %v919
    %v5587 = vpop.f32.mrf.mxu0
    %v5588 = vadd.f32 %v5443, %v5587
    %v5589 = vpop.f32.mrf.mxu0
    %5590 = vmatprep.mubr.f32.mxu0 %v928
    %5591 = vmatmul.mubr.f32.gmra.mxu0 %v927
    %v5592 = vpop.f32.mrf.mxu0
    %v5593 = vadd.f32 %v5448, %v5592
    %v5594 = vpop.f32.mrf.mxu0
    %5595 = vmatprep.mubr.f32.mxu0 %v936
    %5596 = vmatmul.mubr.f32.gmra.mxu0 %v935
    %v5597 = vpop.f32.mrf.mxu0
    %v5598 = vadd.f32 %v5453, %v5597
    %v5599 = vpop.f32.mrf.mxu0
    %5600 = vmatprep.mubr.f32.mxu0 %v944
    %5601 = vmatmul.mubr.f32.gmra.mxu0 %v943
    %v5602 = vpop.f32.mrf.mxu0
    %v5603 = vadd.f32 %v5458, %v5602
    %v5604 = vpop.f32.mrf.mxu0
    %5605 = vmatprep.mubr.f32.mxu0 %v952
    %5606 = vmatmul.mubr.f32.gmra.mxu0 %v951
    %v5607 = vpop.f32.mrf.mxu0
    %v5608 = vadd.f32 %v5463, %v5607
    %v5609 = vpop.f32.mrf.mxu0
    %5610 = vmatprep.mubr.f32.mxu0 %v960
    %5611 = vmatmul.mubr.f32.gmra.mxu0 %v959
    %v5612 = vpop.f32.mrf.mxu0
    %v5613 = vadd.f32 %v5468, %v5612
    %v5614 = vpop.f32.mrf.mxu0
    %5615 = vmatprep.mubr.f32.mxu0 %v968
    %5616 = vmatmul.mubr.f32.gmra.mxu0 %v967
    %v5617 = vpop.f32.mrf.mxu0
    %v5618 = vadd.f32 %v5473, %v5617
    %v5619 = vpop.f32.mrf.mxu0
    %5620 = vmatprep.mubr.f32.mxu0 %v976
    %5621 = vmatmul.mubr.f32.gmra.mxu0 %v975
    %v5622 = vpop.f32.mrf.mxu0
    %v5623 = vadd.f32 %v5478, %v5622
    %v5624 = vpop.f32.mrf.mxu0
    %5625 = vmatprep.mubr.f32.mxu0 %v984
    %5626 = vmatmul.mubr.f32.gmra.mxu0 %v983
    %v5627 = vpop.f32.mrf.mxu0
    %v5628 = vadd.f32 %v5483, %v5627
    %v5629 = vpop.f32.mrf.mxu0
    %5630 = vmatprep.mubr.f32.mxu0 %v992
    %5631 = vmatmul.mubr.f32.gmra.mxu0 %v991
    %v5632 = vpop.f32.mrf.mxu0
    %v5633 = vadd.f32 %v5488, %v5632
    %v5634 = vpop.f32.mrf.mxu0
    %5635 = vmatprep.mubr.f32.mxu0 %v1000
    %5636 = vmatmul.mubr.f32.gmra.mxu0 %v999
    %v5637 = vpop.f32.mrf.mxu0
    %v5638 = vadd.f32 %v5493, %v5637
    %v5639 = vpop.f32.mrf.mxu0
    %5640 = vdwg.mxu0
    %5641 = vmatprep.subr.mxu0 0.0
    %5642 = vmatpush1.msra.mxu0 %v4819
    %5643 = vmatprep.subr.mxu0 0.0
    %5644 = vmatpush1.msra.mxu0 %v4818
    %5645 = vmatprep.subr.mxu0 0.0
    %5646 = vmatpush1.msra.mxu0 %v4817
    %5647 = vmatprep.subr.mxu0 0.0
    %5648 = vmatpush1.msra.mxu0 %v4816
    %5649 = vmatprep.subr.mxu0 0.0
    %5650 = vmatpush1.msra.mxu0 %v4815
    %5651 = vmatprep.subr.mxu0 0.0
    %5652 = vmatpush1.msra.mxu0 %v4814
    %5653 = vmatprep.subr.mxu0 0.0
    %5654 = vmatpush1.msra.mxu0 %v4813
    %5655 = vmatprep.subr.mxu0 0.0
    %5656 = vmatpush1.msra.mxu0 %v4812
    %5657 = vmatprep.subr.mxu0 0.0
    %5658 = vmatpush1.msra.mxu0 %v4811
    %5659 = vmatprep.subr.mxu0 0.0
    %5660 = vmatpush1.msra.mxu0 %v4810
    %5661 = vmatprep.subr.mxu0 0.0
    %5662 = vmatpush1.msra.mxu0 %v4809
    %5663 = vmatprep.subr.mxu0 0.0
    %5664 = vmatpush1.msra.mxu0 %v4808
    %5665 = vmatprep.subr.mxu0 0.0
    %5666 = vmatpush1.msra.mxu0 %v4807
    %5667 = vmatprep.subr.mxu0 0.0
    %5668 = vmatpush1.msra.mxu0 %v4806
    %5669 = vmatprep.subr.mxu0 0.0
    %5670 = vmatpush1.msra.mxu0 %v4805
    %5671 = vmatprep.subr.mxu0 0.0
    %5672 = vmatpush1.msra.mxu0 %v4804
    %5673 = vmatprep.subr.mxu0 0.0
    %5674 = vmatpush2.msra.mxu0 %v4835
    %5675 = vmatprep.subr.mxu0 0.0
    %5676 = vmatpush2.msra.mxu0 %v4834
    %5677 = vmatprep.subr.mxu0 0.0
    %5678 = vmatpush2.msra.mxu0 %v4833
    %5679 = vmatprep.subr.mxu0 0.0
    %5680 = vmatpush2.msra.mxu0 %v4832
    %5681 = vmatprep.subr.mxu0 0.0
    %5682 = vmatpush2.msra.mxu0 %v4831
    %5683 = vmatprep.subr.mxu0 0.0
    %5684 = vmatpush2.msra.mxu0 %v4830
    %5685 = vmatprep.subr.mxu0 0.0
    %5686 = vmatpush2.msra.mxu0 %v4829
    %5687 = vmatprep.subr.mxu0 0.0
    %5688 = vmatpush2.msra.mxu0 %v4828
    %5689 = vmatprep.subr.mxu0 0.0
    %5690 = vmatpush2.msra.mxu0 %v4827
    %5691 = vmatprep.subr.mxu0 0.0
    %5692 = vmatpush2.msra.mxu0 %v4826
    %5693 = vmatprep.subr.mxu0 0.0
    %5694 = vmatpush2.msra.mxu0 %v4825
    %5695 = vmatprep.subr.mxu0 0.0
    %5696 = vmatpush2.msra.mxu0 %v4824
    %5697 = vmatprep.subr.mxu0 0.0
    %5698 = vmatpush2.msra.mxu0 %v4823
    %5699 = vmatprep.subr.mxu0 0.0
    %5700 = vmatpush2.msra.mxu0 %v4822
    %5701 = vmatprep.subr.mxu0 0.0
    %5702 = vmatpush2.msra.mxu0 %v4821
    %5703 = vmatprep.subr.mxu0 0.0
    %5704 = vmatpush2.msra.mxu0 %v4820
    %5705 = vmatprep.mubr.f32.mxu0 %v458
    %5706 = vmatmul.mubr.f32.gmra.mxu0 %v457
    %v5707 = vpop.f32.mrf.mxu0
    %v5708 = vadd.f32 %v5563, %v5707
    %v5709 = vpop.f32.mrf.mxu0
    %5710 = vmatprep.mubr.f32.mxu0 %v466
    %5711 = vmatmul.mubr.f32.gmra.mxu0 %v465
    %v5712 = vpop.f32.mrf.mxu0
    %v5713 = vadd.f32 %v5568, %v5712
    %v5714 = vpop.f32.mrf.mxu0
    %5715 = vmatprep.mubr.f32.mxu0 %v474
    %5716 = vmatmul.mubr.f32.gmra.mxu0 %v473
    %v5717 = vpop.f32.mrf.mxu0
    %v5718 = vadd.f32 %v5573, %v5717
    %v5719 = vpop.f32.mrf.mxu0
    %5720 = vmatprep.mubr.f32.mxu0 %v482
    %5721 = vmatmul.mubr.f32.gmra.mxu0 %v481
    %v5722 = vpop.f32.mrf.mxu0
    %v5723 = vadd.f32 %v5578, %v5722
    %v5724 = vpop.f32.mrf.mxu0
    %5725 = vmatprep.mubr.f32.mxu0 %v490
    %5726 = vmatmul.mubr.f32.gmra.mxu0 %v489
    %v5727 = vpop.f32.mrf.mxu0
    %v5728 = vadd.f32 %v5583, %v5727
    %v5729 = vpop.f32.mrf.mxu0
    %5730 = vmatprep.mubr.f32.mxu0 %v498
    %5731 = vmatmul.mubr.f32.gmra.mxu0 %v497
    %v5732 = vpop.f32.mrf.mxu0
    %v5733 = vadd.f32 %v5588, %v5732
    %v5734 = vpop.f32.mrf.mxu0
    %5735 = vmatprep.mubr.f32.mxu0 %v506
    %5736 = vmatmul.mubr.f32.gmra.mxu0 %v505
    %v5737 = vpop.f32.mrf.mxu0
    %v5738 = vadd.f32 %v5593, %v5737
    %v5739 = vpop.f32.mrf.mxu0
    %5740 = vmatprep.mubr.f32.mxu0 %v514
    %5741 = vmatmul.mubr.f32.gmra.mxu0 %v513
    %v5742 = vpop.f32.mrf.mxu0
    %v5743 = vadd.f32 %v5598, %v5742
    %v5744 = vpop.f32.mrf.mxu0
    %5745 = vmatprep.mubr.f32.mxu0 %v522
    %5746 = vmatmul.mubr.f32.gmra.mxu0 %v521
    %v5747 = vpop.f32.mrf.mxu0
    %v5748 = vadd.f32 %v5603, %v5747
    %v5749 = vpop.f32.mrf.mxu0
    %5750 = vmatprep.mubr.f32.mxu0 %v530
    %5751 = vmatmul.mubr.f32.gmra.mxu0 %v529
    %v5752 = vpop.f32.mrf.mxu0
    %v5753 = vadd.f32 %v5608, %v5752
    %v5754 = vpop.f32.mrf.mxu0
    %5755 = vmatprep.mubr.f32.mxu0 %v538
    %5756 = vmatmul.mubr.f32.gmra.mxu0 %v537
    %v5757 = vpop.f32.mrf.mxu0
    %v5758 = vadd.f32 %v5613, %v5757
    %v5759 = vpop.f32.mrf.mxu0
    %5760 = vmatprep.mubr.f32.mxu0 %v546
    %5761 = vmatmul.mubr.f32.gmra.mxu0 %v545
    %v5762 = vpop.f32.mrf.mxu0
    %v5763 = vadd.f32 %v5618, %v5762
    %v5764 = vpop.f32.mrf.mxu0
    %5765 = vmatprep.mubr.f32.mxu0 %v554
    %5766 = vmatmul.mubr.f32.gmra.mxu0 %v553
    %v5767 = vpop.f32.mrf.mxu0
    %v5768 = vadd.f32 %v5623, %v5767
    %v5769 = vpop.f32.mrf.mxu0
    %5770 = vmatprep.mubr.f32.mxu0 %v562
    %5771 = vmatmul.mubr.f32.gmra.mxu0 %v561
    %v5772 = vpop.f32.mrf.mxu0
    %v5773 = vadd.f32 %v5628, %v5772
    %v5774 = vpop.f32.mrf.mxu0
    %5775 = vmatprep.mubr.f32.mxu0 %v570
    %5776 = vmatmul.mubr.f32.gmra.mxu0 %v569
    %v5777 = vpop.f32.mrf.mxu0
    %v5778 = vadd.f32 %v5633, %v5777
    %v5779 = vpop.f32.mrf.mxu0
    %5780 = vmatprep.mubr.f32.mxu0 %v578
    %5781 = vmatmul.mubr.f32.gmra.mxu0 %v577
    %v5782 = vpop.f32.mrf.mxu0
    %v5783 = vadd.f32 %v5638, %v5782
    %v5784 = vpop.f32.mrf.mxu0
    %5785 = vdwg.mxu0
    %5786 = vmatprep.subr.mxu0 0.0
    %5787 = vmatpush1.msra.mxu0 %v4851
    %5788 = vmatprep.subr.mxu0 0.0
    %5789 = vmatpush1.msra.mxu0 %v4850
    %5790 = vmatprep.subr.mxu0 0.0
    %5791 = vmatpush1.msra.mxu0 %v4849
    %5792 = vmatprep.subr.mxu0 0.0
    %5793 = vmatpush1.msra.mxu0 %v4848
    %5794 = vmatprep.subr.mxu0 0.0
    %5795 = vmatpush1.msra.mxu0 %v4847
    %5796 = vmatprep.subr.mxu0 0.0
    %5797 = vmatpush1.msra.mxu0 %v4846
    %5798 = vmatprep.subr.mxu0 0.0
    %5799 = vmatpush1.msra.mxu0 %v4845
    %5800 = vmatprep.subr.mxu0 0.0
    %5801 = vmatpush1.msra.mxu0 %v4844
    %5802 = vmatprep.subr.mxu0 0.0
    %5803 = vmatpush1.msra.mxu0 %v4843
    %5804 = vmatprep.subr.mxu0 0.0
    %5805 = vmatpush1.msra.mxu0 %v4842
    %5806 = vmatprep.subr.mxu0 0.0
    %5807 = vmatpush1.msra.mxu0 %v4841
    %5808 = vmatprep.subr.mxu0 0.0
    %5809 = vmatpush1.msra.mxu0 %v4840
    %5810 = vmatprep.subr.mxu0 0.0
    %5811 = vmatpush1.msra.mxu0 %v4839
    %5812 = vmatprep.subr.mxu0 0.0
    %5813 = vmatpush1.msra.mxu0 %v4838
    %5814 = vmatprep.subr.mxu0 0.0
    %5815 = vmatpush1.msra.mxu0 %v4837
    %5816 = vmatprep.subr.mxu0 0.0
    %5817 = vmatpush1.msra.mxu0 %v4836
    %5818 = vmatprep.subr.mxu0 0.0
    %5819 = vmatpush2.msra.mxu0 %v4867
    %5820 = vmatprep.subr.mxu0 0.0
    %5821 = vmatpush2.msra.mxu0 %v4866
    %5822 = vmatprep.subr.mxu0 0.0
    %5823 = vmatpush2.msra.mxu0 %v4865
    %5824 = vmatprep.subr.mxu0 0.0
    %5825 = vmatpush2.msra.mxu0 %v4864
    %5826 = vmatprep.subr.mxu0 0.0
    %5827 = vmatpush2.msra.mxu0 %v4863
    %5828 = vmatprep.subr.mxu0 0.0
    %5829 = vmatpush2.msra.mxu0 %v4862
    %5830 = vmatprep.subr.mxu0 0.0
    %5831 = vmatpush2.msra.mxu0 %v4861
    %5832 = vmatprep.subr.mxu0 0.0
    %5833 = vmatpush2.msra.mxu0 %v4860
    %5834 = vmatprep.subr.mxu0 0.0
    %5835 = vmatpush2.msra.mxu0 %v4859
    %5836 = vmatprep.subr.mxu0 0.0
    %5837 = vmatpush2.msra.mxu0 %v4858
    %5838 = vmatprep.subr.mxu0 0.0
    %5839 = vmatpush2.msra.mxu0 %v4857
    %5840 = vmatprep.subr.mxu0 0.0
    %5841 = vmatpush2.msra.mxu0 %v4856
    %5842 = vmatprep.subr.mxu0 0.0
    %5843 = vmatpush2.msra.mxu0 %v4855
    %5844 = vmatprep.subr.mxu0 0.0
    %5845 = vmatpush2.msra.mxu0 %v4854
    %5846 = vmatprep.subr.mxu0 0.0
    %5847 = vmatpush2.msra.mxu0 %v4853
    %5848 = vmatprep.subr.mxu0 0.0
    %5849 = vmatpush2.msra.mxu0 %v4852
    %5850 = vmatprep.mubr.f32.mxu0 %v460
    %5851 = vmatmul.mubr.f32.gmra.mxu0 %v459
    %v5852 = vpop.f32.mrf.mxu0
    %v5853 = vadd.f32 %v5708, %v5852
    %v5854 = vpop.f32.mrf.mxu0
    %5855 = vmatprep.mubr.f32.mxu0 %v468
    %5856 = vmatmul.mubr.f32.gmra.mxu0 %v467
    %v5857 = vpop.f32.mrf.mxu0
    %v5858 = vadd.f32 %v5713, %v5857
    %v5859 = vpop.f32.mrf.mxu0
    %5860 = vmatprep.mubr.f32.mxu0 %v476
    %5861 = vmatmul.mubr.f32.gmra.mxu0 %v475
    %v5862 = vpop.f32.mrf.mxu0
    %v5863 = vadd.f32 %v5718, %v5862
    %v5864 = vpop.f32.mrf.mxu0
    %5865 = vmatprep.mubr.f32.mxu0 %v484
    %5866 = vmatmul.mubr.f32.gmra.mxu0 %v483
    %v5867 = vpop.f32.mrf.mxu0
    %v5868 = vadd.f32 %v5723, %v5867
    %v5869 = vpop.f32.mrf.mxu0
    %5870 = vmatprep.mubr.f32.mxu0 %v492
    %5871 = vmatmul.mubr.f32.gmra.mxu0 %v491
    %v5872 = vpop.f32.mrf.mxu0
    %v5873 = vadd.f32 %v5728, %v5872
    %v5874 = vpop.f32.mrf.mxu0
    %5875 = vmatprep.mubr.f32.mxu0 %v500
    %5876 = vmatmul.mubr.f32.gmra.mxu0 %v499
    %v5877 = vpop.f32.mrf.mxu0
    %v5878 = vadd.f32 %v5733, %v5877
    %v5879 = vpop.f32.mrf.mxu0
    %5880 = vmatprep.mubr.f32.mxu0 %v508
    %5881 = vmatmul.mubr.f32.gmra.mxu0 %v507
    %v5882 = vpop.f32.mrf.mxu0
    %v5883 = vadd.f32 %v5738, %v5882
    %v5884 = vpop.f32.mrf.mxu0
    %5885 = vmatprep.mubr.f32.mxu0 %v516
    %5886 = vmatmul.mubr.f32.gmra.mxu0 %v515
    %v5887 = vpop.f32.mrf.mxu0
    %v5888 = vadd.f32 %v5743, %v5887
    %v5889 = vpop.f32.mrf.mxu0
    %5890 = vmatprep.mubr.f32.mxu0 %v524
    %5891 = vmatmul.mubr.f32.gmra.mxu0 %v523
    %v5892 = vpop.f32.mrf.mxu0
    %v5893 = vadd.f32 %v5748, %v5892
    %v5894 = vpop.f32.mrf.mxu0
    %5895 = vmatprep.mubr.f32.mxu0 %v532
    %5896 = vmatmul.mubr.f32.gmra.mxu0 %v531
    %v5897 = vpop.f32.mrf.mxu0
    %v5898 = vadd.f32 %v5753, %v5897
    %v5899 = vpop.f32.mrf.mxu0
    %5900 = vmatprep.mubr.f32.mxu0 %v540
    %5901 = vmatmul.mubr.f32.gmra.mxu0 %v539
    %v5902 = vpop.f32.mrf.mxu0
    %v5903 = vadd.f32 %v5758, %v5902
    %v5904 = vpop.f32.mrf.mxu0
    %5905 = vmatprep.mubr.f32.mxu0 %v548
    %5906 = vmatmul.mubr.f32.gmra.mxu0 %v547
    %v5907 = vpop.f32.mrf.mxu0
    %v5908 = vadd.f32 %v5763, %v5907
    %v5909 = vpop.f32.mrf.mxu0
    %5910 = vmatprep.mubr.f32.mxu0 %v556
    %5911 = vmatmul.mubr.f32.gmra.mxu0 %v555
    %v5912 = vpop.f32.mrf.mxu0
    %v5913 = vadd.f32 %v5768, %v5912
    %v5914 = vpop.f32.mrf.mxu0
    %5915 = vmatprep.mubr.f32.mxu0 %v564
    %5916 = vmatmul.mubr.f32.gmra.mxu0 %v563
    %v5917 = vpop.f32.mrf.mxu0
    %v5918 = vadd.f32 %v5773, %v5917
    %v5919 = vpop.f32.mrf.mxu0
    %5920 = vmatprep.mubr.f32.mxu0 %v572
    %5921 = vmatmul.mubr.f32.gmra.mxu0 %v571
    %v5922 = vpop.f32.mrf.mxu0
    %v5923 = vadd.f32 %v5778, %v5922
    %v5924 = vpop.f32.mrf.mxu0
    %5925 = vmatprep.mubr.f32.mxu0 %v580
    %5926 = vmatmul.mubr.f32.gmra.mxu0 %v579
    %v5927 = vpop.f32.mrf.mxu0
    %v5928 = vadd.f32 %v5783, %v5927
    %v5929 = vpop.f32.mrf.mxu0
    %5930 = vdwg.mxu0
    %5931 = vmatprep.subr.mxu0 0.0
    %5932 = vmatpush1.msra.mxu0 %v4883
    %5933 = vmatprep.subr.mxu0 0.0
    %5934 = vmatpush1.msra.mxu0 %v4882
    %5935 = vmatprep.subr.mxu0 0.0
    %5936 = vmatpush1.msra.mxu0 %v4881
    %5937 = vmatprep.subr.mxu0 0.0
    %5938 = vmatpush1.msra.mxu0 %v4880
    %5939 = vmatprep.subr.mxu0 0.0
    %5940 = vmatpush1.msra.mxu0 %v4879
    %5941 = vmatprep.subr.mxu0 0.0
    %5942 = vmatpush1.msra.mxu0 %v4878
    %5943 = vmatprep.subr.mxu0 0.0
    %5944 = vmatpush1.msra.mxu0 %v4877
    %5945 = vmatprep.subr.mxu0 0.0
    %5946 = vmatpush1.msra.mxu0 %v4876
    %5947 = vmatprep.subr.mxu0 0.0
    %5948 = vmatpush1.msra.mxu0 %v4875
    %5949 = vmatprep.subr.mxu0 0.0
    %5950 = vmatpush1.msra.mxu0 %v4874
    %5951 = vmatprep.subr.mxu0 0.0
    %5952 = vmatpush1.msra.mxu0 %v4873
    %5953 = vmatprep.subr.mxu0 0.0
    %5954 = vmatpush1.msra.mxu0 %v4872
    %5955 = vmatprep.subr.mxu0 0.0
    %5956 = vmatpush1.msra.mxu0 %v4871
    %5957 = vmatprep.subr.mxu0 0.0
    %5958 = vmatpush1.msra.mxu0 %v4870
    %5959 = vmatprep.subr.mxu0 0.0
    %5960 = vmatpush1.msra.mxu0 %v4869
    %5961 = vmatprep.subr.mxu0 0.0
    %5962 = vmatpush1.msra.mxu0 %v4868
    %5963 = vmatprep.subr.mxu0 0.0
    %5964 = vmatpush2.msra.mxu0 %v4899
    %5965 = vmatprep.subr.mxu0 0.0
    %5966 = vmatpush2.msra.mxu0 %v4898
    %5967 = vmatprep.subr.mxu0 0.0
    %5968 = vmatpush2.msra.mxu0 %v4897
    %5969 = vmatprep.subr.mxu0 0.0
    %5970 = vmatpush2.msra.mxu0 %v4896
    %5971 = vmatprep.subr.mxu0 0.0
    %5972 = vmatpush2.msra.mxu0 %v4895
    %5973 = vmatprep.subr.mxu0 0.0
    %5974 = vmatpush2.msra.mxu0 %v4894
    %5975 = vmatprep.subr.mxu0 0.0
    %5976 = vmatpush2.msra.mxu0 %v4893
    %5977 = vmatprep.subr.mxu0 0.0
    %5978 = vmatpush2.msra.mxu0 %v4892
    %5979 = vmatprep.subr.mxu0 0.0
    %5980 = vmatpush2.msra.mxu0 %v4891
    %5981 = vmatprep.subr.mxu0 0.0
    %5982 = vmatpush2.msra.mxu0 %v4890
    %5983 = vmatprep.subr.mxu0 0.0
    %5984 = vmatpush2.msra.mxu0 %v4889
    %5985 = vmatprep.subr.mxu0 0.0
    %5986 = vmatpush2.msra.mxu0 %v4888
    %5987 = vmatprep.subr.mxu0 0.0
    %5988 = vmatpush2.msra.mxu0 %v4887
    %5989 = vmatprep.subr.mxu0 0.0
    %5990 = vmatpush2.msra.mxu0 %v4886
    %5991 = vmatprep.subr.mxu0 0.0
    %5992 = vmatpush2.msra.mxu0 %v4885
    %5993 = vmatprep.subr.mxu0 0.0
    %5994 = vmatpush2.msra.mxu0 %v4884
    %5995 = vmatprep.mubr.f32.mxu0 %v462
    %5996 = vmatmul.mubr.f32.gmra.mxu0 %v461
    %v5997 = vpop.f32.mrf.mxu0
    %v5998 = vadd.f32 %v5853, %v5997
    %v5999 = vpop.f32.mrf.mxu0
    %6000 = vmatprep.mubr.f32.mxu0 %v470
    %6001 = vmatmul.mubr.f32.gmra.mxu0 %v469
    %v6002 = vpop.f32.mrf.mxu0
    %v6003 = vadd.f32 %v5858, %v6002
    %v6004 = vpop.f32.mrf.mxu0
    %6005 = vmatprep.mubr.f32.mxu0 %v478
    %6006 = vmatmul.mubr.f32.gmra.mxu0 %v477
    %v6007 = vpop.f32.mrf.mxu0
    %v6008 = vadd.f32 %v5863, %v6007
    %v6009 = vpop.f32.mrf.mxu0
    %6010 = vmatprep.mubr.f32.mxu0 %v486
    %6011 = vmatmul.mubr.f32.gmra.mxu0 %v485
    %v6012 = vpop.f32.mrf.mxu0
    %v6013 = vadd.f32 %v5868, %v6012
    %v6014 = vpop.f32.mrf.mxu0
    %6015 = vmatprep.mubr.f32.mxu0 %v494
    %6016 = vmatmul.mubr.f32.gmra.mxu0 %v493
    %v6017 = vpop.f32.mrf.mxu0
    %v6018 = vadd.f32 %v5873, %v6017
    %v6019 = vpop.f32.mrf.mxu0
    %6020 = vmatprep.mubr.f32.mxu0 %v502
    %6021 = vmatmul.mubr.f32.gmra.mxu0 %v501
    %v6022 = vpop.f32.mrf.mxu0
    %v6023 = vadd.f32 %v5878, %v6022
    %v6024 = vpop.f32.mrf.mxu0
    %6025 = vmatprep.mubr.f32.mxu0 %v510
    %6026 = vmatmul.mubr.f32.gmra.mxu0 %v509
    %v6027 = vpop.f32.mrf.mxu0
    %v6028 = vadd.f32 %v5883, %v6027
    %v6029 = vpop.f32.mrf.mxu0
    %6030 = vmatprep.mubr.f32.mxu0 %v518
    %6031 = vmatmul.mubr.f32.gmra.mxu0 %v517
    %v6032 = vpop.f32.mrf.mxu0
    %v6033 = vadd.f32 %v5888, %v6032
    %v6034 = vpop.f32.mrf.mxu0
    %6035 = vmatprep.mubr.f32.mxu0 %v526
    %6036 = vmatmul.mubr.f32.gmra.mxu0 %v525
    %v6037 = vpop.f32.mrf.mxu0
    %v6038 = vadd.f32 %v5893, %v6037
    %v6039 = vpop.f32.mrf.mxu0
    %6040 = vmatprep.mubr.f32.mxu0 %v534
    %6041 = vmatmul.mubr.f32.gmra.mxu0 %v533
    %v6042 = vpop.f32.mrf.mxu0
    %v6043 = vadd.f32 %v5898, %v6042
    %v6044 = vpop.f32.mrf.mxu0
    %6045 = vmatprep.mubr.f32.mxu0 %v542
    %6046 = vmatmul.mubr.f32.gmra.mxu0 %v541
    %v6047 = vpop.f32.mrf.mxu0
    %v6048 = vadd.f32 %v5903, %v6047
    %v6049 = vpop.f32.mrf.mxu0
    %6050 = vmatprep.mubr.f32.mxu0 %v550
    %6051 = vmatmul.mubr.f32.gmra.mxu0 %v549
    %v6052 = vpop.f32.mrf.mxu0
    %v6053 = vadd.f32 %v5908, %v6052
    %v6054 = vpop.f32.mrf.mxu0
    %6055 = vmatprep.mubr.f32.mxu0 %v558
    %6056 = vmatmul.mubr.f32.gmra.mxu0 %v557
    %v6057 = vpop.f32.mrf.mxu0
    %v6058 = vadd.f32 %v5913, %v6057
    %v6059 = vpop.f32.mrf.mxu0
    %6060 = vmatprep.mubr.f32.mxu0 %v566
    %6061 = vmatmul.mubr.f32.gmra.mxu0 %v565
    %v6062 = vpop.f32.mrf.mxu0
    %v6063 = vadd.f32 %v5918, %v6062
    %v6064 = vpop.f32.mrf.mxu0
    %6065 = vmatprep.mubr.f32.mxu0 %v574
    %6066 = vmatmul.mubr.f32.gmra.mxu0 %v573
    %v6067 = vpop.f32.mrf.mxu0
    %v6068 = vadd.f32 %v5923, %v6067
    %v6069 = vpop.f32.mrf.mxu0
    %6070 = vmatprep.mubr.f32.mxu0 %v582
    %6071 = vmatmul.mubr.f32.gmra.mxu0 %v581
    %v6072 = vpop.f32.mrf.mxu0
    %v6073 = vadd.f32 %v5928, %v6072
    %v6074 = vpop.f32.mrf.mxu0
    %6075 = vdwg.mxu0
    %6076 = vmatprep.subr.mxu0 0.0
    %6077 = vmatpush1.msra.mxu0 %v4915
    %6078 = vmatprep.subr.mxu0 0.0
    %6079 = vmatpush1.msra.mxu0 %v4914
    %6080 = vmatprep.subr.mxu0 0.0
    %6081 = vmatpush1.msra.mxu0 %v4913
    %6082 = vmatprep.subr.mxu0 0.0
    %6083 = vmatpush1.msra.mxu0 %v4912
    %6084 = vmatprep.subr.mxu0 0.0
    %6085 = vmatpush1.msra.mxu0 %v4911
    %6086 = vmatprep.subr.mxu0 0.0
    %6087 = vmatpush1.msra.mxu0 %v4910
    %6088 = vmatprep.subr.mxu0 0.0
    %6089 = vmatpush1.msra.mxu0 %v4909
    %6090 = vmatprep.subr.mxu0 0.0
    %6091 = vmatpush1.msra.mxu0 %v4908
    %6092 = vmatprep.subr.mxu0 0.0
    %6093 = vmatpush1.msra.mxu0 %v4907
    %6094 = vmatprep.subr.mxu0 0.0
    %6095 = vmatpush1.msra.mxu0 %v4906
    %6096 = vmatprep.subr.mxu0 0.0
    %6097 = vmatpush1.msra.mxu0 %v4905
    %6098 = vmatprep.subr.mxu0 0.0
    %6099 = vmatpush1.msra.mxu0 %v4904
    %6100 = vmatprep.subr.mxu0 0.0
    %6101 = vmatpush1.msra.mxu0 %v4903
    %6102 = vmatprep.subr.mxu0 0.0
    %6103 = vmatpush1.msra.mxu0 %v4902
    %6104 = vmatprep.subr.mxu0 0.0
    %6105 = vmatpush1.msra.mxu0 %v4901
    %6106 = vmatprep.subr.mxu0 0.0
    %6107 = vmatpush1.msra.mxu0 %v4900
    %6108 = vmatprep.subr.mxu0 0.0
    %6109 = vmatpush2.msra.mxu0 %v4931
    %6110 = vmatprep.subr.mxu0 0.0
    %6111 = vmatpush2.msra.mxu0 %v4930
    %6112 = vmatprep.subr.mxu0 0.0
    %6113 = vmatpush2.msra.mxu0 %v4929
    %6114 = vmatprep.subr.mxu0 0.0
    %6115 = vmatpush2.msra.mxu0 %v4928
    %6116 = vmatprep.subr.mxu0 0.0
    %6117 = vmatpush2.msra.mxu0 %v4927
    %6118 = vmatprep.subr.mxu0 0.0
    %6119 = vmatpush2.msra.mxu0 %v4926
    %6120 = vmatprep.subr.mxu0 0.0
    %6121 = vmatpush2.msra.mxu0 %v4925
    %6122 = vmatprep.subr.mxu0 0.0
    %6123 = vmatpush2.msra.mxu0 %v4924
    %6124 = vmatprep.subr.mxu0 0.0
    %6125 = vmatpush2.msra.mxu0 %v4923
    %6126 = vmatprep.subr.mxu0 0.0
    %6127 = vmatpush2.msra.mxu0 %v4922
    %6128 = vmatprep.subr.mxu0 0.0
    %6129 = vmatpush2.msra.mxu0 %v4921
    %6130 = vmatprep.subr.mxu0 0.0
    %6131 = vmatpush2.msra.mxu0 %v4920
    %6132 = vmatprep.subr.mxu0 0.0
    %6133 = vmatpush2.msra.mxu0 %v4919
    %6134 = vmatprep.subr.mxu0 0.0
    %6135 = vmatpush2.msra.mxu0 %v4918
    %6136 = vmatprep.subr.mxu0 0.0
    %6137 = vmatpush2.msra.mxu0 %v4917
    %6138 = vmatprep.subr.mxu0 0.0
    %6139 = vmatpush2.msra.mxu0 %v4916
    %6140 = vmatprep.mubr.f32.mxu0 %v464
    %6141 = vmatmul.mubr.f32.gmra.mxu0 %v463
    %v6142 = vpop.f32.mrf.mxu0
    %v6143 = vadd.f32 %v5998, %v6142
    %v6144 = vpop.f32.mrf.mxu0
    %6145 = vmatprep.mubr.f32.mxu0 %v472
    %6146 = vmatmul.mubr.f32.gmra.mxu0 %v471
    %v6147 = vpop.f32.mrf.mxu0
    %v6148 = vadd.f32 %v6003, %v6147
    %v6149 = vpop.f32.mrf.mxu0
    %6150 = vmatprep.mubr.f32.mxu0 %v480
    %6151 = vmatmul.mubr.f32.gmra.mxu0 %v479
    %v6152 = vpop.f32.mrf.mxu0
    %v6153 = vadd.f32 %v6008, %v6152
    %v6154 = vpop.f32.mrf.mxu0
    %6155 = vmatprep.mubr.f32.mxu0 %v488
    %6156 = vmatmul.mubr.f32.gmra.mxu0 %v487
    %v6157 = vpop.f32.mrf.mxu0
    %v6158 = vadd.f32 %v6013, %v6157
    %v6159 = vpop.f32.mrf.mxu0
    %6160 = vmatprep.mubr.f32.mxu0 %v496
    %6161 = vmatmul.mubr.f32.gmra.mxu0 %v495
    %v6162 = vpop.f32.mrf.mxu0
    %v6163 = vadd.f32 %v6018, %v6162
    %v6164 = vpop.f32.mrf.mxu0
    %6165 = vmatprep.mubr.f32.mxu0 %v504
    %6166 = vmatmul.mubr.f32.gmra.mxu0 %v503
    %v6167 = vpop.f32.mrf.mxu0
    %v6168 = vadd.f32 %v6023, %v6167
    %v6169 = vpop.f32.mrf.mxu0
    %6170 = vmatprep.mubr.f32.mxu0 %v512
    %6171 = vmatmul.mubr.f32.gmra.mxu0 %v511
    %v6172 = vpop.f32.mrf.mxu0
    %v6173 = vadd.f32 %v6028, %v6172
    %v6174 = vpop.f32.mrf.mxu0
    %6175 = vmatprep.mubr.f32.mxu0 %v520
    %6176 = vmatmul.mubr.f32.gmra.mxu0 %v519
    %v6177 = vpop.f32.mrf.mxu0
    %v6178 = vadd.f32 %v6033, %v6177
    %v6179 = vpop.f32.mrf.mxu0
    %6180 = vmatprep.mubr.f32.mxu0 %v528
    %6181 = vmatmul.mubr.f32.gmra.mxu0 %v527
    %v6182 = vpop.f32.mrf.mxu0
    %v6183 = vadd.f32 %v6038, %v6182
    %v6184 = vpop.f32.mrf.mxu0
    %6185 = vmatprep.mubr.f32.mxu0 %v536
    %6186 = vmatmul.mubr.f32.gmra.mxu0 %v535
    %v6187 = vpop.f32.mrf.mxu0
    %v6188 = vadd.f32 %v6043, %v6187
    %v6189 = vpop.f32.mrf.mxu0
    %6190 = vmatprep.mubr.f32.mxu0 %v544
    %6191 = vmatmul.mubr.f32.gmra.mxu0 %v543
    %v6192 = vpop.f32.mrf.mxu0
    %v6193 = vadd.f32 %v6048, %v6192
    %v6194 = vpop.f32.mrf.mxu0
    %6195 = vmatprep.mubr.f32.mxu0 %v552
    %6196 = vmatmul.mubr.f32.gmra.mxu0 %v551
    %v6197 = vpop.f32.mrf.mxu0
    %v6198 = vadd.f32 %v6053, %v6197
    %v6199 = vpop.f32.mrf.mxu0
    %6200 = vmatprep.mubr.f32.mxu0 %v560
    %6201 = vmatmul.mubr.f32.gmra.mxu0 %v559
    %v6202 = vpop.f32.mrf.mxu0
    %v6203 = vadd.f32 %v6058, %v6202
    %v6204 = vpop.f32.mrf.mxu0
    %6205 = vmatprep.mubr.f32.mxu0 %v568
    %6206 = vmatmul.mubr.f32.gmra.mxu0 %v567
    %v6207 = vpop.f32.mrf.mxu0
    %v6208 = vadd.f32 %v6063, %v6207
    %v6209 = vpop.f32.mrf.mxu0
    %6210 = vmatprep.mubr.f32.mxu0 %v576
    %6211 = vmatmul.mubr.f32.gmra.mxu0 %v575
    %v6212 = vpop.f32.mrf.mxu0
    %v6213 = vadd.f32 %v6068, %v6212
    %v6214 = vpop.f32.mrf.mxu0
    %6215 = vmatprep.mubr.f32.mxu0 %v584
    %6216 = vmatmul.mubr.f32.gmra.mxu0 %v583
    %v6217 = vpop.f32.mrf.mxu0
    %v6218 = vadd.f32 %v6073, %v6217
    %v6219 = vpop.f32.mrf.mxu0
    %6220 = vdwg.mxu0
    %s6221 = scalar_lea.vmem [#allocation11], 256
    %v6222 = vld [vmem:[%s6221] sm:$0xff]
    %v6223 = vld [vmem:[%s6221 + $0x8] sm:$0xff]
    %v6224 = vld [vmem:[%s6221 + $0x10] sm:$0xff]
    %v6225 = vld [vmem:[%s6221 + $0x18] sm:$0xff]
    %v6226 = vld [vmem:[%s6221 + $0x20] sm:$0xff]
    %v6227 = vld [vmem:[%s6221 + $0x28] sm:$0xff]
    %v6228 = vld [vmem:[%s6221 + $0x30] sm:$0xff]
    %v6229 = vld [vmem:[%s6221 + $0x38] sm:$0xff]
    %v6230 = vld [vmem:[%s6221 + $0x40] sm:$0xff]
    %v6231 = vld [vmem:[%s6221 + $0x48] sm:$0xff]
    %v6232 = vld [vmem:[%s6221 + $0x50] sm:$0xff]
    %v6233 = vld [vmem:[%s6221 + $0x58] sm:$0xff]
    %v6234 = vld [vmem:[%s6221 + $0x60] sm:$0xff]
    %v6235 = vld [vmem:[%s6221 + $0x68] sm:$0xff]
    %v6236 = vld [vmem:[%s6221 + $0x70] sm:$0xff]
    %v6237 = vld [vmem:[%s6221 + $0x78] sm:$0xff]
    %6238 = vmatprep.subr.mxu0 0.0
    %6239 = vmatpush1.msra.mxu0 %v6237
    %6240 = vmatprep.subr.mxu0 0.0
    %6241 = vmatpush1.msra.mxu0 %v6236
    %6242 = vmatprep.subr.mxu0 0.0
    %6243 = vmatpush1.msra.mxu0 %v6235
    %6244 = vmatprep.subr.mxu0 0.0
    %6245 = vmatpush1.msra.mxu0 %v6234
    %6246 = vmatprep.subr.mxu0 0.0
    %6247 = vmatpush1.msra.mxu0 %v6233
    %6248 = vmatprep.subr.mxu0 0.0
    %6249 = vmatpush1.msra.mxu0 %v6232
    %6250 = vmatprep.subr.mxu0 0.0
    %6251 = vmatpush1.msra.mxu0 %v6231
    %6252 = vmatprep.subr.mxu0 0.0
    %6253 = vmatpush1.msra.mxu0 %v6230
    %6254 = vmatprep.subr.mxu0 0.0
    %6255 = vmatpush1.msra.mxu0 %v6229
    %6256 = vmatprep.subr.mxu0 0.0
    %6257 = vmatpush1.msra.mxu0 %v6228
    %6258 = vmatprep.subr.mxu0 0.0
    %6259 = vmatpush1.msra.mxu0 %v6227
    %6260 = vmatprep.subr.mxu0 0.0
    %6261 = vmatpush1.msra.mxu0 %v6226
    %6262 = vmatprep.subr.mxu0 0.0
    %6263 = vmatpush1.msra.mxu0 %v6225
    %6264 = vmatprep.subr.mxu0 0.0
    %6265 = vmatpush1.msra.mxu0 %v6224
    %6266 = vmatprep.subr.mxu0 0.0
    %6267 = vmatpush1.msra.mxu0 %v6223
    %6268 = vmatprep.subr.mxu0 0.0
    %6269 = vmatpush1.msra.mxu0 %v6222
    %6270 = vmatprep.subr.mxu0 0.0
    %6271 = vmatpush2.msra.mxu0 0.0
    %6272 = vmatprep.subr.mxu0 0.0
    %6273 = vmatpush2.msra.mxu0 0.0
    %6274 = vmatprep.subr.mxu0 0.0
    %6275 = vmatpush2.msra.mxu0 0.0
    %6276 = vmatprep.subr.mxu0 0.0
    %6277 = vmatpush2.msra.mxu0 0.0
    %6278 = vmatprep.subr.mxu0 0.0
    %6279 = vmatpush2.msra.mxu0 0.0
    %6280 = vmatprep.subr.mxu0 0.0
    %6281 = vmatpush2.msra.mxu0 0.0
    %6282 = vmatprep.subr.mxu0 0.0
    %6283 = vmatpush2.msra.mxu0 0.0
    %6284 = vmatprep.subr.mxu0 0.0
    %6285 = vmatpush2.msra.mxu0 0.0
    %6286 = vmatprep.subr.mxu0 0.0
    %6287 = vmatpush2.msra.mxu0 0.0
    %6288 = vmatprep.subr.mxu0 0.0
    %6289 = vmatpush2.msra.mxu0 0.0
    %6290 = vmatprep.subr.mxu0 0.0
    %6291 = vmatpush2.msra.mxu0 0.0
    %6292 = vmatprep.subr.mxu0 0.0
    %6293 = vmatpush2.msra.mxu0 0.0
    %6294 = vmatprep.subr.mxu0 0.0
    %6295 = vmatpush2.msra.mxu0 0.0
    %6296 = vmatprep.subr.mxu0 0.0
    %6297 = vmatpush2.msra.mxu0 0.0
    %6298 = vmatprep.subr.mxu0 0.0
    %6299 = vmatpush2.msra.mxu0 0.0
    %6300 = vmatprep.subr.mxu0 0.0
    %6301 = vmatpush2.msra.mxu0 0.0
    %6302 = vmatprep.mubr.f32.mxu0 0.0
    %6303 = vmatmul.mubr.f32.gmra.mxu0 %v1001
    %v6304 = vpop.f32.mrf.mxu0
    %v6305 = vadd.f32 0.0, %v6304
    %v6306 = vpop.f32.mrf.mxu0
    %6307 = vmatprep.mubr.f32.mxu0 0.0
    %6308 = vmatmul.mubr.f32.gmra.mxu0 %v1002
    %v6309 = vpop.f32.mrf.mxu0
    %v6310 = vadd.f32 0.0, %v6309
    %v6311 = vpop.f32.mrf.mxu0
    %6312 = vmatprep.mubr.f32.mxu0 0.0
    %6313 = vmatmul.mubr.f32.gmra.mxu0 %v1003
    %v6314 = vpop.f32.mrf.mxu0
    %v6315 = vadd.f32 0.0, %v6314
    %v6316 = vpop.f32.mrf.mxu0
    %6317 = vmatprep.mubr.f32.mxu0 0.0
    %6318 = vmatmul.mubr.f32.gmra.mxu0 %v1004
    %v6319 = vpop.f32.mrf.mxu0
    %v6320 = vadd.f32 0.0, %v6319
    %v6321 = vpop.f32.mrf.mxu0
    %6322 = vmatprep.mubr.f32.mxu0 0.0
    %6323 = vmatmul.mubr.f32.gmra.mxu0 %v1005
    %v6324 = vpop.f32.mrf.mxu0
    %v6325 = vadd.f32 0.0, %v6324
    %v6326 = vpop.f32.mrf.mxu0
    %6327 = vmatprep.mubr.f32.mxu0 0.0
    %6328 = vmatmul.mubr.f32.gmra.mxu0 %v1006
    %v6329 = vpop.f32.mrf.mxu0
    %v6330 = vadd.f32 0.0, %v6329
    %v6331 = vpop.f32.mrf.mxu0
    %6332 = vmatprep.mubr.f32.mxu0 0.0
    %6333 = vmatmul.mubr.f32.gmra.mxu0 %v1007
    %v6334 = vpop.f32.mrf.mxu0
    %v6335 = vadd.f32 0.0, %v6334
    %v6336 = vpop.f32.mrf.mxu0
    %6337 = vmatprep.mubr.f32.mxu0 0.0
    %6338 = vmatmul.mubr.f32.gmra.mxu0 %v1008
    %v6339 = vpop.f32.mrf.mxu0
    %v6340 = vadd.f32 0.0, %v6339
    %v6341 = vpop.f32.mrf.mxu0
    %6342 = vmatprep.mubr.f32.mxu0 0.0
    %6343 = vmatmul.mubr.f32.gmra.mxu0 %v1009
    %v6344 = vpop.f32.mrf.mxu0
    %v6345 = vadd.f32 0.0, %v6344
    %v6346 = vpop.f32.mrf.mxu0
    %6347 = vmatprep.mubr.f32.mxu0 0.0
    %6348 = vmatmul.mubr.f32.gmra.mxu0 %v1010
    %v6349 = vpop.f32.mrf.mxu0
    %v6350 = vadd.f32 0.0, %v6349
    %v6351 = vpop.f32.mrf.mxu0
    %6352 = vmatprep.mubr.f32.mxu0 0.0
    %6353 = vmatmul.mubr.f32.gmra.mxu0 %v1011
    %v6354 = vpop.f32.mrf.mxu0
    %v6355 = vadd.f32 0.0, %v6354
    %v6356 = vpop.f32.mrf.mxu0
    %6357 = vmatprep.mubr.f32.mxu0 0.0
    %6358 = vmatmul.mubr.f32.gmra.mxu0 %v1012
    %v6359 = vpop.f32.mrf.mxu0
    %v6360 = vadd.f32 0.0, %v6359
    %v6361 = vpop.f32.mrf.mxu0
    %6362 = vmatprep.mubr.f32.mxu0 0.0
    %6363 = vmatmul.mubr.f32.gmra.mxu0 %v1013
    %v6364 = vpop.f32.mrf.mxu0
    %v6365 = vadd.f32 0.0, %v6364
    %v6366 = vpop.f32.mrf.mxu0
    %6367 = vmatprep.mubr.f32.mxu0 0.0
    %6368 = vmatmul.mubr.f32.gmra.mxu0 %v1014
    %v6369 = vpop.f32.mrf.mxu0
    %v6370 = vadd.f32 0.0, %v6369
    %v6371 = vpop.f32.mrf.mxu0
    %6372 = vmatprep.mubr.f32.mxu0 0.0
    %6373 = vmatmul.mubr.f32.gmra.mxu0 %v1015
    %v6374 = vpop.f32.mrf.mxu0
    %v6375 = vadd.f32 0.0, %v6374
    %v6376 = vpop.f32.mrf.mxu0
    %6377 = vmatprep.mubr.f32.mxu0 0.0
    %6378 = vmatmul.mubr.f32.gmra.mxu0 %v1016
    %v6379 = vpop.f32.mrf.mxu0
    %v6380 = vadd.f32 0.0, %v6379
    %v6381 = vpop.f32.mrf.mxu0
    %6382 = vdwg.mxu0
    %v6383 = vadd.f32 %v6143, %v6305
    %v6384 = vadd.f32 %v6148, %v6310
    %v6385 = vadd.f32 %v6153, %v6315
    %v6386 = vadd.f32 %v6158, %v6320
    %v6387 = vadd.f32 %v6163, %v6325
    %v6388 = vadd.f32 %v6168, %v6330
    %v6389 = vadd.f32 %v6173, %v6335
    %v6390 = vadd.f32 %v6178, %v6340
    %v6391 = vadd.f32 %v6183, %v6345
    %v6392 = vadd.f32 %v6188, %v6350
    %v6393 = vadd.f32 %v6193, %v6355
    %v6394 = vadd.f32 %v6198, %v6360
    %v6395 = vadd.f32 %v6203, %v6365
    %v6396 = vadd.f32 %v6208, %v6370
    %v6397 = vadd.f32 %v6213, %v6375
    %v6398 = vadd.f32 %v6218, %v6380
    %v6399 = vld [vmem:[#allocation13 + $0x2] sm:$0x1]
    %v6400 = vlaneseq
    %v6401 = vshrl.u32 %v6400, 7
    %v6402 = vsub.s32 0, %v6401
    %v6403 = vrot.slane %v6399, %v6402
    %v6404 = vadd.f32 %v6383, %v6403
    %v6405 = vadd.f32 %v6384, %v6403
    %v6406 = vadd.f32 %v6385, %v6403
    %v6407 = vadd.f32 %v6386, %v6403
    %v6408 = vadd.f32 %v6387, %v6403
    %v6409 = vadd.f32 %v6388, %v6403
    %v6410 = vadd.f32 %v6389, %v6403
    %v6411 = vadd.f32 %v6390, %v6403
    %v6412 = vadd.f32 %v6391, %v6403
    %v6413 = vadd.f32 %v6392, %v6403
    %v6414 = vadd.f32 %v6393, %v6403
    %v6415 = vadd.f32 %v6394, %v6403
    %v6416 = vadd.f32 %v6395, %v6403
    %v6417 = vadd.f32 %v6396, %v6403
    %v6418 = vadd.f32 %v6397, %v6403
    %v6419 = vadd.f32 %v6398, %v6403
    %v6420 = vmax.f32 %v6404, 0.0
    %v6421 = vmax.f32 %v6405, 0.0
    %v6422 = vmax.f32 %v6406, 0.0
    %v6423 = vmax.f32 %v6407, 0.0
    %v6424 = vmax.f32 %v6408, 0.0
    %v6425 = vmax.f32 %v6409, 0.0
    %v6426 = vmax.f32 %v6410, 0.0
    %v6427 = vmax.f32 %v6411, 0.0
    %v6428 = vmax.f32 %v6412, 0.0
    %v6429 = vmax.f32 %v6413, 0.0
    %v6430 = vmax.f32 %v6414, 0.0
    %v6431 = vmax.f32 %v6415, 0.0
    %v6432 = vmax.f32 %v6416, 0.0
    %v6433 = vmax.f32 %v6417, 0.0
    %v6434 = vmax.f32 %v6418, 0.0
    %v6435 = vmax.f32 %v6419, 0.0
    %s6436 = scalar_lea.vmem [#allocation14], 256
    %v6437 = vld [vmem:[%s6436] sm:$0xff]
    %v6438 = vld [vmem:[%s6436 + $0x8] sm:$0xff]
    %v6439 = vld [vmem:[%s6436 + $0x10] sm:$0xff]
    %v6440 = vld [vmem:[%s6436 + $0x18] sm:$0xff]
    %v6441 = vld [vmem:[%s6436 + $0x20] sm:$0xff]
    %v6442 = vld [vmem:[%s6436 + $0x28] sm:$0xff]
    %v6443 = vld [vmem:[%s6436 + $0x30] sm:$0xff]
    %v6444 = vld [vmem:[%s6436 + $0x38] sm:$0xff]
    %v6445 = vld [vmem:[%s6436 + $0x40] sm:$0xff]
    %v6446 = vld [vmem:[%s6436 + $0x48] sm:$0xff]
    %v6447 = vld [vmem:[%s6436 + $0x50] sm:$0xff]
    %v6448 = vld [vmem:[%s6436 + $0x58] sm:$0xff]
    %v6449 = vld [vmem:[%s6436 + $0x60] sm:$0xff]
    %v6450 = vld [vmem:[%s6436 + $0x68] sm:$0xff]
    %v6451 = vld [vmem:[%s6436 + $0x70] sm:$0xff]
    %v6452 = vld [vmem:[%s6436 + $0x78] sm:$0xff]
    %v6453 = vld [vmem:[#allocation16 + $0x2] sm:$0x1]
    %v6454 = vlaneseq
    %v6455 = vshrl.u32 %v6454, 7
    %v6456 = vsub.s32 0, %v6455
    %v6457 = vrot.slane %v6453, %v6456
    %6458 = vmatprep.subr.mxu0 0.0
    %6459 = vmatpush1.msra.mxu0 %v6452
    %6460 = vmatprep.subr.mxu0 0.0
    %6461 = vmatpush1.msra.mxu0 %v6451
    %6462 = vmatprep.subr.mxu0 0.0
    %6463 = vmatpush1.msra.mxu0 %v6450
    %6464 = vmatprep.subr.mxu0 0.0
    %6465 = vmatpush1.msra.mxu0 %v6449
    %6466 = vmatprep.subr.mxu0 0.0
    %6467 = vmatpush1.msra.mxu0 %v6448
    %6468 = vmatprep.subr.mxu0 0.0
    %6469 = vmatpush1.msra.mxu0 %v6447
    %6470 = vmatprep.subr.mxu0 0.0
    %6471 = vmatpush1.msra.mxu0 %v6446
    %6472 = vmatprep.subr.mxu0 0.0
    %6473 = vmatpush1.msra.mxu0 %v6445
    %6474 = vmatprep.subr.mxu0 0.0
    %6475 = vmatpush1.msra.mxu0 %v6444
    %6476 = vmatprep.subr.mxu0 0.0
    %6477 = vmatpush1.msra.mxu0 %v6443
    %6478 = vmatprep.subr.mxu0 0.0
    %6479 = vmatpush1.msra.mxu0 %v6442
    %6480 = vmatprep.subr.mxu0 0.0
    %6481 = vmatpush1.msra.mxu0 %v6441
    %6482 = vmatprep.subr.mxu0 0.0
    %6483 = vmatpush1.msra.mxu0 %v6440
    %6484 = vmatprep.subr.mxu0 0.0
    %6485 = vmatpush1.msra.mxu0 %v6439
    %6486 = vmatprep.subr.mxu0 0.0
    %6487 = vmatpush1.msra.mxu0 %v6438
    %6488 = vmatprep.subr.mxu0 0.0
    %6489 = vmatpush1.msra.mxu0 %v6437
    %6490 = vmatprep.subr.mxu0 0.0
    %6491 = vmatpush2.msra.mxu0 0.0
    %6492 = vmatprep.subr.mxu0 0.0
    %6493 = vmatpush2.msra.mxu0 0.0
    %6494 = vmatprep.subr.mxu0 0.0
    %6495 = vmatpush2.msra.mxu0 0.0
    %6496 = vmatprep.subr.mxu0 0.0
    %6497 = vmatpush2.msra.mxu0 0.0
    %6498 = vmatprep.subr.mxu0 0.0
    %6499 = vmatpush2.msra.mxu0 0.0
    %6500 = vmatprep.subr.mxu0 0.0
    %6501 = vmatpush2.msra.mxu0 0.0
    %6502 = vmatprep.subr.mxu0 0.0
    %6503 = vmatpush2.msra.mxu0 0.0
    %6504 = vmatprep.subr.mxu0 0.0
    %6505 = vmatpush2.msra.mxu0 0.0
    %6506 = vmatprep.subr.mxu0 0.0
    %6507 = vmatpush2.msra.mxu0 0.0
    %6508 = vmatprep.subr.mxu0 0.0
    %6509 = vmatpush2.msra.mxu0 0.0
    %6510 = vmatprep.subr.mxu0 0.0
    %6511 = vmatpush2.msra.mxu0 0.0
    %6512 = vmatprep.subr.mxu0 0.0
    %6513 = vmatpush2.msra.mxu0 0.0
    %6514 = vmatprep.subr.mxu0 0.0
    %6515 = vmatpush2.msra.mxu0 0.0
    %6516 = vmatprep.subr.mxu0 0.0
    %6517 = vmatpush2.msra.mxu0 0.0
    %6518 = vmatprep.subr.mxu0 0.0
    %6519 = vmatpush2.msra.mxu0 0.0
    %6520 = vmatprep.subr.mxu0 0.0
    %6521 = vmatpush2.msra.mxu0 0.0
    %6522 = vmatprep.mubr.f32.mxu0 0.0
    %6523 = vmatmul.mubr.f32.gmra.mxu0 %v6420
    %v6524 = vpop.f32.mrf.mxu0
    %v6525 = vadd.f32 %v6457, %v6524
    %v6526 = vpop.f32.mrf.mxu0
    %6527 = vmatprep.mubr.f32.mxu0 0.0
    %6528 = vmatmul.mubr.f32.gmra.mxu0 %v6421
    %v6529 = vpop.f32.mrf.mxu0
    %v6530 = vadd.f32 %v6457, %v6529
    %v6531 = vpop.f32.mrf.mxu0
    %6532 = vmatprep.mubr.f32.mxu0 0.0
    %6533 = vmatmul.mubr.f32.gmra.mxu0 %v6422
    %v6534 = vpop.f32.mrf.mxu0
    %v6535 = vadd.f32 %v6457, %v6534
    %v6536 = vpop.f32.mrf.mxu0
    %6537 = vmatprep.mubr.f32.mxu0 0.0
    %6538 = vmatmul.mubr.f32.gmra.mxu0 %v6423
    %v6539 = vpop.f32.mrf.mxu0
    %v6540 = vadd.f32 %v6457, %v6539
    %v6541 = vpop.f32.mrf.mxu0
    %6542 = vmatprep.mubr.f32.mxu0 0.0
    %6543 = vmatmul.mubr.f32.gmra.mxu0 %v6424
    %v6544 = vpop.f32.mrf.mxu0
    %v6545 = vadd.f32 %v6457, %v6544
    %v6546 = vpop.f32.mrf.mxu0
    %6547 = vmatprep.mubr.f32.mxu0 0.0
    %6548 = vmatmul.mubr.f32.gmra.mxu0 %v6425
    %v6549 = vpop.f32.mrf.mxu0
    %v6550 = vadd.f32 %v6457, %v6549
    %v6551 = vpop.f32.mrf.mxu0
    %6552 = vmatprep.mubr.f32.mxu0 0.0
    %6553 = vmatmul.mubr.f32.gmra.mxu0 %v6426
    %v6554 = vpop.f32.mrf.mxu0
    %v6555 = vadd.f32 %v6457, %v6554
    %v6556 = vpop.f32.mrf.mxu0
    %6557 = vmatprep.mubr.f32.mxu0 0.0
    %6558 = vmatmul.mubr.f32.gmra.mxu0 %v6427
    %v6559 = vpop.f32.mrf.mxu0
    %v6560 = vadd.f32 %v6457, %v6559
    %v6561 = vpop.f32.mrf.mxu0
    %6562 = vmatprep.mubr.f32.mxu0 0.0
    %6563 = vmatmul.mubr.f32.gmra.mxu0 %v6428
    %v6564 = vpop.f32.mrf.mxu0
    %v6565 = vadd.f32 %v6457, %v6564
    %v6566 = vpop.f32.mrf.mxu0
    %6567 = vmatprep.mubr.f32.mxu0 0.0
    %6568 = vmatmul.mubr.f32.gmra.mxu0 %v6429
    %v6569 = vpop.f32.mrf.mxu0
    %v6570 = vadd.f32 %v6457, %v6569
    %v6571 = vpop.f32.mrf.mxu0
    %6572 = vmatprep.mubr.f32.mxu0 0.0
    %6573 = vmatmul.mubr.f32.gmra.mxu0 %v6430
    %v6574 = vpop.f32.mrf.mxu0
    %v6575 = vadd.f32 %v6457, %v6574
    %v6576 = vpop.f32.mrf.mxu0
    %6577 = vmatprep.mubr.f32.mxu0 0.0
    %6578 = vmatmul.mubr.f32.gmra.mxu0 %v6431
    %v6579 = vpop.f32.mrf.mxu0
    %v6580 = vadd.f32 %v6457, %v6579
    %v6581 = vpop.f32.mrf.mxu0
    %6582 = vmatprep.mubr.f32.mxu0 0.0
    %6583 = vmatmul.mubr.f32.gmra.mxu0 %v6432
    %v6584 = vpop.f32.mrf.mxu0
    %v6585 = vadd.f32 %v6457, %v6584
    %v6586 = vpop.f32.mrf.mxu0
    %6587 = vmatprep.mubr.f32.mxu0 0.0
    %6588 = vmatmul.mubr.f32.gmra.mxu0 %v6433
    %v6589 = vpop.f32.mrf.mxu0
    %v6590 = vadd.f32 %v6457, %v6589
    %v6591 = vpop.f32.mrf.mxu0
    %6592 = vmatprep.mubr.f32.mxu0 0.0
    %6593 = vmatmul.mubr.f32.gmra.mxu0 %v6434
    %v6594 = vpop.f32.mrf.mxu0
    %v6595 = vadd.f32 %v6457, %v6594
    %v6596 = vpop.f32.mrf.mxu0
    %6597 = vmatprep.mubr.f32.mxu0 0.0
    %6598 = vmatmul.mubr.f32.gmra.mxu0 %v6435
    %v6599 = vpop.f32.mrf.mxu0
    %v6600 = vadd.f32 %v6457, %v6599
    %v6601 = vpop.f32.mrf.mxu0
    %6602 = vdwg.mxu0
    %v6603 = vmax.f32 %v6525, 0.0
    %v6604 = vmax.f32 %v6530, 0.0
    %v6605 = vmax.f32 %v6535, 0.0
    %v6606 = vmax.f32 %v6540, 0.0
    %v6607 = vmax.f32 %v6545, 0.0
    %v6608 = vmax.f32 %v6550, 0.0
    %v6609 = vmax.f32 %v6555, 0.0
    %v6610 = vmax.f32 %v6560, 0.0
    %v6611 = vmax.f32 %v6565, 0.0
    %v6612 = vmax.f32 %v6570, 0.0
    %v6613 = vmax.f32 %v6575, 0.0
    %v6614 = vmax.f32 %v6580, 0.0
    %v6615 = vmax.f32 %v6585, 0.0
    %v6616 = vmax.f32 %v6590, 0.0
    %v6617 = vmax.f32 %v6595, 0.0
    %v6618 = vmax.f32 %v6600, 0.0
    %v6619 = vld [vmem:[#allocation17 + $0x2] sm:$0x1]
    %v6620 = vlaneseq
    %v6621 = vshrl.u32 %v6620, 7
    %v6622 = vsub.s32 0, %v6621
    %v6623 = vrot.slane %v6619, %v6622
    %v6624 = vmul.f32 %v6603, %v6623
    %v6625 = vmul.f32 %v6604, %v6623
    %v6626 = vmul.f32 %v6605, %v6623
    %v6627 = vmul.f32 %v6606, %v6623
    %v6628 = vmul.f32 %v6607, %v6623
    %v6629 = vmul.f32 %v6608, %v6623
    %v6630 = vmul.f32 %v6609, %v6623
    %v6631 = vmul.f32 %v6610, %v6623
    %v6632 = vmul.f32 %v6611, %v6623
    %v6633 = vmul.f32 %v6612, %v6623
    %v6634 = vmul.f32 %v6613, %v6623
    %v6635 = vmul.f32 %v6614, %v6623
    %v6636 = vmul.f32 %v6615, %v6623
    %v6637 = vmul.f32 %v6616, %v6623
    %v6638 = vmul.f32 %v6617, %v6623
    %v6639 = vmul.f32 %v6618, %v6623
    %6640 = vadd.xlane.f32.xlu0 %v6624
    %v6641 = vpop.xlane.xlu0 %6640
    %6642 = vadd.xlane.f32.xlu0 %v6625
    %v6643 = vpop.xlane.xlu0 %6642
    %6644 = vadd.xlane.f32.xlu0 %v6626
    %v6645 = vpop.xlane.xlu0 %6644
    %6646 = vadd.xlane.f32.xlu0 %v6627
    %v6647 = vpop.xlane.xlu0 %6646
    %6648 = vadd.xlane.f32.xlu0 %v6628
    %v6649 = vpop.xlane.xlu0 %6648
    %6650 = vadd.xlane.f32.xlu0 %v6629
    %v6651 = vpop.xlane.xlu0 %6650
    %6652 = vadd.xlane.f32.xlu0 %v6630
    %v6653 = vpop.xlane.xlu0 %6652
    %6654 = vadd.xlane.f32.xlu0 %v6631
    %v6655 = vpop.xlane.xlu0 %6654
    %6656 = vadd.xlane.f32.xlu0 %v6632
    %v6657 = vpop.xlane.xlu0 %6656
    %6658 = vadd.xlane.f32.xlu0 %v6633
    %v6659 = vpop.xlane.xlu0 %6658
    %6660 = vadd.xlane.f32.xlu0 %v6634
    %v6661 = vpop.xlane.xlu0 %6660
    %6662 = vadd.xlane.f32.xlu0 %v6635
    %v6663 = vpop.xlane.xlu0 %6662
    %6664 = vadd.xlane.f32.xlu0 %v6636
    %v6665 = vpop.xlane.xlu0 %6664
    %6666 = vadd.xlane.f32.xlu0 %v6637
    %v6667 = vpop.xlane.xlu0 %6666
    %6668 = vadd.xlane.f32.xlu0 %v6638
    %v6669 = vpop.xlane.xlu0 %6668
    %6670 = vadd.xlane.f32.xlu0 %v6639
    %v6671 = vpop.xlane.xlu0 %6670
    %v6672 = vld [vmem:[%s10 + $0x2] sm:$0x1]
    %6674 = vset.pattern.permute.xlu0 0
    %6675 = vperm.xlu0 %6674, %v6672
    %v6676 = vpop.permute.xlu0 %6675
    %v6677 = vlaneseq
    %v6678 = vshrl.u32 %v6677, 7
    %v6679 = vsub.s32 0, %v6678
    %v6680 = vrot.slane %v6676, %v6679
    %v6682 = vadd.f32 %v6641, %v6680
    %v6683 = vadd.f32 %v6643, %v6680
    %v6684 = vadd.f32 %v6645, %v6680
    %v6685 = vadd.f32 %v6647, %v6680
    %v6686 = vadd.f32 %v6649, %v6680
    %v6687 = vadd.f32 %v6651, %v6680
    %v6688 = vadd.f32 %v6653, %v6680
    %v6689 = vadd.f32 %v6655, %v6680
    %v6690 = vadd.f32 %v6657, %v6680
    %v6691 = vadd.f32 %v6659, %v6680
    %v6692 = vadd.f32 %v6661, %v6680
    %v6693 = vadd.f32 %v6663, %v6680
    %v6694 = vadd.f32 %v6665, %v6680
    %v6695 = vadd.f32 %v6667, %v6680
    %v6696 = vadd.f32 %v6669, %v6680
    %v6697 = vadd.f32 %v6671, %v6680
    %6714 = vset.pattern.permute.xlu0 0
    %6715 = vperm.xlu0 %6714, %v2892
    %v6716 = vpop.permute.xlu0 %6715
    %6717 = vset.pattern.permute.xlu0 0
    %6718 = vperm.xlu0 %6717, %v2893
    %v6719 = vpop.permute.xlu0 %6718
    %6720 = vset.pattern.permute.xlu0 0
    %6721 = vperm.xlu0 %6720, %v2894
    %v6722 = vpop.permute.xlu0 %6721
    %6723 = vset.pattern.permute.xlu0 0
    %6724 = vperm.xlu0 %6723, %v2895
    %v6725 = vpop.permute.xlu0 %6724
    %6726 = vset.pattern.permute.xlu0 0
    %6727 = vperm.xlu0 %6726, %v2896
    %v6728 = vpop.permute.xlu0 %6727
    %6729 = vset.pattern.permute.xlu0 0
    %6730 = vperm.xlu0 %6729, %v2897
    %v6731 = vpop.permute.xlu0 %6730
    %6732 = vset.pattern.permute.xlu0 0
    %6733 = vperm.xlu0 %6732, %v2898
    %v6734 = vpop.permute.xlu0 %6733
    %6735 = vset.pattern.permute.xlu0 0
    %6736 = vperm.xlu0 %6735, %v2899
    %v6737 = vpop.permute.xlu0 %6736
    %6738 = vset.pattern.permute.xlu0 0
    %6739 = vperm.xlu0 %6738, %v2900
    %v6740 = vpop.permute.xlu0 %6739
    %6741 = vset.pattern.permute.xlu0 0
    %6742 = vperm.xlu0 %6741, %v2901
    %v6743 = vpop.permute.xlu0 %6742
    %6744 = vset.pattern.permute.xlu0 0
    %6745 = vperm.xlu0 %6744, %v2902
    %v6746 = vpop.permute.xlu0 %6745
    %6747 = vset.pattern.permute.xlu0 0
    %6748 = vperm.xlu0 %6747, %v2903
    %v6749 = vpop.permute.xlu0 %6748
    %6750 = vset.pattern.permute.xlu0 0
    %6751 = vperm.xlu0 %6750, %v2904
    %v6752 = vpop.permute.xlu0 %6751
    %6753 = vset.pattern.permute.xlu0 0
    %6754 = vperm.xlu0 %6753, %v2905
    %v6755 = vpop.permute.xlu0 %6754
    %6756 = vset.pattern.permute.xlu0 0
    %6757 = vperm.xlu0 %6756, %v2906
    %v6758 = vpop.permute.xlu0 %6757
    %6759 = vset.pattern.permute.xlu0 0
    %6760 = vperm.xlu0 %6759, %v2907
    %v6761 = vpop.permute.xlu0 %6760
    %v6762 = vlaneseq
    %v6763 = vand.u32 %v6762, 127
    %v6764 = vlaneseq
    %v6765 = vshrl.u32 %v6764, 7
    %v6766 = vsub.s32 %v6763, %v6765
    %v6767 = vrot.slane %v6716, %v6766
    %v6768 = vadd.s32 %v6763, 4294967288
    %v6769 = vlaneseq
    %v6770 = vshrl.u32 %v6769, 7
    %v6771 = vsub.s32 %v6768, %v6770
    %v6772 = vrot.slane %v6719, %v6771
    %vm6773 = vcmask 130112
    %v6774 = vsel %vm6773, %v6772, %v6767
    %v6775 = vadd.s32 %v6763, 4294967280
    %v6776 = vlaneseq
    %v6777 = vshrl.u32 %v6776, 7
    %v6778 = vsub.s32 %v6775, %v6777
    %v6779 = vrot.slane %v6722, %v6778
    %vm6780 = vcmask 195712
    %v6781 = vsel %vm6780, %v6779, %v6774
    %v6782 = vadd.s32 %v6763, 4294967272
    %v6783 = vlaneseq
    %v6784 = vshrl.u32 %v6783, 7
    %v6785 = vsub.s32 %v6782, %v6784
    %v6786 = vrot.slane %v6725, %v6785
    %vm6787 = vcmask 261312
    %v6788 = vsel %vm6787, %v6786, %v6781
    %v6789 = vadd.s32 %v6763, 4294967264
    %v6790 = vlaneseq
    %v6791 = vshrl.u32 %v6790, 7
    %v6792 = vsub.s32 %v6789, %v6791
    %v6793 = vrot.slane %v6728, %v6792
    %vm6794 = vcmask 326912
    %v6795 = vsel %vm6794, %v6793, %v6788
    %v6796 = vadd.s32 %v6763, 4294967256
    %v6797 = vlaneseq
    %v6798 = vshrl.u32 %v6797, 7
    %v6799 = vsub.s32 %v6796, %v6798
    %v6800 = vrot.slane %v6731, %v6799
    %vm6801 = vcmask 392512
    %v6802 = vsel %vm6801, %v6800, %v6795
    %v6803 = vadd.s32 %v6763, 4294967248
    %v6804 = vlaneseq
    %v6805 = vshrl.u32 %v6804, 7
    %v6806 = vsub.s32 %v6803, %v6805
    %v6807 = vrot.slane %v6734, %v6806
    %vm6808 = vcmask 458112
    %v6809 = vsel %vm6808, %v6807, %v6802
    %v6810 = vadd.s32 %v6763, 4294967240
    %v6811 = vlaneseq
    %v6812 = vshrl.u32 %v6811, 7
    %v6813 = vsub.s32 %v6810, %v6812
    %v6814 = vrot.slane %v6737, %v6813
    %vm6815 = vcmask 523712
    %v6816 = vsel %vm6815, %v6814, %v6809
    %v6817 = vadd.s32 %v6763, 4294967232
    %v6818 = vlaneseq
    %v6819 = vshrl.u32 %v6818, 7
    %v6820 = vsub.s32 %v6817, %v6819
    %v6821 = vrot.slane %v6740, %v6820
    %vm6822 = vcmask 589312
    %v6823 = vsel %vm6822, %v6821, %v6816
    %v6824 = vadd.s32 %v6763, 4294967224
    %v6825 = vlaneseq
    %v6826 = vshrl.u32 %v6825, 7
    %v6827 = vsub.s32 %v6824, %v6826
    %v6828 = vrot.slane %v6743, %v6827
    %vm6829 = vcmask 654912
    %v6830 = vsel %vm6829, %v6828, %v6823
    %v6831 = vadd.s32 %v6763, 4294967216
    %v6832 = vlaneseq
    %v6833 = vshrl.u32 %v6832, 7
    %v6834 = vsub.s32 %v6831, %v6833
    %v6835 = vrot.slane %v6746, %v6834
    %vm6836 = vcmask 720512
    %v6837 = vsel %vm6836, %v6835, %v6830
    %v6838 = vadd.s32 %v6763, 4294967208
    %v6839 = vlaneseq
    %v6840 = vshrl.u32 %v6839, 7
    %v6841 = vsub.s32 %v6838, %v6840
    %v6842 = vrot.slane %v6749, %v6841
    %vm6843 = vcmask 786112
    %v6844 = vsel %vm6843, %v6842, %v6837
    %v6845 = vadd.s32 %v6763, 4294967200
    %v6846 = vlaneseq
    %v6847 = vshrl.u32 %v6846, 7
    %v6848 = vsub.s32 %v6845, %v6847
    %v6849 = vrot.slane %v6752, %v6848
    %vm6850 = vcmask 851712
    %v6851 = vsel %vm6850, %v6849, %v6844
    %v6852 = vadd.s32 %v6763, 4294967192
    %v6853 = vlaneseq
    %v6854 = vshrl.u32 %v6853, 7
    %v6855 = vsub.s32 %v6852, %v6854
    %v6856 = vrot.slane %v6755, %v6855
    %vm6857 = vcmask 917312
    %v6858 = vsel %vm6857, %v6856, %v6851
    %v6859 = vadd.s32 %v6763, 4294967184
    %v6860 = vlaneseq
    %v6861 = vshrl.u32 %v6860, 7
    %v6862 = vsub.s32 %v6859, %v6861
    %v6863 = vrot.slane %v6758, %v6862
    %vm6864 = vcmask 982912
    %v6865 = vsel %vm6864, %v6863, %v6858
    %v6866 = vadd.s32 %v6763, 4294967176
    %v6867 = vlaneseq
    %v6868 = vshrl.u32 %v6867, 7
    %v6869 = vsub.s32 %v6866, %v6868
    %v6870 = vrot.slane %v6761, %v6869
    %vm6871 = vcmask 1048512
    %v6872 = vsel %vm6871, %v6870, %v6865
    %6890 = vset.pattern.permute.xlu0 0
    %6891 = vperm.xlu0 %6890, %v4787
    %v6892 = vpop.permute.xlu0 %6891
    %6893 = vset.pattern.permute.xlu0 0
    %6894 = vperm.xlu0 %6893, %v4788
    %v6895 = vpop.permute.xlu0 %6894
    %6896 = vset.pattern.permute.xlu0 0
    %6897 = vperm.xlu0 %6896, %v4789
    %v6898 = vpop.permute.xlu0 %6897
    %6899 = vset.pattern.permute.xlu0 0
    %6900 = vperm.xlu0 %6899, %v4790
    %v6901 = vpop.permute.xlu0 %6900
    %6902 = vset.pattern.permute.xlu0 0
    %6903 = vperm.xlu0 %6902, %v4791
    %v6904 = vpop.permute.xlu0 %6903
    %6905 = vset.pattern.permute.xlu0 0
    %6906 = vperm.xlu0 %6905, %v4792
    %v6907 = vpop.permute.xlu0 %6906
    %6908 = vset.pattern.permute.xlu0 0
    %6909 = vperm.xlu0 %6908, %v4793
    %v6910 = vpop.permute.xlu0 %6909
    %6911 = vset.pattern.permute.xlu0 0
    %6912 = vperm.xlu0 %6911, %v4794
    %v6913 = vpop.permute.xlu0 %6912
    %6914 = vset.pattern.permute.xlu0 0
    %6915 = vperm.xlu0 %6914, %v4795
    %v6916 = vpop.permute.xlu0 %6915
    %6917 = vset.pattern.permute.xlu0 0
    %6918 = vperm.xlu0 %6917, %v4796
    %v6919 = vpop.permute.xlu0 %6918
    %6920 = vset.pattern.permute.xlu0 0
    %6921 = vperm.xlu0 %6920, %v4797
    %v6922 = vpop.permute.xlu0 %6921
    %6923 = vset.pattern.permute.xlu0 0
    %6924 = vperm.xlu0 %6923, %v4798
    %v6925 = vpop.permute.xlu0 %6924
    %6926 = vset.pattern.permute.xlu0 0
    %6927 = vperm.xlu0 %6926, %v4799
    %v6928 = vpop.permute.xlu0 %6927
    %6929 = vset.pattern.permute.xlu0 0
    %6930 = vperm.xlu0 %6929, %v4800
    %v6931 = vpop.permute.xlu0 %6930
    %6932 = vset.pattern.permute.xlu0 0
    %6933 = vperm.xlu0 %6932, %v4801
    %v6934 = vpop.permute.xlu0 %6933
    %6935 = vset.pattern.permute.xlu0 0
    %6936 = vperm.xlu0 %6935, %v4802
    %v6937 = vpop.permute.xlu0 %6936
    %v6938 = vlaneseq
    %v6939 = vshrl.u32 %v6938, 7
    %v6940 = vsub.s32 %v6763, %v6939
    %v6941 = vrot.slane %v6892, %v6940
    %v6942 = vlaneseq
    %v6943 = vshrl.u32 %v6942, 7
    %v6944 = vsub.s32 %v6768, %v6943
    %v6945 = vrot.slane %v6895, %v6944
    %v6946 = vsel %vm6773, %v6945, %v6941
    %v6947 = vlaneseq
    %v6948 = vshrl.u32 %v6947, 7
    %v6949 = vsub.s32 %v6775, %v6948
    %v6950 = vrot.slane %v6898, %v6949
    %v6951 = vsel %vm6780, %v6950, %v6946
    %v6952 = vlaneseq
    %v6953 = vshrl.u32 %v6952, 7
    %v6954 = vsub.s32 %v6782, %v6953
    %v6955 = vrot.slane %v6901, %v6954
    %v6956 = vsel %vm6787, %v6955, %v6951
    %v6957 = vlaneseq
    %v6958 = vshrl.u32 %v6957, 7
    %v6959 = vsub.s32 %v6789, %v6958
    %v6960 = vrot.slane %v6904, %v6959
    %v6961 = vsel %vm6794, %v6960, %v6956
    %v6962 = vlaneseq
    %v6963 = vshrl.u32 %v6962, 7
    %v6964 = vsub.s32 %v6796, %v6963
    %v6965 = vrot.slane %v6907, %v6964
    %v6966 = vsel %vm6801, %v6965, %v6961
    %v6967 = vlaneseq
    %v6968 = vshrl.u32 %v6967, 7
    %v6969 = vsub.s32 %v6803, %v6968
    %v6970 = vrot.slane %v6910, %v6969
    %v6971 = vsel %vm6808, %v6970, %v6966
    %v6972 = vlaneseq
    %v6973 = vshrl.u32 %v6972, 7
    %v6974 = vsub.s32 %v6810, %v6973
    %v6975 = vrot.slane %v6913, %v6974
    %v6976 = vsel %vm6815, %v6975, %v6971
    %v6977 = vlaneseq
    %v6978 = vshrl.u32 %v6977, 7
    %v6979 = vsub.s32 %v6817, %v6978
    %v6980 = vrot.slane %v6916, %v6979
    %v6981 = vsel %vm6822, %v6980, %v6976
    %v6982 = vlaneseq
    %v6983 = vshrl.u32 %v6982, 7
    %v6984 = vsub.s32 %v6824, %v6983
    %v6985 = vrot.slane %v6919, %v6984
    %v6986 = vsel %vm6829, %v6985, %v6981
    %v6987 = vlaneseq
    %v6988 = vshrl.u32 %v6987, 7
    %v6989 = vsub.s32 %v6831, %v6988
    %v6990 = vrot.slane %v6922, %v6989
    %v6991 = vsel %vm6836, %v6990, %v6986
    %v6992 = vlaneseq
    %v6993 = vshrl.u32 %v6992, 7
    %v6994 = vsub.s32 %v6838, %v6993
    %v6995 = vrot.slane %v6925, %v6994
    %v6996 = vsel %vm6843, %v6995, %v6991
    %v6997 = vlaneseq
    %v6998 = vshrl.u32 %v6997, 7
    %v6999 = vsub.s32 %v6845, %v6998
    %v7000 = vrot.slane %v6928, %v6999
    %v7001 = vsel %vm6850, %v7000, %v6996
    %v7002 = vlaneseq
    %v7003 = vshrl.u32 %v7002, 7
    %v7004 = vsub.s32 %v6852, %v7003
    %v7005 = vrot.slane %v6931, %v7004
    %v7006 = vsel %vm6857, %v7005, %v7001
    %v7007 = vlaneseq
    %v7008 = vshrl.u32 %v7007, 7
    %v7009 = vsub.s32 %v6859, %v7008
    %v7010 = vrot.slane %v6934, %v7009
    %v7011 = vsel %vm6864, %v7010, %v7006
    %v7012 = vlaneseq
    %v7013 = vshrl.u32 %v7012, 7
    %v7014 = vsub.s32 %v6866, %v7013
    %v7015 = vrot.slane %v6937, %v7014
    %v7016 = vsel %vm6871, %v7015, %v7011
    %7034 = vset.pattern.permute.xlu0 0
    %7035 = vperm.xlu0 %7034, %v6682
    %v7036 = vpop.permute.xlu0 %7035
    %7037 = vset.pattern.permute.xlu0 0
    %7038 = vperm.xlu0 %7037, %v6683
    %v7039 = vpop.permute.xlu0 %7038
    %7040 = vset.pattern.permute.xlu0 0
    %7041 = vperm.xlu0 %7040, %v6684
    %v7042 = vpop.permute.xlu0 %7041
    %7043 = vset.pattern.permute.xlu0 0
    %7044 = vperm.xlu0 %7043, %v6685
    %v7045 = vpop.permute.xlu0 %7044
    %7046 = vset.pattern.permute.xlu0 0
    %7047 = vperm.xlu0 %7046, %v6686
    %v7048 = vpop.permute.xlu0 %7047
    %7049 = vset.pattern.permute.xlu0 0
    %7050 = vperm.xlu0 %7049, %v6687
    %v7051 = vpop.permute.xlu0 %7050
    %7052 = vset.pattern.permute.xlu0 0
    %7053 = vperm.xlu0 %7052, %v6688
    %v7054 = vpop.permute.xlu0 %7053
    %7055 = vset.pattern.permute.xlu0 0
    %7056 = vperm.xlu0 %7055, %v6689
    %v7057 = vpop.permute.xlu0 %7056
    %7058 = vset.pattern.permute.xlu0 0
    %7059 = vperm.xlu0 %7058, %v6690
    %v7060 = vpop.permute.xlu0 %7059
    %7061 = vset.pattern.permute.xlu0 0
    %7062 = vperm.xlu0 %7061, %v6691
    %v7063 = vpop.permute.xlu0 %7062
    %7064 = vset.pattern.permute.xlu0 0
    %7065 = vperm.xlu0 %7064, %v6692
    %v7066 = vpop.permute.xlu0 %7065
    %7067 = vset.pattern.permute.xlu0 0
    %7068 = vperm.xlu0 %7067, %v6693
    %v7069 = vpop.permute.xlu0 %7068
    %7070 = vset.pattern.permute.xlu0 0
    %7071 = vperm.xlu0 %7070, %v6694
    %v7072 = vpop.permute.xlu0 %7071
    %7073 = vset.pattern.permute.xlu0 0
    %7074 = vperm.xlu0 %7073, %v6695
    %v7075 = vpop.permute.xlu0 %7074
    %7076 = vset.pattern.permute.xlu0 0
    %7077 = vperm.xlu0 %7076, %v6696
    %v7078 = vpop.permute.xlu0 %7077
    %7079 = vset.pattern.permute.xlu0 0
    %7080 = vperm.xlu0 %7079, %v6697
    %v7081 = vpop.permute.xlu0 %7080
    %v7082 = vlaneseq
    %v7083 = vshrl.u32 %v7082, 7
    %v7084 = vsub.s32 %v6763, %v7083
    %v7085 = vrot.slane %v7036, %v7084
    %v7086 = vlaneseq
    %v7087 = vshrl.u32 %v7086, 7
    %v7088 = vsub.s32 %v6768, %v7087
    %v7089 = vrot.slane %v7039, %v7088
    %v7090 = vsel %vm6773, %v7089, %v7085
    %v7091 = vlaneseq
    %v7092 = vshrl.u32 %v7091, 7
    %v7093 = vsub.s32 %v6775, %v7092
    %v7094 = vrot.slane %v7042, %v7093
    %v7095 = vsel %vm6780, %v7094, %v7090
    %v7096 = vlaneseq
    %v7097 = vshrl.u32 %v7096, 7
    %v7098 = vsub.s32 %v6782, %v7097
    %v7099 = vrot.slane %v7045, %v7098
    %v7100 = vsel %vm6787, %v7099, %v7095
    %v7101 = vlaneseq
    %v7102 = vshrl.u32 %v7101, 7
    %v7103 = vsub.s32 %v6789, %v7102
    %v7104 = vrot.slane %v7048, %v7103
    %v7105 = vsel %vm6794, %v7104, %v7100
    %v7106 = vlaneseq
    %v7107 = vshrl.u32 %v7106, 7
    %v7108 = vsub.s32 %v6796, %v7107
    %v7109 = vrot.slane %v7051, %v7108
    %v7110 = vsel %vm6801, %v7109, %v7105
    %v7111 = vlaneseq
    %v7112 = vshrl.u32 %v7111, 7
    %v7113 = vsub.s32 %v6803, %v7112
    %v7114 = vrot.slane %v7054, %v7113
    %v7115 = vsel %vm6808, %v7114, %v7110
    %v7116 = vlaneseq
    %v7117 = vshrl.u32 %v7116, 7
    %v7118 = vsub.s32 %v6810, %v7117
    %v7119 = vrot.slane %v7057, %v7118
    %v7120 = vsel %vm6815, %v7119, %v7115
    %v7121 = vlaneseq
    %v7122 = vshrl.u32 %v7121, 7
    %v7123 = vsub.s32 %v6817, %v7122
    %v7124 = vrot.slane %v7060, %v7123
    %v7125 = vsel %vm6822, %v7124, %v7120
    %v7126 = vlaneseq
    %v7127 = vshrl.u32 %v7126, 7
    %v7128 = vsub.s32 %v6824, %v7127
    %v7129 = vrot.slane %v7063, %v7128
    %v7130 = vsel %vm6829, %v7129, %v7125
    %v7131 = vlaneseq
    %v7132 = vshrl.u32 %v7131, 7
    %v7133 = vsub.s32 %v6831, %v7132
    %v7134 = vrot.slane %v7066, %v7133
    %v7135 = vsel %vm6836, %v7134, %v7130
    %v7136 = vlaneseq
    %v7137 = vshrl.u32 %v7136, 7
    %v7138 = vsub.s32 %v6838, %v7137
    %v7139 = vrot.slane %v7069, %v7138
    %v7140 = vsel %vm6843, %v7139, %v7135
    %v7141 = vlaneseq
    %v7142 = vshrl.u32 %v7141, 7
    %v7143 = vsub.s32 %v6845, %v7142
    %v7144 = vrot.slane %v7072, %v7143
    %v7145 = vsel %vm6850, %v7144, %v7140
    %v7146 = vlaneseq
    %v7147 = vshrl.u32 %v7146, 7
    %v7148 = vsub.s32 %v6852, %v7147
    %v7149 = vrot.slane %v7075, %v7148
    %v7150 = vsel %vm6857, %v7149, %v7145
    %v7151 = vlaneseq
    %v7152 = vshrl.u32 %v7151, 7
    %v7153 = vsub.s32 %v6859, %v7152
    %v7154 = vrot.slane %v7078, %v7153
    %v7155 = vsel %vm6864, %v7154, %v7150
    %v7156 = vlaneseq
    %v7157 = vshrl.u32 %v7156, 7
    %v7158 = vsub.s32 %v6866, %v7157
    %v7159 = vrot.slane %v7081, %v7158
    %v7160 = vsel %vm6871, %v7159, %v7155
    %vm7162 = vcmask 1040384
    %v7163 = vsel %vm7162, %v6872, %v7016
    %vm7164 = vcmask 1041408
    %v7165 = vsel %vm7164, %v7163, %v7160
    %7166 = vst [vmem:[#allocation19] sm:$0x7] %v7165
    // Predicated region
    $region86: #{tpu_custom_call.1} parent=1 // pred_check
      _
    $region87: #{tpu_custom_call.1} parent=1 // pred_check_branch
      %7168 = sbr.rel (0) target = $region89
    $region88: #{tpu_custom_call.1} parent=1 // pred_region
      %s7170 = ssub.s32 64, 64
      %7171 = vsyncadd [#allocation4], %s7170
      %s7173 = sshll.u32 [#allocation19], 4
      %s7174 = int_to_ptr.vmem [resolvable:$true] %s7173
      %7176 = dma.vmem_to_hbm [thread:$0]  %s7174, 64, %s11, [#allocation4]
    $region89: #{tpu_custom_call.1} parent=1 // pred_fallthru
      _
    // Predicated region
    $region90: #{tpu_custom_call.1} parent=1 // pred_check
      _
    $region91: #{tpu_custom_call.1} parent=1 // pred_check_branch
      %7178 = sbr.rel (0) target = $region93
    $region92: #{tpu_custom_call.1} parent=1 // pred_region
      %7179 = dma.done [#allocation4], 64
    $region93: #{tpu_custom_call.1} parent=1 // pred_fallthru
      _
    %7180 = vsyncpa [#allocation3], 1
    %7181 = vsyncpa [#allocation6], 1
    %7182 = vsyncpa [#allocation9], 1
    %7183 = vsyncpa [#allocation12], 1
    %7184 = vsyncpa [#allocation15], 1
    %7185 = vsyncpa [#allocation18], 1
    %7186 = vsyncpa [#allocation4], 1

</llo_original>
